<compile_context>
chip_gen: v5e
topology: v5e:2x2
jax: 0.10.0
libtpu: 0.0.40
codegen_flags: <defaults>
</compile_context>

<pallas_src>
import jax
import jax.numpy as jnp
from jax import lax
from jax.experimental import pallas as pl
from jax.experimental.pallas import tpu as pltpu


# ----------------------------------------------------------------------------- kernel
def make_bilstm_kernel(num_layers, T, H, bn):
    """Fused multi-layer bidirectional LSTM over a block of `bn` rows."""
    G = 4 * H       # per-direction gate width (packed gate order: i, f, o, g)

    def kernel(*refs):
        # refs = (lens, x, [w_ih_cat, w_hh, b_cat] * L, out, scratch...)
        len_ref, x_ref = refs[0], refs[1]
        w_refs = refs[2:2 + 3 * num_layers]
        o_ref = refs[2 + 3 * num_layers]
        scratch = refs[3 + 3 * num_layers:]
        ginf_ref, ginb_ref, hf_ref, cf_ref, hb_ref, cb_ref = scratch[:6]
        bufs = scratch[6:]                       # ping-pong layer activations

        for layer in range(num_layers):
            w_ih_ref, w_hh_ref, b_ref = w_refs[3 * layer: 3 * layer + 3]
            in_ref = x_ref if layer == 0 else bufs[(layer - 1) % len(bufs)]
            out_ref = o_ref if layer == num_layers - 1 else bufs[layer % len(bufs)]

            # ---- input projection hoisted out of the recurrence ------------
            # One (bn, Din) @ (Din, 8H) matmul per timestep covering BOTH
            # directions; bias folded in here (loop-invariant add emitted once).
            @pl.loop(0, T)
            def _proj(t):
                g = (jnp.dot(in_ref[t], w_ih_ref[...],
                             preferred_element_type=jnp.float32)
                     + b_ref[...])
                ginf_ref[t] = g[:, :G]
                ginb_ref[t] = g[:, G:]

            # ---- zero initial state ----------------------------------------
            hf_ref[...] = jnp.zeros_like(hf_ref)
            cf_ref[...] = jnp.zeros_like(cf_ref)
            hb_ref[...] = jnp.zeros_like(hb_ref)
            cb_ref[...] = jnp.zeros_like(cb_ref)

            # ---- fused forward + backward recurrence -----------------------
            @pl.loop(0, T)
            def _step(s):
                t_b = T - 1 - s
                lens = len_ref[...]                          # (bn, 1) int32
                h_f = hf_ref[...]
                c_f = cf_ref[...]
                h_b = hb_ref[...]
                c_b = cb_ref[...]

                g_f = ginf_ref[s] + jnp.dot(
                    h_f, w_hh_ref[0], preferred_element_type=jnp.float32)
                g_b = ginb_ref[t_b] + jnp.dot(
                    h_b, w_hh_ref[1], preferred_element_type=jnp.float32)

                # packed gate order (i, f, o, g): one sigmoid over the
                # contiguous 3H i/f/o lanes, one tanh over the cell-gate lanes.
                sg_f = jax.nn.sigmoid(g_f[:, :3 * H])
                gg_f = jnp.tanh(g_f[:, 3 * H:])
                sg_b = jax.nn.sigmoid(g_b[:, :3 * H])
                gg_b = jnp.tanh(g_b[:, 3 * H:])

                c_f_new = sg_f[:, H:2 * H] * c_f + sg_f[:, :H] * gg_f
                h_f_new = sg_f[:, 2 * H:3 * H] * jnp.tanh(c_f_new)
                c_b_new = sg_b[:, H:2 * H] * c_b + sg_b[:, :H] * gg_b
                h_b_new = sg_b[:, 2 * H:3 * H] * jnp.tanh(c_b_new)

                v_f = s < lens                               # packed-seq masks
                v_b = t_b < lens
                hf_ref[...] = jnp.where(v_f, h_f_new, h_f)
                cf_ref[...] = jnp.where(v_f, c_f_new, c_f)
                hb_ref[...] = jnp.where(v_b, h_b_new, h_b)
                cb_ref[...] = jnp.where(v_b, c_b_new, c_b)

                out_ref[s, :, :H] = jnp.where(v_f, h_f_new, 0.0)
                out_ref[t_b, :, H:] = jnp.where(v_b, h_b_new, 0.0)

    return kernel


def bilstm_forward(x_tne, lens, packed_params, *, H, bn=128):
    """x_tne: (T, N_pad, E) f32 time-major inputs; lens: (N_pad, 1) int32."""
    T, N_pad, E = x_tne.shape
    num_layers = len(packed_params)
    assert N_pad % bn == 0
    n_bufs = 0 if num_layers == 1 else min(2, num_layers - 1)

    flat_w = []
    in_specs = [
        pl.BlockSpec((bn, 1), lambda i: (i, 0)),             # per-row lengths
        pl.BlockSpec((T, bn, E), lambda i: (0, i, 0)),       # inputs, time-major
    ]
    for (w_ih, w_hh, b) in packed_params:
        flat_w += [w_ih, w_hh, b]
        in_specs += [
            pl.BlockSpec(w_ih.shape, lambda i: (0, 0)),      # (Din, 8H)
            pl.BlockSpec(w_hh.shape, lambda i: (0, 0, 0)),   # (2, H, 4H)
            pl.BlockSpec(b.shape, lambda i: (0, 0)),         # (1, 8H)
        ]

    scratch = [
        pltpu.VMEM((T, bn, 4 * H), jnp.float32),   # hoisted gates, fwd dir
        pltpu.VMEM((T, bn, 4 * H), jnp.float32),   # hoisted gates, bwd dir
        pltpu.VMEM((bn, H), jnp.float32),          # h fwd
        pltpu.VMEM((bn, H), jnp.float32),          # c fwd
        pltpu.VMEM((bn, H), jnp.float32),          # h bwd
        pltpu.VMEM((bn, H), jnp.float32),          # c bwd
    ] + [pltpu.VMEM((T, bn, 2 * H), jnp.float32)] * n_bufs

    return pl.pallas_call(
        make_bilstm_kernel(num_layers, T, H, bn),
        out_shape=jax.ShapeDtypeStruct((T, N_pad, 2 * H), jnp.float32),
        grid_spec=pltpu.PrefetchScalarGridSpec(
            num_scalar_prefetch=0,
            grid=(N_pad // bn,),
            in_specs=in_specs,
            out_specs=pl.BlockSpec((T, bn, 2 * H), lambda i: (0, i, 0)),
            scratch_shapes=scratch,
        ),
        compiler_params=pltpu.CompilerParams(
            dimension_semantics=("parallel",)),
    )(lens, x_tne, *flat_w)


# ----------------------------------------------------------------------------- packing
def pack_lstm_params(lstm_params, H):
    """Torch-layout (pre-transposed) params -> kernel format.

    Per layer: w_ih (2, Din, 4H), w_hh (2, H, 4H), b (2, 1, 4H) in torch gate
    order (i, f, g, o) -> permute gates to (i, f, o, g), concatenate both
    directions' input weights/bias along the output axis.
    """
    def perm(w):  # last dim = 4H, (i,f,g,o) -> (i,f,o,g)
        return jnp.concatenate(
            [w[..., :2 * H], w[..., 3 * H:], w[..., 2 * H:3 * H]], axis=-1)

    packed = []
    for (w_ih, w_hh, b) in lstm_params:
        w_ih_p, w_hh_p, b_p = perm(w_ih), perm(w_hh), perm(b)
        w_ih_cat = jnp.concatenate([w_ih_p[0], w_ih_p[1]], axis=-1)   # (Din, 8H)
        b_cat = jnp.concatenate([b_p[0], b_p[1]], axis=-1)            # (1, 8H)
        packed.append((w_ih_cat, w_hh_p, b_cat))
    return packed


# ----------------------------------------------------------------------------- wrapper
def posterior_indicated_inputs(tokens, posteriors, embs):
    """Embedding lookups + posteriorIndictedEmb (packed-sequence plumbing, plain JAX)."""
    src_lens = [t.shape[0] for t in tokens]
    amr_lens = [p.shape[0] for p in posteriors]
    T = max(src_lens)
    d_emb = sum(embs[k].shape[1] for k in
                ("word_fix_lut", "lemma_lut", "pos_lut", "ner_lut"))
    rows, row_lens = [], []
    for toks, post, sl, al in zip(tokens, posteriors, src_lens, amr_lens):
        e = jnp.concatenate([
            embs["word_fix_lut"][toks[:, 0]],
            embs["lemma_lut"][toks[:, 1]],
            embs["pos_lut"][toks[:, 2]],
            embs["ner_lut"][toks[:, 3]],
        ], axis=1)                                           # (sl, d_emb)
        e = jnp.pad(e, ((0, T - sl), (0, 0)))                # pad src positions
        if post.ndim == 2:                                   # MyPackedSequence branch
            ind = jnp.pad(post.astype(jnp.float32),
                          ((0, 0), (0, T - post.shape[1])))  # soft posterior as indicator
        else:                                                # list branch: one-hot scatter
            ind = jax.nn.one_hot(post, T, dtype=jnp.float32)  # (al, T)
        x_i = jnp.concatenate(
            [jnp.broadcast_to(e[None], (al, T, d_emb)), ind[:, :, None]], axis=2)
        rows.append(x_i)
        row_lens += [sl] * al
    x = jnp.concatenate(rows, axis=0)                        # (N, T, d_emb + 1)
    return x, jnp.asarray(row_lens, jnp.int32), amr_lens


def rel_sentence_encoder(tokens, posteriors, embs, lstm_params, *, H, bn=128):
    x, row_lens, amr_lens = posterior_indicated_inputs(tokens, posteriors, embs)
    N, T, E = x.shape
    N_pad = ((N + bn - 1) // bn) * bn
    x = jnp.pad(x, ((0, N_pad - N), (0, 0), (0, 0)))
    lens = jnp.pad(row_lens, (0, N_pad - N)).reshape(N_pad, 1)
    x_tne = jnp.transpose(x, (1, 0, 2))                      # time-major for the kernel
    packed = pack_lstm_params(lstm_params, H)
    out = bilstm_forward(x_tne, lens, packed, H=H, bn=bn)
    out = jnp.transpose(out, (1, 0, 2))[:N]                  # (N, T, 2H) padded outputs
    return out, row_lens, amr_lens                           # DoublePackedSequence pieces


# ----------------------------------------------------------------------------- reference
def bilstm_reference(x_tne, lens, lstm_params, H):
    """Pure-JAX packed bidirectional LSTM (torch gate order, same masked updates)."""
    T, N, _ = x_tne.shape
    cur = x_tne
    hi = lax.Precision.HIGHEST
    for (w_ih, w_hh, b) in lstm_params:
        nxt = jnp.zeros((T, N, 2 * H), jnp.float32)
        for d in range(2):
            h = jnp.zeros((N, H), jnp.float32)
            c = jnp.zeros((N, H), jnp.float32)
            steps = range(T) if d == 0 else range(T - 1, -1, -1)
            for t in steps:
                g = (jnp.dot(cur[t], w_ih[d], precision=hi)
                     + jnp.dot(h, w_hh[d], precision=hi) + b[d])
                i_g = jax.nn.sigmoid(g[:, 0 * H:1 * H])
                f_g = jax.nn.sigmoid(g[:, 1 * H:2 * H])
                g_g = jnp.tanh(g[:, 2 * H:3 * H])
                o_g = jax.nn.sigmoid(g[:, 3 * H:4 * H])
                c_new = f_g * c + i_g * g_g
                h_new = o_g * jnp.tanh(c_new)
                valid = t < lens
                h = jnp.where(valid, h_new, h)
                c = jnp.where(valid, c_new, c)
                nxt = nxt.at[t, :, d * H:(d + 1) * H].set(jnp.where(valid, h_new, 0.0))
        cur = nxt
    return cur


# ----------------------------------------------------------------------------- main
if __name__ == "__main__":
    key = jax.random.PRNGKey(0)

    # opt-equivalent config: rel_rnn_size=128, brnn=True -> hidden=64, rel_enlayers=2
    # (H=64 keeps the output last dim 2H=128 lane-dense on TPU).
    H, num_layers = 64, 2
    word_dim, lemma_dim, pos_dim, ner_dim = 16, 8, 4, 4
    E = word_dim + lemma_dim + pos_dim + ner_dim + 1         # +1 indicator column = 33

    # 8 sentences; N = sum(amr_lens) = 520 rows -> N_pad = 640, grid = 5 blocks of 128.
    src_lens = [14, 12, 11, 9, 13, 10, 8, 14]
    amr_lens = [70, 66, 64, 60, 68, 62, 58, 72]

    ks = iter(jax.random.split(key, 64))
    embs = {
        "word_fix_lut": 0.5 * jax.random.normal(next(ks), (50, word_dim), jnp.float32),
        "lemma_lut":    0.5 * jax.random.normal(next(ks), (40, lemma_dim), jnp.float32),
        "pos_lut":      0.5 * jax.random.normal(next(ks), (20, pos_dim), jnp.float32),
        "ner_lut":      0.5 * jax.random.normal(next(ks), (10, ner_dim), jnp.float32),
    }

    # LSTM params in pre-transposed torch layout + folded biases:
    # w_ih (2, Din, 4H), w_hh (2, H, 4H), b = b_ih + b_hh (2, 1, 4H), gate order (i,f,g,o).
    lstm_params = []
    for layer in range(num_layers):
        din = E if layer == 0 else 2 * H
        w_ih = 0.3 * jax.random.normal(next(ks), (2, din, 4 * H), jnp.float32)
        w_hh = 0.3 * jax.random.normal(next(ks), (2, H, 4 * H), jnp.float32)
        b = 0.1 * jax.random.normal(next(ks), (2, 1, 4 * H), jnp.float32)
        lstm_params.append((w_ih, w_hh, b))

    tokens, posteriors = [], []
    for sl, al in zip(src_lens, amr_lens):
        tokens.append(jax.random.randint(next(ks), (sl, 4), 0, 10))      # word/lemma/pos/ner ids
        posteriors.append(jax.random.randint(next(ks), (al,), 0, sl))    # hard alignments

    out, row_lens, out_amr_lens = rel_sentence_encoder(
        tokens, posteriors, embs, lstm_params, H=H, bn=128)
    jax.block_until_ready(out)

    # Pure-JAX reference (identical packed-BiLSTM math) for validation.
    x, rl, _ = posterior_indicated_inputs(tokens, posteriors, embs)
    N, T, _ = x.shape
    ref = bilstm_reference(jnp.transpose(x, (1, 0, 2)), rl.reshape(N, 1), lstm_params, H)
    ref = jnp.transpose(ref, (1, 0, 2))

    assert out.shape == (sum(amr_lens), max(src_lens), 2 * H)
    assert out_amr_lens == amr_lens
    assert bool(jnp.allclose(out, ref, atol=1e-3, rtol=1e-3)), "mismatch vs reference"
    print("KERNEL_OK")
</pallas_src>

<mosaic_0001>
module attributes {stable_mosaic.version = 11 : i64} {
  func.func @kernel(%arg0: i32, %arg1: memref<128x1xi32, #tpu.memory_space<vmem>>, %arg2: memref<14x128x33xf32, #tpu.memory_space<vmem>>, %arg3: memref<33x512xf32, #tpu.memory_space<vmem>>, %arg4: memref<2x64x256xf32, #tpu.memory_space<vmem>>, %arg5: memref<1x512xf32, #tpu.memory_space<vmem>>, %arg6: memref<128x512xf32, #tpu.memory_space<vmem>>, %arg7: memref<2x64x256xf32, #tpu.memory_space<vmem>>, %arg8: memref<1x512xf32, #tpu.memory_space<vmem>>, %arg9: memref<14x128x128xf32, #tpu.memory_space<vmem>>, %arg10: memref<14x128x256xf32, #tpu.memory_space<vmem>>, %arg11: memref<14x128x256xf32, #tpu.memory_space<vmem>>, %arg12: memref<128x64xf32, #tpu.memory_space<vmem>>, %arg13: memref<128x64xf32, #tpu.memory_space<vmem>>, %arg14: memref<128x64xf32, #tpu.memory_space<vmem>>, %arg15: memref<128x64xf32, #tpu.memory_space<vmem>>, %arg16: memref<14x128x128xf32, #tpu.memory_space<vmem>>) attributes {dimension_semantics = [#tpu.dimension_semantics<parallel>], iteration_bounds = array<i64: 5>, scalar_prefetch = 0 : i64, scratch_operands = 7 : i64, tpu.core_type = #tpu.core_type<tc>, window_params = [{transform_indices = @transform_0, window_bounds = array<i64: 128, 1>}, {transform_indices = @transform_1, window_bounds = array<i64: 14, 128, 33>}, {pipeline_mode = #tpu.pipeline_mode<synchronous>, transform_indices = @transform_2, window_bounds = array<i64: 33, 512>}, {pipeline_mode = #tpu.pipeline_mode<synchronous>, transform_indices = @transform_3, window_bounds = array<i64: 2, 64, 256>}, {pipeline_mode = #tpu.pipeline_mode<synchronous>, transform_indices = @transform_4, window_bounds = array<i64: 1, 512>}, {pipeline_mode = #tpu.pipeline_mode<synchronous>, transform_indices = @transform_5, window_bounds = array<i64: 128, 512>}, {pipeline_mode = #tpu.pipeline_mode<synchronous>, transform_indices = @transform_6, window_bounds = array<i64: 2, 64, 256>}, {pipeline_mode = #tpu.pipeline_mode<synchronous>, transform_indices = @transform_7, window_bounds = array<i64: 1, 512>}, {transform_indices = @transform_8, window_bounds = array<i64: 14, 128, 128>}]} {
    %c0_i32 = arith.constant 0 : i32
    %c14_i32 = arith.constant 14 : i32
    %0 = arith.addi %c0_i32, %c14_i32 : i32
    %c1_i32 = arith.constant 1 : i32
    scf.for %arg17 = %c0_i32 to %0 step %c1_i32  : i32 {
      %c1_i32_35 = arith.constant 1 : i32
      %20 = arith.muli %arg17, %c1_i32_35 : i32
      %c0_i32_36 = arith.constant 0 : i32
      %21 = arith.addi %c0_i32_36, %20 : i32
      %22 = arith.index_cast %21 : i32 to index
      %c0_37 = arith.constant 0 : index
      %c0_38 = arith.constant 0 : index
      %23 = vector.load %arg2[%22, %c0_37, %c0_38] : memref<14x128x33xf32, #tpu.memory_space<vmem>>, vector<1x128x33xf32>
      %24 = vector.shape_cast %23 : vector<1x128x33xf32> to vector<128x33xf32>
      %c0_39 = arith.constant 0 : index
      %c0_40 = arith.constant 0 : index
      %25 = vector.load %arg3[%c0_39, %c0_40] : memref<33x512xf32, #tpu.memory_space<vmem>>, vector<33x512xf32>
      %cst_41 = arith.constant dense<0.000000e+00> : vector<128x512xf32>
      %26 = tpu.matmul %24, %25, %cst_41 {dimension_numbers = #tpu.dot_dimension_numbers<[1], [0], [0], [1], [0, 0, 1, 1], [], []>} : vector<128x33xf32>, vector<33x512xf32>, vector<128x512xf32> -> vector<128x512xf32>
      %c0_42 = arith.constant 0 : index
      %c0_43 = arith.constant 0 : index
      %27 = vector.load %arg5[%c0_42, %c0_43] : memref<1x512xf32, #tpu.memory_space<vmem>>, vector<1x512xf32>
      %28 = vector.broadcast %27 : vector<1x512xf32> to vector<128x512xf32>
      %29 = arith.addf %26, %28 : vector<128x512xf32>
      %30 = vector.extract_strided_slice %29 {offsets = [0, 0], sizes = [128, 256], strides = [1, 1]} : vector<128x512xf32> to vector<128x256xf32>
      %31 = arith.index_cast %21 : i32 to index
      %c0_44 = arith.constant 0 : index
      %c0_45 = arith.constant 0 : index
      %32 = vector.load %arg10[%31, %c0_44, %c0_45] : memref<14x128x256xf32, #tpu.memory_space<vmem>>, vector<1x128x256xf32>
      %33 = vector.shape_cast %32 : vector<1x128x256xf32> to vector<128x256xf32>
      %34 = vector.shape_cast %30 : vector<128x256xf32> to vector<1x128x256xf32>
      tpu.vector_store %arg10[%31, %c0_44, %c0_45], %34 {strides = array<i32>} : memref<14x128x256xf32, #tpu.memory_space<vmem>>, vector<1x128x256xf32>,
      %35 = vector.extract_strided_slice %29 {offsets = [0, 256], sizes = [128, 256], strides = [1, 1]} : vector<128x512xf32> to vector<128x256xf32>
      %36 = arith.index_cast %21 : i32 to index
      %c0_46 = arith.constant 0 : index
      %c0_47 = arith.constant 0 : index
      %37 = vector.load %arg11[%36, %c0_46, %c0_47] : memref<14x128x256xf32, #tpu.memory_space<vmem>>, vector<1x128x256xf32>
      %38 = vector.shape_cast %37 : vector<1x128x256xf32> to vector<128x256xf32>
      %39 = vector.shape_cast %35 : vector<128x256xf32> to vector<1x128x256xf32>
      tpu.vector_store %arg11[%36, %c0_46, %c0_47], %39 {strides = array<i32>} : memref<14x128x256xf32, #tpu.memory_space<vmem>>, vector<1x128x256xf32>,
    }
    %c14_i32_0 = arith.constant 14 : i32
    %cst = arith.constant 0.000000e+00 : f32
    %1 = vector.broadcast %cst : f32 to vector<128x64xf32>
    %c0 = arith.constant 0 : index
    %c0_1 = arith.constant 0 : index
    %2 = vector.load %arg12[%c0, %c0_1] : memref<128x64xf32, #tpu.memory_space<vmem>>, vector<128x64xf32>
    tpu.vector_store %arg12[%c0, %c0_1], %1 {strides = array<i32>} : memref<128x64xf32, #tpu.memory_space<vmem>>, vector<128x64xf32>,
    %cst_2 = arith.constant 0.000000e+00 : f32
    %3 = vector.broadcast %cst_2 : f32 to vector<128x64xf32>
    %c0_3 = arith.constant 0 : index
    %c0_4 = arith.constant 0 : index
    %4 = vector.load %arg13[%c0_3, %c0_4] : memref<128x64xf32, #tpu.memory_space<vmem>>, vector<128x64xf32>
    tpu.vector_store %arg13[%c0_3, %c0_4], %3 {strides = array<i32>} : memref<128x64xf32, #tpu.memory_space<vmem>>, vector<128x64xf32>,
    %cst_5 = arith.constant 0.000000e+00 : f32
    %5 = vector.broadcast %cst_5 : f32 to vector<128x64xf32>
    %c0_6 = arith.constant 0 : index
    %c0_7 = arith.constant 0 : index
    %6 = vector.load %arg14[%c0_6, %c0_7] : memref<128x64xf32, #tpu.memory_space<vmem>>, vector<128x64xf32>
    tpu.vector_store %arg14[%c0_6, %c0_7], %5 {strides = array<i32>} : memref<128x64xf32, #tpu.memory_space<vmem>>, vector<128x64xf32>,
    %cst_8 = arith.constant 0.000000e+00 : f32
    %7 = vector.broadcast %cst_8 : f32 to vector<128x64xf32>
    %c0_9 = arith.constant 0 : index
    %c0_10 = arith.constant 0 : index
    %8 = vector.load %arg15[%c0_9, %c0_10] : memref<128x64xf32, #tpu.memory_space<vmem>>, vector<128x64xf32>
    tpu.vector_store %arg15[%c0_9, %c0_10], %7 {strides = array<i32>} : memref<128x64xf32, #tpu.memory_space<vmem>>, vector<128x64xf32>,
    %c0_i32_11 = arith.constant 0 : i32
    %c14_i32_12 = arith.constant 14 : i32
    %9 = arith.addi %c0_i32_11, %c14_i32_12 : i32
    %c1_i32_13 = arith.constant 1 : i32
    scf.for %arg17 = %c0_i32_11 to %9 step %c1_i32_13  : i32 {
      %c1_i32_35 = arith.constant 1 : i32
      %20 = arith.muli %arg17, %c1_i32_35 : i32
      %c0_i32_36 = arith.constant 0 : i32
      %21 = arith.addi %c0_i32_36, %20 : i32
      %c13_i32 = arith.constant 13 : i32
      %22 = arith.subi %c13_i32, %21 : i32
      %c0_37 = arith.constant 0 : index
      %c0_38 = arith.constant 0 : index
      %23 = vector.load %arg1[%c0_37, %c0_38] : memref<128x1xi32, #tpu.memory_space<vmem>>, vector<128x1xi32>
      %c0_39 = arith.constant 0 : index
      %c0_40 = arith.constant 0 : index
      %24 = vector.load %arg12[%c0_39, %c0_40] : memref<128x64xf32, #tpu.memory_space<vmem>>, vector<128x64xf32>
      %c0_41 = arith.constant 0 : index
      %c0_42 = arith.constant 0 : index
      %25 = vector.load %arg13[%c0_41, %c0_42] : memref<128x64xf32, #tpu.memory_space<vmem>>, vector<128x64xf32>
      %c0_43 = arith.constant 0 : index
      %c0_44 = arith.constant 0 : index
      %26 = vector.load %arg14[%c0_43, %c0_44] : memref<128x64xf32, #tpu.memory_space<vmem>>, vector<128x64xf32>
      %c0_45 = arith.constant 0 : index
      %c0_46 = arith.constant 0 : index
      %27 = vector.load %arg15[%c0_45, %c0_46] : memref<128x64xf32, #tpu.memory_space<vmem>>, vector<128x64xf32>
      %28 = arith.index_cast %21 : i32 to index
      %c0_47 = arith.constant 0 : index
      %c0_48 = arith.constant 0 : index
      %29 = vector.load %arg10[%28, %c0_47, %c0_48] : memref<14x128x256xf32, #tpu.memory_space<vmem>>, vector<1x128x256xf32>
      %30 = vector.shape_cast %29 : vector<1x128x256xf32> to vector<128x256xf32>
      %c0_49 = arith.constant 0 : index
      %c0_50 = arith.constant 0 : index
      %c0_51 = arith.constant 0 : index
      %31 = vector.load %arg4[%c0_49, %c0_50, %c0_51] : memref<2x64x256xf32, #tpu.memory_space<vmem>>, vector<1x64x256xf32>
      %32 = vector.shape_cast %31 : vector<1x64x256xf32> to vector<64x256xf32>
      %cst_52 = arith.constant dense<0.000000e+00> : vector<128x256xf32>
      %33 = tpu.matmul %24, %32, %cst_52 {dimension_numbers = #tpu.dot_dimension_numbers<[1], [0], [0], [1], [0, 0, 1, 1], [], []>} : vector<128x64xf32>, vector<64x256xf32>, vector<128x256xf32> -> vector<128x256xf32>
      %34 = arith.addf %30, %33 : vector<128x256xf32>
      %35 = arith.index_cast %22 : i32 to index
      %c0_53 = arith.constant 0 : index
      %c0_54 = arith.constant 0 : index
      %36 = vector.load %arg11[%35, %c0_53, %c0_54] : memref<14x128x256xf32, #tpu.memory_space<vmem>>, vector<1x128x256xf32>
      %37 = vector.shape_cast %36 : vector<1x128x256xf32> to vector<128x256xf32>
      %c1 = arith.constant 1 : index
      %c0_55 = arith.constant 0 : index
      %c0_56 = arith.constant 0 : index
      %38 = vector.load %arg4[%c1, %c0_55, %c0_56] : memref<2x64x256xf32, #tpu.memory_space<vmem>>, vector<1x64x256xf32>
      %39 = vector.shape_cast %38 : vector<1x64x256xf32> to vector<64x256xf32>
      %cst_57 = arith.constant dense<0.000000e+00> : vector<128x256xf32>
      %40 = tpu.matmul %26, %39, %cst_57 {dimension_numbers = #tpu.dot_dimension_numbers<[1], [0], [0], [1], [0, 0, 1, 1], [], []>} : vector<128x64xf32>, vector<64x256xf32>, vector<128x256xf32> -> vector<128x256xf32>
      %41 = arith.addf %37, %40 : vector<128x256xf32>
      %42 = vector.extract_strided_slice %34 {offsets = [0, 0], sizes = [128, 192], strides = [1, 1]} : vector<128x256xf32> to vector<128x192xf32>
      %43 = arith.negf %42 : vector<128x192xf32>
      %44 = math.exp %43 : vector<128x192xf32>
      %cst_58 = arith.constant 1.000000e+00 : f32
      %45 = vector.broadcast %cst_58 : f32 to vector<128x192xf32>
      %46 = arith.addf %45, %44 : vector<128x192xf32>
      %47 = arith.divf %45, %46 : vector<128x192xf32>
      %48 = vector.extract_strided_slice %34 {offsets = [0, 192], sizes = [128, 64], strides = [1, 1]} : vector<128x256xf32> to vector<128x64xf32>
      %49 = math.tanh %48 : vector<128x64xf32>
      %50 = vector.extract_strided_slice %41 {offsets = [0, 0], sizes = [128, 192], strides = [1, 1]} : vector<128x256xf32> to vector<128x192xf32>
      %51 = arith.negf %50 : vector<128x192xf32>
      %52 = math.exp %51 : vector<128x192xf32>
      %cst_59 = arith.constant 1.000000e+00 : f32
      %53 = vector.broadcast %cst_59 : f32 to vector<128x192xf32>
      %54 = arith.addf %53, %52 : vector<128x192xf32>
      %55 = arith.divf %53, %54 : vector<128x192xf32>
      %56 = vector.extract_strided_slice %41 {offsets = [0, 192], sizes = [128, 64], strides = [1, 1]} : vector<128x256xf32> to vector<128x64xf32>
      %57 = math.tanh %56 : vector<128x64xf32>
      %58 = vector.extract_strided_slice %47 {offsets = [0, 64], sizes = [128, 64], strides = [1, 1]} : vector<128x192xf32> to vector<128x64xf32>
      %59 = arith.mulf %58, %25 : vector<128x64xf32>
      %60 = vector.extract_strided_slice %47 {offsets = [0, 0], sizes = [128, 64], strides = [1, 1]} : vector<128x192xf32> to vector<128x64xf32>
      %61 = arith.mulf %60, %49 : vector<128x64xf32>
      %62 = arith.addf %59, %61 : vector<128x64xf32>
      %63 = vector.extract_strided_slice %47 {offsets = [0, 128], sizes = [128, 64], strides = [1, 1]} : vector<128x192xf32> to vector<128x64xf32>
      %64 = math.tanh %62 : vector<128x64xf32>
      %65 = arith.mulf %63, %64 : vector<128x64xf32>
      %66 = vector.extract_strided_slice %55 {offsets = [0, 64], sizes = [128, 64], strides = [1, 1]} : vector<128x192xf32> to vector<128x64xf32>
      %67 = arith.mulf %66, %27 : vector<128x64xf32>
      %68 = vector.extract_strided_slice %55 {offsets = [0, 0], sizes = [128, 64], strides = [1, 1]} : vector<128x192xf32> to vector<128x64xf32>
      %69 = arith.mulf %68, %57 : vector<128x64xf32>
      %70 = arith.addf %67, %69 : vector<128x64xf32>
      %71 = vector.extract_strided_slice %55 {offsets = [0, 128], sizes = [128, 64], strides = [1, 1]} : vector<128x192xf32> to vector<128x64xf32>
      %72 = math.tanh %70 : vector<128x64xf32>
      %73 = arith.mulf %71, %72 : vector<128x64xf32>
      %74 = vector.broadcast %21 : i32 to vector<128x1xi32>
      %75 = arith.cmpi slt, %74, %23 : vector<128x1xi32>
      %76 = vector.broadcast %22 : i32 to vector<128x1xi32>
      %77 = arith.cmpi slt, %76, %23 : vector<128x1xi32>
      %78 = vector.shape_cast %75 : vector<128x1xi1> to vector<128x1xi1>
      %79 = vector.broadcast %78 : vector<128x1xi1> to vector<128x64xi1>
      %80 = arith.select %79, %65, %24 : vector<128x64xi1>, vector<128x64xf32>
      %c0_60 = arith.constant 0 : index
      %c0_61 = arith.constant 0 : index
      %81 = vector.load %arg12[%c0_60, %c0_61] : memref<128x64xf32, #tpu.memory_space<vmem>>, vector<128x64xf32>
      tpu.vector_store %arg12[%c0_60, %c0_61], %80 {strides = array<i32>} : memref<128x64xf32, #tpu.memory_space<vmem>>, vector<128x64xf32>,
      %82 = vector.shape_cast %75 : vector<128x1xi1> to vector<128x1xi1>
      %83 = vector.broadcast %82 : vector<128x1xi1> to vector<128x64xi1>
      %84 = arith.select %83, %62, %25 : vector<128x64xi1>, vector<128x64xf32>
      %c0_62 = arith.constant 0 : index
      %c0_63 = arith.constant 0 : index
      %85 = vector.load %arg13[%c0_62, %c0_63] : memref<128x64xf32, #tpu.memory_space<vmem>>, vector<128x64xf32>
      tpu.vector_store %arg13[%c0_62, %c0_63], %84 {strides = array<i32>} : memref<128x64xf32, #tpu.memory_space<vmem>>, vector<128x64xf32>,
      %86 = vector.shape_cast %77 : vector<128x1xi1> to vector<128x1xi1>
      %87 = vector.broadcast %86 : vector<128x1xi1> to vector<128x64xi1>
      %88 = arith.select %87, %73, %26 : vector<128x64xi1>, vector<128x64xf32>
      %c0_64 = arith.constant 0 : index
      %c0_65 = arith.constant 0 : index
      %89 = vector.load %arg14[%c0_64, %c0_65] : memref<128x64xf32, #tpu.memory_space<vmem>>, vector<128x64xf32>
      tpu.vector_store %arg14[%c0_64, %c0_65], %88 {strides = array<i32>} : memref<128x64xf32, #tpu.memory_space<vmem>>, vector<128x64xf32>,
      %90 = vector.shape_cast %77 : vector<128x1xi1> to vector<128x1xi1>
      %91 = vector.broadcast %90 : vector<128x1xi1> to vector<128x64xi1>
      %92 = arith.select %91, %70, %27 : vector<128x64xi1>, vector<128x64xf32>
      %c0_66 = arith.constant 0 : index
      %c0_67 = arith.constant 0 : index
      %93 = vector.load %arg15[%c0_66, %c0_67] : memref<128x64xf32, #tpu.memory_space<vmem>>, vector<128x64xf32>
      tpu.vector_store %arg15[%c0_66, %c0_67], %92 {strides = array<i32>} : memref<128x64xf32, #tpu.memory_space<vmem>>, vector<128x64xf32>,
      %cst_68 = arith.constant 0.000000e+00 : f32
      %94 = vector.shape_cast %75 : vector<128x1xi1> to vector<128x1xi1>
      %95 = vector.broadcast %94 : vector<128x1xi1> to vector<128x64xi1>
      %96 = vector.broadcast %cst_68 : f32 to vector<128x64xf32>
      %97 = arith.select %95, %65, %96 : vector<128x64xi1>, vector<128x64xf32>
      %98 = arith.index_cast %21 : i32 to index
      %c0_69 = arith.constant 0 : index
      %c0_70 = arith.constant 0 : index
      %99 = vector.load %arg16[%98, %c0_69, %c0_70] : memref<14x128x128xf32, #tpu.memory_space<vmem>>, vector<1x128x64xf32>
      %100 = vector.shape_cast %99 : vector<1x128x64xf32> to vector<128x64xf32>
      %101 = vector.shape_cast %97 : vector<128x64xf32> to vector<1x128x64xf32>
      tpu.vector_store %arg16[%98, %c0_69, %c0_70], %101 {strides = array<i32>} : memref<14x128x128xf32, #tpu.memory_space<vmem>>, vector<1x128x64xf32>,
      %cst_71 = arith.constant 0.000000e+00 : f32
      %102 = vector.shape_cast %77 : vector<128x1xi1> to vector<128x1xi1>
      %103 = vector.broadcast %102 : vector<128x1xi1> to vector<128x64xi1>
      %104 = vector.broadcast %cst_71 : f32 to vector<128x64xf32>
      %105 = arith.select %103, %73, %104 : vector<128x64xi1>, vector<128x64xf32>
      %106 = arith.index_cast %22 : i32 to index
      %c0_72 = arith.constant 0 : index
      %c64 = arith.constant 64 : index
      %107 = vector.load %arg16[%106, %c0_72, %c64] : memref<14x128x128xf32, #tpu.memory_space<vmem>>, vector<1x128x64xf32>
      %108 = vector.shape_cast %107 : vector<1x128x64xf32> to vector<128x64xf32>
      %109 = vector.shape_cast %105 : vector<128x64xf32> to vector<1x128x64xf32>
      tpu.vector_store %arg16[%106, %c0_72, %c64], %109 {strides = array<i32>} : memref<14x128x128xf32, #tpu.memory_space<vmem>>, vector<1x128x64xf32>,
    }
    %c14_i32_14 = arith.constant 14 : i32
    %c0_i32_15 = arith.constant 0 : i32
    %c14_i32_16 = arith.constant 14 : i32
    %10 = arith.addi %c0_i32_15, %c14_i32_16 : i32
    %c1_i32_17 = arith.constant 1 : i32
    scf.for %arg17 = %c0_i32_15 to %10 step %c1_i32_17  : i32 {
      %c1_i32_35 = arith.constant 1 : i32
      %20 = arith.muli %arg17, %c1_i32_35 : i32
      %c0_i32_36 = arith.constant 0 : i32
      %21 = arith.addi %c0_i32_36, %20 : i32
      %22 = arith.index_cast %21 : i32 to index
      %c0_37 = arith.constant 0 : index
      %c0_38 = arith.constant 0 : index
      %23 = vector.load %arg16[%22, %c0_37, %c0_38] : memref<14x128x128xf32, #tpu.memory_space<vmem>>, vector<1x128x128xf32>
      %24 = vector.shape_cast %23 : vector<1x128x128xf32> to vector<128x128xf32>
      %c0_39 = arith.constant 0 : index
      %c0_40 = arith.constant 0 : index
      %25 = vector.load %arg6[%c0_39, %c0_40] : memref<128x512xf32, #tpu.memory_space<vmem>>, vector<128x512xf32>
      %cst_41 = arith.constant dense<0.000000e+00> : vector<128x512xf32>
      %26 = tpu.matmul %24, %25, %cst_41 {dimension_numbers = #tpu.dot_dimension_numbers<[1], [0], [0], [1], [0, 0, 1, 1], [], []>} : vector<128x128xf32>, vector<128x512xf32>, vector<128x512xf32> -> vector<128x512xf32>
      %c0_42 = arith.constant 0 : index
      %c0_43 = arith.constant 0 : index
      %27 = vector.load %arg8[%c0_42, %c0_43] : memref<1x512xf32, #tpu.memory_space<vmem>>, vector<1x512xf32>
      %28 = vector.broadcast %27 : vector<1x512xf32> to vector<128x512xf32>
      %29 = arith.addf %26, %28 : vector<128x512xf32>
      %30 = vector.extract_strided_slice %29 {offsets = [0, 0], sizes = [128, 256], strides = [1, 1]} : vector<128x512xf32> to vector<128x256xf32>
      %31 = arith.index_cast %21 : i32 to index
      %c0_44 = arith.constant 0 : index
      %c0_45 = arith.constant 0 : index
      %32 = vector.load %arg10[%31, %c0_44, %c0_45] : memref<14x128x256xf32, #tpu.memory_space<vmem>>, vector<1x128x256xf32>
      %33 = vector.shape_cast %32 : vector<1x128x256xf32> to vector<128x256xf32>
      %34 = vector.shape_cast %30 : vector<128x256xf32> to vector<1x128x256xf32>
      tpu.vector_store %arg10[%31, %c0_44, %c0_45], %34 {strides = array<i32>} : memref<14x128x256xf32, #tpu.memory_space<vmem>>, vector<1x128x256xf32>,
      %35 = vector.extract_strided_slice %29 {offsets = [0, 256], sizes = [128, 256], strides = [1, 1]} : vector<128x512xf32> to vector<128x256xf32>
      %36 = arith.index_cast %21 : i32 to index
      %c0_46 = arith.constant 0 : index
      %c0_47 = arith.constant 0 : index
      %37 = vector.load %arg11[%36, %c0_46, %c0_47] : memref<14x128x256xf32, #tpu.memory_space<vmem>>, vector<1x128x256xf32>
      %38 = vector.shape_cast %37 : vector<1x128x256xf32> to vector<128x256xf32>
      %39 = vector.shape_cast %35 : vector<128x256xf32> to vector<1x128x256xf32>
      tpu.vector_store %arg11[%36, %c0_46, %c0_47], %39 {strides = array<i32>} : memref<14x128x256xf32, #tpu.memory_space<vmem>>, vector<1x128x256xf32>,
    }
    %c14_i32_18 = arith.constant 14 : i32
    %cst_19 = arith.constant 0.000000e+00 : f32
    %11 = vector.broadcast %cst_19 : f32 to vector<128x64xf32>
    %c0_20 = arith.constant 0 : index
    %c0_21 = arith.constant 0 : index
    %12 = vector.load %arg12[%c0_20, %c0_21] : memref<128x64xf32, #tpu.memory_space<vmem>>, vector<128x64xf32>
    tpu.vector_store %arg12[%c0_20, %c0_21], %11 {strides = array<i32>} : memref<128x64xf32, #tpu.memory_space<vmem>>, vector<128x64xf32>,
    %cst_22 = arith.constant 0.000000e+00 : f32
    %13 = vector.broadcast %cst_22 : f32 to vector<128x64xf32>
    %c0_23 = arith.constant 0 : index
    %c0_24 = arith.constant 0 : index
    %14 = vector.load %arg13[%c0_23, %c0_24] : memref<128x64xf32, #tpu.memory_space<vmem>>, vector<128x64xf32>
    tpu.vector_store %arg13[%c0_23, %c0_24], %13 {strides = array<i32>} : memref<128x64xf32, #tpu.memory_space<vmem>>, vector<128x64xf32>,
    %cst_25 = arith.constant 0.000000e+00 : f32
    %15 = vector.broadcast %cst_25 : f32 to vector<128x64xf32>
    %c0_26 = arith.constant 0 : index
    %c0_27 = arith.constant 0 : index
    %16 = vector.load %arg14[%c0_26, %c0_27] : memref<128x64xf32, #tpu.memory_space<vmem>>, vector<128x64xf32>
    tpu.vector_store %arg14[%c0_26, %c0_27], %15 {strides = array<i32>} : memref<128x64xf32, #tpu.memory_space<vmem>>, vector<128x64xf32>,
    %cst_28 = arith.constant 0.000000e+00 : f32
    %17 = vector.broadcast %cst_28 : f32 to vector<128x64xf32>
    %c0_29 = arith.constant 0 : index
    %c0_30 = arith.constant 0 : index
    %18 = vector.load %arg15[%c0_29, %c0_30] : memref<128x64xf32, #tpu.memory_space<vmem>>, vector<128x64xf32>
    tpu.vector_store %arg15[%c0_29, %c0_30], %17 {strides = array<i32>} : memref<128x64xf32, #tpu.memory_space<vmem>>, vector<128x64xf32>,
    %c0_i32_31 = arith.constant 0 : i32
    %c14_i32_32 = arith.constant 14 : i32
    %19 = arith.addi %c0_i32_31, %c14_i32_32 : i32
    %c1_i32_33 = arith.constant 1 : i32
    scf.for %arg17 = %c0_i32_31 to %19 step %c1_i32_33  : i32 {
      %c1_i32_35 = arith.constant 1 : i32
      %20 = arith.muli %arg17, %c1_i32_35 : i32
      %c0_i32_36 = arith.constant 0 : i32
      %21 = arith.addi %c0_i32_36, %20 : i32
      %c13_i32 = arith.constant 13 : i32
      %22 = arith.subi %c13_i32, %21 : i32
      %c0_37 = arith.constant 0 : index
      %c0_38 = arith.constant 0 : index
      %23 = vector.load %arg1[%c0_37, %c0_38] : memref<128x1xi32, #tpu.memory_space<vmem>>, vector<128x1xi32>
      %c0_39 = arith.constant 0 : index
      %c0_40 = arith.constant 0 : index
      %24 = vector.load %arg12[%c0_39, %c0_40] : memref<128x64xf32, #tpu.memory_space<vmem>>, vector<128x64xf32>
      %c0_41 = arith.constant 0 : index
      %c0_42 = arith.constant 0 : index
      %25 = vector.load %arg13[%c0_41, %c0_42] : memref<128x64xf32, #tpu.memory_space<vmem>>, vector<128x64xf32>
      %c0_43 = arith.constant 0 : index
      %c0_44 = arith.constant 0 : index
      %26 = vector.load %arg14[%c0_43, %c0_44] : memref<128x64xf32, #tpu.memory_space<vmem>>, vector<128x64xf32>
      %c0_45 = arith.constant 0 : index
      %c0_46 = arith.constant 0 : index
      %27 = vector.load %arg15[%c0_45, %c0_46] : memref<128x64xf32, #tpu.memory_space<vmem>>, vector<128x64xf32>
      %28 = arith.index_cast %21 : i32 to index
      %c0_47 = arith.constant 0 : index
      %c0_48 = arith.constant 0 : index
      %29 = vector.load %arg10[%28, %c0_47, %c0_48] : memref<14x128x256xf32, #tpu.memory_space<vmem>>, vector<1x128x256xf32>
      %30 = vector.shape_cast %29 : vector<1x128x256xf32> to vector<128x256xf32>
      %c0_49 = arith.constant 0 : index
      %c0_50 = arith.constant 0 : index
      %c0_51 = arith.constant 0 : index
      %31 = vector.load %arg7[%c0_49, %c0_50, %c0_51] : memref<2x64x256xf32, #tpu.memory_space<vmem>>, vector<1x64x256xf32>
      %32 = vector.shape_cast %31 : vector<1x64x256xf32> to vector<64x256xf32>
      %cst_52 = arith.constant dense<0.000000e+00> : vector<128x256xf32>
      %33 = tpu.matmul %24, %32, %cst_52 {dimension_numbers = #tpu.dot_dimension_numbers<[1], [0], [0], [1], [0, 0, 1, 1], [], []>} : vector<128x64xf32>, vector<64x256xf32>, vector<128x256xf32> -> vector<128x256xf32>
      %34 = arith.addf %30, %33 : vector<128x256xf32>
      %35 = arith.index_cast %22 : i32 to index
      %c0_53 = arith.constant 0 : index
      %c0_54 = arith.constant 0 : index
      %36 = vector.load %arg11[%35, %c0_53, %c0_54] : memref<14x128x256xf32, #tpu.memory_space<vmem>>, vector<1x128x256xf32>
      %37 = vector.shape_cast %36 : vector<1x128x256xf32> to vector<128x256xf32>
      %c1 = arith.constant 1 : index
      %c0_55 = arith.constant 0 : index
      %c0_56 = arith.constant 0 : index
      %38 = vector.load %arg7[%c1, %c0_55, %c0_56] : memref<2x64x256xf32, #tpu.memory_space<vmem>>, vector<1x64x256xf32>
      %39 = vector.shape_cast %38 : vector<1x64x256xf32> to vector<64x256xf32>
      %cst_57 = arith.constant dense<0.000000e+00> : vector<128x256xf32>
      %40 = tpu.matmul %26, %39, %cst_57 {dimension_numbers = #tpu.dot_dimension_numbers<[1], [0], [0], [1], [0, 0, 1, 1], [], []>} : vector<128x64xf32>, vector<64x256xf32>, vector<128x256xf32> -> vector<128x256xf32>
      %41 = arith.addf %37, %40 : vector<128x256xf32>
      %42 = vector.extract_strided_slice %34 {offsets = [0, 0], sizes = [128, 192], strides = [1, 1]} : vector<128x256xf32> to vector<128x192xf32>
      %43 = arith.negf %42 : vector<128x192xf32>
      %44 = math.exp %43 : vector<128x192xf32>
      %cst_58 = arith.constant 1.000000e+00 : f32
      %45 = vector.broadcast %cst_58 : f32 to vector<128x192xf32>
      %46 = arith.addf %45, %44 : vector<128x192xf32>
      %47 = arith.divf %45, %46 : vector<128x192xf32>
      %48 = vector.extract_strided_slice %34 {offsets = [0, 192], sizes = [128, 64], strides = [1, 1]} : vector<128x256xf32> to vector<128x64xf32>
      %49 = math.tanh %48 : vector<128x64xf32>
      %50 = vector.extract_strided_slice %41 {offsets = [0, 0], sizes = [128, 192], strides = [1, 1]} : vector<128x256xf32> to vector<128x192xf32>
      %51 = arith.negf %50 : vector<128x192xf32>
      %52 = math.exp %51 : vector<128x192xf32>
      %cst_59 = arith.constant 1.000000e+00 : f32
      %53 = vector.broadcast %cst_59 : f32 to vector<128x192xf32>
      %54 = arith.addf %53, %52 : vector<128x192xf32>
      %55 = arith.divf %53, %54 : vector<128x192xf32>
      %56 = vector.extract_strided_slice %41 {offsets = [0, 192], sizes = [128, 64], strides = [1, 1]} : vector<128x256xf32> to vector<128x64xf32>
      %57 = math.tanh %56 : vector<128x64xf32>
      %58 = vector.extract_strided_slice %47 {offsets = [0, 64], sizes = [128, 64], strides = [1, 1]} : vector<128x192xf32> to vector<128x64xf32>
      %59 = arith.mulf %58, %25 : vector<128x64xf32>
      %60 = vector.extract_strided_slice %47 {offsets = [0, 0], sizes = [128, 64], strides = [1, 1]} : vector<128x192xf32> to vector<128x64xf32>
      %61 = arith.mulf %60, %49 : vector<128x64xf32>
      %62 = arith.addf %59, %61 : vector<128x64xf32>
      %63 = vector.extract_strided_slice %47 {offsets = [0, 128], sizes = [128, 64], strides = [1, 1]} : vector<128x192xf32> to vector<128x64xf32>
      %64 = math.tanh %62 : vector<128x64xf32>
      %65 = arith.mulf %63, %64 : vector<128x64xf32>
      %66 = vector.extract_strided_slice %55 {offsets = [0, 64], sizes = [128, 64], strides = [1, 1]} : vector<128x192xf32> to vector<128x64xf32>
      %67 = arith.mulf %66, %27 : vector<128x64xf32>
      %68 = vector.extract_strided_slice %55 {offsets = [0, 0], sizes = [128, 64], strides = [1, 1]} : vector<128x192xf32> to vector<128x64xf32>
      %69 = arith.mulf %68, %57 : vector<128x64xf32>
      %70 = arith.addf %67, %69 : vector<128x64xf32>
      %71 = vector.extract_strided_slice %55 {offsets = [0, 128], sizes = [128, 64], strides = [1, 1]} : vector<128x192xf32> to vector<128x64xf32>
      %72 = math.tanh %70 : vector<128x64xf32>
      %73 = arith.mulf %71, %72 : vector<128x64xf32>
      %74 = vector.broadcast %21 : i32 to vector<128x1xi32>
      %75 = arith.cmpi slt, %74, %23 : vector<128x1xi32>
      %76 = vector.broadcast %22 : i32 to vector<128x1xi32>
      %77 = arith.cmpi slt, %76, %23 : vector<128x1xi32>
      %78 = vector.shape_cast %75 : vector<128x1xi1> to vector<128x1xi1>
      %79 = vector.broadcast %78 : vector<128x1xi1> to vector<128x64xi1>
      %80 = arith.select %79, %65, %24 : vector<128x64xi1>, vector<128x64xf32>
      %c0_60 = arith.constant 0 : index
      %c0_61 = arith.constant 0 : index
      %81 = vector.load %arg12[%c0_60, %c0_61] : memref<128x64xf32, #tpu.memory_space<vmem>>, vector<128x64xf32>
      tpu.vector_store %arg12[%c0_60, %c0_61], %80 {strides = array<i32>} : memref<128x64xf32, #tpu.memory_space<vmem>>, vector<128x64xf32>,
      %82 = vector.shape_cast %75 : vector<128x1xi1> to vector<128x1xi1>
      %83 = vector.broadcast %82 : vector<128x1xi1> to vector<128x64xi1>
      %84 = arith.select %83, %62, %25 : vector<128x64xi1>, vector<128x64xf32>
      %c0_62 = arith.constant 0 : index
      %c0_63 = arith.constant 0 : index
      %85 = vector.load %arg13[%c0_62, %c0_63] : memref<128x64xf32, #tpu.memory_space<vmem>>, vector<128x64xf32>
      tpu.vector_store %arg13[%c0_62, %c0_63], %84 {strides = array<i32>} : memref<128x64xf32, #tpu.memory_space<vmem>>, vector<128x64xf32>,
      %86 = vector.shape_cast %77 : vector<128x1xi1> to vector<128x1xi1>
      %87 = vector.broadcast %86 : vector<128x1xi1> to vector<128x64xi1>
      %88 = arith.select %87, %73, %26 : vector<128x64xi1>, vector<128x64xf32>
      %c0_64 = arith.constant 0 : index
      %c0_65 = arith.constant 0 : index
      %89 = vector.load %arg14[%c0_64, %c0_65] : memref<128x64xf32, #tpu.memory_space<vmem>>, vector<128x64xf32>
      tpu.vector_store %arg14[%c0_64, %c0_65], %88 {strides = array<i32>} : memref<128x64xf32, #tpu.memory_space<vmem>>, vector<128x64xf32>,
      %90 = vector.shape_cast %77 : vector<128x1xi1> to vector<128x1xi1>
      %91 = vector.broadcast %90 : vector<128x1xi1> to vector<128x64xi1>
      %92 = arith.select %91, %70, %27 : vector<128x64xi1>, vector<128x64xf32>
      %c0_66 = arith.constant 0 : index
      %c0_67 = arith.constant 0 : index
      %93 = vector.load %arg15[%c0_66, %c0_67] : memref<128x64xf32, #tpu.memory_space<vmem>>, vector<128x64xf32>
      tpu.vector_store %arg15[%c0_66, %c0_67], %92 {strides = array<i32>} : memref<128x64xf32, #tpu.memory_space<vmem>>, vector<128x64xf32>,
      %cst_68 = arith.constant 0.000000e+00 : f32
      %94 = vector.shape_cast %75 : vector<128x1xi1> to vector<128x1xi1>
      %95 = vector.broadcast %94 : vector<128x1xi1> to vector<128x64xi1>
      %96 = vector.broadcast %cst_68 : f32 to vector<128x64xf32>
      %97 = arith.select %95, %65, %96 : vector<128x64xi1>, vector<128x64xf32>
      %98 = arith.index_cast %21 : i32 to index
      %c0_69 = arith.constant 0 : index
      %c0_70 = arith.constant 0 : index
      %99 = vector.load %arg9[%98, %c0_69, %c0_70] : memref<14x128x128xf32, #tpu.memory_space<vmem>>, vector<1x128x64xf32>
      %100 = vector.shape_cast %99 : vector<1x128x64xf32> to vector<128x64xf32>
      %101 = vector.shape_cast %97 : vector<128x64xf32> to vector<1x128x64xf32>
      tpu.vector_store %arg9[%98, %c0_69, %c0_70], %101 {strides = array<i32>} : memref<14x128x128xf32, #tpu.memory_space<vmem>>, vector<1x128x64xf32>,
      %cst_71 = arith.constant 0.000000e+00 : f32
      %102 = vector.shape_cast %77 : vector<128x1xi1> to vector<128x1xi1>
      %103 = vector.broadcast %102 : vector<128x1xi1> to vector<128x64xi1>
      %104 = vector.broadcast %cst_71 : f32 to vector<128x64xf32>
      %105 = arith.select %103, %73, %104 : vector<128x64xi1>, vector<128x64xf32>
      %106 = arith.index_cast %22 : i32 to index
      %c0_72 = arith.constant 0 : index
      %c64 = arith.constant 64 : index
      %107 = vector.load %arg9[%106, %c0_72, %c64] : memref<14x128x128xf32, #tpu.memory_space<vmem>>, vector<1x128x64xf32>
      %108 = vector.shape_cast %107 : vector<1x128x64xf32> to vector<128x64xf32>
      %109 = vector.shape_cast %105 : vector<128x64xf32> to vector<1x128x64xf32>
      tpu.vector_store %arg9[%106, %c0_72, %c64], %109 {strides = array<i32>} : memref<14x128x128xf32, #tpu.memory_space<vmem>>, vector<1x128x64xf32>,
    }
    %c14_i32_34 = arith.constant 14 : i32
    return
  }
  func.func @transform_0(%arg0: i32) -> (i32, i32) {
    %c0_i32 = arith.constant 0 : i32
    %c0_i32_0 = arith.constant 0 : i32
    return %arg0, %c0_i32 : i32, i32
  }
  func.func @transform_1(%arg0: i32) -> (i32, i32, i32) {
    %c0_i32 = arith.constant 0 : i32
    %c0_i32_0 = arith.constant 0 : i32
    %c0_i32_1 = arith.constant 0 : i32
    return %c0_i32, %arg0, %c0_i32_0 : i32, i32, i32
  }
  func.func @transform_2(%arg0: i32) -> (i32, i32) {
    %c0_i32 = arith.constant 0 : i32
    %c0_i32_0 = arith.constant 0 : i32
    %c0_i32_1 = arith.constant 0 : i32
    return %c0_i32, %c0_i32_0 : i32, i32
  }
  func.func @transform_3(%arg0: i32) -> (i32, i32, i32) {
    %c0_i32 = arith.constant 0 : i32
    %c0_i32_0 = arith.constant 0 : i32
    %c0_i32_1 = arith.constant 0 : i32
    %c0_i32_2 = arith.constant 0 : i32
    return %c0_i32, %c0_i32_0, %c0_i32_1 : i32, i32, i32
  }
  func.func @transform_4(%arg0: i32) -> (i32, i32) {
    %c0_i32 = arith.constant 0 : i32
    %c0_i32_0 = arith.constant 0 : i32
    %c0_i32_1 = arith.constant 0 : i32
    return %c0_i32, %c0_i32_0 : i32, i32
  }
  func.func @transform_5(%arg0: i32) -> (i32, i32) {
    %c0_i32 = arith.constant 0 : i32
    %c0_i32_0 = arith.constant 0 : i32
    %c0_i32_1 = arith.constant 0 : i32
    return %c0_i32, %c0_i32_0 : i32, i32
  }
  func.func @transform_6(%arg0: i32) -> (i32, i32, i32) {
    %c0_i32 = arith.constant 0 : i32
    %c0_i32_0 = arith.constant 0 : i32
    %c0_i32_1 = arith.constant 0 : i32
    %c0_i32_2 = arith.constant 0 : i32
    return %c0_i32, %c0_i32_0, %c0_i32_1 : i32, i32, i32
  }
  func.func @transform_7(%arg0: i32) -> (i32, i32) {
    %c0_i32 = arith.constant 0 : i32
    %c0_i32_0 = arith.constant 0 : i32
    %c0_i32_1 = arith.constant 0 : i32
    return %c0_i32, %c0_i32_0 : i32, i32
  }
  func.func @transform_8(%arg0: i32) -> (i32, i32, i32) {
    %c0_i32 = arith.constant 0 : i32
    %c0_i32_0 = arith.constant 0 : i32
    %c0_i32_1 = arith.constant 0 : i32
    return %c0_i32, %arg0, %c0_i32_0 : i32, i32, i32
  }
}

</mosaic_0001>

<llo_original>
// kernel: tpu_custom_call.1
$region0: #{tpu_custom_call.1}
  #allocation0 [shape = 'u32[]', space=smem, size = 0x4, offset = 0x4, fixed_abs, tag = 'smem constant byte address 0x4 - core index']
  #allocation1 [shape = 'u32[72,128]{1,0:T(1,128)}', space=vmem, size = 0x9000, scoped, tag = 'internal scratch']
  #allocation2 [shape = 'f32[14,128,256]{2,1,0:T(8,128)}', space=vmem, size = 0x1c0000, scoped, tag = 'scratch operand']
  #allocation3 [shape = 'f32[14,128,256]{2,1,0:T(8,128)}', space=vmem, size = 0x1c0000, scoped, tag = 'scratch operand']
  #allocation4 [shape = 'f32[128,64]{1,0:T(8,128)}', space=vmem, size = 0x10000, scoped, tag = 'scratch operand']
  #allocation5 [shape = 'f32[128,64]{1,0:T(8,128)}', space=vmem, size = 0x10000, scoped, tag = 'scratch operand']
  #allocation6 [shape = 'f32[128,64]{1,0:T(8,128)}', space=vmem, size = 0x10000, scoped, tag = 'scratch operand']
  #allocation7 [shape = 'f32[128,64]{1,0:T(8,128)}', space=vmem, size = 0x10000, scoped, tag = 'scratch operand']
  #allocation8 [shape = 'f32[14,128,128]{2,1,0:T(8,128)}', space=vmem, size = 0xe0000, scoped, tag = 'scratch operand']
  #allocation12 [shape = 's32[]', space=sflag, size = 0x4, offset = 0, fixed_abs, tag = 'sflag constant byte address 0x0 - dummy sync flag']
  %s0 = inlined_call_operand.vmem [shape: s32[640,1], index: 0, kind: input, shape index: {}]
  %s1 = inlined_call_operand.vmem [shape: f32[14,640,33], index: 1, kind: input, shape index: {}]
  %s2 = inlined_call_operand.vmem [shape: f32[33,512], index: 2, kind: input, shape index: {}]
  %s3 = inlined_call_operand.vmem [shape: f32[2,64,256], index: 3, kind: input, shape index: {}]
  %s4 = inlined_call_operand.vmem [shape: f32[1,512], index: 4, kind: input, shape index: {}]
  %s5 = inlined_call_operand.vmem [shape: f32[128,512], index: 5, kind: input, shape index: {}]
  %s6 = inlined_call_operand.vmem [shape: f32[2,64,256], index: 6, kind: input, shape index: {}]
  %s7 = inlined_call_operand.vmem [shape: f32[1,512], index: 7, kind: input, shape index: {}]
  %s8 = inlined_call_operand.hbm [shape: f32[14,640,128], index: 8, kind: output, shape index: {}]
  %s9 = sld [smem:[#allocation0]]
  $region131: #{tpu_custom_call.1} parent=0
    _
  %s11 = ssub.s32 1, %s9
  %s12 = scalar_select 0, %s11, %s9
  $region1: #{tpu_custom_call.1} parent=0
    #allocation9 [shape = 'u8[1835008]{0}', space=vmem, size = 0x1c0000, scoped, tag = 'input window, operand 1']
    #allocation10 [shape = 'u8[1835008]{0}', space=vmem, size = 0x1c0000, scoped, tag = 'output window, operand 0']
    #allocation11 [shape = 's32[2]{0}', space=sflag, size = 0x8, scoped, tag = 'scoped memory for tpu_custom_call.1']
    %13 = vsyncpa [#allocation11], 0
    %s14 = scalar_lea.sflag [#allocation11], 1
    %15 = vsyncpa %s14, 0
    loop: start=0, step=1, limit=7
    $region2: #{tpu_custom_call.1} parent=1 // loop_pre_header
      _
    $region3: #{tpu_custom_call.1} parent=1 // loop_header
      %s17 = sphi 0, %s21
      %p18 = scmp.ge.s32.totalorder %s17, 7
      %s27 = sphi 0, %s29
      %s30 = sphi 0, %s27
      %s31 = sphi 0, %s30
      %s47 = sphi 0, %s31
      %s53 = sphi 0, %s55
      %s56 = sphi 0, %s53
      %s57 = sphi 0, %s56
      %s73 = sphi 0, %s57
      %s77 = sphi 0, %s77
      %s79 = sphi 0, %s77
      %s80 = sphi 0, %s79
      %s94 = sphi 0, %s80
      %s98 = sphi 0, %s98
      %s100 = sphi 0, %s98
      %s101 = sphi 0, %s100
      %s115 = sphi 0, %s101
      %s119 = sphi 0, %s119
      %s121 = sphi 0, %s119
      %s122 = sphi 0, %s121
      %s136 = sphi 0, %s122
      %s140 = sphi 0, %s140
      %s142 = sphi 0, %s140
      %s143 = sphi 0, %s142
      %s157 = sphi 0, %s143
      %s161 = sphi 0, %s161
      %s163 = sphi 0, %s161
      %s164 = sphi 0, %s163
      %s178 = sphi 0, %s164
      %s182 = sphi 0, %s182
      %s184 = sphi 0, %s182
      %s185 = sphi 0, %s184
      %s199 = sphi 0, %s185
      %s205 = sphi 0, %s207
      %s208 = sphi 0, %s205
      %s209 = sphi 0, %s208
      %s225 = sphi 0, %s209
    $region4: #{tpu_custom_call.1} parent=1 // loop_header_branch
      %20 = sbr.rel (%p18) target = $region8
    $region5: #{tpu_custom_call.1} parent=1 // loop_body
      %s22 = ssub.s32 %s17, 1
      %s23 = ssub.s32 %s17, 2
      %s24 = sadd.s32 %s17, 1
      %s25 = ssub.s32 %s17, %s24
      %p26 = scmp.eq.s32.totalorder %s25, 0
      %s28 = sadd.s32 %s27, 1
      %s29 = scalar_select %p26, %s27, %s28
      %p32 = pneg %p26
      %p33 = scmp.eq.s32.totalorder %s17, 4
      %p34 = por %p32, %p33
      %p35 = scmp.ne.s32.totalorder %s27, %s30
      %p36 = scmp.eq.s32.totalorder %s17, 0
      %p37 = por %p35, %p36
      %p38 = scmp.ne.s32.totalorder %s27, %s30
      %p39 = scmp.eq.s32.totalorder %s22, 4
      %p40 = por %p38, %p39
      %p41 = scmp.ne.s32.totalorder %s30, %s31
      %p42 = scmp.eq.s32.totalorder %s22, 0
      %p43 = por %p41, %p42
      %p44 = scmp.ne.s32.totalorder %s30, %s31
      %p45 = scmp.eq.s32.totalorder %s23, 4
      %p46 = por %p44, %p45
      %p48 = scmp.ne.s32.totalorder %s31, %s47
      %p49 = scmp.eq.s32.totalorder %s23, 0
      %p50 = por %p48, %p49
      %s51 = ssub.s32 %s17, %s24
      %p52 = scmp.eq.s32.totalorder %s51, 0
      %s54 = sadd.s32 %s53, 1
      %s55 = scalar_select %p52, %s53, %s54
      %p58 = pneg %p52
      %p59 = scmp.eq.s32.totalorder %s17, 4
      %p60 = por %p58, %p59
      %p61 = scmp.ne.s32.totalorder %s53, %s56
      %p62 = scmp.eq.s32.totalorder %s17, 0
      %p63 = por %p61, %p62
      %p64 = scmp.ne.s32.totalorder %s53, %s56
      %p65 = scmp.eq.s32.totalorder %s22, 4
      %p66 = por %p64, %p65
      %p67 = scmp.ne.s32.totalorder %s56, %s57
      %p68 = scmp.eq.s32.totalorder %s22, 0
      %p69 = por %p67, %p68
      %p70 = scmp.ne.s32.totalorder %s56, %s57
      %p71 = scmp.eq.s32.totalorder %s23, 4
      %p72 = por %p70, %p71
      %p74 = scmp.ne.s32.totalorder %s57, %s73
      %p75 = scmp.eq.s32.totalorder %s23, 0
      %p76 = por %p74, %p75
      %s78 = sadd.s32 %s77, 1
      %p81 = scmp.eq.s32.totalorder %s17, 4
      %p82 = scmp.ne.s32.totalorder %s77, %s79
      %p83 = scmp.eq.s32.totalorder %s17, 0
      %p84 = por %p82, %p83
      %p85 = scmp.ne.s32.totalorder %s77, %s79
      %p86 = scmp.eq.s32.totalorder %s22, 4
      %p87 = por %p85, %p86
      %p88 = scmp.ne.s32.totalorder %s79, %s80
      %p89 = scmp.eq.s32.totalorder %s22, 0
      %p90 = por %p88, %p89
      %p91 = scmp.ne.s32.totalorder %s79, %s80
      %p92 = scmp.eq.s32.totalorder %s23, 4
      %p93 = por %p91, %p92
      %p95 = scmp.ne.s32.totalorder %s80, %s94
      %p96 = scmp.eq.s32.totalorder %s23, 0
      %p97 = por %p95, %p96
      %s99 = sadd.s32 %s98, 1
      %p102 = scmp.eq.s32.totalorder %s17, 4
      %p103 = scmp.ne.s32.totalorder %s98, %s100
      %p104 = scmp.eq.s32.totalorder %s17, 0
      %p105 = por %p103, %p104
      %p106 = scmp.ne.s32.totalorder %s98, %s100
      %p107 = scmp.eq.s32.totalorder %s22, 4
      %p108 = por %p106, %p107
      %p109 = scmp.ne.s32.totalorder %s100, %s101
      %p110 = scmp.eq.s32.totalorder %s22, 0
      %p111 = por %p109, %p110
      %p112 = scmp.ne.s32.totalorder %s100, %s101
      %p113 = scmp.eq.s32.totalorder %s23, 4
      %p114 = por %p112, %p113
      %p116 = scmp.ne.s32.totalorder %s101, %s115
      %p117 = scmp.eq.s32.totalorder %s23, 0
      %p118 = por %p116, %p117
      %s120 = sadd.s32 %s119, 1
      %p123 = scmp.eq.s32.totalorder %s17, 4
      %p124 = scmp.ne.s32.totalorder %s119, %s121
      %p125 = scmp.eq.s32.totalorder %s17, 0
      %p126 = por %p124, %p125
      %p127 = scmp.ne.s32.totalorder %s119, %s121
      %p128 = scmp.eq.s32.totalorder %s22, 4
      %p129 = por %p127, %p128
      %p130 = scmp.ne.s32.totalorder %s121, %s122
      %p131 = scmp.eq.s32.totalorder %s22, 0
      %p132 = por %p130, %p131
      %p133 = scmp.ne.s32.totalorder %s121, %s122
      %p134 = scmp.eq.s32.totalorder %s23, 4
      %p135 = por %p133, %p134
      %p137 = scmp.ne.s32.totalorder %s122, %s136
      %p138 = scmp.eq.s32.totalorder %s23, 0
      %p139 = por %p137, %p138
      %s141 = sadd.s32 %s140, 1
      %p144 = scmp.eq.s32.totalorder %s17, 4
      %p145 = scmp.ne.s32.totalorder %s140, %s142
      %p146 = scmp.eq.s32.totalorder %s17, 0
      %p147 = por %p145, %p146
      %p148 = scmp.ne.s32.totalorder %s140, %s142
      %p149 = scmp.eq.s32.totalorder %s22, 4
      %p150 = por %p148, %p149
      %p151 = scmp.ne.s32.totalorder %s142, %s143
      %p152 = scmp.eq.s32.totalorder %s22, 0
      %p153 = por %p151, %p152
      %p154 = scmp.ne.s32.totalorder %s142, %s143
      %p155 = scmp.eq.s32.totalorder %s23, 4
      %p156 = por %p154, %p155
      %p158 = scmp.ne.s32.totalorder %s143, %s157
      %p159 = scmp.eq.s32.totalorder %s23, 0
      %p160 = por %p158, %p159
      %s162 = sadd.s32 %s161, 1
      %p165 = scmp.eq.s32.totalorder %s17, 4
      %p166 = scmp.ne.s32.totalorder %s161, %s163
      %p167 = scmp.eq.s32.totalorder %s17, 0
      %p168 = por %p166, %p167
      %p169 = scmp.ne.s32.totalorder %s161, %s163
      %p170 = scmp.eq.s32.totalorder %s22, 4
      %p171 = por %p169, %p170
      %p172 = scmp.ne.s32.totalorder %s163, %s164
      %p173 = scmp.eq.s32.totalorder %s22, 0
      %p174 = por %p172, %p173
      %p175 = scmp.ne.s32.totalorder %s163, %s164
      %p176 = scmp.eq.s32.totalorder %s23, 4
      %p177 = por %p175, %p176
      %p179 = scmp.ne.s32.totalorder %s164, %s178
      %p180 = scmp.eq.s32.totalorder %s23, 0
      %p181 = por %p179, %p180
      %s183 = sadd.s32 %s182, 1
      %p186 = scmp.eq.s32.totalorder %s17, 4
      %p187 = scmp.ne.s32.totalorder %s182, %s184
      %p188 = scmp.eq.s32.totalorder %s17, 0
      %p189 = por %p187, %p188
      %p190 = scmp.ne.s32.totalorder %s182, %s184
      %p191 = scmp.eq.s32.totalorder %s22, 4
      %p192 = por %p190, %p191
      %p193 = scmp.ne.s32.totalorder %s184, %s185
      %p194 = scmp.eq.s32.totalorder %s22, 0
      %p195 = por %p193, %p194
      %p196 = scmp.ne.s32.totalorder %s184, %s185
      %p197 = scmp.eq.s32.totalorder %s23, 4
      %p198 = por %p196, %p197
      %p200 = scmp.ne.s32.totalorder %s185, %s199
      %p201 = scmp.eq.s32.totalorder %s23, 0
      %p202 = por %p200, %p201
      %s203 = ssub.s32 %s17, %s24
      %p204 = scmp.eq.s32.totalorder %s203, 0
      %s206 = sadd.s32 %s205, 1
      %s207 = scalar_select %p204, %s205, %s206
      %p210 = pneg %p204
      %p211 = scmp.eq.s32.totalorder %s17, 4
      %p212 = por %p210, %p211
      %p213 = scmp.ne.s32.totalorder %s205, %s208
      %p214 = scmp.eq.s32.totalorder %s17, 0
      %p215 = por %p213, %p214
      %p216 = scmp.ne.s32.totalorder %s205, %s208
      %p217 = scmp.eq.s32.totalorder %s22, 4
      %p218 = por %p216, %p217
      %p219 = scmp.ne.s32.totalorder %s208, %s209
      %p220 = scmp.eq.s32.totalorder %s22, 0
      %p221 = por %p219, %p220
      %p222 = scmp.ne.s32.totalorder %s208, %s209
      %p223 = scmp.eq.s32.totalorder %s23, 4
      %p224 = por %p222, %p223
      %p226 = scmp.ne.s32.totalorder %s209, %s225
      %p227 = scmp.eq.s32.totalorder %s23, 0
      %p228 = por %p226, %p227
      %p229 = scmp.le.s32.totalorder 1, %s17
      %p230 = scmp.lt.s32.totalorder %s17, 6
      %p231 = pnand %p229, %p230
      %p232 = pneg %p231
      // Predicated region
      $region9: #{tpu_custom_call.1} parent=5 // pred_check
        _
      $region10: #{tpu_custom_call.1} parent=5 // pred_check_branch
        %234 = sbr.rel (%p231) target = $region12
      $region11: #{tpu_custom_call.1} parent=5 // pred_region
        %s235 = ssub.s32 %s17, 1
        // Predicated region
        $region13: #{tpu_custom_call.1} parent=11 // pred_check
          %p236 = pneg %p90
        $region14: #{tpu_custom_call.1} parent=11 // pred_check_branch
          %238 = sbr.rel (%p236) target = $region16
        $region15: #{tpu_custom_call.1} parent=11 // pred_region
          _
        $region16: #{tpu_custom_call.1} parent=11 // pred_fallthru
          _
        // Predicated region
        $region17: #{tpu_custom_call.1} parent=11 // pred_check
          %p239 = pneg %p111
        $region18: #{tpu_custom_call.1} parent=11 // pred_check_branch
          %241 = sbr.rel (%p239) target = $region20
        $region19: #{tpu_custom_call.1} parent=11 // pred_region
          _
        $region20: #{tpu_custom_call.1} parent=11 // pred_fallthru
          _
        // Predicated region
        $region21: #{tpu_custom_call.1} parent=11 // pred_check
          %p242 = pneg %p132
        $region22: #{tpu_custom_call.1} parent=11 // pred_check_branch
          %244 = sbr.rel (%p242) target = $region24
        $region23: #{tpu_custom_call.1} parent=11 // pred_region
          _
        $region24: #{tpu_custom_call.1} parent=11 // pred_fallthru
          _
        // Predicated region
        $region25: #{tpu_custom_call.1} parent=11 // pred_check
          %p245 = pneg %p153
        $region26: #{tpu_custom_call.1} parent=11 // pred_check_branch
          %247 = sbr.rel (%p245) target = $region28
        $region27: #{tpu_custom_call.1} parent=11 // pred_region
          _
        $region28: #{tpu_custom_call.1} parent=11 // pred_fallthru
          _
        // Predicated region
        $region29: #{tpu_custom_call.1} parent=11 // pred_check
          %p248 = pneg %p174
        $region30: #{tpu_custom_call.1} parent=11 // pred_check_branch
          %250 = sbr.rel (%p248) target = $region32
        $region31: #{tpu_custom_call.1} parent=11 // pred_region
          _
        $region32: #{tpu_custom_call.1} parent=11 // pred_fallthru
          _
        // Predicated region
        $region33: #{tpu_custom_call.1} parent=11 // pred_check
          %p251 = pneg %p195
        $region34: #{tpu_custom_call.1} parent=11 // pred_check_branch
          %253 = sbr.rel (%p251) target = $region36
        $region35: #{tpu_custom_call.1} parent=11 // pred_region
          _
        $region36: #{tpu_custom_call.1} parent=11 // pred_fallthru
          _
      $region12: #{tpu_custom_call.1} parent=5 // pred_fallthru
        _
      %p254 = scmp.lt.s32.totalorder %s17, 5
      // Predicated region
      $region37: #{tpu_custom_call.1} parent=5 // pred_check
        %p255 = pneg %p254
      $region38: #{tpu_custom_call.1} parent=5 // pred_check_branch
        %257 = sbr.rel (%p255) target = $region40
      $region39: #{tpu_custom_call.1} parent=5 // pred_region
        // Predicated region
        $region41: #{tpu_custom_call.1} parent=39 // pred_check
          %p258 = pneg %p37
        $region42: #{tpu_custom_call.1} parent=39 // pred_check_branch
          %260 = sbr.rel (%p258) target = $region44
        $region43: #{tpu_custom_call.1} parent=39 // pred_region
          %s261 = smul.u32 16, %s17
          %p262 = scmp.lt.s32.totalorder %s261, 79
          %s263 = scalar_select %p262, %s261, 79
          %s264 = smul.addr %s263, 8
          %s265 = scalar_lea.vmem %s0, %s264
          %s266 = smul.u32 16, %s17
        $region44: #{tpu_custom_call.1} parent=39 // pred_fallthru
          _
        // Predicated region
        $region45: #{tpu_custom_call.1} parent=39 // pred_check
          %p267 = pneg %p63
        $region46: #{tpu_custom_call.1} parent=39 // pred_check_branch
          %269 = sbr.rel (%p267) target = $region48
        $region47: #{tpu_custom_call.1} parent=39 // pred_region
          %s270 = sand.u32 %s53, 1
          %s271 = sand.u32 %s53, 1
          %s272 = smul.addr %s271, 1792
          %s273 = scalar_lea.vmem [#allocation9], %s272
          %s274 = smul.u32 16, %s17
          %s275 = smul.addr %s274, 8
          %s276 = scalar_lea.vmem %s1, %s275
          // Predicated region
          $region49: #{tpu_custom_call.1} parent=47 // pred_check
            _
          $region50: #{tpu_custom_call.1} parent=47 // pred_check_branch
            %278 = sbr.rel (0) target = $region52
          $region51: #{tpu_custom_call.1} parent=47 // pred_region
            // Predicated region
            $region53: #{tpu_custom_call.1} parent=51 // pred_check
              _
            $region54: #{tpu_custom_call.1} parent=51 // pred_check_branch
              %280 = sbr.rel (0) target = $region56
            $region55: #{tpu_custom_call.1} parent=51 // pred_region
              // Predicated region
              $region68: #{tpu_custom_call.1} parent=55 // pred_check
                _
              $region69: #{tpu_custom_call.1} parent=55 // pred_check_branch
                %742 = sbr.rel (0) target = $region71
              $region70: #{tpu_custom_call.1} parent=55 // pred_region
                loop: start=0, step=1, limit=1
                $region72: #{tpu_custom_call.1} parent=70 // loop_pre_header
                  _
                $region73: #{tpu_custom_call.1} parent=70 // loop_header
                  %s744 = sphi 0, %s748
                  %p745 = scmp.ge.s32.totalorder %s744, 1
                  %s749 = sphi %s276, %s276
                  %s750 = sphi %s273, %s273
                $region74: #{tpu_custom_call.1} parent=70 // loop_header_branch
                  %747 = sbr.rel (%p745) target = $region78
                $region75: #{tpu_custom_call.1} parent=70 // loop_body
                  %v751 = vld [vmem:[%s749] sm:$0xff]
                  %752 = vst [vmem:[%s750] sm:$0xff] %v751
                  %v753 = vld [vmem:[%s749 + $0x8] sm:$0xff]
                  %754 = vst [vmem:[%s750 + $0x8] sm:$0xff] %v753
                  %v755 = vld [vmem:[%s749 + $0x10] sm:$0xff]
                  %756 = vst [vmem:[%s750 + $0x10] sm:$0xff] %v755
                  %v757 = vld [vmem:[%s749 + $0x18] sm:$0xff]
                  %758 = vst [vmem:[%s750 + $0x18] sm:$0xff] %v757
                  %v759 = vld [vmem:[%s749 + $0x20] sm:$0xff]
                  %760 = vst [vmem:[%s750 + $0x20] sm:$0xff] %v759
                  %v761 = vld [vmem:[%s749 + $0x28] sm:$0xff]
                  %762 = vst [vmem:[%s750 + $0x28] sm:$0xff] %v761
                  %v763 = vld [vmem:[%s749 + $0x30] sm:$0xff]
                  %764 = vst [vmem:[%s750 + $0x30] sm:$0xff] %v763
                  %v765 = vld [vmem:[%s749 + $0x38] sm:$0xff]
                  %766 = vst [vmem:[%s750 + $0x38] sm:$0xff] %v765
                  %v767 = vld [vmem:[%s749 + $0x40] sm:$0xff]
                  %768 = vst [vmem:[%s750 + $0x40] sm:$0xff] %v767
                  %v769 = vld [vmem:[%s749 + $0x48] sm:$0xff]
                  %770 = vst [vmem:[%s750 + $0x48] sm:$0xff] %v769
                  %v771 = vld [vmem:[%s749 + $0x50] sm:$0xff]
                  %772 = vst [vmem:[%s750 + $0x50] sm:$0xff] %v771
                  %v773 = vld [vmem:[%s749 + $0x58] sm:$0xff]
                  %774 = vst [vmem:[%s750 + $0x58] sm:$0xff] %v773
                  %v775 = vld [vmem:[%s749 + $0x60] sm:$0xff]
                  %776 = vst [vmem:[%s750 + $0x60] sm:$0xff] %v775
                  %v777 = vld [vmem:[%s749 + $0x68] sm:$0xff]
                  %778 = vst [vmem:[%s750 + $0x68] sm:$0xff] %v777
                  %v779 = vld [vmem:[%s749 + $0x70] sm:$0xff]
                  %780 = vst [vmem:[%s750 + $0x70] sm:$0xff] %v779
                  %v781 = vld [vmem:[%s749 + $0x78] sm:$0xff]
                  %782 = vst [vmem:[%s750 + $0x78] sm:$0xff] %v781
                  %v783 = vld [vmem:[%s749 + $0x280] sm:$0xff]
                  %784 = vst [vmem:[%s750 + $0x80] sm:$0xff] %v783
                  %v785 = vld [vmem:[%s749 + $0x288] sm:$0xff]
                  %786 = vst [vmem:[%s750 + $0x88] sm:$0xff] %v785
                  %v787 = vld [vmem:[%s749 + $0x290] sm:$0xff]
                  %788 = vst [vmem:[%s750 + $0x90] sm:$0xff] %v787
                  %v789 = vld [vmem:[%s749 + $0x298] sm:$0xff]
                  %790 = vst [vmem:[%s750 + $0x98] sm:$0xff] %v789
                  %v791 = vld [vmem:[%s749 + $0x2a0] sm:$0xff]
                  %792 = vst [vmem:[%s750 + $0xa0] sm:$0xff] %v791
                  %v793 = vld [vmem:[%s749 + $0x2a8] sm:$0xff]
                  %794 = vst [vmem:[%s750 + $0xa8] sm:$0xff] %v793
                  %v795 = vld [vmem:[%s749 + $0x2b0] sm:$0xff]
                  %796 = vst [vmem:[%s750 + $0xb0] sm:$0xff] %v795
                  %v797 = vld [vmem:[%s749 + $0x2b8] sm:$0xff]
                  %798 = vst [vmem:[%s750 + $0xb8] sm:$0xff] %v797
                  %v799 = vld [vmem:[%s749 + $0x2c0] sm:$0xff]
                  %800 = vst [vmem:[%s750 + $0xc0] sm:$0xff] %v799
                  %v801 = vld [vmem:[%s749 + $0x2c8] sm:$0xff]
                  %802 = vst [vmem:[%s750 + $0xc8] sm:$0xff] %v801
                  %v803 = vld [vmem:[%s749 + $0x2d0] sm:$0xff]
                  %804 = vst [vmem:[%s750 + $0xd0] sm:$0xff] %v803
                  %v805 = vld [vmem:[%s749 + $0x2d8] sm:$0xff]
                  %806 = vst [vmem:[%s750 + $0xd8] sm:$0xff] %v805
                  %v807 = vld [vmem:[%s749 + $0x2e0] sm:$0xff]
                  %808 = vst [vmem:[%s750 + $0xe0] sm:$0xff] %v807
                  %v809 = vld [vmem:[%s749 + $0x2e8] sm:$0xff]
                  %810 = vst [vmem:[%s750 + $0xe8] sm:$0xff] %v809
                  %v811 = vld [vmem:[%s749 + $0x2f0] sm:$0xff]
                  %812 = vst [vmem:[%s750 + $0xf0] sm:$0xff] %v811
                  %v813 = vld [vmem:[%s749 + $0x2f8] sm:$0xff]
                  %814 = vst [vmem:[%s750 + $0xf8] sm:$0xff] %v813
                  %v815 = vld [vmem:[%s749 + $0x500] sm:$0xff]
                  %816 = vst [vmem:[%s750 + $0x100] sm:$0xff] %v815
                  %v817 = vld [vmem:[%s749 + $0x508] sm:$0xff]
                  %818 = vst [vmem:[%s750 + $0x108] sm:$0xff] %v817
                  %v819 = vld [vmem:[%s749 + $0x510] sm:$0xff]
                  %820 = vst [vmem:[%s750 + $0x110] sm:$0xff] %v819
                  %v821 = vld [vmem:[%s749 + $0x518] sm:$0xff]
                  %822 = vst [vmem:[%s750 + $0x118] sm:$0xff] %v821
                  %v823 = vld [vmem:[%s749 + $0x520] sm:$0xff]
                  %824 = vst [vmem:[%s750 + $0x120] sm:$0xff] %v823
                  %v825 = vld [vmem:[%s749 + $0x528] sm:$0xff]
                  %826 = vst [vmem:[%s750 + $0x128] sm:$0xff] %v825
                  %v827 = vld [vmem:[%s749 + $0x530] sm:$0xff]
                  %828 = vst [vmem:[%s750 + $0x130] sm:$0xff] %v827
                  %v829 = vld [vmem:[%s749 + $0x538] sm:$0xff]
                  %830 = vst [vmem:[%s750 + $0x138] sm:$0xff] %v829
                  %v831 = vld [vmem:[%s749 + $0x540] sm:$0xff]
                  %832 = vst [vmem:[%s750 + $0x140] sm:$0xff] %v831
                  %v833 = vld [vmem:[%s749 + $0x548] sm:$0xff]
                  %834 = vst [vmem:[%s750 + $0x148] sm:$0xff] %v833
                  %v835 = vld [vmem:[%s749 + $0x550] sm:$0xff]
                  %836 = vst [vmem:[%s750 + $0x150] sm:$0xff] %v835
                  %v837 = vld [vmem:[%s749 + $0x558] sm:$0xff]
                  %838 = vst [vmem:[%s750 + $0x158] sm:$0xff] %v837
                  %v839 = vld [vmem:[%s749 + $0x560] sm:$0xff]
                  %840 = vst [vmem:[%s750 + $0x160] sm:$0xff] %v839
                  %v841 = vld [vmem:[%s749 + $0x568] sm:$0xff]
                  %842 = vst [vmem:[%s750 + $0x168] sm:$0xff] %v841
                  %v843 = vld [vmem:[%s749 + $0x570] sm:$0xff]
                  %844 = vst [vmem:[%s750 + $0x170] sm:$0xff] %v843
                  %v845 = vld [vmem:[%s749 + $0x578] sm:$0xff]
                  %846 = vst [vmem:[%s750 + $0x178] sm:$0xff] %v845
                  %v847 = vld [vmem:[%s749 + $0x780] sm:$0xff]
                  %848 = vst [vmem:[%s750 + $0x180] sm:$0xff] %v847
                  %v849 = vld [vmem:[%s749 + $0x788] sm:$0xff]
                  %850 = vst [vmem:[%s750 + $0x188] sm:$0xff] %v849
                  %v851 = vld [vmem:[%s749 + $0x790] sm:$0xff]
                  %852 = vst [vmem:[%s750 + $0x190] sm:$0xff] %v851
                  %v853 = vld [vmem:[%s749 + $0x798] sm:$0xff]
                  %854 = vst [vmem:[%s750 + $0x198] sm:$0xff] %v853
                  %v855 = vld [vmem:[%s749 + $0x7a0] sm:$0xff]
                  %856 = vst [vmem:[%s750 + $0x1a0] sm:$0xff] %v855
                  %v857 = vld [vmem:[%s749 + $0x7a8] sm:$0xff]
                  %858 = vst [vmem:[%s750 + $0x1a8] sm:$0xff] %v857
                  %v859 = vld [vmem:[%s749 + $0x7b0] sm:$0xff]
                  %860 = vst [vmem:[%s750 + $0x1b0] sm:$0xff] %v859
                  %v861 = vld [vmem:[%s749 + $0x7b8] sm:$0xff]
                  %862 = vst [vmem:[%s750 + $0x1b8] sm:$0xff] %v861
                  %v863 = vld [vmem:[%s749 + $0x7c0] sm:$0xff]
                  %864 = vst [vmem:[%s750 + $0x1c0] sm:$0xff] %v863
                  %v865 = vld [vmem:[%s749 + $0x7c8] sm:$0xff]
                  %866 = vst [vmem:[%s750 + $0x1c8] sm:$0xff] %v865
                  %v867 = vld [vmem:[%s749 + $0x7d0] sm:$0xff]
                  %868 = vst [vmem:[%s750 + $0x1d0] sm:$0xff] %v867
                  %v869 = vld [vmem:[%s749 + $0x7d8] sm:$0xff]
                  %870 = vst [vmem:[%s750 + $0x1d8] sm:$0xff] %v869
                  %v871 = vld [vmem:[%s749 + $0x7e0] sm:$0xff]
                  %872 = vst [vmem:[%s750 + $0x1e0] sm:$0xff] %v871
                  %v873 = vld [vmem:[%s749 + $0x7e8] sm:$0xff]
                  %874 = vst [vmem:[%s750 + $0x1e8] sm:$0xff] %v873
                  %v875 = vld [vmem:[%s749 + $0x7f0] sm:$0xff]
                  %876 = vst [vmem:[%s750 + $0x1f0] sm:$0xff] %v875
                  %v877 = vld [vmem:[%s749 + $0x7f8] sm:$0xff]
                  %878 = vst [vmem:[%s750 + $0x1f8] sm:$0xff] %v877
                  %v879 = vld [vmem:[%s749 + $0xa00] sm:$0xff]
                  %880 = vst [vmem:[%s750 + $0x200] sm:$0xff] %v879
                  %v881 = vld [vmem:[%s749 + $0xa08] sm:$0xff]
                  %882 = vst [vmem:[%s750 + $0x208] sm:$0xff] %v881
                  %v883 = vld [vmem:[%s749 + $0xa10] sm:$0xff]
                  %884 = vst [vmem:[%s750 + $0x210] sm:$0xff] %v883
                  %v885 = vld [vmem:[%s749 + $0xa18] sm:$0xff]
                  %886 = vst [vmem:[%s750 + $0x218] sm:$0xff] %v885
                  %v887 = vld [vmem:[%s749 + $0xa20] sm:$0xff]
                  %888 = vst [vmem:[%s750 + $0x220] sm:$0xff] %v887
                  %v889 = vld [vmem:[%s749 + $0xa28] sm:$0xff]
                  %890 = vst [vmem:[%s750 + $0x228] sm:$0xff] %v889
                  %v891 = vld [vmem:[%s749 + $0xa30] sm:$0xff]
                  %892 = vst [vmem:[%s750 + $0x230] sm:$0xff] %v891
                  %v893 = vld [vmem:[%s749 + $0xa38] sm:$0xff]
                  %894 = vst [vmem:[%s750 + $0x238] sm:$0xff] %v893
                  %v895 = vld [vmem:[%s749 + $0xa40] sm:$0xff]
                  %896 = vst [vmem:[%s750 + $0x240] sm:$0xff] %v895
                  %v897 = vld [vmem:[%s749 + $0xa48] sm:$0xff]
                  %898 = vst [vmem:[%s750 + $0x248] sm:$0xff] %v897
                  %v899 = vld [vmem:[%s749 + $0xa50] sm:$0xff]
                  %900 = vst [vmem:[%s750 + $0x250] sm:$0xff] %v899
                  %v901 = vld [vmem:[%s749 + $0xa58] sm:$0xff]
                  %902 = vst [vmem:[%s750 + $0x258] sm:$0xff] %v901
                  %v903 = vld [vmem:[%s749 + $0xa60] sm:$0xff]
                  %904 = vst [vmem:[%s750 + $0x260] sm:$0xff] %v903
                  %v905 = vld [vmem:[%s749 + $0xa68] sm:$0xff]
                  %906 = vst [vmem:[%s750 + $0x268] sm:$0xff] %v905
                  %v907 = vld [vmem:[%s749 + $0xa70] sm:$0xff]
                  %908 = vst [vmem:[%s750 + $0x270] sm:$0xff] %v907
                  %v909 = vld [vmem:[%s749 + $0xa78] sm:$0xff]
                  %910 = vst [vmem:[%s750 + $0x278] sm:$0xff] %v909
                  %v911 = vld [vmem:[%s749 + $0xc80] sm:$0xff]
                  %912 = vst [vmem:[%s750 + $0x280] sm:$0xff] %v911
                  %v913 = vld [vmem:[%s749 + $0xc88] sm:$0xff]
                  %914 = vst [vmem:[%s750 + $0x288] sm:$0xff] %v913
                  %v915 = vld [vmem:[%s749 + $0xc90] sm:$0xff]
                  %916 = vst [vmem:[%s750 + $0x290] sm:$0xff] %v915
                  %v917 = vld [vmem:[%s749 + $0xc98] sm:$0xff]
                  %918 = vst [vmem:[%s750 + $0x298] sm:$0xff] %v917
                  %v919 = vld [vmem:[%s749 + $0xca0] sm:$0xff]
                  %920 = vst [vmem:[%s750 + $0x2a0] sm:$0xff] %v919
                  %v921 = vld [vmem:[%s749 + $0xca8] sm:$0xff]
                  %922 = vst [vmem:[%s750 + $0x2a8] sm:$0xff] %v921
                  %v923 = vld [vmem:[%s749 + $0xcb0] sm:$0xff]
                  %924 = vst [vmem:[%s750 + $0x2b0] sm:$0xff] %v923
                  %v925 = vld [vmem:[%s749 + $0xcb8] sm:$0xff]
                  %926 = vst [vmem:[%s750 + $0x2b8] sm:$0xff] %v925
                  %v927 = vld [vmem:[%s749 + $0xcc0] sm:$0xff]
                  %928 = vst [vmem:[%s750 + $0x2c0] sm:$0xff] %v927
                  %v929 = vld [vmem:[%s749 + $0xcc8] sm:$0xff]
                  %930 = vst [vmem:[%s750 + $0x2c8] sm:$0xff] %v929
                  %v931 = vld [vmem:[%s749 + $0xcd0] sm:$0xff]
                  %932 = vst [vmem:[%s750 + $0x2d0] sm:$0xff] %v931
                  %v933 = vld [vmem:[%s749 + $0xcd8] sm:$0xff]
                  %934 = vst [vmem:[%s750 + $0x2d8] sm:$0xff] %v933
                  %v935 = vld [vmem:[%s749 + $0xce0] sm:$0xff]
                  %936 = vst [vmem:[%s750 + $0x2e0] sm:$0xff] %v935
                  %v937 = vld [vmem:[%s749 + $0xce8] sm:$0xff]
                  %938 = vst [vmem:[%s750 + $0x2e8] sm:$0xff] %v937
                  %v939 = vld [vmem:[%s749 + $0xcf0] sm:$0xff]
                  %940 = vst [vmem:[%s750 + $0x2f0] sm:$0xff] %v939
                  %v941 = vld [vmem:[%s749 + $0xcf8] sm:$0xff]
                  %942 = vst [vmem:[%s750 + $0x2f8] sm:$0xff] %v941
                  %v943 = vld [vmem:[%s749 + $0xf00] sm:$0xff]
                  %944 = vst [vmem:[%s750 + $0x300] sm:$0xff] %v943
                  %v945 = vld [vmem:[%s749 + $0xf08] sm:$0xff]
                  %946 = vst [vmem:[%s750 + $0x308] sm:$0xff] %v945
                  %v947 = vld [vmem:[%s749 + $0xf10] sm:$0xff]
                  %948 = vst [vmem:[%s750 + $0x310] sm:$0xff] %v947
                  %v949 = vld [vmem:[%s749 + $0xf18] sm:$0xff]
                  %950 = vst [vmem:[%s750 + $0x318] sm:$0xff] %v949
                  %v951 = vld [vmem:[%s749 + $0xf20] sm:$0xff]
                  %952 = vst [vmem:[%s750 + $0x320] sm:$0xff] %v951
                  %v953 = vld [vmem:[%s749 + $0xf28] sm:$0xff]
                  %954 = vst [vmem:[%s750 + $0x328] sm:$0xff] %v953
                  %v955 = vld [vmem:[%s749 + $0xf30] sm:$0xff]
                  %956 = vst [vmem:[%s750 + $0x330] sm:$0xff] %v955
                  %v957 = vld [vmem:[%s749 + $0xf38] sm:$0xff]
                  %958 = vst [vmem:[%s750 + $0x338] sm:$0xff] %v957
                  %v959 = vld [vmem:[%s749 + $0xf40] sm:$0xff]
                  %960 = vst [vmem:[%s750 + $0x340] sm:$0xff] %v959
                  %v961 = vld [vmem:[%s749 + $0xf48] sm:$0xff]
                  %962 = vst [vmem:[%s750 + $0x348] sm:$0xff] %v961
                  %v963 = vld [vmem:[%s749 + $0xf50] sm:$0xff]
                  %964 = vst [vmem:[%s750 + $0x350] sm:$0xff] %v963
                  %v965 = vld [vmem:[%s749 + $0xf58] sm:$0xff]
                  %966 = vst [vmem:[%s750 + $0x358] sm:$0xff] %v965
                  %v967 = vld [vmem:[%s749 + $0xf60] sm:$0xff]
                  %968 = vst [vmem:[%s750 + $0x360] sm:$0xff] %v967
                  %v969 = vld [vmem:[%s749 + $0xf68] sm:$0xff]
                  %970 = vst [vmem:[%s750 + $0x368] sm:$0xff] %v969
                  %v971 = vld [vmem:[%s749 + $0xf70] sm:$0xff]
                  %972 = vst [vmem:[%s750 + $0x370] sm:$0xff] %v971
                  %v973 = vld [vmem:[%s749 + $0xf78] sm:$0xff]
                  %974 = vst [vmem:[%s750 + $0x378] sm:$0xff] %v973
                  %v975 = vld [vmem:[%s749 + $0x1180] sm:$0xff]
                  %976 = vst [vmem:[%s750 + $0x380] sm:$0xff] %v975
                  %v977 = vld [vmem:[%s749 + $0x1188] sm:$0xff]
                  %978 = vst [vmem:[%s750 + $0x388] sm:$0xff] %v977
                  %v979 = vld [vmem:[%s749 + $0x1190] sm:$0xff]
                  %980 = vst [vmem:[%s750 + $0x390] sm:$0xff] %v979
                  %v981 = vld [vmem:[%s749 + $0x1198] sm:$0xff]
                  %982 = vst [vmem:[%s750 + $0x398] sm:$0xff] %v981
                  %v983 = vld [vmem:[%s749 + $0x11a0] sm:$0xff]
                  %984 = vst [vmem:[%s750 + $0x3a0] sm:$0xff] %v983
                  %v985 = vld [vmem:[%s749 + $0x11a8] sm:$0xff]
                  %986 = vst [vmem:[%s750 + $0x3a8] sm:$0xff] %v985
                  %v987 = vld [vmem:[%s749 + $0x11b0] sm:$0xff]
                  %988 = vst [vmem:[%s750 + $0x3b0] sm:$0xff] %v987
                  %v989 = vld [vmem:[%s749 + $0x11b8] sm:$0xff]
                  %990 = vst [vmem:[%s750 + $0x3b8] sm:$0xff] %v989
                  %v991 = vld [vmem:[%s749 + $0x11c0] sm:$0xff]
                  %992 = vst [vmem:[%s750 + $0x3c0] sm:$0xff] %v991
                  %v993 = vld [vmem:[%s749 + $0x11c8] sm:$0xff]
                  %994 = vst [vmem:[%s750 + $0x3c8] sm:$0xff] %v993
                  %v995 = vld [vmem:[%s749 + $0x11d0] sm:$0xff]
                  %996 = vst [vmem:[%s750 + $0x3d0] sm:$0xff] %v995
                  %v997 = vld [vmem:[%s749 + $0x11d8] sm:$0xff]
                  %998 = vst [vmem:[%s750 + $0x3d8] sm:$0xff] %v997
                  %v999 = vld [vmem:[%s749 + $0x11e0] sm:$0xff]
                  %1000 = vst [vmem:[%s750 + $0x3e0] sm:$0xff] %v999
                  %v1001 = vld [vmem:[%s749 + $0x11e8] sm:$0xff]
                  %1002 = vst [vmem:[%s750 + $0x3e8] sm:$0xff] %v1001
                  %v1003 = vld [vmem:[%s749 + $0x11f0] sm:$0xff]
                  %1004 = vst [vmem:[%s750 + $0x3f0] sm:$0xff] %v1003
                  %v1005 = vld [vmem:[%s749 + $0x11f8] sm:$0xff]
                  %1006 = vst [vmem:[%s750 + $0x3f8] sm:$0xff] %v1005
                  %v1007 = vld [vmem:[%s749 + $0x1400] sm:$0xff]
                  %1008 = vst [vmem:[%s750 + $0x400] sm:$0xff] %v1007
                  %v1009 = vld [vmem:[%s749 + $0x1408] sm:$0xff]
                  %1010 = vst [vmem:[%s750 + $0x408] sm:$0xff] %v1009
                  %v1011 = vld [vmem:[%s749 + $0x1410] sm:$0xff]
                  %1012 = vst [vmem:[%s750 + $0x410] sm:$0xff] %v1011
                  %v1013 = vld [vmem:[%s749 + $0x1418] sm:$0xff]
                  %1014 = vst [vmem:[%s750 + $0x418] sm:$0xff] %v1013
                  %v1015 = vld [vmem:[%s749 + $0x1420] sm:$0xff]
                  %1016 = vst [vmem:[%s750 + $0x420] sm:$0xff] %v1015
                  %v1017 = vld [vmem:[%s749 + $0x1428] sm:$0xff]
                  %1018 = vst [vmem:[%s750 + $0x428] sm:$0xff] %v1017
                  %v1019 = vld [vmem:[%s749 + $0x1430] sm:$0xff]
                  %1020 = vst [vmem:[%s750 + $0x430] sm:$0xff] %v1019
                  %v1021 = vld [vmem:[%s749 + $0x1438] sm:$0xff]
                  %1022 = vst [vmem:[%s750 + $0x438] sm:$0xff] %v1021
                  %v1023 = vld [vmem:[%s749 + $0x1440] sm:$0xff]
                  %1024 = vst [vmem:[%s750 + $0x440] sm:$0xff] %v1023
                  %v1025 = vld [vmem:[%s749 + $0x1448] sm:$0xff]
                  %1026 = vst [vmem:[%s750 + $0x448] sm:$0xff] %v1025
                  %v1027 = vld [vmem:[%s749 + $0x1450] sm:$0xff]
                  %1028 = vst [vmem:[%s750 + $0x450] sm:$0xff] %v1027
                  %v1029 = vld [vmem:[%s749 + $0x1458] sm:$0xff]
                  %1030 = vst [vmem:[%s750 + $0x458] sm:$0xff] %v1029
                  %v1031 = vld [vmem:[%s749 + $0x1460] sm:$0xff]
                  %1032 = vst [vmem:[%s750 + $0x460] sm:$0xff] %v1031
                  %v1033 = vld [vmem:[%s749 + $0x1468] sm:$0xff]
                  %1034 = vst [vmem:[%s750 + $0x468] sm:$0xff] %v1033
                  %v1035 = vld [vmem:[%s749 + $0x1470] sm:$0xff]
                  %1036 = vst [vmem:[%s750 + $0x470] sm:$0xff] %v1035
                  %v1037 = vld [vmem:[%s749 + $0x1478] sm:$0xff]
                  %1038 = vst [vmem:[%s750 + $0x478] sm:$0xff] %v1037
                  %v1039 = vld [vmem:[%s749 + $0x1680] sm:$0xff]
                  %1040 = vst [vmem:[%s750 + $0x480] sm:$0xff] %v1039
                  %v1041 = vld [vmem:[%s749 + $0x1688] sm:$0xff]
                  %1042 = vst [vmem:[%s750 + $0x488] sm:$0xff] %v1041
                  %v1043 = vld [vmem:[%s749 + $0x1690] sm:$0xff]
                  %1044 = vst [vmem:[%s750 + $0x490] sm:$0xff] %v1043
                  %v1045 = vld [vmem:[%s749 + $0x1698] sm:$0xff]
                  %1046 = vst [vmem:[%s750 + $0x498] sm:$0xff] %v1045
                  %v1047 = vld [vmem:[%s749 + $0x16a0] sm:$0xff]
                  %1048 = vst [vmem:[%s750 + $0x4a0] sm:$0xff] %v1047
                  %v1049 = vld [vmem:[%s749 + $0x16a8] sm:$0xff]
                  %1050 = vst [vmem:[%s750 + $0x4a8] sm:$0xff] %v1049
                  %v1051 = vld [vmem:[%s749 + $0x16b0] sm:$0xff]
                  %1052 = vst [vmem:[%s750 + $0x4b0] sm:$0xff] %v1051
                  %v1053 = vld [vmem:[%s749 + $0x16b8] sm:$0xff]
                  %1054 = vst [vmem:[%s750 + $0x4b8] sm:$0xff] %v1053
                  %v1055 = vld [vmem:[%s749 + $0x16c0] sm:$0xff]
                  %1056 = vst [vmem:[%s750 + $0x4c0] sm:$0xff] %v1055
                  %v1057 = vld [vmem:[%s749 + $0x16c8] sm:$0xff]
                  %1058 = vst [vmem:[%s750 + $0x4c8] sm:$0xff] %v1057
                  %v1059 = vld [vmem:[%s749 + $0x16d0] sm:$0xff]
                  %1060 = vst [vmem:[%s750 + $0x4d0] sm:$0xff] %v1059
                  %v1061 = vld [vmem:[%s749 + $0x16d8] sm:$0xff]
                  %1062 = vst [vmem:[%s750 + $0x4d8] sm:$0xff] %v1061
                  %v1063 = vld [vmem:[%s749 + $0x16e0] sm:$0xff]
                  %1064 = vst [vmem:[%s750 + $0x4e0] sm:$0xff] %v1063
                  %v1065 = vld [vmem:[%s749 + $0x16e8] sm:$0xff]
                  %1066 = vst [vmem:[%s750 + $0x4e8] sm:$0xff] %v1065
                  %v1067 = vld [vmem:[%s749 + $0x16f0] sm:$0xff]
                  %1068 = vst [vmem:[%s750 + $0x4f0] sm:$0xff] %v1067
                  %v1069 = vld [vmem:[%s749 + $0x16f8] sm:$0xff]
                  %1070 = vst [vmem:[%s750 + $0x4f8] sm:$0xff] %v1069
                  %v1071 = vld [vmem:[%s749 + $0x1900] sm:$0xff]
                  %1072 = vst [vmem:[%s750 + $0x500] sm:$0xff] %v1071
                  %v1073 = vld [vmem:[%s749 + $0x1908] sm:$0xff]
                  %1074 = vst [vmem:[%s750 + $0x508] sm:$0xff] %v1073
                  %v1075 = vld [vmem:[%s749 + $0x1910] sm:$0xff]
                  %1076 = vst [vmem:[%s750 + $0x510] sm:$0xff] %v1075
                  %v1077 = vld [vmem:[%s749 + $0x1918] sm:$0xff]
                  %1078 = vst [vmem:[%s750 + $0x518] sm:$0xff] %v1077
                  %v1079 = vld [vmem:[%s749 + $0x1920] sm:$0xff]
                  %1080 = vst [vmem:[%s750 + $0x520] sm:$0xff] %v1079
                  %v1081 = vld [vmem:[%s749 + $0x1928] sm:$0xff]
                  %1082 = vst [vmem:[%s750 + $0x528] sm:$0xff] %v1081
                  %v1083 = vld [vmem:[%s749 + $0x1930] sm:$0xff]
                  %1084 = vst [vmem:[%s750 + $0x530] sm:$0xff] %v1083
                  %v1085 = vld [vmem:[%s749 + $0x1938] sm:$0xff]
                  %1086 = vst [vmem:[%s750 + $0x538] sm:$0xff] %v1085
                  %v1087 = vld [vmem:[%s749 + $0x1940] sm:$0xff]
                  %1088 = vst [vmem:[%s750 + $0x540] sm:$0xff] %v1087
                  %v1089 = vld [vmem:[%s749 + $0x1948] sm:$0xff]
                  %1090 = vst [vmem:[%s750 + $0x548] sm:$0xff] %v1089
                  %v1091 = vld [vmem:[%s749 + $0x1950] sm:$0xff]
                  %1092 = vst [vmem:[%s750 + $0x550] sm:$0xff] %v1091
                  %v1093 = vld [vmem:[%s749 + $0x1958] sm:$0xff]
                  %1094 = vst [vmem:[%s750 + $0x558] sm:$0xff] %v1093
                  %v1095 = vld [vmem:[%s749 + $0x1960] sm:$0xff]
                  %1096 = vst [vmem:[%s750 + $0x560] sm:$0xff] %v1095
                  %v1097 = vld [vmem:[%s749 + $0x1968] sm:$0xff]
                  %1098 = vst [vmem:[%s750 + $0x568] sm:$0xff] %v1097
                  %v1099 = vld [vmem:[%s749 + $0x1970] sm:$0xff]
                  %1100 = vst [vmem:[%s750 + $0x570] sm:$0xff] %v1099
                  %v1101 = vld [vmem:[%s749 + $0x1978] sm:$0xff]
                  %1102 = vst [vmem:[%s750 + $0x578] sm:$0xff] %v1101
                  %v1103 = vld [vmem:[%s749 + $0x1b80] sm:$0xff]
                  %1104 = vst [vmem:[%s750 + $0x580] sm:$0xff] %v1103
                  %v1105 = vld [vmem:[%s749 + $0x1b88] sm:$0xff]
                  %1106 = vst [vmem:[%s750 + $0x588] sm:$0xff] %v1105
                  %v1107 = vld [vmem:[%s749 + $0x1b90] sm:$0xff]
                  %1108 = vst [vmem:[%s750 + $0x590] sm:$0xff] %v1107
                  %v1109 = vld [vmem:[%s749 + $0x1b98] sm:$0xff]
                  %1110 = vst [vmem:[%s750 + $0x598] sm:$0xff] %v1109
                  %v1111 = vld [vmem:[%s749 + $0x1ba0] sm:$0xff]
                  %1112 = vst [vmem:[%s750 + $0x5a0] sm:$0xff] %v1111
                  %v1113 = vld [vmem:[%s749 + $0x1ba8] sm:$0xff]
                  %1114 = vst [vmem:[%s750 + $0x5a8] sm:$0xff] %v1113
                  %v1115 = vld [vmem:[%s749 + $0x1bb0] sm:$0xff]
                  %1116 = vst [vmem:[%s750 + $0x5b0] sm:$0xff] %v1115
                  %v1117 = vld [vmem:[%s749 + $0x1bb8] sm:$0xff]
                  %1118 = vst [vmem:[%s750 + $0x5b8] sm:$0xff] %v1117
                  %v1119 = vld [vmem:[%s749 + $0x1bc0] sm:$0xff]
                  %1120 = vst [vmem:[%s750 + $0x5c0] sm:$0xff] %v1119
                  %v1121 = vld [vmem:[%s749 + $0x1bc8] sm:$0xff]
                  %1122 = vst [vmem:[%s750 + $0x5c8] sm:$0xff] %v1121
                  %v1123 = vld [vmem:[%s749 + $0x1bd0] sm:$0xff]
                  %1124 = vst [vmem:[%s750 + $0x5d0] sm:$0xff] %v1123
                  %v1125 = vld [vmem:[%s749 + $0x1bd8] sm:$0xff]
                  %1126 = vst [vmem:[%s750 + $0x5d8] sm:$0xff] %v1125
                  %v1127 = vld [vmem:[%s749 + $0x1be0] sm:$0xff]
                  %1128 = vst [vmem:[%s750 + $0x5e0] sm:$0xff] %v1127
                  %v1129 = vld [vmem:[%s749 + $0x1be8] sm:$0xff]
                  %1130 = vst [vmem:[%s750 + $0x5e8] sm:$0xff] %v1129
                  %v1131 = vld [vmem:[%s749 + $0x1bf0] sm:$0xff]
                  %1132 = vst [vmem:[%s750 + $0x5f0] sm:$0xff] %v1131
                  %v1133 = vld [vmem:[%s749 + $0x1bf8] sm:$0xff]
                  %1134 = vst [vmem:[%s750 + $0x5f8] sm:$0xff] %v1133
                  %v1135 = vld [vmem:[%s749 + $0x1e00] sm:$0xff]
                  %1136 = vst [vmem:[%s750 + $0x600] sm:$0xff] %v1135
                  %v1137 = vld [vmem:[%s749 + $0x1e08] sm:$0xff]
                  %1138 = vst [vmem:[%s750 + $0x608] sm:$0xff] %v1137
                  %v1139 = vld [vmem:[%s749 + $0x1e10] sm:$0xff]
                  %1140 = vst [vmem:[%s750 + $0x610] sm:$0xff] %v1139
                  %v1141 = vld [vmem:[%s749 + $0x1e18] sm:$0xff]
                  %1142 = vst [vmem:[%s750 + $0x618] sm:$0xff] %v1141
                  %v1143 = vld [vmem:[%s749 + $0x1e20] sm:$0xff]
                  %1144 = vst [vmem:[%s750 + $0x620] sm:$0xff] %v1143
                  %v1145 = vld [vmem:[%s749 + $0x1e28] sm:$0xff]
                  %1146 = vst [vmem:[%s750 + $0x628] sm:$0xff] %v1145
                  %v1147 = vld [vmem:[%s749 + $0x1e30] sm:$0xff]
                  %1148 = vst [vmem:[%s750 + $0x630] sm:$0xff] %v1147
                  %v1149 = vld [vmem:[%s749 + $0x1e38] sm:$0xff]
                  %1150 = vst [vmem:[%s750 + $0x638] sm:$0xff] %v1149
                  %v1151 = vld [vmem:[%s749 + $0x1e40] sm:$0xff]
                  %1152 = vst [vmem:[%s750 + $0x640] sm:$0xff] %v1151
                  %v1153 = vld [vmem:[%s749 + $0x1e48] sm:$0xff]
                  %1154 = vst [vmem:[%s750 + $0x648] sm:$0xff] %v1153
                  %v1155 = vld [vmem:[%s749 + $0x1e50] sm:$0xff]
                  %1156 = vst [vmem:[%s750 + $0x650] sm:$0xff] %v1155
                  %v1157 = vld [vmem:[%s749 + $0x1e58] sm:$0xff]
                  %1158 = vst [vmem:[%s750 + $0x658] sm:$0xff] %v1157
                  %v1159 = vld [vmem:[%s749 + $0x1e60] sm:$0xff]
                  %1160 = vst [vmem:[%s750 + $0x660] sm:$0xff] %v1159
                  %v1161 = vld [vmem:[%s749 + $0x1e68] sm:$0xff]
                  %1162 = vst [vmem:[%s750 + $0x668] sm:$0xff] %v1161
                  %v1163 = vld [vmem:[%s749 + $0x1e70] sm:$0xff]
                  %1164 = vst [vmem:[%s750 + $0x670] sm:$0xff] %v1163
                  %v1165 = vld [vmem:[%s749 + $0x1e78] sm:$0xff]
                  %1166 = vst [vmem:[%s750 + $0x678] sm:$0xff] %v1165
                  %v1167 = vld [vmem:[%s749 + $0x2080] sm:$0xff]
                  %1168 = vst [vmem:[%s750 + $0x680] sm:$0xff] %v1167
                  %v1169 = vld [vmem:[%s749 + $0x2088] sm:$0xff]
                  %1170 = vst [vmem:[%s750 + $0x688] sm:$0xff] %v1169
                  %v1171 = vld [vmem:[%s749 + $0x2090] sm:$0xff]
                  %1172 = vst [vmem:[%s750 + $0x690] sm:$0xff] %v1171
                  %v1173 = vld [vmem:[%s749 + $0x2098] sm:$0xff]
                  %1174 = vst [vmem:[%s750 + $0x698] sm:$0xff] %v1173
                  %v1175 = vld [vmem:[%s749 + $0x20a0] sm:$0xff]
                  %1176 = vst [vmem:[%s750 + $0x6a0] sm:$0xff] %v1175
                  %v1177 = vld [vmem:[%s749 + $0x20a8] sm:$0xff]
                  %1178 = vst [vmem:[%s750 + $0x6a8] sm:$0xff] %v1177
                  %v1179 = vld [vmem:[%s749 + $0x20b0] sm:$0xff]
                  %1180 = vst [vmem:[%s750 + $0x6b0] sm:$0xff] %v1179
                  %v1181 = vld [vmem:[%s749 + $0x20b8] sm:$0xff]
                  %1182 = vst [vmem:[%s750 + $0x6b8] sm:$0xff] %v1181
                  %v1183 = vld [vmem:[%s749 + $0x20c0] sm:$0xff]
                  %1184 = vst [vmem:[%s750 + $0x6c0] sm:$0xff] %v1183
                  %v1185 = vld [vmem:[%s749 + $0x20c8] sm:$0xff]
                  %1186 = vst [vmem:[%s750 + $0x6c8] sm:$0xff] %v1185
                  %v1187 = vld [vmem:[%s749 + $0x20d0] sm:$0xff]
                  %1188 = vst [vmem:[%s750 + $0x6d0] sm:$0xff] %v1187
                  %v1189 = vld [vmem:[%s749 + $0x20d8] sm:$0xff]
                  %1190 = vst [vmem:[%s750 + $0x6d8] sm:$0xff] %v1189
                  %v1191 = vld [vmem:[%s749 + $0x20e0] sm:$0xff]
                  %1192 = vst [vmem:[%s750 + $0x6e0] sm:$0xff] %v1191
                  %v1193 = vld [vmem:[%s749 + $0x20e8] sm:$0xff]
                  %1194 = vst [vmem:[%s750 + $0x6e8] sm:$0xff] %v1193
                  %v1195 = vld [vmem:[%s749 + $0x20f0] sm:$0xff]
                  %1196 = vst [vmem:[%s750 + $0x6f0] sm:$0xff] %v1195
                  %v1197 = vld [vmem:[%s749 + $0x20f8] sm:$0xff]
                  %1198 = vst [vmem:[%s750 + $0x6f8] sm:$0xff] %v1197
                $region76: #{tpu_custom_call.1} parent=70 // loop_footer
                  %s748 = sadd.s32 1, %s744
                $region77: #{tpu_custom_call.1} parent=70 // loop_footer_branch
                  %743 = sbr.rel target = $region73
                $region78: #{tpu_custom_call.1} parent=70 // loop_exit
                  _
              $region71: #{tpu_custom_call.1} parent=55 // pred_fallthru
                _
              // Predicated region
              $region79: #{tpu_custom_call.1} parent=55 // pred_check
                _
              $region80: #{tpu_custom_call.1} parent=55 // pred_check_branch
                %1200 = sbr.rel target = $region82
              $region81: #{tpu_custom_call.1} parent=55 // pred_region
                _
              $region82: #{tpu_custom_call.1} parent=55 // pred_fallthru
                _
            $region56: #{tpu_custom_call.1} parent=51 // pred_fallthru
              _
            // Predicated region
            $region57: #{tpu_custom_call.1} parent=51 // pred_check
              _
            $region58: #{tpu_custom_call.1} parent=51 // pred_check_branch
              %282 = sbr.rel target = $region60
            $region59: #{tpu_custom_call.1} parent=51 // pred_region
              %s284 = ssub.s32 256, 1
              loop: start=0, step=1, limit=1
              $region61: #{tpu_custom_call.1} parent=59 // loop_pre_header
                _
              $region62: #{tpu_custom_call.1} parent=59 // loop_header
                %s286 = sphi 0, %s290
                %p287 = scmp.ge.s32.totalorder %s286, 1
                %s291 = sphi %s276, %s276
                %s292 = sphi %s273, %s273
              $region63: #{tpu_custom_call.1} parent=59 // loop_header_branch
                %289 = sbr.rel (%p287) target = $region67
              $region64: #{tpu_custom_call.1} parent=59 // loop_body
                %v293 = vld [vmem:[%s291] sm:%s284]
                %294 = vst [vmem:[%s292] sm:%s284] %v293
                %v295 = vld [vmem:[%s291 + $0x8] sm:%s284]
                %296 = vst [vmem:[%s292 + $0x8] sm:%s284] %v295
                %v297 = vld [vmem:[%s291 + $0x10] sm:%s284]
                %298 = vst [vmem:[%s292 + $0x10] sm:%s284] %v297
                %v299 = vld [vmem:[%s291 + $0x18] sm:%s284]
                %300 = vst [vmem:[%s292 + $0x18] sm:%s284] %v299
                %v301 = vld [vmem:[%s291 + $0x20] sm:%s284]
                %302 = vst [vmem:[%s292 + $0x20] sm:%s284] %v301
                %v303 = vld [vmem:[%s291 + $0x28] sm:%s284]
                %304 = vst [vmem:[%s292 + $0x28] sm:%s284] %v303
                %v305 = vld [vmem:[%s291 + $0x30] sm:%s284]
                %306 = vst [vmem:[%s292 + $0x30] sm:%s284] %v305
                %v307 = vld [vmem:[%s291 + $0x38] sm:%s284]
                %308 = vst [vmem:[%s292 + $0x38] sm:%s284] %v307
                %v309 = vld [vmem:[%s291 + $0x40] sm:%s284]
                %310 = vst [vmem:[%s292 + $0x40] sm:%s284] %v309
                %v311 = vld [vmem:[%s291 + $0x48] sm:%s284]
                %312 = vst [vmem:[%s292 + $0x48] sm:%s284] %v311
                %v313 = vld [vmem:[%s291 + $0x50] sm:%s284]
                %314 = vst [vmem:[%s292 + $0x50] sm:%s284] %v313
                %v315 = vld [vmem:[%s291 + $0x58] sm:%s284]
                %316 = vst [vmem:[%s292 + $0x58] sm:%s284] %v315
                %v317 = vld [vmem:[%s291 + $0x60] sm:%s284]
                %318 = vst [vmem:[%s292 + $0x60] sm:%s284] %v317
                %v319 = vld [vmem:[%s291 + $0x68] sm:%s284]
                %320 = vst [vmem:[%s292 + $0x68] sm:%s284] %v319
                %v321 = vld [vmem:[%s291 + $0x70] sm:%s284]
                %322 = vst [vmem:[%s292 + $0x70] sm:%s284] %v321
                %v323 = vld [vmem:[%s291 + $0x78] sm:%s284]
                %324 = vst [vmem:[%s292 + $0x78] sm:%s284] %v323
                %v325 = vld [vmem:[%s291 + $0x280] sm:%s284]
                %326 = vst [vmem:[%s292 + $0x80] sm:%s284] %v325
                %v327 = vld [vmem:[%s291 + $0x288] sm:%s284]
                %328 = vst [vmem:[%s292 + $0x88] sm:%s284] %v327
                %v329 = vld [vmem:[%s291 + $0x290] sm:%s284]
                %330 = vst [vmem:[%s292 + $0x90] sm:%s284] %v329
                %v331 = vld [vmem:[%s291 + $0x298] sm:%s284]
                %332 = vst [vmem:[%s292 + $0x98] sm:%s284] %v331
                %v333 = vld [vmem:[%s291 + $0x2a0] sm:%s284]
                %334 = vst [vmem:[%s292 + $0xa0] sm:%s284] %v333
                %v335 = vld [vmem:[%s291 + $0x2a8] sm:%s284]
                %336 = vst [vmem:[%s292 + $0xa8] sm:%s284] %v335
                %v337 = vld [vmem:[%s291 + $0x2b0] sm:%s284]
                %338 = vst [vmem:[%s292 + $0xb0] sm:%s284] %v337
                %v339 = vld [vmem:[%s291 + $0x2b8] sm:%s284]
                %340 = vst [vmem:[%s292 + $0xb8] sm:%s284] %v339
                %v341 = vld [vmem:[%s291 + $0x2c0] sm:%s284]
                %342 = vst [vmem:[%s292 + $0xc0] sm:%s284] %v341
                %v343 = vld [vmem:[%s291 + $0x2c8] sm:%s284]
                %344 = vst [vmem:[%s292 + $0xc8] sm:%s284] %v343
                %v345 = vld [vmem:[%s291 + $0x2d0] sm:%s284]
                %346 = vst [vmem:[%s292 + $0xd0] sm:%s284] %v345
                %v347 = vld [vmem:[%s291 + $0x2d8] sm:%s284]
                %348 = vst [vmem:[%s292 + $0xd8] sm:%s284] %v347
                %v349 = vld [vmem:[%s291 + $0x2e0] sm:%s284]
                %350 = vst [vmem:[%s292 + $0xe0] sm:%s284] %v349
                %v351 = vld [vmem:[%s291 + $0x2e8] sm:%s284]
                %352 = vst [vmem:[%s292 + $0xe8] sm:%s284] %v351
                %v353 = vld [vmem:[%s291 + $0x2f0] sm:%s284]
                %354 = vst [vmem:[%s292 + $0xf0] sm:%s284] %v353
                %v355 = vld [vmem:[%s291 + $0x2f8] sm:%s284]
                %356 = vst [vmem:[%s292 + $0xf8] sm:%s284] %v355
                %v357 = vld [vmem:[%s291 + $0x500] sm:%s284]
                %358 = vst [vmem:[%s292 + $0x100] sm:%s284] %v357
                %v359 = vld [vmem:[%s291 + $0x508] sm:%s284]
                %360 = vst [vmem:[%s292 + $0x108] sm:%s284] %v359
                %v361 = vld [vmem:[%s291 + $0x510] sm:%s284]
                %362 = vst [vmem:[%s292 + $0x110] sm:%s284] %v361
                %v363 = vld [vmem:[%s291 + $0x518] sm:%s284]
                %364 = vst [vmem:[%s292 + $0x118] sm:%s284] %v363
                %v365 = vld [vmem:[%s291 + $0x520] sm:%s284]
                %366 = vst [vmem:[%s292 + $0x120] sm:%s284] %v365
                %v367 = vld [vmem:[%s291 + $0x528] sm:%s284]
                %368 = vst [vmem:[%s292 + $0x128] sm:%s284] %v367
                %v369 = vld [vmem:[%s291 + $0x530] sm:%s284]
                %370 = vst [vmem:[%s292 + $0x130] sm:%s284] %v369
                %v371 = vld [vmem:[%s291 + $0x538] sm:%s284]
                %372 = vst [vmem:[%s292 + $0x138] sm:%s284] %v371
                %v373 = vld [vmem:[%s291 + $0x540] sm:%s284]
                %374 = vst [vmem:[%s292 + $0x140] sm:%s284] %v373
                %v375 = vld [vmem:[%s291 + $0x548] sm:%s284]
                %376 = vst [vmem:[%s292 + $0x148] sm:%s284] %v375
                %v377 = vld [vmem:[%s291 + $0x550] sm:%s284]
                %378 = vst [vmem:[%s292 + $0x150] sm:%s284] %v377
                %v379 = vld [vmem:[%s291 + $0x558] sm:%s284]
                %380 = vst [vmem:[%s292 + $0x158] sm:%s284] %v379
                %v381 = vld [vmem:[%s291 + $0x560] sm:%s284]
                %382 = vst [vmem:[%s292 + $0x160] sm:%s284] %v381
                %v383 = vld [vmem:[%s291 + $0x568] sm:%s284]
                %384 = vst [vmem:[%s292 + $0x168] sm:%s284] %v383
                %v385 = vld [vmem:[%s291 + $0x570] sm:%s284]
                %386 = vst [vmem:[%s292 + $0x170] sm:%s284] %v385
                %v387 = vld [vmem:[%s291 + $0x578] sm:%s284]
                %388 = vst [vmem:[%s292 + $0x178] sm:%s284] %v387
                %v389 = vld [vmem:[%s291 + $0x780] sm:%s284]
                %390 = vst [vmem:[%s292 + $0x180] sm:%s284] %v389
                %v391 = vld [vmem:[%s291 + $0x788] sm:%s284]
                %392 = vst [vmem:[%s292 + $0x188] sm:%s284] %v391
                %v393 = vld [vmem:[%s291 + $0x790] sm:%s284]
                %394 = vst [vmem:[%s292 + $0x190] sm:%s284] %v393
                %v395 = vld [vmem:[%s291 + $0x798] sm:%s284]
                %396 = vst [vmem:[%s292 + $0x198] sm:%s284] %v395
                %v397 = vld [vmem:[%s291 + $0x7a0] sm:%s284]
                %398 = vst [vmem:[%s292 + $0x1a0] sm:%s284] %v397
                %v399 = vld [vmem:[%s291 + $0x7a8] sm:%s284]
                %400 = vst [vmem:[%s292 + $0x1a8] sm:%s284] %v399
                %v401 = vld [vmem:[%s291 + $0x7b0] sm:%s284]
                %402 = vst [vmem:[%s292 + $0x1b0] sm:%s284] %v401
                %v403 = vld [vmem:[%s291 + $0x7b8] sm:%s284]
                %404 = vst [vmem:[%s292 + $0x1b8] sm:%s284] %v403
                %v405 = vld [vmem:[%s291 + $0x7c0] sm:%s284]
                %406 = vst [vmem:[%s292 + $0x1c0] sm:%s284] %v405
                %v407 = vld [vmem:[%s291 + $0x7c8] sm:%s284]
                %408 = vst [vmem:[%s292 + $0x1c8] sm:%s284] %v407
                %v409 = vld [vmem:[%s291 + $0x7d0] sm:%s284]
                %410 = vst [vmem:[%s292 + $0x1d0] sm:%s284] %v409
                %v411 = vld [vmem:[%s291 + $0x7d8] sm:%s284]
                %412 = vst [vmem:[%s292 + $0x1d8] sm:%s284] %v411
                %v413 = vld [vmem:[%s291 + $0x7e0] sm:%s284]
                %414 = vst [vmem:[%s292 + $0x1e0] sm:%s284] %v413
                %v415 = vld [vmem:[%s291 + $0x7e8] sm:%s284]
                %416 = vst [vmem:[%s292 + $0x1e8] sm:%s284] %v415
                %v417 = vld [vmem:[%s291 + $0x7f0] sm:%s284]
                %418 = vst [vmem:[%s292 + $0x1f0] sm:%s284] %v417
                %v419 = vld [vmem:[%s291 + $0x7f8] sm:%s284]
                %420 = vst [vmem:[%s292 + $0x1f8] sm:%s284] %v419
                %v421 = vld [vmem:[%s291 + $0xa00] sm:%s284]
                %422 = vst [vmem:[%s292 + $0x200] sm:%s284] %v421
                %v423 = vld [vmem:[%s291 + $0xa08] sm:%s284]
                %424 = vst [vmem:[%s292 + $0x208] sm:%s284] %v423
                %v425 = vld [vmem:[%s291 + $0xa10] sm:%s284]
                %426 = vst [vmem:[%s292 + $0x210] sm:%s284] %v425
                %v427 = vld [vmem:[%s291 + $0xa18] sm:%s284]
                %428 = vst [vmem:[%s292 + $0x218] sm:%s284] %v427
                %v429 = vld [vmem:[%s291 + $0xa20] sm:%s284]
                %430 = vst [vmem:[%s292 + $0x220] sm:%s284] %v429
                %v431 = vld [vmem:[%s291 + $0xa28] sm:%s284]
                %432 = vst [vmem:[%s292 + $0x228] sm:%s284] %v431
                %v433 = vld [vmem:[%s291 + $0xa30] sm:%s284]
                %434 = vst [vmem:[%s292 + $0x230] sm:%s284] %v433
                %v435 = vld [vmem:[%s291 + $0xa38] sm:%s284]
                %436 = vst [vmem:[%s292 + $0x238] sm:%s284] %v435
                %v437 = vld [vmem:[%s291 + $0xa40] sm:%s284]
                %438 = vst [vmem:[%s292 + $0x240] sm:%s284] %v437
                %v439 = vld [vmem:[%s291 + $0xa48] sm:%s284]
                %440 = vst [vmem:[%s292 + $0x248] sm:%s284] %v439
                %v441 = vld [vmem:[%s291 + $0xa50] sm:%s284]
                %442 = vst [vmem:[%s292 + $0x250] sm:%s284] %v441
                %v443 = vld [vmem:[%s291 + $0xa58] sm:%s284]
                %444 = vst [vmem:[%s292 + $0x258] sm:%s284] %v443
                %v445 = vld [vmem:[%s291 + $0xa60] sm:%s284]
                %446 = vst [vmem:[%s292 + $0x260] sm:%s284] %v445
                %v447 = vld [vmem:[%s291 + $0xa68] sm:%s284]
                %448 = vst [vmem:[%s292 + $0x268] sm:%s284] %v447
                %v449 = vld [vmem:[%s291 + $0xa70] sm:%s284]
                %450 = vst [vmem:[%s292 + $0x270] sm:%s284] %v449
                %v451 = vld [vmem:[%s291 + $0xa78] sm:%s284]
                %452 = vst [vmem:[%s292 + $0x278] sm:%s284] %v451
                %v453 = vld [vmem:[%s291 + $0xc80] sm:%s284]
                %454 = vst [vmem:[%s292 + $0x280] sm:%s284] %v453
                %v455 = vld [vmem:[%s291 + $0xc88] sm:%s284]
                %456 = vst [vmem:[%s292 + $0x288] sm:%s284] %v455
                %v457 = vld [vmem:[%s291 + $0xc90] sm:%s284]
                %458 = vst [vmem:[%s292 + $0x290] sm:%s284] %v457
                %v459 = vld [vmem:[%s291 + $0xc98] sm:%s284]
                %460 = vst [vmem:[%s292 + $0x298] sm:%s284] %v459
                %v461 = vld [vmem:[%s291 + $0xca0] sm:%s284]
                %462 = vst [vmem:[%s292 + $0x2a0] sm:%s284] %v461
                %v463 = vld [vmem:[%s291 + $0xca8] sm:%s284]
                %464 = vst [vmem:[%s292 + $0x2a8] sm:%s284] %v463
                %v465 = vld [vmem:[%s291 + $0xcb0] sm:%s284]
                %466 = vst [vmem:[%s292 + $0x2b0] sm:%s284] %v465
                %v467 = vld [vmem:[%s291 + $0xcb8] sm:%s284]
                %468 = vst [vmem:[%s292 + $0x2b8] sm:%s284] %v467
                %v469 = vld [vmem:[%s291 + $0xcc0] sm:%s284]
                %470 = vst [vmem:[%s292 + $0x2c0] sm:%s284] %v469
                %v471 = vld [vmem:[%s291 + $0xcc8] sm:%s284]
                %472 = vst [vmem:[%s292 + $0x2c8] sm:%s284] %v471
                %v473 = vld [vmem:[%s291 + $0xcd0] sm:%s284]
                %474 = vst [vmem:[%s292 + $0x2d0] sm:%s284] %v473
                %v475 = vld [vmem:[%s291 + $0xcd8] sm:%s284]
                %476 = vst [vmem:[%s292 + $0x2d8] sm:%s284] %v475
                %v477 = vld [vmem:[%s291 + $0xce0] sm:%s284]
                %478 = vst [vmem:[%s292 + $0x2e0] sm:%s284] %v477
                %v479 = vld [vmem:[%s291 + $0xce8] sm:%s284]
                %480 = vst [vmem:[%s292 + $0x2e8] sm:%s284] %v479
                %v481 = vld [vmem:[%s291 + $0xcf0] sm:%s284]
                %482 = vst [vmem:[%s292 + $0x2f0] sm:%s284] %v481
                %v483 = vld [vmem:[%s291 + $0xcf8] sm:%s284]
                %484 = vst [vmem:[%s292 + $0x2f8] sm:%s284] %v483
                %v485 = vld [vmem:[%s291 + $0xf00] sm:%s284]
                %486 = vst [vmem:[%s292 + $0x300] sm:%s284] %v485
                %v487 = vld [vmem:[%s291 + $0xf08] sm:%s284]
                %488 = vst [vmem:[%s292 + $0x308] sm:%s284] %v487
                %v489 = vld [vmem:[%s291 + $0xf10] sm:%s284]
                %490 = vst [vmem:[%s292 + $0x310] sm:%s284] %v489
                %v491 = vld [vmem:[%s291 + $0xf18] sm:%s284]
                %492 = vst [vmem:[%s292 + $0x318] sm:%s284] %v491
                %v493 = vld [vmem:[%s291 + $0xf20] sm:%s284]
                %494 = vst [vmem:[%s292 + $0x320] sm:%s284] %v493
                %v495 = vld [vmem:[%s291 + $0xf28] sm:%s284]
                %496 = vst [vmem:[%s292 + $0x328] sm:%s284] %v495
                %v497 = vld [vmem:[%s291 + $0xf30] sm:%s284]
                %498 = vst [vmem:[%s292 + $0x330] sm:%s284] %v497
                %v499 = vld [vmem:[%s291 + $0xf38] sm:%s284]
                %500 = vst [vmem:[%s292 + $0x338] sm:%s284] %v499
                %v501 = vld [vmem:[%s291 + $0xf40] sm:%s284]
                %502 = vst [vmem:[%s292 + $0x340] sm:%s284] %v501
                %v503 = vld [vmem:[%s291 + $0xf48] sm:%s284]
                %504 = vst [vmem:[%s292 + $0x348] sm:%s284] %v503
                %v505 = vld [vmem:[%s291 + $0xf50] sm:%s284]
                %506 = vst [vmem:[%s292 + $0x350] sm:%s284] %v505
                %v507 = vld [vmem:[%s291 + $0xf58] sm:%s284]
                %508 = vst [vmem:[%s292 + $0x358] sm:%s284] %v507
                %v509 = vld [vmem:[%s291 + $0xf60] sm:%s284]
                %510 = vst [vmem:[%s292 + $0x360] sm:%s284] %v509
                %v511 = vld [vmem:[%s291 + $0xf68] sm:%s284]
                %512 = vst [vmem:[%s292 + $0x368] sm:%s284] %v511
                %v513 = vld [vmem:[%s291 + $0xf70] sm:%s284]
                %514 = vst [vmem:[%s292 + $0x370] sm:%s284] %v513
                %v515 = vld [vmem:[%s291 + $0xf78] sm:%s284]
                %516 = vst [vmem:[%s292 + $0x378] sm:%s284] %v515
                %v517 = vld [vmem:[%s291 + $0x1180] sm:%s284]
                %518 = vst [vmem:[%s292 + $0x380] sm:%s284] %v517
                %v519 = vld [vmem:[%s291 + $0x1188] sm:%s284]
                %520 = vst [vmem:[%s292 + $0x388] sm:%s284] %v519
                %v521 = vld [vmem:[%s291 + $0x1190] sm:%s284]
                %522 = vst [vmem:[%s292 + $0x390] sm:%s284] %v521
                %v523 = vld [vmem:[%s291 + $0x1198] sm:%s284]
                %524 = vst [vmem:[%s292 + $0x398] sm:%s284] %v523
                %v525 = vld [vmem:[%s291 + $0x11a0] sm:%s284]
                %526 = vst [vmem:[%s292 + $0x3a0] sm:%s284] %v525
                %v527 = vld [vmem:[%s291 + $0x11a8] sm:%s284]
                %528 = vst [vmem:[%s292 + $0x3a8] sm:%s284] %v527
                %v529 = vld [vmem:[%s291 + $0x11b0] sm:%s284]
                %530 = vst [vmem:[%s292 + $0x3b0] sm:%s284] %v529
                %v531 = vld [vmem:[%s291 + $0x11b8] sm:%s284]
                %532 = vst [vmem:[%s292 + $0x3b8] sm:%s284] %v531
                %v533 = vld [vmem:[%s291 + $0x11c0] sm:%s284]
                %534 = vst [vmem:[%s292 + $0x3c0] sm:%s284] %v533
                %v535 = vld [vmem:[%s291 + $0x11c8] sm:%s284]
                %536 = vst [vmem:[%s292 + $0x3c8] sm:%s284] %v535
                %v537 = vld [vmem:[%s291 + $0x11d0] sm:%s284]
                %538 = vst [vmem:[%s292 + $0x3d0] sm:%s284] %v537
                %v539 = vld [vmem:[%s291 + $0x11d8] sm:%s284]
                %540 = vst [vmem:[%s292 + $0x3d8] sm:%s284] %v539
                %v541 = vld [vmem:[%s291 + $0x11e0] sm:%s284]
                %542 = vst [vmem:[%s292 + $0x3e0] sm:%s284] %v541
                %v543 = vld [vmem:[%s291 + $0x11e8] sm:%s284]
                %544 = vst [vmem:[%s292 + $0x3e8] sm:%s284] %v543
                %v545 = vld [vmem:[%s291 + $0x11f0] sm:%s284]
                %546 = vst [vmem:[%s292 + $0x3f0] sm:%s284] %v545
                %v547 = vld [vmem:[%s291 + $0x11f8] sm:%s284]
                %548 = vst [vmem:[%s292 + $0x3f8] sm:%s284] %v547
                %v549 = vld [vmem:[%s291 + $0x1400] sm:%s284]
                %550 = vst [vmem:[%s292 + $0x400] sm:%s284] %v549
                %v551 = vld [vmem:[%s291 + $0x1408] sm:%s284]
                %552 = vst [vmem:[%s292 + $0x408] sm:%s284] %v551
                %v553 = vld [vmem:[%s291 + $0x1410] sm:%s284]
                %554 = vst [vmem:[%s292 + $0x410] sm:%s284] %v553
                %v555 = vld [vmem:[%s291 + $0x1418] sm:%s284]
                %556 = vst [vmem:[%s292 + $0x418] sm:%s284] %v555
                %v557 = vld [vmem:[%s291 + $0x1420] sm:%s284]
                %558 = vst [vmem:[%s292 + $0x420] sm:%s284] %v557
                %v559 = vld [vmem:[%s291 + $0x1428] sm:%s284]
                %560 = vst [vmem:[%s292 + $0x428] sm:%s284] %v559
                %v561 = vld [vmem:[%s291 + $0x1430] sm:%s284]
                %562 = vst [vmem:[%s292 + $0x430] sm:%s284] %v561
                %v563 = vld [vmem:[%s291 + $0x1438] sm:%s284]
                %564 = vst [vmem:[%s292 + $0x438] sm:%s284] %v563
                %v565 = vld [vmem:[%s291 + $0x1440] sm:%s284]
                %566 = vst [vmem:[%s292 + $0x440] sm:%s284] %v565
                %v567 = vld [vmem:[%s291 + $0x1448] sm:%s284]
                %568 = vst [vmem:[%s292 + $0x448] sm:%s284] %v567
                %v569 = vld [vmem:[%s291 + $0x1450] sm:%s284]
                %570 = vst [vmem:[%s292 + $0x450] sm:%s284] %v569
                %v571 = vld [vmem:[%s291 + $0x1458] sm:%s284]
                %572 = vst [vmem:[%s292 + $0x458] sm:%s284] %v571
                %v573 = vld [vmem:[%s291 + $0x1460] sm:%s284]
                %574 = vst [vmem:[%s292 + $0x460] sm:%s284] %v573
                %v575 = vld [vmem:[%s291 + $0x1468] sm:%s284]
                %576 = vst [vmem:[%s292 + $0x468] sm:%s284] %v575
                %v577 = vld [vmem:[%s291 + $0x1470] sm:%s284]
                %578 = vst [vmem:[%s292 + $0x470] sm:%s284] %v577
                %v579 = vld [vmem:[%s291 + $0x1478] sm:%s284]
                %580 = vst [vmem:[%s292 + $0x478] sm:%s284] %v579
                %v581 = vld [vmem:[%s291 + $0x1680] sm:%s284]
                %582 = vst [vmem:[%s292 + $0x480] sm:%s284] %v581
                %v583 = vld [vmem:[%s291 + $0x1688] sm:%s284]
                %584 = vst [vmem:[%s292 + $0x488] sm:%s284] %v583
                %v585 = vld [vmem:[%s291 + $0x1690] sm:%s284]
                %586 = vst [vmem:[%s292 + $0x490] sm:%s284] %v585
                %v587 = vld [vmem:[%s291 + $0x1698] sm:%s284]
                %588 = vst [vmem:[%s292 + $0x498] sm:%s284] %v587
                %v589 = vld [vmem:[%s291 + $0x16a0] sm:%s284]
                %590 = vst [vmem:[%s292 + $0x4a0] sm:%s284] %v589
                %v591 = vld [vmem:[%s291 + $0x16a8] sm:%s284]
                %592 = vst [vmem:[%s292 + $0x4a8] sm:%s284] %v591
                %v593 = vld [vmem:[%s291 + $0x16b0] sm:%s284]
                %594 = vst [vmem:[%s292 + $0x4b0] sm:%s284] %v593
                %v595 = vld [vmem:[%s291 + $0x16b8] sm:%s284]
                %596 = vst [vmem:[%s292 + $0x4b8] sm:%s284] %v595
                %v597 = vld [vmem:[%s291 + $0x16c0] sm:%s284]
                %598 = vst [vmem:[%s292 + $0x4c0] sm:%s284] %v597
                %v599 = vld [vmem:[%s291 + $0x16c8] sm:%s284]
                %600 = vst [vmem:[%s292 + $0x4c8] sm:%s284] %v599
                %v601 = vld [vmem:[%s291 + $0x16d0] sm:%s284]
                %602 = vst [vmem:[%s292 + $0x4d0] sm:%s284] %v601
                %v603 = vld [vmem:[%s291 + $0x16d8] sm:%s284]
                %604 = vst [vmem:[%s292 + $0x4d8] sm:%s284] %v603
                %v605 = vld [vmem:[%s291 + $0x16e0] sm:%s284]
                %606 = vst [vmem:[%s292 + $0x4e0] sm:%s284] %v605
                %v607 = vld [vmem:[%s291 + $0x16e8] sm:%s284]
                %608 = vst [vmem:[%s292 + $0x4e8] sm:%s284] %v607
                %v609 = vld [vmem:[%s291 + $0x16f0] sm:%s284]
                %610 = vst [vmem:[%s292 + $0x4f0] sm:%s284] %v609
                %v611 = vld [vmem:[%s291 + $0x16f8] sm:%s284]
                %612 = vst [vmem:[%s292 + $0x4f8] sm:%s284] %v611
                %v613 = vld [vmem:[%s291 + $0x1900] sm:%s284]
                %614 = vst [vmem:[%s292 + $0x500] sm:%s284] %v613
                %v615 = vld [vmem:[%s291 + $0x1908] sm:%s284]
                %616 = vst [vmem:[%s292 + $0x508] sm:%s284] %v615
                %v617 = vld [vmem:[%s291 + $0x1910] sm:%s284]
                %618 = vst [vmem:[%s292 + $0x510] sm:%s284] %v617
                %v619 = vld [vmem:[%s291 + $0x1918] sm:%s284]
                %620 = vst [vmem:[%s292 + $0x518] sm:%s284] %v619
                %v621 = vld [vmem:[%s291 + $0x1920] sm:%s284]
                %622 = vst [vmem:[%s292 + $0x520] sm:%s284] %v621
                %v623 = vld [vmem:[%s291 + $0x1928] sm:%s284]
                %624 = vst [vmem:[%s292 + $0x528] sm:%s284] %v623
                %v625 = vld [vmem:[%s291 + $0x1930] sm:%s284]
                %626 = vst [vmem:[%s292 + $0x530] sm:%s284] %v625
                %v627 = vld [vmem:[%s291 + $0x1938] sm:%s284]
                %628 = vst [vmem:[%s292 + $0x538] sm:%s284] %v627
                %v629 = vld [vmem:[%s291 + $0x1940] sm:%s284]
                %630 = vst [vmem:[%s292 + $0x540] sm:%s284] %v629
                %v631 = vld [vmem:[%s291 + $0x1948] sm:%s284]
                %632 = vst [vmem:[%s292 + $0x548] sm:%s284] %v631
                %v633 = vld [vmem:[%s291 + $0x1950] sm:%s284]
                %634 = vst [vmem:[%s292 + $0x550] sm:%s284] %v633
                %v635 = vld [vmem:[%s291 + $0x1958] sm:%s284]
                %636 = vst [vmem:[%s292 + $0x558] sm:%s284] %v635
                %v637 = vld [vmem:[%s291 + $0x1960] sm:%s284]
                %638 = vst [vmem:[%s292 + $0x560] sm:%s284] %v637
                %v639 = vld [vmem:[%s291 + $0x1968] sm:%s284]
                %640 = vst [vmem:[%s292 + $0x568] sm:%s284] %v639
                %v641 = vld [vmem:[%s291 + $0x1970] sm:%s284]
                %642 = vst [vmem:[%s292 + $0x570] sm:%s284] %v641
                %v643 = vld [vmem:[%s291 + $0x1978] sm:%s284]
                %644 = vst [vmem:[%s292 + $0x578] sm:%s284] %v643
                %v645 = vld [vmem:[%s291 + $0x1b80] sm:%s284]
                %646 = vst [vmem:[%s292 + $0x580] sm:%s284] %v645
                %v647 = vld [vmem:[%s291 + $0x1b88] sm:%s284]
                %648 = vst [vmem:[%s292 + $0x588] sm:%s284] %v647
                %v649 = vld [vmem:[%s291 + $0x1b90] sm:%s284]
                %650 = vst [vmem:[%s292 + $0x590] sm:%s284] %v649
                %v651 = vld [vmem:[%s291 + $0x1b98] sm:%s284]
                %652 = vst [vmem:[%s292 + $0x598] sm:%s284] %v651
                %v653 = vld [vmem:[%s291 + $0x1ba0] sm:%s284]
                %654 = vst [vmem:[%s292 + $0x5a0] sm:%s284] %v653
                %v655 = vld [vmem:[%s291 + $0x1ba8] sm:%s284]
                %656 = vst [vmem:[%s292 + $0x5a8] sm:%s284] %v655
                %v657 = vld [vmem:[%s291 + $0x1bb0] sm:%s284]
                %658 = vst [vmem:[%s292 + $0x5b0] sm:%s284] %v657
                %v659 = vld [vmem:[%s291 + $0x1bb8] sm:%s284]
                %660 = vst [vmem:[%s292 + $0x5b8] sm:%s284] %v659
                %v661 = vld [vmem:[%s291 + $0x1bc0] sm:%s284]
                %662 = vst [vmem:[%s292 + $0x5c0] sm:%s284] %v661
                %v663 = vld [vmem:[%s291 + $0x1bc8] sm:%s284]
                %664 = vst [vmem:[%s292 + $0x5c8] sm:%s284] %v663
                %v665 = vld [vmem:[%s291 + $0x1bd0] sm:%s284]
                %666 = vst [vmem:[%s292 + $0x5d0] sm:%s284] %v665
                %v667 = vld [vmem:[%s291 + $0x1bd8] sm:%s284]
                %668 = vst [vmem:[%s292 + $0x5d8] sm:%s284] %v667
                %v669 = vld [vmem:[%s291 + $0x1be0] sm:%s284]
                %670 = vst [vmem:[%s292 + $0x5e0] sm:%s284] %v669
                %v671 = vld [vmem:[%s291 + $0x1be8] sm:%s284]
                %672 = vst [vmem:[%s292 + $0x5e8] sm:%s284] %v671
                %v673 = vld [vmem:[%s291 + $0x1bf0] sm:%s284]
                %674 = vst [vmem:[%s292 + $0x5f0] sm:%s284] %v673
                %v675 = vld [vmem:[%s291 + $0x1bf8] sm:%s284]
                %676 = vst [vmem:[%s292 + $0x5f8] sm:%s284] %v675
                %v677 = vld [vmem:[%s291 + $0x1e00] sm:%s284]
                %678 = vst [vmem:[%s292 + $0x600] sm:%s284] %v677
                %v679 = vld [vmem:[%s291 + $0x1e08] sm:%s284]
                %680 = vst [vmem:[%s292 + $0x608] sm:%s284] %v679
                %v681 = vld [vmem:[%s291 + $0x1e10] sm:%s284]
                %682 = vst [vmem:[%s292 + $0x610] sm:%s284] %v681
                %v683 = vld [vmem:[%s291 + $0x1e18] sm:%s284]
                %684 = vst [vmem:[%s292 + $0x618] sm:%s284] %v683
                %v685 = vld [vmem:[%s291 + $0x1e20] sm:%s284]
                %686 = vst [vmem:[%s292 + $0x620] sm:%s284] %v685
                %v687 = vld [vmem:[%s291 + $0x1e28] sm:%s284]
                %688 = vst [vmem:[%s292 + $0x628] sm:%s284] %v687
                %v689 = vld [vmem:[%s291 + $0x1e30] sm:%s284]
                %690 = vst [vmem:[%s292 + $0x630] sm:%s284] %v689
                %v691 = vld [vmem:[%s291 + $0x1e38] sm:%s284]
                %692 = vst [vmem:[%s292 + $0x638] sm:%s284] %v691
                %v693 = vld [vmem:[%s291 + $0x1e40] sm:%s284]
                %694 = vst [vmem:[%s292 + $0x640] sm:%s284] %v693
                %v695 = vld [vmem:[%s291 + $0x1e48] sm:%s284]
                %696 = vst [vmem:[%s292 + $0x648] sm:%s284] %v695
                %v697 = vld [vmem:[%s291 + $0x1e50] sm:%s284]
                %698 = vst [vmem:[%s292 + $0x650] sm:%s284] %v697
                %v699 = vld [vmem:[%s291 + $0x1e58] sm:%s284]
                %700 = vst [vmem:[%s292 + $0x658] sm:%s284] %v699
                %v701 = vld [vmem:[%s291 + $0x1e60] sm:%s284]
                %702 = vst [vmem:[%s292 + $0x660] sm:%s284] %v701
                %v703 = vld [vmem:[%s291 + $0x1e68] sm:%s284]
                %704 = vst [vmem:[%s292 + $0x668] sm:%s284] %v703
                %v705 = vld [vmem:[%s291 + $0x1e70] sm:%s284]
                %706 = vst [vmem:[%s292 + $0x670] sm:%s284] %v705
                %v707 = vld [vmem:[%s291 + $0x1e78] sm:%s284]
                %708 = vst [vmem:[%s292 + $0x678] sm:%s284] %v707
                %v709 = vld [vmem:[%s291 + $0x2080] sm:%s284]
                %710 = vst [vmem:[%s292 + $0x680] sm:%s284] %v709
                %v711 = vld [vmem:[%s291 + $0x2088] sm:%s284]
                %712 = vst [vmem:[%s292 + $0x688] sm:%s284] %v711
                %v713 = vld [vmem:[%s291 + $0x2090] sm:%s284]
                %714 = vst [vmem:[%s292 + $0x690] sm:%s284] %v713
                %v715 = vld [vmem:[%s291 + $0x2098] sm:%s284]
                %716 = vst [vmem:[%s292 + $0x698] sm:%s284] %v715
                %v717 = vld [vmem:[%s291 + $0x20a0] sm:%s284]
                %718 = vst [vmem:[%s292 + $0x6a0] sm:%s284] %v717
                %v719 = vld [vmem:[%s291 + $0x20a8] sm:%s284]
                %720 = vst [vmem:[%s292 + $0x6a8] sm:%s284] %v719
                %v721 = vld [vmem:[%s291 + $0x20b0] sm:%s284]
                %722 = vst [vmem:[%s292 + $0x6b0] sm:%s284] %v721
                %v723 = vld [vmem:[%s291 + $0x20b8] sm:%s284]
                %724 = vst [vmem:[%s292 + $0x6b8] sm:%s284] %v723
                %v725 = vld [vmem:[%s291 + $0x20c0] sm:%s284]
                %726 = vst [vmem:[%s292 + $0x6c0] sm:%s284] %v725
                %v727 = vld [vmem:[%s291 + $0x20c8] sm:%s284]
                %728 = vst [vmem:[%s292 + $0x6c8] sm:%s284] %v727
                %v729 = vld [vmem:[%s291 + $0x20d0] sm:%s284]
                %730 = vst [vmem:[%s292 + $0x6d0] sm:%s284] %v729
                %v731 = vld [vmem:[%s291 + $0x20d8] sm:%s284]
                %732 = vst [vmem:[%s292 + $0x6d8] sm:%s284] %v731
                %v733 = vld [vmem:[%s291 + $0x20e0] sm:%s284]
                %734 = vst [vmem:[%s292 + $0x6e0] sm:%s284] %v733
                %v735 = vld [vmem:[%s291 + $0x20e8] sm:%s284]
                %736 = vst [vmem:[%s292 + $0x6e8] sm:%s284] %v735
                %v737 = vld [vmem:[%s291 + $0x20f0] sm:%s284]
                %738 = vst [vmem:[%s292 + $0x6f0] sm:%s284] %v737
                %v739 = vld [vmem:[%s291 + $0x20f8] sm:%s284]
                %740 = vst [vmem:[%s292 + $0x6f8] sm:%s284] %v739
              $region65: #{tpu_custom_call.1} parent=59 // loop_footer
                %s290 = sadd.s32 1, %s286
              $region66: #{tpu_custom_call.1} parent=59 // loop_footer_branch
                %285 = sbr.rel target = $region62
              $region67: #{tpu_custom_call.1} parent=59 // loop_exit
                _
            $region60: #{tpu_custom_call.1} parent=51 // pred_fallthru
              _
          $region52: #{tpu_custom_call.1} parent=47 // pred_fallthru
            _
          %1201 = vnop
        $region48: #{tpu_custom_call.1} parent=39 // pred_fallthru
          _
      $region40: #{tpu_custom_call.1} parent=5 // pred_fallthru
        _
      %p1202 = scmp.le.s32.totalorder 1, %s17
      %p1203 = scmp.lt.s32.totalorder %s17, 6
      %p1204 = pnand %p1202, %p1203
      %p1205 = pneg %p1204
      // Predicated region
      $region83: #{tpu_custom_call.1} parent=5 // pred_check
        _
      $region84: #{tpu_custom_call.1} parent=5 // pred_check_branch
        %1207 = sbr.rel (%p1204) target = $region86
      $region85: #{tpu_custom_call.1} parent=5 // pred_region
        %s1208 = ssub.s32 %s17, 1
        %s1209 = sand.u32 %s56, 1
        %s1210 = sand.u32 %s56, 1
        %s1211 = smul.addr %s1210, 1792
        %s1212 = scalar_lea.vmem [#allocation9], %s1211
        // Predicated region
        $region87: #{tpu_custom_call.1} parent=85 // pred_check
          %p1213 = pneg %p69
        $region88: #{tpu_custom_call.1} parent=85 // pred_check_branch
          %1215 = sbr.rel (%p1213) target = $region90
        $region89: #{tpu_custom_call.1} parent=85 // pred_region
          _
        $region90: #{tpu_custom_call.1} parent=85 // pred_fallthru
          _
        %s1216 = smul.u32 16, %s22
        %p1217 = scmp.lt.s32.totalorder %s1216, 79
        %s1218 = scalar_select %p1217, %s1216, 79
        %s1219 = smul.addr %s1218, 8
        %s1220 = scalar_lea.vmem %s0, %s1219
        %p1221 = pneg %p43
        %p1222 = pneg %p40
        %s1223 = sand.u32 %s56, 1
        %s1224 = sand.u32 %s56, 1
        %s1225 = smul.addr %s1224, 1792
        %s1226 = scalar_lea.vmem [#allocation9], %s1225
        %p1227 = pneg %p69
        %p1228 = pneg %p66
        %p1229 = pneg %p90
        %p1230 = pneg %p87
        %p1231 = pneg %p111
        %p1232 = pneg %p108
        %p1233 = pneg %p132
        %p1234 = pneg %p129
        %p1235 = pneg %p153
        %p1236 = pneg %p150
        %p1237 = pneg %p174
        %p1238 = pneg %p171
        %p1239 = pneg %p195
        %p1240 = pneg %p192
        %p1241 = pneg %p221
        %p1242 = pneg %p218
        %s1243 = sand.u32 %s208, 1
        %s1244 = scalar_lea.sflag [#allocation11], %s1243
        %s1245 = sand.u32 %s208, 1
        %s1246 = smul.addr %s1245, 1792
        %s1247 = scalar_lea.vmem [#allocation10], %s1246
        %s1248 = smul.u32 16, %s22
        %p1249 = scmp.lt.s32.totalorder %s1248, 79
        %s1250 = scalar_select %p1249, %s1248, 79
        %s1251 = smul.addr %s1250, 8
        %s1252 = scalar_lea.vmem %s0, %s1251
        %s1253 = smul.u32 16, %s22
        %s1254 = smul.u32 16, %s22
        %s1255 = smul.u32 16, %s22
        loop: start=0, step=1, limit=14
        $region91: #{tpu_custom_call.1} parent=85 // loop_pre_header
          _
        $region92: #{tpu_custom_call.1} parent=85 // loop_header
          %s1257 = sphi 0, %s1261
          %p1258 = scmp.ge.s32.totalorder %s1257, 14
        $region93: #{tpu_custom_call.1} parent=85 // loop_header_branch
          %1260 = sbr.rel (%p1258) target = $region97
        $region94: #{tpu_custom_call.1} parent=85 // loop_body
          %s1262 = smul.u32 %s1257, 128
          %s1263 = scalar_lea.vmem %s1212, %s1262 [#allocation9]
          %v1264 = vld [vmem:[%s1263] sm:$0xff]
          %v1265 = vld [vmem:[%s1263 + $0x8] sm:$0xff]
          %v1266 = vld [vmem:[%s1263 + $0x10] sm:$0xff]
          %v1267 = vld [vmem:[%s1263 + $0x18] sm:$0xff]
          %v1268 = vld [vmem:[%s1263 + $0x20] sm:$0xff]
          %v1269 = vld [vmem:[%s1263 + $0x28] sm:$0xff]
          %v1270 = vld [vmem:[%s1263 + $0x30] sm:$0xff]
          %v1271 = vld [vmem:[%s1263 + $0x38] sm:$0xff]
          %v1272 = vld [vmem:[%s1263 + $0x40] sm:$0xff]
          %v1273 = vld [vmem:[%s1263 + $0x48] sm:$0xff]
          %v1274 = vld [vmem:[%s1263 + $0x50] sm:$0xff]
          %v1275 = vld [vmem:[%s1263 + $0x58] sm:$0xff]
          %v1276 = vld [vmem:[%s1263 + $0x60] sm:$0xff]
          %v1277 = vld [vmem:[%s1263 + $0x68] sm:$0xff]
          %v1278 = vld [vmem:[%s1263 + $0x70] sm:$0xff]
          %v1279 = vld [vmem:[%s1263 + $0x78] sm:$0xff]
          %v1280 = vld [vmem:[%s2] sm:$0xff]
          %v1281 = vld [vmem:[%s2 + $0x8] sm:$0xff]
          %v1282 = vld [vmem:[%s2 + $0x10] sm:$0xff]
          %v1283 = vld [vmem:[%s2 + $0x18] sm:$0xff]
          %v1284 = vld [vmem:[%s2 + $0x20] sm:$0xff]
          %v1285 = vld [vmem:[%s2 + $0x28] sm:$0xff]
          %v1286 = vld [vmem:[%s2 + $0x30] sm:$0xff]
          %v1287 = vld [vmem:[%s2 + $0x38] sm:$0xff]
          %v1288 = vld [vmem:[%s2 + $0x40] sm:$0xff]
          %v1289 = vld [vmem:[%s2 + $0x48] sm:$0xff]
          %v1290 = vld [vmem:[%s2 + $0x50] sm:$0xff]
          %v1291 = vld [vmem:[%s2 + $0x58] sm:$0xff]
          %v1292 = vld [vmem:[%s2 + $0x60] sm:$0xff]
          %v1293 = vld [vmem:[%s2 + $0x68] sm:$0xff]
          %v1294 = vld [vmem:[%s2 + $0x70] sm:$0xff]
          %v1295 = vld [vmem:[%s2 + $0x78] sm:$0xff]
          %v1296 = vld [vmem:[%s2 + $0x80] sm:$0x1]
          %v1297 = vld [vmem:[%s2 + $0x88] sm:$0x1]
          %v1298 = vld [vmem:[%s2 + $0x90] sm:$0x1]
          %v1299 = vld [vmem:[%s2 + $0x98] sm:$0x1]
          %v1300 = vld [vmem:[%s4] sm:$0xf]
          %v1302 = vperm.slane %v1300, 0
          %v1303 = vperm.slane %v1300, 1
          %v1304 = vperm.slane %v1300, 2
          %v1305 = vperm.slane %v1300, 3
          %vm1310 = vcmask 269312
          %v1312 = vsel %vm1310, %v1264, 0
          %v1315 = vsel %vm1310, %v1265, 0
          %v1318 = vsel %vm1310, %v1266, 0
          %v1321 = vsel %vm1310, %v1267, 0
          %v1324 = vsel %vm1310, %v1268, 0
          %v1327 = vsel %vm1310, %v1269, 0
          %v1330 = vsel %vm1310, %v1270, 0
          %v1333 = vsel %vm1310, %v1271, 0
          %v1336 = vsel %vm1310, %v1272, 0
          %v1339 = vsel %vm1310, %v1273, 0
          %v1342 = vsel %vm1310, %v1274, 0
          %v1345 = vsel %vm1310, %v1275, 0
          %v1348 = vsel %vm1310, %v1276, 0
          %v1351 = vsel %vm1310, %v1277, 0
          %v1354 = vsel %vm1310, %v1278, 0
          %v1357 = vsel %vm1310, %v1279, 0
          %vm1359 = vcmask 1040384
          %v1361 = vsel %vm1359, %v1296, 0
          %v1364 = vsel %vm1359, %v1297, 0
          %v1367 = vsel %vm1359, %v1298, 0
          %v1370 = vsel %vm1359, %v1299, 0
          %1372 = vmatpush.msra.mxu0 0.0
          %1373 = vmatpush.msra.mxu0 0.0
          %1374 = vmatpush.msra.mxu0 0.0
          %1375 = vmatpush.msra.mxu0 0.0
          %1376 = vmatpush.msra.mxu0 0.0
          %1377 = vmatpush.msra.mxu0 0.0
          %1378 = vmatpush.msra.mxu0 0.0
          %1379 = vmatpush.msra.mxu0 0.0
          %1380 = vmatpush.msra.mxu0 0.0
          %1381 = vmatpush.msra.mxu0 0.0
          %1382 = vmatpush.msra.mxu0 0.0
          %1383 = vmatpush.msra.mxu0 %v1361
          %1384 = vmatpush.msra.mxu0 %v1292
          %1385 = vmatpush.msra.mxu0 %v1288
          %1386 = vmatpush.msra.mxu0 %v1284
          %1387 = vmatpush.msra.mxu0 %v1280
          %1388 = vmatmul.f32.gmra.mxu0 %v1312
          %v1389 = vpop.f32.mrf.mxu0
          %v1390 = vadd.f32 %v1302, %v1389
          %1391 = vmatmul.f32.gmra.mxu0 %v1315
          %v1392 = vpop.f32.mrf.mxu0
          %v1393 = vadd.f32 %v1302, %v1392
          %1394 = vmatmul.f32.gmra.mxu0 %v1318
          %v1395 = vpop.f32.mrf.mxu0
          %v1396 = vadd.f32 %v1302, %v1395
          %1397 = vmatmul.f32.gmra.mxu0 %v1321
          %v1398 = vpop.f32.mrf.mxu0
          %v1399 = vadd.f32 %v1302, %v1398
          %1400 = vmatmul.f32.gmra.mxu0 %v1324
          %v1401 = vpop.f32.mrf.mxu0
          %v1402 = vadd.f32 %v1302, %v1401
          %1403 = vmatmul.f32.gmra.mxu0 %v1327
          %v1404 = vpop.f32.mrf.mxu0
          %v1405 = vadd.f32 %v1302, %v1404
          %1406 = vmatmul.f32.gmra.mxu0 %v1330
          %v1407 = vpop.f32.mrf.mxu0
          %v1408 = vadd.f32 %v1302, %v1407
          %1409 = vmatmul.f32.gmra.mxu0 %v1333
          %v1410 = vpop.f32.mrf.mxu0
          %v1411 = vadd.f32 %v1302, %v1410
          %1412 = vmatmul.f32.gmra.mxu0 %v1336
          %v1413 = vpop.f32.mrf.mxu0
          %v1414 = vadd.f32 %v1302, %v1413
          %1415 = vmatmul.f32.gmra.mxu0 %v1339
          %v1416 = vpop.f32.mrf.mxu0
          %v1417 = vadd.f32 %v1302, %v1416
          %1418 = vmatmul.f32.gmra.mxu0 %v1342
          %v1419 = vpop.f32.mrf.mxu0
          %v1420 = vadd.f32 %v1302, %v1419
          %1421 = vmatmul.f32.gmra.mxu0 %v1345
          %v1422 = vpop.f32.mrf.mxu0
          %v1423 = vadd.f32 %v1302, %v1422
          %1424 = vmatmul.f32.gmra.mxu0 %v1348
          %v1425 = vpop.f32.mrf.mxu0
          %v1426 = vadd.f32 %v1302, %v1425
          %1427 = vmatmul.f32.gmra.mxu0 %v1351
          %v1428 = vpop.f32.mrf.mxu0
          %v1429 = vadd.f32 %v1302, %v1428
          %1430 = vmatmul.f32.gmra.mxu0 %v1354
          %v1431 = vpop.f32.mrf.mxu0
          %v1432 = vadd.f32 %v1302, %v1431
          %1433 = vmatmul.f32.gmra.mxu0 %v1357
          %v1434 = vpop.f32.mrf.mxu0
          %v1435 = vadd.f32 %v1302, %v1434
          %1436 = vdwg.mxu0
          %1437 = vmatpush.msra.mxu0 0.0
          %1438 = vmatpush.msra.mxu0 0.0
          %1439 = vmatpush.msra.mxu0 0.0
          %1440 = vmatpush.msra.mxu0 0.0
          %1441 = vmatpush.msra.mxu0 0.0
          %1442 = vmatpush.msra.mxu0 0.0
          %1443 = vmatpush.msra.mxu0 0.0
          %1444 = vmatpush.msra.mxu0 0.0
          %1445 = vmatpush.msra.mxu0 0.0
          %1446 = vmatpush.msra.mxu0 0.0
          %1447 = vmatpush.msra.mxu0 0.0
          %1448 = vmatpush.msra.mxu0 %v1364
          %1449 = vmatpush.msra.mxu0 %v1293
          %1450 = vmatpush.msra.mxu0 %v1289
          %1451 = vmatpush.msra.mxu0 %v1285
          %1452 = vmatpush.msra.mxu0 %v1281
          %1453 = vmatmul.f32.gmra.mxu0 %v1312
          %v1454 = vpop.f32.mrf.mxu0
          %v1455 = vadd.f32 %v1303, %v1454
          %1456 = vmatmul.f32.gmra.mxu0 %v1315
          %v1457 = vpop.f32.mrf.mxu0
          %v1458 = vadd.f32 %v1303, %v1457
          %1459 = vmatmul.f32.gmra.mxu0 %v1318
          %v1460 = vpop.f32.mrf.mxu0
          %v1461 = vadd.f32 %v1303, %v1460
          %1462 = vmatmul.f32.gmra.mxu0 %v1321
          %v1463 = vpop.f32.mrf.mxu0
          %v1464 = vadd.f32 %v1303, %v1463
          %1465 = vmatmul.f32.gmra.mxu0 %v1324
          %v1466 = vpop.f32.mrf.mxu0
          %v1467 = vadd.f32 %v1303, %v1466
          %1468 = vmatmul.f32.gmra.mxu0 %v1327
          %v1469 = vpop.f32.mrf.mxu0
          %v1470 = vadd.f32 %v1303, %v1469
          %1471 = vmatmul.f32.gmra.mxu0 %v1330
          %v1472 = vpop.f32.mrf.mxu0
          %v1473 = vadd.f32 %v1303, %v1472
          %1474 = vmatmul.f32.gmra.mxu0 %v1333
          %v1475 = vpop.f32.mrf.mxu0
          %v1476 = vadd.f32 %v1303, %v1475
          %1477 = vmatmul.f32.gmra.mxu0 %v1336
          %v1478 = vpop.f32.mrf.mxu0
          %v1479 = vadd.f32 %v1303, %v1478
          %1480 = vmatmul.f32.gmra.mxu0 %v1339
          %v1481 = vpop.f32.mrf.mxu0
          %v1482 = vadd.f32 %v1303, %v1481
          %1483 = vmatmul.f32.gmra.mxu0 %v1342
          %v1484 = vpop.f32.mrf.mxu0
          %v1485 = vadd.f32 %v1303, %v1484
          %1486 = vmatmul.f32.gmra.mxu0 %v1345
          %v1487 = vpop.f32.mrf.mxu0
          %v1488 = vadd.f32 %v1303, %v1487
          %1489 = vmatmul.f32.gmra.mxu0 %v1348
          %v1490 = vpop.f32.mrf.mxu0
          %v1491 = vadd.f32 %v1303, %v1490
          %1492 = vmatmul.f32.gmra.mxu0 %v1351
          %v1493 = vpop.f32.mrf.mxu0
          %v1494 = vadd.f32 %v1303, %v1493
          %1495 = vmatmul.f32.gmra.mxu0 %v1354
          %v1496 = vpop.f32.mrf.mxu0
          %v1497 = vadd.f32 %v1303, %v1496
          %1498 = vmatmul.f32.gmra.mxu0 %v1357
          %v1499 = vpop.f32.mrf.mxu0
          %v1500 = vadd.f32 %v1303, %v1499
          %1501 = vdwg.mxu0
          %1502 = vmatpush.msra.mxu0 0.0
          %1503 = vmatpush.msra.mxu0 0.0
          %1504 = vmatpush.msra.mxu0 0.0
          %1505 = vmatpush.msra.mxu0 0.0
          %1506 = vmatpush.msra.mxu0 0.0
          %1507 = vmatpush.msra.mxu0 0.0
          %1508 = vmatpush.msra.mxu0 0.0
          %1509 = vmatpush.msra.mxu0 0.0
          %1510 = vmatpush.msra.mxu0 0.0
          %1511 = vmatpush.msra.mxu0 0.0
          %1512 = vmatpush.msra.mxu0 0.0
          %1513 = vmatpush.msra.mxu0 %v1367
          %1514 = vmatpush.msra.mxu0 %v1294
          %1515 = vmatpush.msra.mxu0 %v1290
          %1516 = vmatpush.msra.mxu0 %v1286
          %1517 = vmatpush.msra.mxu0 %v1282
          %1518 = vmatmul.f32.gmra.mxu0 %v1312
          %v1519 = vpop.f32.mrf.mxu0
          %v1520 = vadd.f32 %v1304, %v1519
          %1521 = vmatmul.f32.gmra.mxu0 %v1315
          %v1522 = vpop.f32.mrf.mxu0
          %v1523 = vadd.f32 %v1304, %v1522
          %1524 = vmatmul.f32.gmra.mxu0 %v1318
          %v1525 = vpop.f32.mrf.mxu0
          %v1526 = vadd.f32 %v1304, %v1525
          %1527 = vmatmul.f32.gmra.mxu0 %v1321
          %v1528 = vpop.f32.mrf.mxu0
          %v1529 = vadd.f32 %v1304, %v1528
          %1530 = vmatmul.f32.gmra.mxu0 %v1324
          %v1531 = vpop.f32.mrf.mxu0
          %v1532 = vadd.f32 %v1304, %v1531
          %1533 = vmatmul.f32.gmra.mxu0 %v1327
          %v1534 = vpop.f32.mrf.mxu0
          %v1535 = vadd.f32 %v1304, %v1534
          %1536 = vmatmul.f32.gmra.mxu0 %v1330
          %v1537 = vpop.f32.mrf.mxu0
          %v1538 = vadd.f32 %v1304, %v1537
          %1539 = vmatmul.f32.gmra.mxu0 %v1333
          %v1540 = vpop.f32.mrf.mxu0
          %v1541 = vadd.f32 %v1304, %v1540
          %1542 = vmatmul.f32.gmra.mxu0 %v1336
          %v1543 = vpop.f32.mrf.mxu0
          %v1544 = vadd.f32 %v1304, %v1543
          %1545 = vmatmul.f32.gmra.mxu0 %v1339
          %v1546 = vpop.f32.mrf.mxu0
          %v1547 = vadd.f32 %v1304, %v1546
          %1548 = vmatmul.f32.gmra.mxu0 %v1342
          %v1549 = vpop.f32.mrf.mxu0
          %v1550 = vadd.f32 %v1304, %v1549
          %1551 = vmatmul.f32.gmra.mxu0 %v1345
          %v1552 = vpop.f32.mrf.mxu0
          %v1553 = vadd.f32 %v1304, %v1552
          %1554 = vmatmul.f32.gmra.mxu0 %v1348
          %v1555 = vpop.f32.mrf.mxu0
          %v1556 = vadd.f32 %v1304, %v1555
          %1557 = vmatmul.f32.gmra.mxu0 %v1351
          %v1558 = vpop.f32.mrf.mxu0
          %v1559 = vadd.f32 %v1304, %v1558
          %1560 = vmatmul.f32.gmra.mxu0 %v1354
          %v1561 = vpop.f32.mrf.mxu0
          %v1562 = vadd.f32 %v1304, %v1561
          %1563 = vmatmul.f32.gmra.mxu0 %v1357
          %v1564 = vpop.f32.mrf.mxu0
          %v1565 = vadd.f32 %v1304, %v1564
          %1566 = vdwg.mxu0
          %1567 = vmatpush.msra.mxu0 0.0
          %1568 = vmatpush.msra.mxu0 0.0
          %1569 = vmatpush.msra.mxu0 0.0
          %1570 = vmatpush.msra.mxu0 0.0
          %1571 = vmatpush.msra.mxu0 0.0
          %1572 = vmatpush.msra.mxu0 0.0
          %1573 = vmatpush.msra.mxu0 0.0
          %1574 = vmatpush.msra.mxu0 0.0
          %1575 = vmatpush.msra.mxu0 0.0
          %1576 = vmatpush.msra.mxu0 0.0
          %1577 = vmatpush.msra.mxu0 0.0
          %1578 = vmatpush.msra.mxu0 %v1370
          %1579 = vmatpush.msra.mxu0 %v1295
          %1580 = vmatpush.msra.mxu0 %v1291
          %1581 = vmatpush.msra.mxu0 %v1287
          %1582 = vmatpush.msra.mxu0 %v1283
          %1583 = vmatmul.f32.gmra.mxu0 %v1312
          %v1584 = vpop.f32.mrf.mxu0
          %v1585 = vadd.f32 %v1305, %v1584
          %1586 = vmatmul.f32.gmra.mxu0 %v1315
          %v1587 = vpop.f32.mrf.mxu0
          %v1588 = vadd.f32 %v1305, %v1587
          %1589 = vmatmul.f32.gmra.mxu0 %v1318
          %v1590 = vpop.f32.mrf.mxu0
          %v1591 = vadd.f32 %v1305, %v1590
          %1592 = vmatmul.f32.gmra.mxu0 %v1321
          %v1593 = vpop.f32.mrf.mxu0
          %v1594 = vadd.f32 %v1305, %v1593
          %1595 = vmatmul.f32.gmra.mxu0 %v1324
          %v1596 = vpop.f32.mrf.mxu0
          %v1597 = vadd.f32 %v1305, %v1596
          %1598 = vmatmul.f32.gmra.mxu0 %v1327
          %v1599 = vpop.f32.mrf.mxu0
          %v1600 = vadd.f32 %v1305, %v1599
          %1601 = vmatmul.f32.gmra.mxu0 %v1330
          %v1602 = vpop.f32.mrf.mxu0
          %v1603 = vadd.f32 %v1305, %v1602
          %1604 = vmatmul.f32.gmra.mxu0 %v1333
          %v1605 = vpop.f32.mrf.mxu0
          %v1606 = vadd.f32 %v1305, %v1605
          %1607 = vmatmul.f32.gmra.mxu0 %v1336
          %v1608 = vpop.f32.mrf.mxu0
          %v1609 = vadd.f32 %v1305, %v1608
          %1610 = vmatmul.f32.gmra.mxu0 %v1339
          %v1611 = vpop.f32.mrf.mxu0
          %v1612 = vadd.f32 %v1305, %v1611
          %1613 = vmatmul.f32.gmra.mxu0 %v1342
          %v1614 = vpop.f32.mrf.mxu0
          %v1615 = vadd.f32 %v1305, %v1614
          %1616 = vmatmul.f32.gmra.mxu0 %v1345
          %v1617 = vpop.f32.mrf.mxu0
          %v1618 = vadd.f32 %v1305, %v1617
          %1619 = vmatmul.f32.gmra.mxu0 %v1348
          %v1620 = vpop.f32.mrf.mxu0
          %v1621 = vadd.f32 %v1305, %v1620
          %1622 = vmatmul.f32.gmra.mxu0 %v1351
          %v1623 = vpop.f32.mrf.mxu0
          %v1624 = vadd.f32 %v1305, %v1623
          %1625 = vmatmul.f32.gmra.mxu0 %v1354
          %v1626 = vpop.f32.mrf.mxu0
          %v1627 = vadd.f32 %v1305, %v1626
          %1628 = vmatmul.f32.gmra.mxu0 %v1357
          %v1629 = vpop.f32.mrf.mxu0
          %v1630 = vadd.f32 %v1305, %v1629
          %1631 = vdwg.mxu0
          %s1632 = smul.u32 %s1257, 32
          %s1633 = smul.addr %s1632, 8
          %s1634 = scalar_lea.vmem [#allocation2], %s1633
          %1635 = vst [vmem:[%s1634] sm:$0xff] %v1390
          %1636 = vst [vmem:[%s1634 + $0x8] sm:$0xff] %v1455
          %1637 = vst [vmem:[%s1634 + $0x10] sm:$0xff] %v1393
          %1638 = vst [vmem:[%s1634 + $0x18] sm:$0xff] %v1458
          %1639 = vst [vmem:[%s1634 + $0x20] sm:$0xff] %v1396
          %1640 = vst [vmem:[%s1634 + $0x28] sm:$0xff] %v1461
          %1641 = vst [vmem:[%s1634 + $0x30] sm:$0xff] %v1399
          %1642 = vst [vmem:[%s1634 + $0x38] sm:$0xff] %v1464
          %1643 = vst [vmem:[%s1634 + $0x40] sm:$0xff] %v1402
          %1644 = vst [vmem:[%s1634 + $0x48] sm:$0xff] %v1467
          %1645 = vst [vmem:[%s1634 + $0x50] sm:$0xff] %v1405
          %1646 = vst [vmem:[%s1634 + $0x58] sm:$0xff] %v1470
          %1647 = vst [vmem:[%s1634 + $0x60] sm:$0xff] %v1408
          %1648 = vst [vmem:[%s1634 + $0x68] sm:$0xff] %v1473
          %1649 = vst [vmem:[%s1634 + $0x70] sm:$0xff] %v1411
          %1650 = vst [vmem:[%s1634 + $0x78] sm:$0xff] %v1476
          %1651 = vst [vmem:[%s1634 + $0x80] sm:$0xff] %v1414
          %1652 = vst [vmem:[%s1634 + $0x88] sm:$0xff] %v1479
          %1653 = vst [vmem:[%s1634 + $0x90] sm:$0xff] %v1417
          %1654 = vst [vmem:[%s1634 + $0x98] sm:$0xff] %v1482
          %1655 = vst [vmem:[%s1634 + $0xa0] sm:$0xff] %v1420
          %1656 = vst [vmem:[%s1634 + $0xa8] sm:$0xff] %v1485
          %1657 = vst [vmem:[%s1634 + $0xb0] sm:$0xff] %v1423
          %1658 = vst [vmem:[%s1634 + $0xb8] sm:$0xff] %v1488
          %1659 = vst [vmem:[%s1634 + $0xc0] sm:$0xff] %v1426
          %1660 = vst [vmem:[%s1634 + $0xc8] sm:$0xff] %v1491
          %1661 = vst [vmem:[%s1634 + $0xd0] sm:$0xff] %v1429
          %1662 = vst [vmem:[%s1634 + $0xd8] sm:$0xff] %v1494
          %1663 = vst [vmem:[%s1634 + $0xe0] sm:$0xff] %v1432
          %1664 = vst [vmem:[%s1634 + $0xe8] sm:$0xff] %v1497
          %1665 = vst [vmem:[%s1634 + $0xf0] sm:$0xff] %v1435
          %1666 = vst [vmem:[%s1634 + $0xf8] sm:$0xff] %v1500
          %s1667 = smul.addr %s1632, 8
          %s1668 = scalar_lea.vmem [#allocation3], %s1667
          %1669 = vst [vmem:[%s1668] sm:$0xff] %v1520
          %1670 = vst [vmem:[%s1668 + $0x8] sm:$0xff] %v1585
          %1671 = vst [vmem:[%s1668 + $0x10] sm:$0xff] %v1523
          %1672 = vst [vmem:[%s1668 + $0x18] sm:$0xff] %v1588
          %1673 = vst [vmem:[%s1668 + $0x20] sm:$0xff] %v1526
          %1674 = vst [vmem:[%s1668 + $0x28] sm:$0xff] %v1591
          %1675 = vst [vmem:[%s1668 + $0x30] sm:$0xff] %v1529
          %1676 = vst [vmem:[%s1668 + $0x38] sm:$0xff] %v1594
          %1677 = vst [vmem:[%s1668 + $0x40] sm:$0xff] %v1532
          %1678 = vst [vmem:[%s1668 + $0x48] sm:$0xff] %v1597
          %1679 = vst [vmem:[%s1668 + $0x50] sm:$0xff] %v1535
          %1680 = vst [vmem:[%s1668 + $0x58] sm:$0xff] %v1600
          %1681 = vst [vmem:[%s1668 + $0x60] sm:$0xff] %v1538
          %1682 = vst [vmem:[%s1668 + $0x68] sm:$0xff] %v1603
          %1683 = vst [vmem:[%s1668 + $0x70] sm:$0xff] %v1541
          %1684 = vst [vmem:[%s1668 + $0x78] sm:$0xff] %v1606
          %1685 = vst [vmem:[%s1668 + $0x80] sm:$0xff] %v1544
          %1686 = vst [vmem:[%s1668 + $0x88] sm:$0xff] %v1609
          %1687 = vst [vmem:[%s1668 + $0x90] sm:$0xff] %v1547
          %1688 = vst [vmem:[%s1668 + $0x98] sm:$0xff] %v1612
          %1689 = vst [vmem:[%s1668 + $0xa0] sm:$0xff] %v1550
          %1690 = vst [vmem:[%s1668 + $0xa8] sm:$0xff] %v1615
          %1691 = vst [vmem:[%s1668 + $0xb0] sm:$0xff] %v1553
          %1692 = vst [vmem:[%s1668 + $0xb8] sm:$0xff] %v1618
          %1693 = vst [vmem:[%s1668 + $0xc0] sm:$0xff] %v1556
          %1694 = vst [vmem:[%s1668 + $0xc8] sm:$0xff] %v1621
          %1695 = vst [vmem:[%s1668 + $0xd0] sm:$0xff] %v1559
          %1696 = vst [vmem:[%s1668 + $0xd8] sm:$0xff] %v1624
          %1697 = vst [vmem:[%s1668 + $0xe0] sm:$0xff] %v1562
          %1698 = vst [vmem:[%s1668 + $0xe8] sm:$0xff] %v1627
          %1699 = vst [vmem:[%s1668 + $0xf0] sm:$0xff] %v1565
          %1700 = vst [vmem:[%s1668 + $0xf8] sm:$0xff] %v1630
        $region95: #{tpu_custom_call.1} parent=85 // loop_footer
          %s1261 = sadd.s32 1, %s1257
        $region96: #{tpu_custom_call.1} parent=85 // loop_footer_branch
          %1256 = sbr.rel target = $region92
        $region97: #{tpu_custom_call.1} parent=85 // loop_exit
          _
        %vm1701 = vcmask 523264
        %1702 = vst.msk [vmem:[#allocation4] sm:$0xff] %vm1701, 0.0
        %1703 = vst.msk [vmem:[#allocation4 + $0x8] sm:$0xff] %vm1701, 0.0
        %1704 = vst.msk [vmem:[#allocation4 + $0x10] sm:$0xff] %vm1701, 0.0
        %1705 = vst.msk [vmem:[#allocation4 + $0x18] sm:$0xff] %vm1701, 0.0
        %1706 = vst.msk [vmem:[#allocation4 + $0x20] sm:$0xff] %vm1701, 0.0
        %1707 = vst.msk [vmem:[#allocation4 + $0x28] sm:$0xff] %vm1701, 0.0
        %1708 = vst.msk [vmem:[#allocation4 + $0x30] sm:$0xff] %vm1701, 0.0
        %1709 = vst.msk [vmem:[#allocation4 + $0x38] sm:$0xff] %vm1701, 0.0
        %1710 = vst.msk [vmem:[#allocation4 + $0x40] sm:$0xff] %vm1701, 0.0
        %1711 = vst.msk [vmem:[#allocation4 + $0x48] sm:$0xff] %vm1701, 0.0
        %1712 = vst.msk [vmem:[#allocation4 + $0x50] sm:$0xff] %vm1701, 0.0
        %1713 = vst.msk [vmem:[#allocation4 + $0x58] sm:$0xff] %vm1701, 0.0
        %1714 = vst.msk [vmem:[#allocation4 + $0x60] sm:$0xff] %vm1701, 0.0
        %1715 = vst.msk [vmem:[#allocation4 + $0x68] sm:$0xff] %vm1701, 0.0
        %1716 = vst.msk [vmem:[#allocation4 + $0x70] sm:$0xff] %vm1701, 0.0
        %1717 = vst.msk [vmem:[#allocation4 + $0x78] sm:$0xff] %vm1701, 0.0
        %1718 = vst.msk [vmem:[#allocation5] sm:$0xff] %vm1701, 0.0
        %1719 = vst.msk [vmem:[#allocation5 + $0x8] sm:$0xff] %vm1701, 0.0
        %1720 = vst.msk [vmem:[#allocation5 + $0x10] sm:$0xff] %vm1701, 0.0
        %1721 = vst.msk [vmem:[#allocation5 + $0x18] sm:$0xff] %vm1701, 0.0
        %1722 = vst.msk [vmem:[#allocation5 + $0x20] sm:$0xff] %vm1701, 0.0
        %1723 = vst.msk [vmem:[#allocation5 + $0x28] sm:$0xff] %vm1701, 0.0
        %1724 = vst.msk [vmem:[#allocation5 + $0x30] sm:$0xff] %vm1701, 0.0
        %1725 = vst.msk [vmem:[#allocation5 + $0x38] sm:$0xff] %vm1701, 0.0
        %1726 = vst.msk [vmem:[#allocation5 + $0x40] sm:$0xff] %vm1701, 0.0
        %1727 = vst.msk [vmem:[#allocation5 + $0x48] sm:$0xff] %vm1701, 0.0
        %1728 = vst.msk [vmem:[#allocation5 + $0x50] sm:$0xff] %vm1701, 0.0
        %1729 = vst.msk [vmem:[#allocation5 + $0x58] sm:$0xff] %vm1701, 0.0
        %1730 = vst.msk [vmem:[#allocation5 + $0x60] sm:$0xff] %vm1701, 0.0
        %1731 = vst.msk [vmem:[#allocation5 + $0x68] sm:$0xff] %vm1701, 0.0
        %1732 = vst.msk [vmem:[#allocation5 + $0x70] sm:$0xff] %vm1701, 0.0
        %1733 = vst.msk [vmem:[#allocation5 + $0x78] sm:$0xff] %vm1701, 0.0
        %1734 = vst.msk [vmem:[#allocation6] sm:$0xff] %vm1701, 0.0
        %1735 = vst.msk [vmem:[#allocation6 + $0x8] sm:$0xff] %vm1701, 0.0
        %1736 = vst.msk [vmem:[#allocation6 + $0x10] sm:$0xff] %vm1701, 0.0
        %1737 = vst.msk [vmem:[#allocation6 + $0x18] sm:$0xff] %vm1701, 0.0
        %1738 = vst.msk [vmem:[#allocation6 + $0x20] sm:$0xff] %vm1701, 0.0
        %1739 = vst.msk [vmem:[#allocation6 + $0x28] sm:$0xff] %vm1701, 0.0
        %1740 = vst.msk [vmem:[#allocation6 + $0x30] sm:$0xff] %vm1701, 0.0
        %1741 = vst.msk [vmem:[#allocation6 + $0x38] sm:$0xff] %vm1701, 0.0
        %1742 = vst.msk [vmem:[#allocation6 + $0x40] sm:$0xff] %vm1701, 0.0
        %1743 = vst.msk [vmem:[#allocation6 + $0x48] sm:$0xff] %vm1701, 0.0
        %1744 = vst.msk [vmem:[#allocation6 + $0x50] sm:$0xff] %vm1701, 0.0
        %1745 = vst.msk [vmem:[#allocation6 + $0x58] sm:$0xff] %vm1701, 0.0
        %1746 = vst.msk [vmem:[#allocation6 + $0x60] sm:$0xff] %vm1701, 0.0
        %1747 = vst.msk [vmem:[#allocation6 + $0x68] sm:$0xff] %vm1701, 0.0
        %1748 = vst.msk [vmem:[#allocation6 + $0x70] sm:$0xff] %vm1701, 0.0
        %1749 = vst.msk [vmem:[#allocation6 + $0x78] sm:$0xff] %vm1701, 0.0
        %1750 = vst.msk [vmem:[#allocation7] sm:$0xff] %vm1701, 0.0
        %1751 = vst.msk [vmem:[#allocation7 + $0x8] sm:$0xff] %vm1701, 0.0
        %1752 = vst.msk [vmem:[#allocation7 + $0x10] sm:$0xff] %vm1701, 0.0
        %1753 = vst.msk [vmem:[#allocation7 + $0x18] sm:$0xff] %vm1701, 0.0
        %1754 = vst.msk [vmem:[#allocation7 + $0x20] sm:$0xff] %vm1701, 0.0
        %1755 = vst.msk [vmem:[#allocation7 + $0x28] sm:$0xff] %vm1701, 0.0
        %1756 = vst.msk [vmem:[#allocation7 + $0x30] sm:$0xff] %vm1701, 0.0
        %1757 = vst.msk [vmem:[#allocation7 + $0x38] sm:$0xff] %vm1701, 0.0
        %1758 = vst.msk [vmem:[#allocation7 + $0x40] sm:$0xff] %vm1701, 0.0
        %1759 = vst.msk [vmem:[#allocation7 + $0x48] sm:$0xff] %vm1701, 0.0
        %1760 = vst.msk [vmem:[#allocation7 + $0x50] sm:$0xff] %vm1701, 0.0
        %1761 = vst.msk [vmem:[#allocation7 + $0x58] sm:$0xff] %vm1701, 0.0
        %1762 = vst.msk [vmem:[#allocation7 + $0x60] sm:$0xff] %vm1701, 0.0
        %1763 = vst.msk [vmem:[#allocation7 + $0x68] sm:$0xff] %vm1701, 0.0
        %1764 = vst.msk [vmem:[#allocation7 + $0x70] sm:$0xff] %vm1701, 0.0
        %1765 = vst.msk [vmem:[#allocation7 + $0x78] sm:$0xff] %vm1701, 0.0
        loop: start=0, step=1, limit=14
        $region98: #{tpu_custom_call.1} parent=85 // loop_pre_header
          _
        $region99: #{tpu_custom_call.1} parent=85 // loop_header
          %s1767 = sphi 0, %s1771
          %p1768 = scmp.ge.s32.totalorder %s1767, 14
        $region100: #{tpu_custom_call.1} parent=85 // loop_header_branch
          %1770 = sbr.rel (%p1768) target = $region104
        $region101: #{tpu_custom_call.1} parent=85 // loop_body
          %s1772 = ssub.s32 13, %s1767
          %v1773 = vld [vmem:[%s1252] sm:$0xff]
          %v1774 = vld [vmem:[%s1252 + $0x8] sm:$0xff]
          %v1775 = vld [vmem:[%s1252 + $0x10] sm:$0xff]
          %v1776 = vld [vmem:[%s1252 + $0x18] sm:$0xff]
          %v1777 = vld [vmem:[%s1252 + $0x20] sm:$0xff]
          %v1778 = vld [vmem:[%s1252 + $0x28] sm:$0xff]
          %v1779 = vld [vmem:[%s1252 + $0x30] sm:$0xff]
          %v1780 = vld [vmem:[%s1252 + $0x38] sm:$0xff]
          %v1781 = vld [vmem:[%s1252 + $0x40] sm:$0xff]
          %v1782 = vld [vmem:[%s1252 + $0x48] sm:$0xff]
          %v1783 = vld [vmem:[%s1252 + $0x50] sm:$0xff]
          %v1784 = vld [vmem:[%s1252 + $0x58] sm:$0xff]
          %v1785 = vld [vmem:[%s1252 + $0x60] sm:$0xff]
          %v1786 = vld [vmem:[%s1252 + $0x68] sm:$0xff]
          %v1787 = vld [vmem:[%s1252 + $0x70] sm:$0xff]
          %v1788 = vld [vmem:[%s1252 + $0x78] sm:$0xff]
          %v1789 = vld [vmem:[#allocation4] sm:$0xff]
          %v1790 = vld [vmem:[#allocation4 + $0x8] sm:$0xff]
          %v1791 = vld [vmem:[#allocation4 + $0x10] sm:$0xff]
          %v1792 = vld [vmem:[#allocation4 + $0x18] sm:$0xff]
          %v1793 = vld [vmem:[#allocation4 + $0x20] sm:$0xff]
          %v1794 = vld [vmem:[#allocation4 + $0x28] sm:$0xff]
          %v1795 = vld [vmem:[#allocation4 + $0x30] sm:$0xff]
          %v1796 = vld [vmem:[#allocation4 + $0x38] sm:$0xff]
          %v1797 = vld [vmem:[#allocation4 + $0x40] sm:$0xff]
          %v1798 = vld [vmem:[#allocation4 + $0x48] sm:$0xff]
          %v1799 = vld [vmem:[#allocation4 + $0x50] sm:$0xff]
          %v1800 = vld [vmem:[#allocation4 + $0x58] sm:$0xff]
          %v1801 = vld [vmem:[#allocation4 + $0x60] sm:$0xff]
          %v1802 = vld [vmem:[#allocation4 + $0x68] sm:$0xff]
          %v1803 = vld [vmem:[#allocation4 + $0x70] sm:$0xff]
          %v1804 = vld [vmem:[#allocation4 + $0x78] sm:$0xff]
          %v1805 = vld [vmem:[#allocation5] sm:$0xff]
          %v1806 = vld [vmem:[#allocation5 + $0x8] sm:$0xff]
          %v1807 = vld [vmem:[#allocation5 + $0x10] sm:$0xff]
          %v1808 = vld [vmem:[#allocation5 + $0x18] sm:$0xff]
          %v1809 = vld [vmem:[#allocation5 + $0x20] sm:$0xff]
          %v1810 = vld [vmem:[#allocation5 + $0x28] sm:$0xff]
          %v1811 = vld [vmem:[#allocation5 + $0x30] sm:$0xff]
          %v1812 = vld [vmem:[#allocation5 + $0x38] sm:$0xff]
          %v1813 = vld [vmem:[#allocation5 + $0x40] sm:$0xff]
          %v1814 = vld [vmem:[#allocation5 + $0x48] sm:$0xff]
          %v1815 = vld [vmem:[#allocation5 + $0x50] sm:$0xff]
          %v1816 = vld [vmem:[#allocation5 + $0x58] sm:$0xff]
          %v1817 = vld [vmem:[#allocation5 + $0x60] sm:$0xff]
          %v1818 = vld [vmem:[#allocation5 + $0x68] sm:$0xff]
          %v1819 = vld [vmem:[#allocation5 + $0x70] sm:$0xff]
          %v1820 = vld [vmem:[#allocation5 + $0x78] sm:$0xff]
          %v1821 = vld [vmem:[#allocation6] sm:$0xff]
          %v1822 = vld [vmem:[#allocation6 + $0x8] sm:$0xff]
          %v1823 = vld [vmem:[#allocation6 + $0x10] sm:$0xff]
          %v1824 = vld [vmem:[#allocation6 + $0x18] sm:$0xff]
          %v1825 = vld [vmem:[#allocation6 + $0x20] sm:$0xff]
          %v1826 = vld [vmem:[#allocation6 + $0x28] sm:$0xff]
          %v1827 = vld [vmem:[#allocation6 + $0x30] sm:$0xff]
          %v1828 = vld [vmem:[#allocation6 + $0x38] sm:$0xff]
          %v1829 = vld [vmem:[#allocation6 + $0x40] sm:$0xff]
          %v1830 = vld [vmem:[#allocation6 + $0x48] sm:$0xff]
          %v1831 = vld [vmem:[#allocation6 + $0x50] sm:$0xff]
          %v1832 = vld [vmem:[#allocation6 + $0x58] sm:$0xff]
          %v1833 = vld [vmem:[#allocation6 + $0x60] sm:$0xff]
          %v1834 = vld [vmem:[#allocation6 + $0x68] sm:$0xff]
          %v1835 = vld [vmem:[#allocation6 + $0x70] sm:$0xff]
          %v1836 = vld [vmem:[#allocation6 + $0x78] sm:$0xff]
          %v1837 = vld [vmem:[#allocation7] sm:$0xff]
          %v1838 = vld [vmem:[#allocation7 + $0x8] sm:$0xff]
          %v1839 = vld [vmem:[#allocation7 + $0x10] sm:$0xff]
          %v1840 = vld [vmem:[#allocation7 + $0x18] sm:$0xff]
          %v1841 = vld [vmem:[#allocation7 + $0x20] sm:$0xff]
          %v1842 = vld [vmem:[#allocation7 + $0x28] sm:$0xff]
          %v1843 = vld [vmem:[#allocation7 + $0x30] sm:$0xff]
          %v1844 = vld [vmem:[#allocation7 + $0x38] sm:$0xff]
          %v1845 = vld [vmem:[#allocation7 + $0x40] sm:$0xff]
          %v1846 = vld [vmem:[#allocation7 + $0x48] sm:$0xff]
          %v1847 = vld [vmem:[#allocation7 + $0x50] sm:$0xff]
          %v1848 = vld [vmem:[#allocation7 + $0x58] sm:$0xff]
          %v1849 = vld [vmem:[#allocation7 + $0x60] sm:$0xff]
          %v1850 = vld [vmem:[#allocation7 + $0x68] sm:$0xff]
          %v1851 = vld [vmem:[#allocation7 + $0x70] sm:$0xff]
          %v1852 = vld [vmem:[#allocation7 + $0x78] sm:$0xff]
          %s1853 = smul.u32 %s1767, 32
          %s1854 = smul.addr %s1853, 8
          %s1855 = scalar_lea.vmem [#allocation2], %s1854
          %v1856 = vld [vmem:[%s1855] sm:$0xff]
          %v1857 = vld [vmem:[%s1855 + $0x8] sm:$0xff]
          %v1858 = vld [vmem:[%s1855 + $0x10] sm:$0xff]
          %v1859 = vld [vmem:[%s1855 + $0x18] sm:$0xff]
          %v1860 = vld [vmem:[%s1855 + $0x20] sm:$0xff]
          %v1861 = vld [vmem:[%s1855 + $0x28] sm:$0xff]
          %v1862 = vld [vmem:[%s1855 + $0x30] sm:$0xff]
          %v1863 = vld [vmem:[%s1855 + $0x38] sm:$0xff]
          %v1864 = vld [vmem:[%s1855 + $0x40] sm:$0xff]
          %v1865 = vld [vmem:[%s1855 + $0x48] sm:$0xff]
          %v1866 = vld [vmem:[%s1855 + $0x50] sm:$0xff]
          %v1867 = vld [vmem:[%s1855 + $0x58] sm:$0xff]
          %v1868 = vld [vmem:[%s1855 + $0x60] sm:$0xff]
          %v1869 = vld [vmem:[%s1855 + $0x68] sm:$0xff]
          %v1870 = vld [vmem:[%s1855 + $0x70] sm:$0xff]
          %v1871 = vld [vmem:[%s1855 + $0x78] sm:$0xff]
          %v1872 = vld [vmem:[%s1855 + $0x80] sm:$0xff]
          %v1873 = vld [vmem:[%s1855 + $0x88] sm:$0xff]
          %v1874 = vld [vmem:[%s1855 + $0x90] sm:$0xff]
          %v1875 = vld [vmem:[%s1855 + $0x98] sm:$0xff]
          %v1876 = vld [vmem:[%s1855 + $0xa0] sm:$0xff]
          %v1877 = vld [vmem:[%s1855 + $0xa8] sm:$0xff]
          %v1878 = vld [vmem:[%s1855 + $0xb0] sm:$0xff]
          %v1879 = vld [vmem:[%s1855 + $0xb8] sm:$0xff]
          %v1880 = vld [vmem:[%s1855 + $0xc0] sm:$0xff]
          %v1881 = vld [vmem:[%s1855 + $0xc8] sm:$0xff]
          %v1882 = vld [vmem:[%s1855 + $0xd0] sm:$0xff]
          %v1883 = vld [vmem:[%s1855 + $0xd8] sm:$0xff]
          %v1884 = vld [vmem:[%s1855 + $0xe0] sm:$0xff]
          %v1885 = vld [vmem:[%s1855 + $0xe8] sm:$0xff]
          %v1886 = vld [vmem:[%s1855 + $0xf0] sm:$0xff]
          %v1887 = vld [vmem:[%s1855 + $0xf8] sm:$0xff]
          %v1888 = vld [vmem:[%s3] sm:$0xff]
          %v1889 = vld [vmem:[%s3 + $0x8] sm:$0xff]
          %v1890 = vld [vmem:[%s3 + $0x10] sm:$0xff]
          %v1891 = vld [vmem:[%s3 + $0x18] sm:$0xff]
          %v1892 = vld [vmem:[%s3 + $0x20] sm:$0xff]
          %v1893 = vld [vmem:[%s3 + $0x28] sm:$0xff]
          %v1894 = vld [vmem:[%s3 + $0x30] sm:$0xff]
          %v1895 = vld [vmem:[%s3 + $0x38] sm:$0xff]
          %v1896 = vld [vmem:[%s3 + $0x40] sm:$0xff]
          %v1897 = vld [vmem:[%s3 + $0x48] sm:$0xff]
          %v1898 = vld [vmem:[%s3 + $0x50] sm:$0xff]
          %v1899 = vld [vmem:[%s3 + $0x58] sm:$0xff]
          %v1900 = vld [vmem:[%s3 + $0x60] sm:$0xff]
          %v1901 = vld [vmem:[%s3 + $0x68] sm:$0xff]
          %v1902 = vld [vmem:[%s3 + $0x70] sm:$0xff]
          %v1903 = vld [vmem:[%s3 + $0x78] sm:$0xff]
          %v1905 = vsel %vm1701, %v1789, 0
          %v1908 = vsel %vm1701, %v1790, 0
          %v1911 = vsel %vm1701, %v1791, 0
          %v1914 = vsel %vm1701, %v1792, 0
          %v1917 = vsel %vm1701, %v1793, 0
          %v1920 = vsel %vm1701, %v1794, 0
          %v1923 = vsel %vm1701, %v1795, 0
          %v1926 = vsel %vm1701, %v1796, 0
          %v1929 = vsel %vm1701, %v1797, 0
          %v1932 = vsel %vm1701, %v1798, 0
          %v1935 = vsel %vm1701, %v1799, 0
          %v1938 = vsel %vm1701, %v1800, 0
          %v1941 = vsel %vm1701, %v1801, 0
          %v1944 = vsel %vm1701, %v1802, 0
          %v1947 = vsel %vm1701, %v1803, 0
          %v1950 = vsel %vm1701, %v1804, 0
          %1952 = vmatpush.msra.mxu0 0.0
          %1953 = vmatpush.msra.mxu0 0.0
          %1954 = vmatpush.msra.mxu0 0.0
          %1955 = vmatpush.msra.mxu0 0.0
          %1956 = vmatpush.msra.mxu0 0.0
          %1957 = vmatpush.msra.mxu0 0.0
          %1958 = vmatpush.msra.mxu0 0.0
          %1959 = vmatpush.msra.mxu0 0.0
          %1960 = vmatpush.msra.mxu0 %v1902
          %1961 = vmatpush.msra.mxu0 %v1900
          %1962 = vmatpush.msra.mxu0 %v1898
          %1963 = vmatpush.msra.mxu0 %v1896
          %1964 = vmatpush.msra.mxu0 %v1894
          %1965 = vmatpush.msra.mxu0 %v1892
          %1966 = vmatpush.msra.mxu0 %v1890
          %1967 = vmatpush.msra.mxu0 %v1888
          %1968 = vmatmul.f32.gmra.mxu0 %v1905
          %v1969 = vpop.f32.mrf.mxu0
          %v1970 = vadd.f32 0.0, %v1969
          %1971 = vmatmul.f32.gmra.mxu0 %v1908
          %v1972 = vpop.f32.mrf.mxu0
          %v1973 = vadd.f32 0.0, %v1972
          %1974 = vmatmul.f32.gmra.mxu0 %v1911
          %v1975 = vpop.f32.mrf.mxu0
          %v1976 = vadd.f32 0.0, %v1975
          %1977 = vmatmul.f32.gmra.mxu0 %v1914
          %v1978 = vpop.f32.mrf.mxu0
          %v1979 = vadd.f32 0.0, %v1978
          %1980 = vmatmul.f32.gmra.mxu0 %v1917
          %v1981 = vpop.f32.mrf.mxu0
          %v1982 = vadd.f32 0.0, %v1981
          %1983 = vmatmul.f32.gmra.mxu0 %v1920
          %v1984 = vpop.f32.mrf.mxu0
          %v1985 = vadd.f32 0.0, %v1984
          %1986 = vmatmul.f32.gmra.mxu0 %v1923
          %v1987 = vpop.f32.mrf.mxu0
          %v1988 = vadd.f32 0.0, %v1987
          %1989 = vmatmul.f32.gmra.mxu0 %v1926
          %v1990 = vpop.f32.mrf.mxu0
          %v1991 = vadd.f32 0.0, %v1990
          %1992 = vmatmul.f32.gmra.mxu0 %v1929
          %v1993 = vpop.f32.mrf.mxu0
          %v1994 = vadd.f32 0.0, %v1993
          %1995 = vmatmul.f32.gmra.mxu0 %v1932
          %v1996 = vpop.f32.mrf.mxu0
          %v1997 = vadd.f32 0.0, %v1996
          %1998 = vmatmul.f32.gmra.mxu0 %v1935
          %v1999 = vpop.f32.mrf.mxu0
          %v2000 = vadd.f32 0.0, %v1999
          %2001 = vmatmul.f32.gmra.mxu0 %v1938
          %v2002 = vpop.f32.mrf.mxu0
          %v2003 = vadd.f32 0.0, %v2002
          %2004 = vmatmul.f32.gmra.mxu0 %v1941
          %v2005 = vpop.f32.mrf.mxu0
          %v2006 = vadd.f32 0.0, %v2005
          %2007 = vmatmul.f32.gmra.mxu0 %v1944
          %v2008 = vpop.f32.mrf.mxu0
          %v2009 = vadd.f32 0.0, %v2008
          %2010 = vmatmul.f32.gmra.mxu0 %v1947
          %v2011 = vpop.f32.mrf.mxu0
          %v2012 = vadd.f32 0.0, %v2011
          %2013 = vmatmul.f32.gmra.mxu0 %v1950
          %v2014 = vpop.f32.mrf.mxu0
          %v2015 = vadd.f32 0.0, %v2014
          %2016 = vdwg.mxu0
          %2017 = vmatpush.msra.mxu0 0.0
          %2018 = vmatpush.msra.mxu0 0.0
          %2019 = vmatpush.msra.mxu0 0.0
          %2020 = vmatpush.msra.mxu0 0.0
          %2021 = vmatpush.msra.mxu0 0.0
          %2022 = vmatpush.msra.mxu0 0.0
          %2023 = vmatpush.msra.mxu0 0.0
          %2024 = vmatpush.msra.mxu0 0.0
          %2025 = vmatpush.msra.mxu0 %v1903
          %2026 = vmatpush.msra.mxu0 %v1901
          %2027 = vmatpush.msra.mxu0 %v1899
          %2028 = vmatpush.msra.mxu0 %v1897
          %2029 = vmatpush.msra.mxu0 %v1895
          %2030 = vmatpush.msra.mxu0 %v1893
          %2031 = vmatpush.msra.mxu0 %v1891
          %2032 = vmatpush.msra.mxu0 %v1889
          %2033 = vmatmul.f32.gmra.mxu0 %v1905
          %v2034 = vpop.f32.mrf.mxu0
          %v2035 = vadd.f32 0.0, %v2034
          %2036 = vmatmul.f32.gmra.mxu0 %v1908
          %v2037 = vpop.f32.mrf.mxu0
          %v2038 = vadd.f32 0.0, %v2037
          %2039 = vmatmul.f32.gmra.mxu0 %v1911
          %v2040 = vpop.f32.mrf.mxu0
          %v2041 = vadd.f32 0.0, %v2040
          %2042 = vmatmul.f32.gmra.mxu0 %v1914
          %v2043 = vpop.f32.mrf.mxu0
          %v2044 = vadd.f32 0.0, %v2043
          %2045 = vmatmul.f32.gmra.mxu0 %v1917
          %v2046 = vpop.f32.mrf.mxu0
          %v2047 = vadd.f32 0.0, %v2046
          %2048 = vmatmul.f32.gmra.mxu0 %v1920
          %v2049 = vpop.f32.mrf.mxu0
          %v2050 = vadd.f32 0.0, %v2049
          %2051 = vmatmul.f32.gmra.mxu0 %v1923
          %v2052 = vpop.f32.mrf.mxu0
          %v2053 = vadd.f32 0.0, %v2052
          %2054 = vmatmul.f32.gmra.mxu0 %v1926
          %v2055 = vpop.f32.mrf.mxu0
          %v2056 = vadd.f32 0.0, %v2055
          %2057 = vmatmul.f32.gmra.mxu0 %v1929
          %v2058 = vpop.f32.mrf.mxu0
          %v2059 = vadd.f32 0.0, %v2058
          %2060 = vmatmul.f32.gmra.mxu0 %v1932
          %v2061 = vpop.f32.mrf.mxu0
          %v2062 = vadd.f32 0.0, %v2061
          %2063 = vmatmul.f32.gmra.mxu0 %v1935
          %v2064 = vpop.f32.mrf.mxu0
          %v2065 = vadd.f32 0.0, %v2064
          %2066 = vmatmul.f32.gmra.mxu0 %v1938
          %v2067 = vpop.f32.mrf.mxu0
          %v2068 = vadd.f32 0.0, %v2067
          %2069 = vmatmul.f32.gmra.mxu0 %v1941
          %v2070 = vpop.f32.mrf.mxu0
          %v2071 = vadd.f32 0.0, %v2070
          %2072 = vmatmul.f32.gmra.mxu0 %v1944
          %v2073 = vpop.f32.mrf.mxu0
          %v2074 = vadd.f32 0.0, %v2073
          %2075 = vmatmul.f32.gmra.mxu0 %v1947
          %v2076 = vpop.f32.mrf.mxu0
          %v2077 = vadd.f32 0.0, %v2076
          %2078 = vmatmul.f32.gmra.mxu0 %v1950
          %v2079 = vpop.f32.mrf.mxu0
          %v2080 = vadd.f32 0.0, %v2079
          %2081 = vdwg.mxu0
          %v2082 = vadd.f32 %v1856, %v1970
          %v2083 = vadd.f32 %v1857, %v2035
          %v2084 = vadd.f32 %v1858, %v1973
          %v2085 = vadd.f32 %v1859, %v2038
          %v2086 = vadd.f32 %v1860, %v1976
          %v2087 = vadd.f32 %v1861, %v2041
          %v2088 = vadd.f32 %v1862, %v1979
          %v2089 = vadd.f32 %v1863, %v2044
          %v2090 = vadd.f32 %v1864, %v1982
          %v2091 = vadd.f32 %v1865, %v2047
          %v2092 = vadd.f32 %v1866, %v1985
          %v2093 = vadd.f32 %v1867, %v2050
          %v2094 = vadd.f32 %v1868, %v1988
          %v2095 = vadd.f32 %v1869, %v2053
          %v2096 = vadd.f32 %v1870, %v1991
          %v2097 = vadd.f32 %v1871, %v2056
          %v2098 = vadd.f32 %v1872, %v1994
          %v2099 = vadd.f32 %v1873, %v2059
          %v2100 = vadd.f32 %v1874, %v1997
          %v2101 = vadd.f32 %v1875, %v2062
          %v2102 = vadd.f32 %v1876, %v2000
          %v2103 = vadd.f32 %v1877, %v2065
          %v2104 = vadd.f32 %v1878, %v2003
          %v2105 = vadd.f32 %v1879, %v2068
          %v2106 = vadd.f32 %v1880, %v2006
          %v2107 = vadd.f32 %v1881, %v2071
          %v2108 = vadd.f32 %v1882, %v2009
          %v2109 = vadd.f32 %v1883, %v2074
          %v2110 = vadd.f32 %v1884, %v2012
          %v2111 = vadd.f32 %v1885, %v2077
          %v2112 = vadd.f32 %v1886, %v2015
          %v2113 = vadd.f32 %v1887, %v2080
          %s2114 = smul.u32 %s1772, 32
          %s2115 = smul.addr %s2114, 8
          %s2116 = scalar_lea.vmem [#allocation3], %s2115
          %v2117 = vld [vmem:[%s2116] sm:$0xff]
          %v2118 = vld [vmem:[%s2116 + $0x8] sm:$0xff]
          %v2119 = vld [vmem:[%s2116 + $0x10] sm:$0xff]
          %v2120 = vld [vmem:[%s2116 + $0x18] sm:$0xff]
          %v2121 = vld [vmem:[%s2116 + $0x20] sm:$0xff]
          %v2122 = vld [vmem:[%s2116 + $0x28] sm:$0xff]
          %v2123 = vld [vmem:[%s2116 + $0x30] sm:$0xff]
          %v2124 = vld [vmem:[%s2116 + $0x38] sm:$0xff]
          %v2125 = vld [vmem:[%s2116 + $0x40] sm:$0xff]
          %v2126 = vld [vmem:[%s2116 + $0x48] sm:$0xff]
          %v2127 = vld [vmem:[%s2116 + $0x50] sm:$0xff]
          %v2128 = vld [vmem:[%s2116 + $0x58] sm:$0xff]
          %v2129 = vld [vmem:[%s2116 + $0x60] sm:$0xff]
          %v2130 = vld [vmem:[%s2116 + $0x68] sm:$0xff]
          %v2131 = vld [vmem:[%s2116 + $0x70] sm:$0xff]
          %v2132 = vld [vmem:[%s2116 + $0x78] sm:$0xff]
          %v2133 = vld [vmem:[%s2116 + $0x80] sm:$0xff]
          %v2134 = vld [vmem:[%s2116 + $0x88] sm:$0xff]
          %v2135 = vld [vmem:[%s2116 + $0x90] sm:$0xff]
          %v2136 = vld [vmem:[%s2116 + $0x98] sm:$0xff]
          %v2137 = vld [vmem:[%s2116 + $0xa0] sm:$0xff]
          %v2138 = vld [vmem:[%s2116 + $0xa8] sm:$0xff]
          %v2139 = vld [vmem:[%s2116 + $0xb0] sm:$0xff]
          %v2140 = vld [vmem:[%s2116 + $0xb8] sm:$0xff]
          %v2141 = vld [vmem:[%s2116 + $0xc0] sm:$0xff]
          %v2142 = vld [vmem:[%s2116 + $0xc8] sm:$0xff]
          %v2143 = vld [vmem:[%s2116 + $0xd0] sm:$0xff]
          %v2144 = vld [vmem:[%s2116 + $0xd8] sm:$0xff]
          %v2145 = vld [vmem:[%s2116 + $0xe0] sm:$0xff]
          %v2146 = vld [vmem:[%s2116 + $0xe8] sm:$0xff]
          %v2147 = vld [vmem:[%s2116 + $0xf0] sm:$0xff]
          %v2148 = vld [vmem:[%s2116 + $0xf8] sm:$0xff]
          %s2149 = scalar_lea.vmem %s3, 128
          %v2150 = vld [vmem:[%s2149] sm:$0xff]
          %v2151 = vld [vmem:[%s2149 + $0x8] sm:$0xff]
          %v2152 = vld [vmem:[%s2149 + $0x10] sm:$0xff]
          %v2153 = vld [vmem:[%s2149 + $0x18] sm:$0xff]
          %v2154 = vld [vmem:[%s2149 + $0x20] sm:$0xff]
          %v2155 = vld [vmem:[%s2149 + $0x28] sm:$0xff]
          %v2156 = vld [vmem:[%s2149 + $0x30] sm:$0xff]
          %v2157 = vld [vmem:[%s2149 + $0x38] sm:$0xff]
          %v2158 = vld [vmem:[%s2149 + $0x40] sm:$0xff]
          %v2159 = vld [vmem:[%s2149 + $0x48] sm:$0xff]
          %v2160 = vld [vmem:[%s2149 + $0x50] sm:$0xff]
          %v2161 = vld [vmem:[%s2149 + $0x58] sm:$0xff]
          %v2162 = vld [vmem:[%s2149 + $0x60] sm:$0xff]
          %v2163 = vld [vmem:[%s2149 + $0x68] sm:$0xff]
          %v2164 = vld [vmem:[%s2149 + $0x70] sm:$0xff]
          %v2165 = vld [vmem:[%s2149 + $0x78] sm:$0xff]
          %v2167 = vsel %vm1701, %v1821, 0
          %v2170 = vsel %vm1701, %v1822, 0
          %v2173 = vsel %vm1701, %v1823, 0
          %v2176 = vsel %vm1701, %v1824, 0
          %v2179 = vsel %vm1701, %v1825, 0
          %v2182 = vsel %vm1701, %v1826, 0
          %v2185 = vsel %vm1701, %v1827, 0
          %v2188 = vsel %vm1701, %v1828, 0
          %v2191 = vsel %vm1701, %v1829, 0
          %v2194 = vsel %vm1701, %v1830, 0
          %v2197 = vsel %vm1701, %v1831, 0
          %v2200 = vsel %vm1701, %v1832, 0
          %v2203 = vsel %vm1701, %v1833, 0
          %v2206 = vsel %vm1701, %v1834, 0
          %v2209 = vsel %vm1701, %v1835, 0
          %v2212 = vsel %vm1701, %v1836, 0
          %2214 = vmatpush.msra.mxu0 0.0
          %2215 = vmatpush.msra.mxu0 0.0
          %2216 = vmatpush.msra.mxu0 0.0
          %2217 = vmatpush.msra.mxu0 0.0
          %2218 = vmatpush.msra.mxu0 0.0
          %2219 = vmatpush.msra.mxu0 0.0
          %2220 = vmatpush.msra.mxu0 0.0
          %2221 = vmatpush.msra.mxu0 0.0
          %2222 = vmatpush.msra.mxu0 %v2164
          %2223 = vmatpush.msra.mxu0 %v2162
          %2224 = vmatpush.msra.mxu0 %v2160
          %2225 = vmatpush.msra.mxu0 %v2158
          %2226 = vmatpush.msra.mxu0 %v2156
          %2227 = vmatpush.msra.mxu0 %v2154
          %2228 = vmatpush.msra.mxu0 %v2152
          %2229 = vmatpush.msra.mxu0 %v2150
          %2230 = vmatmul.f32.gmra.mxu0 %v2167
          %v2231 = vpop.f32.mrf.mxu0
          %v2232 = vadd.f32 0.0, %v2231
          %2233 = vmatmul.f32.gmra.mxu0 %v2170
          %v2234 = vpop.f32.mrf.mxu0
          %v2235 = vadd.f32 0.0, %v2234
          %2236 = vmatmul.f32.gmra.mxu0 %v2173
          %v2237 = vpop.f32.mrf.mxu0
          %v2238 = vadd.f32 0.0, %v2237
          %2239 = vmatmul.f32.gmra.mxu0 %v2176
          %v2240 = vpop.f32.mrf.mxu0
          %v2241 = vadd.f32 0.0, %v2240
          %2242 = vmatmul.f32.gmra.mxu0 %v2179
          %v2243 = vpop.f32.mrf.mxu0
          %v2244 = vadd.f32 0.0, %v2243
          %2245 = vmatmul.f32.gmra.mxu0 %v2182
          %v2246 = vpop.f32.mrf.mxu0
          %v2247 = vadd.f32 0.0, %v2246
          %2248 = vmatmul.f32.gmra.mxu0 %v2185
          %v2249 = vpop.f32.mrf.mxu0
          %v2250 = vadd.f32 0.0, %v2249
          %2251 = vmatmul.f32.gmra.mxu0 %v2188
          %v2252 = vpop.f32.mrf.mxu0
          %v2253 = vadd.f32 0.0, %v2252
          %2254 = vmatmul.f32.gmra.mxu0 %v2191
          %v2255 = vpop.f32.mrf.mxu0
          %v2256 = vadd.f32 0.0, %v2255
          %2257 = vmatmul.f32.gmra.mxu0 %v2194
          %v2258 = vpop.f32.mrf.mxu0
          %v2259 = vadd.f32 0.0, %v2258
          %2260 = vmatmul.f32.gmra.mxu0 %v2197
          %v2261 = vpop.f32.mrf.mxu0
          %v2262 = vadd.f32 0.0, %v2261
          %2263 = vmatmul.f32.gmra.mxu0 %v2200
          %v2264 = vpop.f32.mrf.mxu0
          %v2265 = vadd.f32 0.0, %v2264
          %2266 = vmatmul.f32.gmra.mxu0 %v2203
          %v2267 = vpop.f32.mrf.mxu0
          %v2268 = vadd.f32 0.0, %v2267
          %2269 = vmatmul.f32.gmra.mxu0 %v2206
          %v2270 = vpop.f32.mrf.mxu0
          %v2271 = vadd.f32 0.0, %v2270
          %2272 = vmatmul.f32.gmra.mxu0 %v2209
          %v2273 = vpop.f32.mrf.mxu0
          %v2274 = vadd.f32 0.0, %v2273
          %2275 = vmatmul.f32.gmra.mxu0 %v2212
          %v2276 = vpop.f32.mrf.mxu0
          %v2277 = vadd.f32 0.0, %v2276
          %2278 = vdwg.mxu0
          %2279 = vmatpush.msra.mxu0 0.0
          %2280 = vmatpush.msra.mxu0 0.0
          %2281 = vmatpush.msra.mxu0 0.0
          %2282 = vmatpush.msra.mxu0 0.0
          %2283 = vmatpush.msra.mxu0 0.0
          %2284 = vmatpush.msra.mxu0 0.0
          %2285 = vmatpush.msra.mxu0 0.0
          %2286 = vmatpush.msra.mxu0 0.0
          %2287 = vmatpush.msra.mxu0 %v2165
          %2288 = vmatpush.msra.mxu0 %v2163
          %2289 = vmatpush.msra.mxu0 %v2161
          %2290 = vmatpush.msra.mxu0 %v2159
          %2291 = vmatpush.msra.mxu0 %v2157
          %2292 = vmatpush.msra.mxu0 %v2155
          %2293 = vmatpush.msra.mxu0 %v2153
          %2294 = vmatpush.msra.mxu0 %v2151
          %2295 = vmatmul.f32.gmra.mxu0 %v2167
          %v2296 = vpop.f32.mrf.mxu0
          %v2297 = vadd.f32 0.0, %v2296
          %2298 = vmatmul.f32.gmra.mxu0 %v2170
          %v2299 = vpop.f32.mrf.mxu0
          %v2300 = vadd.f32 0.0, %v2299
          %2301 = vmatmul.f32.gmra.mxu0 %v2173
          %v2302 = vpop.f32.mrf.mxu0
          %v2303 = vadd.f32 0.0, %v2302
          %2304 = vmatmul.f32.gmra.mxu0 %v2176
          %v2305 = vpop.f32.mrf.mxu0
          %v2306 = vadd.f32 0.0, %v2305
          %2307 = vmatmul.f32.gmra.mxu0 %v2179
          %v2308 = vpop.f32.mrf.mxu0
          %v2309 = vadd.f32 0.0, %v2308
          %2310 = vmatmul.f32.gmra.mxu0 %v2182
          %v2311 = vpop.f32.mrf.mxu0
          %v2312 = vadd.f32 0.0, %v2311
          %2313 = vmatmul.f32.gmra.mxu0 %v2185
          %v2314 = vpop.f32.mrf.mxu0
          %v2315 = vadd.f32 0.0, %v2314
          %2316 = vmatmul.f32.gmra.mxu0 %v2188
          %v2317 = vpop.f32.mrf.mxu0
          %v2318 = vadd.f32 0.0, %v2317
          %2319 = vmatmul.f32.gmra.mxu0 %v2191
          %v2320 = vpop.f32.mrf.mxu0
          %v2321 = vadd.f32 0.0, %v2320
          %2322 = vmatmul.f32.gmra.mxu0 %v2194
          %v2323 = vpop.f32.mrf.mxu0
          %v2324 = vadd.f32 0.0, %v2323
          %2325 = vmatmul.f32.gmra.mxu0 %v2197
          %v2326 = vpop.f32.mrf.mxu0
          %v2327 = vadd.f32 0.0, %v2326
          %2328 = vmatmul.f32.gmra.mxu0 %v2200
          %v2329 = vpop.f32.mrf.mxu0
          %v2330 = vadd.f32 0.0, %v2329
          %2331 = vmatmul.f32.gmra.mxu0 %v2203
          %v2332 = vpop.f32.mrf.mxu0
          %v2333 = vadd.f32 0.0, %v2332
          %2334 = vmatmul.f32.gmra.mxu0 %v2206
          %v2335 = vpop.f32.mrf.mxu0
          %v2336 = vadd.f32 0.0, %v2335
          %2337 = vmatmul.f32.gmra.mxu0 %v2209
          %v2338 = vpop.f32.mrf.mxu0
          %v2339 = vadd.f32 0.0, %v2338
          %2340 = vmatmul.f32.gmra.mxu0 %v2212
          %v2341 = vpop.f32.mrf.mxu0
          %v2342 = vadd.f32 0.0, %v2341
          %2343 = vdwg.mxu0
          %v2344 = vadd.f32 %v2117, %v2232
          %v2345 = vadd.f32 %v2118, %v2297
          %v2346 = vadd.f32 %v2119, %v2235
          %v2347 = vadd.f32 %v2120, %v2300
          %v2348 = vadd.f32 %v2121, %v2238
          %v2349 = vadd.f32 %v2122, %v2303
          %v2350 = vadd.f32 %v2123, %v2241
          %v2351 = vadd.f32 %v2124, %v2306
          %v2352 = vadd.f32 %v2125, %v2244
          %v2353 = vadd.f32 %v2126, %v2309
          %v2354 = vadd.f32 %v2127, %v2247
          %v2355 = vadd.f32 %v2128, %v2312
          %v2356 = vadd.f32 %v2129, %v2250
          %v2357 = vadd.f32 %v2130, %v2315
          %v2358 = vadd.f32 %v2131, %v2253
          %v2359 = vadd.f32 %v2132, %v2318
          %v2360 = vadd.f32 %v2133, %v2256
          %v2361 = vadd.f32 %v2134, %v2321
          %v2362 = vadd.f32 %v2135, %v2259
          %v2363 = vadd.f32 %v2136, %v2324
          %v2364 = vadd.f32 %v2137, %v2262
          %v2365 = vadd.f32 %v2138, %v2327
          %v2366 = vadd.f32 %v2139, %v2265
          %v2367 = vadd.f32 %v2140, %v2330
          %v2368 = vadd.f32 %v2141, %v2268
          %v2369 = vadd.f32 %v2142, %v2333
          %v2370 = vadd.f32 %v2143, %v2271
          %v2371 = vadd.f32 %v2144, %v2336
          %v2372 = vadd.f32 %v2145, %v2274
          %v2373 = vadd.f32 %v2146, %v2339
          %v2374 = vadd.f32 %v2147, %v2277
          %v2375 = vadd.f32 %v2148, %v2342
          %v2376 = vxor.u32 %v2082, 2147483648
          %v2377 = vxor.u32 %v2083, 2147483648
          %v2378 = vxor.u32 %v2084, 2147483648
          %v2379 = vxor.u32 %v2085, 2147483648
          %v2380 = vxor.u32 %v2086, 2147483648
          %v2381 = vxor.u32 %v2087, 2147483648
          %v2382 = vxor.u32 %v2088, 2147483648
          %v2383 = vxor.u32 %v2089, 2147483648
          %v2384 = vxor.u32 %v2090, 2147483648
          %v2385 = vxor.u32 %v2091, 2147483648
          %v2386 = vxor.u32 %v2092, 2147483648
          %v2387 = vxor.u32 %v2093, 2147483648
          %v2388 = vxor.u32 %v2094, 2147483648
          %v2389 = vxor.u32 %v2095, 2147483648
          %v2390 = vxor.u32 %v2096, 2147483648
          %v2391 = vxor.u32 %v2097, 2147483648
          %v2392 = vxor.u32 %v2098, 2147483648
          %v2393 = vxor.u32 %v2099, 2147483648
          %v2394 = vxor.u32 %v2100, 2147483648
          %v2395 = vxor.u32 %v2101, 2147483648
          %v2396 = vxor.u32 %v2102, 2147483648
          %v2397 = vxor.u32 %v2103, 2147483648
          %v2398 = vxor.u32 %v2104, 2147483648
          %v2399 = vxor.u32 %v2105, 2147483648
          %v2400 = vxor.u32 %v2106, 2147483648
          %v2401 = vxor.u32 %v2107, 2147483648
          %v2402 = vxor.u32 %v2108, 2147483648
          %v2403 = vxor.u32 %v2109, 2147483648
          %v2404 = vxor.u32 %v2110, 2147483648
          %v2405 = vxor.u32 %v2111, 2147483648
          %v2406 = vxor.u32 %v2112, 2147483648
          %v2407 = vxor.u32 %v2113, 2147483648
          %v2408 = vmul.f32 %v2376, 1.442695
          %v2409 = vpow.pop %v2408
          %v2410 = vmul.f32 %v2377, 1.442695
          %v2411 = vpow.pop %v2410
          %v2412 = vmul.f32 %v2378, 1.442695
          %v2413 = vpow.pop %v2412
          %v2414 = vmul.f32 %v2379, 1.442695
          %v2415 = vpow.pop %v2414
          %v2416 = vmul.f32 %v2380, 1.442695
          %v2417 = vpow.pop %v2416
          %v2418 = vmul.f32 %v2381, 1.442695
          %v2419 = vpow.pop %v2418
          %v2420 = vmul.f32 %v2382, 1.442695
          %v2421 = vpow.pop %v2420
          %v2422 = vmul.f32 %v2383, 1.442695
          %v2423 = vpow.pop %v2422
          %v2424 = vmul.f32 %v2384, 1.442695
          %v2425 = vpow.pop %v2424
          %v2426 = vmul.f32 %v2385, 1.442695
          %v2427 = vpow.pop %v2426
          %v2428 = vmul.f32 %v2386, 1.442695
          %v2429 = vpow.pop %v2428
          %v2430 = vmul.f32 %v2387, 1.442695
          %v2431 = vpow.pop %v2430
          %v2432 = vmul.f32 %v2388, 1.442695
          %v2433 = vpow.pop %v2432
          %v2434 = vmul.f32 %v2389, 1.442695
          %v2435 = vpow.pop %v2434
          %v2436 = vmul.f32 %v2390, 1.442695
          %v2437 = vpow.pop %v2436
          %v2438 = vmul.f32 %v2391, 1.442695
          %v2439 = vpow.pop %v2438
          %v2440 = vmul.f32 %v2392, 1.442695
          %v2441 = vpow.pop %v2440
          %v2442 = vmul.f32 %v2393, 1.442695
          %v2443 = vpow.pop %v2442
          %v2444 = vmul.f32 %v2394, 1.442695
          %v2445 = vpow.pop %v2444
          %v2446 = vmul.f32 %v2395, 1.442695
          %v2447 = vpow.pop %v2446
          %v2448 = vmul.f32 %v2396, 1.442695
          %v2449 = vpow.pop %v2448
          %v2450 = vmul.f32 %v2397, 1.442695
          %v2451 = vpow.pop %v2450
          %v2452 = vmul.f32 %v2398, 1.442695
          %v2453 = vpow.pop %v2452
          %v2454 = vmul.f32 %v2399, 1.442695
          %v2455 = vpow.pop %v2454
          %v2456 = vmul.f32 %v2400, 1.442695
          %v2457 = vpow.pop %v2456
          %v2458 = vmul.f32 %v2401, 1.442695
          %v2459 = vpow.pop %v2458
          %v2460 = vmul.f32 %v2402, 1.442695
          %v2461 = vpow.pop %v2460
          %v2462 = vmul.f32 %v2403, 1.442695
          %v2463 = vpow.pop %v2462
          %v2464 = vmul.f32 %v2404, 1.442695
          %v2465 = vpow.pop %v2464
          %v2466 = vmul.f32 %v2405, 1.442695
          %v2467 = vpow.pop %v2466
          %v2468 = vmul.f32 %v2406, 1.442695
          %v2469 = vpow.pop %v2468
          %v2470 = vmul.f32 %v2407, 1.442695
          %v2471 = vpow.pop %v2470
          %v2472 = vadd.f32 %v2409, 1.0
          %v2473 = vadd.f32 %v2411, 1.0
          %v2474 = vadd.f32 %v2413, 1.0
          %v2475 = vadd.f32 %v2415, 1.0
          %v2476 = vadd.f32 %v2417, 1.0
          %v2477 = vadd.f32 %v2419, 1.0
          %v2478 = vadd.f32 %v2421, 1.0
          %v2479 = vadd.f32 %v2423, 1.0
          %v2480 = vadd.f32 %v2425, 1.0
          %v2481 = vadd.f32 %v2427, 1.0
          %v2482 = vadd.f32 %v2429, 1.0
          %v2483 = vadd.f32 %v2431, 1.0
          %v2484 = vadd.f32 %v2433, 1.0
          %v2485 = vadd.f32 %v2435, 1.0
          %v2486 = vadd.f32 %v2437, 1.0
          %v2487 = vadd.f32 %v2439, 1.0
          %v2488 = vadd.f32 %v2441, 1.0
          %v2489 = vadd.f32 %v2443, 1.0
          %v2490 = vadd.f32 %v2445, 1.0
          %v2491 = vadd.f32 %v2447, 1.0
          %v2492 = vadd.f32 %v2449, 1.0
          %v2493 = vadd.f32 %v2451, 1.0
          %v2494 = vadd.f32 %v2453, 1.0
          %v2495 = vadd.f32 %v2455, 1.0
          %v2496 = vadd.f32 %v2457, 1.0
          %v2497 = vadd.f32 %v2459, 1.0
          %v2498 = vadd.f32 %v2461, 1.0
          %v2499 = vadd.f32 %v2463, 1.0
          %v2500 = vadd.f32 %v2465, 1.0
          %v2501 = vadd.f32 %v2467, 1.0
          %v2502 = vadd.f32 %v2469, 1.0
          %v2503 = vadd.f32 %v2471, 1.0
          %v2504 = vrcp.pop %v2472
          %v2505 = vmul.f32 %v2472, %v2504
          %v2506 = vsub.f32 1.0, %v2505
          %v2507 = vmul.f32 %v2504, %v2506
          %v2508 = vadd.f32 %v2504, %v2507
          %vm2509 = vweird.f32 %v2472
          %vm2510 = vweird.f32 %v2504
          %vm2511 = vmor %vm2509, %vm2510
          %v2512 = vsel %vm2511, %v2504, %v2508
          %v2513 = vand.u32 2147483647, %v2472
          %vm2514 = vcmp.eq.f32.partialorder %v2513, 8.507059e+37
          %v2515 = vand.u32 %v2472, 2147483648
          %v2516 = vor.u32 1.1754944e-38, %v2515
          %v2517 = vsel %vm2514, %v2516, %v2512
          %v2518 = vmul.f32 1.0, %v2517
          %v2519 = vrcp.pop %v2473
          %v2520 = vmul.f32 %v2473, %v2519
          %v2521 = vsub.f32 1.0, %v2520
          %v2522 = vmul.f32 %v2519, %v2521
          %v2523 = vadd.f32 %v2519, %v2522
          %vm2524 = vweird.f32 %v2473
          %vm2525 = vweird.f32 %v2519
          %vm2526 = vmor %vm2524, %vm2525
          %v2527 = vsel %vm2526, %v2519, %v2523
          %v2528 = vand.u32 2147483647, %v2473
          %vm2529 = vcmp.eq.f32.partialorder %v2528, 8.507059e+37
          %v2530 = vand.u32 %v2473, 2147483648
          %v2531 = vor.u32 1.1754944e-38, %v2530
          %v2532 = vsel %vm2529, %v2531, %v2527
          %v2533 = vmul.f32 1.0, %v2532
          %v2534 = vrcp.pop %v2474
          %v2535 = vmul.f32 %v2474, %v2534
          %v2536 = vsub.f32 1.0, %v2535
          %v2537 = vmul.f32 %v2534, %v2536
          %v2538 = vadd.f32 %v2534, %v2537
          %vm2539 = vweird.f32 %v2474
          %vm2540 = vweird.f32 %v2534
          %vm2541 = vmor %vm2539, %vm2540
          %v2542 = vsel %vm2541, %v2534, %v2538
          %v2543 = vand.u32 2147483647, %v2474
          %vm2544 = vcmp.eq.f32.partialorder %v2543, 8.507059e+37
          %v2545 = vand.u32 %v2474, 2147483648
          %v2546 = vor.u32 1.1754944e-38, %v2545
          %v2547 = vsel %vm2544, %v2546, %v2542
          %v2548 = vmul.f32 1.0, %v2547
          %v2549 = vrcp.pop %v2475
          %v2550 = vmul.f32 %v2475, %v2549
          %v2551 = vsub.f32 1.0, %v2550
          %v2552 = vmul.f32 %v2549, %v2551
          %v2553 = vadd.f32 %v2549, %v2552
          %vm2554 = vweird.f32 %v2475
          %vm2555 = vweird.f32 %v2549
          %vm2556 = vmor %vm2554, %vm2555
          %v2557 = vsel %vm2556, %v2549, %v2553
          %v2558 = vand.u32 2147483647, %v2475
          %vm2559 = vcmp.eq.f32.partialorder %v2558, 8.507059e+37
          %v2560 = vand.u32 %v2475, 2147483648
          %v2561 = vor.u32 1.1754944e-38, %v2560
          %v2562 = vsel %vm2559, %v2561, %v2557
          %v2563 = vmul.f32 1.0, %v2562
          %v2564 = vrcp.pop %v2476
          %v2565 = vmul.f32 %v2476, %v2564
          %v2566 = vsub.f32 1.0, %v2565
          %v2567 = vmul.f32 %v2564, %v2566
          %v2568 = vadd.f32 %v2564, %v2567
          %vm2569 = vweird.f32 %v2476
          %vm2570 = vweird.f32 %v2564
          %vm2571 = vmor %vm2569, %vm2570
          %v2572 = vsel %vm2571, %v2564, %v2568
          %v2573 = vand.u32 2147483647, %v2476
          %vm2574 = vcmp.eq.f32.partialorder %v2573, 8.507059e+37
          %v2575 = vand.u32 %v2476, 2147483648
          %v2576 = vor.u32 1.1754944e-38, %v2575
          %v2577 = vsel %vm2574, %v2576, %v2572
          %v2578 = vmul.f32 1.0, %v2577
          %v2579 = vrcp.pop %v2477
          %v2580 = vmul.f32 %v2477, %v2579
          %v2581 = vsub.f32 1.0, %v2580
          %v2582 = vmul.f32 %v2579, %v2581
          %v2583 = vadd.f32 %v2579, %v2582
          %vm2584 = vweird.f32 %v2477
          %vm2585 = vweird.f32 %v2579
          %vm2586 = vmor %vm2584, %vm2585
          %v2587 = vsel %vm2586, %v2579, %v2583
          %v2588 = vand.u32 2147483647, %v2477
          %vm2589 = vcmp.eq.f32.partialorder %v2588, 8.507059e+37
          %v2590 = vand.u32 %v2477, 2147483648
          %v2591 = vor.u32 1.1754944e-38, %v2590
          %v2592 = vsel %vm2589, %v2591, %v2587
          %v2593 = vmul.f32 1.0, %v2592
          %v2594 = vrcp.pop %v2478
          %v2595 = vmul.f32 %v2478, %v2594
          %v2596 = vsub.f32 1.0, %v2595
          %v2597 = vmul.f32 %v2594, %v2596
          %v2598 = vadd.f32 %v2594, %v2597
          %vm2599 = vweird.f32 %v2478
          %vm2600 = vweird.f32 %v2594
          %vm2601 = vmor %vm2599, %vm2600
          %v2602 = vsel %vm2601, %v2594, %v2598
          %v2603 = vand.u32 2147483647, %v2478
          %vm2604 = vcmp.eq.f32.partialorder %v2603, 8.507059e+37
          %v2605 = vand.u32 %v2478, 2147483648
          %v2606 = vor.u32 1.1754944e-38, %v2605
          %v2607 = vsel %vm2604, %v2606, %v2602
          %v2608 = vmul.f32 1.0, %v2607
          %v2609 = vrcp.pop %v2479
          %v2610 = vmul.f32 %v2479, %v2609
          %v2611 = vsub.f32 1.0, %v2610
          %v2612 = vmul.f32 %v2609, %v2611
          %v2613 = vadd.f32 %v2609, %v2612
          %vm2614 = vweird.f32 %v2479
          %vm2615 = vweird.f32 %v2609
          %vm2616 = vmor %vm2614, %vm2615
          %v2617 = vsel %vm2616, %v2609, %v2613
          %v2618 = vand.u32 2147483647, %v2479
          %vm2619 = vcmp.eq.f32.partialorder %v2618, 8.507059e+37
          %v2620 = vand.u32 %v2479, 2147483648
          %v2621 = vor.u32 1.1754944e-38, %v2620
          %v2622 = vsel %vm2619, %v2621, %v2617
          %v2623 = vmul.f32 1.0, %v2622
          %v2624 = vrcp.pop %v2480
          %v2625 = vmul.f32 %v2480, %v2624
          %v2626 = vsub.f32 1.0, %v2625
          %v2627 = vmul.f32 %v2624, %v2626
          %v2628 = vadd.f32 %v2624, %v2627
          %vm2629 = vweird.f32 %v2480
          %vm2630 = vweird.f32 %v2624
          %vm2631 = vmor %vm2629, %vm2630
          %v2632 = vsel %vm2631, %v2624, %v2628
          %v2633 = vand.u32 2147483647, %v2480
          %vm2634 = vcmp.eq.f32.partialorder %v2633, 8.507059e+37
          %v2635 = vand.u32 %v2480, 2147483648
          %v2636 = vor.u32 1.1754944e-38, %v2635
          %v2637 = vsel %vm2634, %v2636, %v2632
          %v2638 = vmul.f32 1.0, %v2637
          %v2639 = vrcp.pop %v2481
          %v2640 = vmul.f32 %v2481, %v2639
          %v2641 = vsub.f32 1.0, %v2640
          %v2642 = vmul.f32 %v2639, %v2641
          %v2643 = vadd.f32 %v2639, %v2642
          %vm2644 = vweird.f32 %v2481
          %vm2645 = vweird.f32 %v2639
          %vm2646 = vmor %vm2644, %vm2645
          %v2647 = vsel %vm2646, %v2639, %v2643
          %v2648 = vand.u32 2147483647, %v2481
          %vm2649 = vcmp.eq.f32.partialorder %v2648, 8.507059e+37
          %v2650 = vand.u32 %v2481, 2147483648
          %v2651 = vor.u32 1.1754944e-38, %v2650
          %v2652 = vsel %vm2649, %v2651, %v2647
          %v2653 = vmul.f32 1.0, %v2652
          %v2654 = vrcp.pop %v2482
          %v2655 = vmul.f32 %v2482, %v2654
          %v2656 = vsub.f32 1.0, %v2655
          %v2657 = vmul.f32 %v2654, %v2656
          %v2658 = vadd.f32 %v2654, %v2657
          %vm2659 = vweird.f32 %v2482
          %vm2660 = vweird.f32 %v2654
          %vm2661 = vmor %vm2659, %vm2660
          %v2662 = vsel %vm2661, %v2654, %v2658
          %v2663 = vand.u32 2147483647, %v2482
          %vm2664 = vcmp.eq.f32.partialorder %v2663, 8.507059e+37
          %v2665 = vand.u32 %v2482, 2147483648
          %v2666 = vor.u32 1.1754944e-38, %v2665
          %v2667 = vsel %vm2664, %v2666, %v2662
          %v2668 = vmul.f32 1.0, %v2667
          %v2669 = vrcp.pop %v2483
          %v2670 = vmul.f32 %v2483, %v2669
          %v2671 = vsub.f32 1.0, %v2670
          %v2672 = vmul.f32 %v2669, %v2671
          %v2673 = vadd.f32 %v2669, %v2672
          %vm2674 = vweird.f32 %v2483
          %vm2675 = vweird.f32 %v2669
          %vm2676 = vmor %vm2674, %vm2675
          %v2677 = vsel %vm2676, %v2669, %v2673
          %v2678 = vand.u32 2147483647, %v2483
          %vm2679 = vcmp.eq.f32.partialorder %v2678, 8.507059e+37
          %v2680 = vand.u32 %v2483, 2147483648
          %v2681 = vor.u32 1.1754944e-38, %v2680
          %v2682 = vsel %vm2679, %v2681, %v2677
          %v2683 = vmul.f32 1.0, %v2682
          %v2684 = vrcp.pop %v2484
          %v2685 = vmul.f32 %v2484, %v2684
          %v2686 = vsub.f32 1.0, %v2685
          %v2687 = vmul.f32 %v2684, %v2686
          %v2688 = vadd.f32 %v2684, %v2687
          %vm2689 = vweird.f32 %v2484
          %vm2690 = vweird.f32 %v2684
          %vm2691 = vmor %vm2689, %vm2690
          %v2692 = vsel %vm2691, %v2684, %v2688
          %v2693 = vand.u32 2147483647, %v2484
          %vm2694 = vcmp.eq.f32.partialorder %v2693, 8.507059e+37
          %v2695 = vand.u32 %v2484, 2147483648
          %v2696 = vor.u32 1.1754944e-38, %v2695
          %v2697 = vsel %vm2694, %v2696, %v2692
          %v2698 = vmul.f32 1.0, %v2697
          %v2699 = vrcp.pop %v2485
          %v2700 = vmul.f32 %v2485, %v2699
          %v2701 = vsub.f32 1.0, %v2700
          %v2702 = vmul.f32 %v2699, %v2701
          %v2703 = vadd.f32 %v2699, %v2702
          %vm2704 = vweird.f32 %v2485
          %vm2705 = vweird.f32 %v2699
          %vm2706 = vmor %vm2704, %vm2705
          %v2707 = vsel %vm2706, %v2699, %v2703
          %v2708 = vand.u32 2147483647, %v2485
          %vm2709 = vcmp.eq.f32.partialorder %v2708, 8.507059e+37
          %v2710 = vand.u32 %v2485, 2147483648
          %v2711 = vor.u32 1.1754944e-38, %v2710
          %v2712 = vsel %vm2709, %v2711, %v2707
          %v2713 = vmul.f32 1.0, %v2712
          %v2714 = vrcp.pop %v2486
          %v2715 = vmul.f32 %v2486, %v2714
          %v2716 = vsub.f32 1.0, %v2715
          %v2717 = vmul.f32 %v2714, %v2716
          %v2718 = vadd.f32 %v2714, %v2717
          %vm2719 = vweird.f32 %v2486
          %vm2720 = vweird.f32 %v2714
          %vm2721 = vmor %vm2719, %vm2720
          %v2722 = vsel %vm2721, %v2714, %v2718
          %v2723 = vand.u32 2147483647, %v2486
          %vm2724 = vcmp.eq.f32.partialorder %v2723, 8.507059e+37
          %v2725 = vand.u32 %v2486, 2147483648
          %v2726 = vor.u32 1.1754944e-38, %v2725
          %v2727 = vsel %vm2724, %v2726, %v2722
          %v2728 = vmul.f32 1.0, %v2727
          %v2729 = vrcp.pop %v2487
          %v2730 = vmul.f32 %v2487, %v2729
          %v2731 = vsub.f32 1.0, %v2730
          %v2732 = vmul.f32 %v2729, %v2731
          %v2733 = vadd.f32 %v2729, %v2732
          %vm2734 = vweird.f32 %v2487
          %vm2735 = vweird.f32 %v2729
          %vm2736 = vmor %vm2734, %vm2735
          %v2737 = vsel %vm2736, %v2729, %v2733
          %v2738 = vand.u32 2147483647, %v2487
          %vm2739 = vcmp.eq.f32.partialorder %v2738, 8.507059e+37
          %v2740 = vand.u32 %v2487, 2147483648
          %v2741 = vor.u32 1.1754944e-38, %v2740
          %v2742 = vsel %vm2739, %v2741, %v2737
          %v2743 = vmul.f32 1.0, %v2742
          %v2744 = vrcp.pop %v2488
          %v2745 = vmul.f32 %v2488, %v2744
          %v2746 = vsub.f32 1.0, %v2745
          %v2747 = vmul.f32 %v2744, %v2746
          %v2748 = vadd.f32 %v2744, %v2747
          %vm2749 = vweird.f32 %v2488
          %vm2750 = vweird.f32 %v2744
          %vm2751 = vmor %vm2749, %vm2750
          %v2752 = vsel %vm2751, %v2744, %v2748
          %v2753 = vand.u32 2147483647, %v2488
          %vm2754 = vcmp.eq.f32.partialorder %v2753, 8.507059e+37
          %v2755 = vand.u32 %v2488, 2147483648
          %v2756 = vor.u32 1.1754944e-38, %v2755
          %v2757 = vsel %vm2754, %v2756, %v2752
          %v2758 = vmul.f32 1.0, %v2757
          %v2759 = vrcp.pop %v2489
          %v2760 = vmul.f32 %v2489, %v2759
          %v2761 = vsub.f32 1.0, %v2760
          %v2762 = vmul.f32 %v2759, %v2761
          %v2763 = vadd.f32 %v2759, %v2762
          %vm2764 = vweird.f32 %v2489
          %vm2765 = vweird.f32 %v2759
          %vm2766 = vmor %vm2764, %vm2765
          %v2767 = vsel %vm2766, %v2759, %v2763
          %v2768 = vand.u32 2147483647, %v2489
          %vm2769 = vcmp.eq.f32.partialorder %v2768, 8.507059e+37
          %v2770 = vand.u32 %v2489, 2147483648
          %v2771 = vor.u32 1.1754944e-38, %v2770
          %v2772 = vsel %vm2769, %v2771, %v2767
          %v2773 = vmul.f32 1.0, %v2772
          %v2774 = vrcp.pop %v2490
          %v2775 = vmul.f32 %v2490, %v2774
          %v2776 = vsub.f32 1.0, %v2775
          %v2777 = vmul.f32 %v2774, %v2776
          %v2778 = vadd.f32 %v2774, %v2777
          %vm2779 = vweird.f32 %v2490
          %vm2780 = vweird.f32 %v2774
          %vm2781 = vmor %vm2779, %vm2780
          %v2782 = vsel %vm2781, %v2774, %v2778
          %v2783 = vand.u32 2147483647, %v2490
          %vm2784 = vcmp.eq.f32.partialorder %v2783, 8.507059e+37
          %v2785 = vand.u32 %v2490, 2147483648
          %v2786 = vor.u32 1.1754944e-38, %v2785
          %v2787 = vsel %vm2784, %v2786, %v2782
          %v2788 = vmul.f32 1.0, %v2787
          %v2789 = vrcp.pop %v2491
          %v2790 = vmul.f32 %v2491, %v2789
          %v2791 = vsub.f32 1.0, %v2790
          %v2792 = vmul.f32 %v2789, %v2791
          %v2793 = vadd.f32 %v2789, %v2792
          %vm2794 = vweird.f32 %v2491
          %vm2795 = vweird.f32 %v2789
          %vm2796 = vmor %vm2794, %vm2795
          %v2797 = vsel %vm2796, %v2789, %v2793
          %v2798 = vand.u32 2147483647, %v2491
          %vm2799 = vcmp.eq.f32.partialorder %v2798, 8.507059e+37
          %v2800 = vand.u32 %v2491, 2147483648
          %v2801 = vor.u32 1.1754944e-38, %v2800
          %v2802 = vsel %vm2799, %v2801, %v2797
          %v2803 = vmul.f32 1.0, %v2802
          %v2804 = vrcp.pop %v2492
          %v2805 = vmul.f32 %v2492, %v2804
          %v2806 = vsub.f32 1.0, %v2805
          %v2807 = vmul.f32 %v2804, %v2806
          %v2808 = vadd.f32 %v2804, %v2807
          %vm2809 = vweird.f32 %v2492
          %vm2810 = vweird.f32 %v2804
          %vm2811 = vmor %vm2809, %vm2810
          %v2812 = vsel %vm2811, %v2804, %v2808
          %v2813 = vand.u32 2147483647, %v2492
          %vm2814 = vcmp.eq.f32.partialorder %v2813, 8.507059e+37
          %v2815 = vand.u32 %v2492, 2147483648
          %v2816 = vor.u32 1.1754944e-38, %v2815
          %v2817 = vsel %vm2814, %v2816, %v2812
          %v2818 = vmul.f32 1.0, %v2817
          %v2819 = vrcp.pop %v2493
          %v2820 = vmul.f32 %v2493, %v2819
          %v2821 = vsub.f32 1.0, %v2820
          %v2822 = vmul.f32 %v2819, %v2821
          %v2823 = vadd.f32 %v2819, %v2822
          %vm2824 = vweird.f32 %v2493
          %vm2825 = vweird.f32 %v2819
          %vm2826 = vmor %vm2824, %vm2825
          %v2827 = vsel %vm2826, %v2819, %v2823
          %v2828 = vand.u32 2147483647, %v2493
          %vm2829 = vcmp.eq.f32.partialorder %v2828, 8.507059e+37
          %v2830 = vand.u32 %v2493, 2147483648
          %v2831 = vor.u32 1.1754944e-38, %v2830
          %v2832 = vsel %vm2829, %v2831, %v2827
          %v2833 = vmul.f32 1.0, %v2832
          %v2834 = vrcp.pop %v2494
          %v2835 = vmul.f32 %v2494, %v2834
          %v2836 = vsub.f32 1.0, %v2835
          %v2837 = vmul.f32 %v2834, %v2836
          %v2838 = vadd.f32 %v2834, %v2837
          %vm2839 = vweird.f32 %v2494
          %vm2840 = vweird.f32 %v2834
          %vm2841 = vmor %vm2839, %vm2840
          %v2842 = vsel %vm2841, %v2834, %v2838
          %v2843 = vand.u32 2147483647, %v2494
          %vm2844 = vcmp.eq.f32.partialorder %v2843, 8.507059e+37
          %v2845 = vand.u32 %v2494, 2147483648
          %v2846 = vor.u32 1.1754944e-38, %v2845
          %v2847 = vsel %vm2844, %v2846, %v2842
          %v2848 = vmul.f32 1.0, %v2847
          %v2849 = vrcp.pop %v2495
          %v2850 = vmul.f32 %v2495, %v2849
          %v2851 = vsub.f32 1.0, %v2850
          %v2852 = vmul.f32 %v2849, %v2851
          %v2853 = vadd.f32 %v2849, %v2852
          %vm2854 = vweird.f32 %v2495
          %vm2855 = vweird.f32 %v2849
          %vm2856 = vmor %vm2854, %vm2855
          %v2857 = vsel %vm2856, %v2849, %v2853
          %v2858 = vand.u32 2147483647, %v2495
          %vm2859 = vcmp.eq.f32.partialorder %v2858, 8.507059e+37
          %v2860 = vand.u32 %v2495, 2147483648
          %v2861 = vor.u32 1.1754944e-38, %v2860
          %v2862 = vsel %vm2859, %v2861, %v2857
          %v2863 = vmul.f32 1.0, %v2862
          %v2864 = vrcp.pop %v2496
          %v2865 = vmul.f32 %v2496, %v2864
          %v2866 = vsub.f32 1.0, %v2865
          %v2867 = vmul.f32 %v2864, %v2866
          %v2868 = vadd.f32 %v2864, %v2867
          %vm2869 = vweird.f32 %v2496
          %vm2870 = vweird.f32 %v2864
          %vm2871 = vmor %vm2869, %vm2870
          %v2872 = vsel %vm2871, %v2864, %v2868
          %v2873 = vand.u32 2147483647, %v2496
          %vm2874 = vcmp.eq.f32.partialorder %v2873, 8.507059e+37
          %v2875 = vand.u32 %v2496, 2147483648
          %v2876 = vor.u32 1.1754944e-38, %v2875
          %v2877 = vsel %vm2874, %v2876, %v2872
          %v2878 = vmul.f32 1.0, %v2877
          %v2879 = vrcp.pop %v2497
          %v2880 = vmul.f32 %v2497, %v2879
          %v2881 = vsub.f32 1.0, %v2880
          %v2882 = vmul.f32 %v2879, %v2881
          %v2883 = vadd.f32 %v2879, %v2882
          %vm2884 = vweird.f32 %v2497
          %vm2885 = vweird.f32 %v2879
          %vm2886 = vmor %vm2884, %vm2885
          %v2887 = vsel %vm2886, %v2879, %v2883
          %v2888 = vand.u32 2147483647, %v2497
          %vm2889 = vcmp.eq.f32.partialorder %v2888, 8.507059e+37
          %v2890 = vand.u32 %v2497, 2147483648
          %v2891 = vor.u32 1.1754944e-38, %v2890
          %v2892 = vsel %vm2889, %v2891, %v2887
          %v2893 = vmul.f32 1.0, %v2892
          %v2894 = vrcp.pop %v2498
          %v2895 = vmul.f32 %v2498, %v2894
          %v2896 = vsub.f32 1.0, %v2895
          %v2897 = vmul.f32 %v2894, %v2896
          %v2898 = vadd.f32 %v2894, %v2897
          %vm2899 = vweird.f32 %v2498
          %vm2900 = vweird.f32 %v2894
          %vm2901 = vmor %vm2899, %vm2900
          %v2902 = vsel %vm2901, %v2894, %v2898
          %v2903 = vand.u32 2147483647, %v2498
          %vm2904 = vcmp.eq.f32.partialorder %v2903, 8.507059e+37
          %v2905 = vand.u32 %v2498, 2147483648
          %v2906 = vor.u32 1.1754944e-38, %v2905
          %v2907 = vsel %vm2904, %v2906, %v2902
          %v2908 = vmul.f32 1.0, %v2907
          %v2909 = vrcp.pop %v2499
          %v2910 = vmul.f32 %v2499, %v2909
          %v2911 = vsub.f32 1.0, %v2910
          %v2912 = vmul.f32 %v2909, %v2911
          %v2913 = vadd.f32 %v2909, %v2912
          %vm2914 = vweird.f32 %v2499
          %vm2915 = vweird.f32 %v2909
          %vm2916 = vmor %vm2914, %vm2915
          %v2917 = vsel %vm2916, %v2909, %v2913
          %v2918 = vand.u32 2147483647, %v2499
          %vm2919 = vcmp.eq.f32.partialorder %v2918, 8.507059e+37
          %v2920 = vand.u32 %v2499, 2147483648
          %v2921 = vor.u32 1.1754944e-38, %v2920
          %v2922 = vsel %vm2919, %v2921, %v2917
          %v2923 = vmul.f32 1.0, %v2922
          %v2924 = vrcp.pop %v2500
          %v2925 = vmul.f32 %v2500, %v2924
          %v2926 = vsub.f32 1.0, %v2925
          %v2927 = vmul.f32 %v2924, %v2926
          %v2928 = vadd.f32 %v2924, %v2927
          %vm2929 = vweird.f32 %v2500
          %vm2930 = vweird.f32 %v2924
          %vm2931 = vmor %vm2929, %vm2930
          %v2932 = vsel %vm2931, %v2924, %v2928
          %v2933 = vand.u32 2147483647, %v2500
          %vm2934 = vcmp.eq.f32.partialorder %v2933, 8.507059e+37
          %v2935 = vand.u32 %v2500, 2147483648
          %v2936 = vor.u32 1.1754944e-38, %v2935
          %v2937 = vsel %vm2934, %v2936, %v2932
          %v2938 = vmul.f32 1.0, %v2937
          %v2939 = vrcp.pop %v2501
          %v2940 = vmul.f32 %v2501, %v2939
          %v2941 = vsub.f32 1.0, %v2940
          %v2942 = vmul.f32 %v2939, %v2941
          %v2943 = vadd.f32 %v2939, %v2942
          %vm2944 = vweird.f32 %v2501
          %vm2945 = vweird.f32 %v2939
          %vm2946 = vmor %vm2944, %vm2945
          %v2947 = vsel %vm2946, %v2939, %v2943
          %v2948 = vand.u32 2147483647, %v2501
          %vm2949 = vcmp.eq.f32.partialorder %v2948, 8.507059e+37
          %v2950 = vand.u32 %v2501, 2147483648
          %v2951 = vor.u32 1.1754944e-38, %v2950
          %v2952 = vsel %vm2949, %v2951, %v2947
          %v2953 = vmul.f32 1.0, %v2952
          %v2954 = vrcp.pop %v2502
          %v2955 = vmul.f32 %v2502, %v2954
          %v2956 = vsub.f32 1.0, %v2955
          %v2957 = vmul.f32 %v2954, %v2956
          %v2958 = vadd.f32 %v2954, %v2957
          %vm2959 = vweird.f32 %v2502
          %vm2960 = vweird.f32 %v2954
          %vm2961 = vmor %vm2959, %vm2960
          %v2962 = vsel %vm2961, %v2954, %v2958
          %v2963 = vand.u32 2147483647, %v2502
          %vm2964 = vcmp.eq.f32.partialorder %v2963, 8.507059e+37
          %v2965 = vand.u32 %v2502, 2147483648
          %v2966 = vor.u32 1.1754944e-38, %v2965
          %v2967 = vsel %vm2964, %v2966, %v2962
          %v2968 = vmul.f32 1.0, %v2967
          %v2969 = vrcp.pop %v2503
          %v2970 = vmul.f32 %v2503, %v2969
          %v2971 = vsub.f32 1.0, %v2970
          %v2972 = vmul.f32 %v2969, %v2971
          %v2973 = vadd.f32 %v2969, %v2972
          %vm2974 = vweird.f32 %v2503
          %vm2975 = vweird.f32 %v2969
          %vm2976 = vmor %vm2974, %vm2975
          %v2977 = vsel %vm2976, %v2969, %v2973
          %v2978 = vand.u32 2147483647, %v2503
          %vm2979 = vcmp.eq.f32.partialorder %v2978, 8.507059e+37
          %v2980 = vand.u32 %v2503, 2147483648
          %v2981 = vor.u32 1.1754944e-38, %v2980
          %v2982 = vsel %vm2979, %v2981, %v2977
          %v2983 = vmul.f32 1.0, %v2982
          %v2984 = vtanh.pop %v2083
          %v2985 = vtanh.pop %v2085
          %v2986 = vtanh.pop %v2087
          %v2987 = vtanh.pop %v2089
          %v2988 = vtanh.pop %v2091
          %v2989 = vtanh.pop %v2093
          %v2990 = vtanh.pop %v2095
          %v2991 = vtanh.pop %v2097
          %v2992 = vtanh.pop %v2099
          %v2993 = vtanh.pop %v2101
          %v2994 = vtanh.pop %v2103
          %v2995 = vtanh.pop %v2105
          %v2996 = vtanh.pop %v2107
          %v2997 = vtanh.pop %v2109
          %v2998 = vtanh.pop %v2111
          %v2999 = vtanh.pop %v2113
          %v3000 = vxor.u32 %v2344, 2147483648
          %v3001 = vxor.u32 %v2345, 2147483648
          %v3002 = vxor.u32 %v2346, 2147483648
          %v3003 = vxor.u32 %v2347, 2147483648
          %v3004 = vxor.u32 %v2348, 2147483648
          %v3005 = vxor.u32 %v2349, 2147483648
          %v3006 = vxor.u32 %v2350, 2147483648
          %v3007 = vxor.u32 %v2351, 2147483648
          %v3008 = vxor.u32 %v2352, 2147483648
          %v3009 = vxor.u32 %v2353, 2147483648
          %v3010 = vxor.u32 %v2354, 2147483648
          %v3011 = vxor.u32 %v2355, 2147483648
          %v3012 = vxor.u32 %v2356, 2147483648
          %v3013 = vxor.u32 %v2357, 2147483648
          %v3014 = vxor.u32 %v2358, 2147483648
          %v3015 = vxor.u32 %v2359, 2147483648
          %v3016 = vxor.u32 %v2360, 2147483648
          %v3017 = vxor.u32 %v2361, 2147483648
          %v3018 = vxor.u32 %v2362, 2147483648
          %v3019 = vxor.u32 %v2363, 2147483648
          %v3020 = vxor.u32 %v2364, 2147483648
          %v3021 = vxor.u32 %v2365, 2147483648
          %v3022 = vxor.u32 %v2366, 2147483648
          %v3023 = vxor.u32 %v2367, 2147483648
          %v3024 = vxor.u32 %v2368, 2147483648
          %v3025 = vxor.u32 %v2369, 2147483648
          %v3026 = vxor.u32 %v2370, 2147483648
          %v3027 = vxor.u32 %v2371, 2147483648
          %v3028 = vxor.u32 %v2372, 2147483648
          %v3029 = vxor.u32 %v2373, 2147483648
          %v3030 = vxor.u32 %v2374, 2147483648
          %v3031 = vxor.u32 %v2375, 2147483648
          %v3032 = vmul.f32 %v3000, 1.442695
          %v3033 = vpow.pop %v3032
          %v3034 = vmul.f32 %v3001, 1.442695
          %v3035 = vpow.pop %v3034
          %v3036 = vmul.f32 %v3002, 1.442695
          %v3037 = vpow.pop %v3036
          %v3038 = vmul.f32 %v3003, 1.442695
          %v3039 = vpow.pop %v3038
          %v3040 = vmul.f32 %v3004, 1.442695
          %v3041 = vpow.pop %v3040
          %v3042 = vmul.f32 %v3005, 1.442695
          %v3043 = vpow.pop %v3042
          %v3044 = vmul.f32 %v3006, 1.442695
          %v3045 = vpow.pop %v3044
          %v3046 = vmul.f32 %v3007, 1.442695
          %v3047 = vpow.pop %v3046
          %v3048 = vmul.f32 %v3008, 1.442695
          %v3049 = vpow.pop %v3048
          %v3050 = vmul.f32 %v3009, 1.442695
          %v3051 = vpow.pop %v3050
          %v3052 = vmul.f32 %v3010, 1.442695
          %v3053 = vpow.pop %v3052
          %v3054 = vmul.f32 %v3011, 1.442695
          %v3055 = vpow.pop %v3054
          %v3056 = vmul.f32 %v3012, 1.442695
          %v3057 = vpow.pop %v3056
          %v3058 = vmul.f32 %v3013, 1.442695
          %v3059 = vpow.pop %v3058
          %v3060 = vmul.f32 %v3014, 1.442695
          %v3061 = vpow.pop %v3060
          %v3062 = vmul.f32 %v3015, 1.442695
          %v3063 = vpow.pop %v3062
          %v3064 = vmul.f32 %v3016, 1.442695
          %v3065 = vpow.pop %v3064
          %v3066 = vmul.f32 %v3017, 1.442695
          %v3067 = vpow.pop %v3066
          %v3068 = vmul.f32 %v3018, 1.442695
          %v3069 = vpow.pop %v3068
          %v3070 = vmul.f32 %v3019, 1.442695
          %v3071 = vpow.pop %v3070
          %v3072 = vmul.f32 %v3020, 1.442695
          %v3073 = vpow.pop %v3072
          %v3074 = vmul.f32 %v3021, 1.442695
          %v3075 = vpow.pop %v3074
          %v3076 = vmul.f32 %v3022, 1.442695
          %v3077 = vpow.pop %v3076
          %v3078 = vmul.f32 %v3023, 1.442695
          %v3079 = vpow.pop %v3078
          %v3080 = vmul.f32 %v3024, 1.442695
          %v3081 = vpow.pop %v3080
          %v3082 = vmul.f32 %v3025, 1.442695
          %v3083 = vpow.pop %v3082
          %v3084 = vmul.f32 %v3026, 1.442695
          %v3085 = vpow.pop %v3084
          %v3086 = vmul.f32 %v3027, 1.442695
          %v3087 = vpow.pop %v3086
          %v3088 = vmul.f32 %v3028, 1.442695
          %v3089 = vpow.pop %v3088
          %v3090 = vmul.f32 %v3029, 1.442695
          %v3091 = vpow.pop %v3090
          %v3092 = vmul.f32 %v3030, 1.442695
          %v3093 = vpow.pop %v3092
          %v3094 = vmul.f32 %v3031, 1.442695
          %v3095 = vpow.pop %v3094
          %v3096 = vadd.f32 %v3033, 1.0
          %v3097 = vadd.f32 %v3035, 1.0
          %v3098 = vadd.f32 %v3037, 1.0
          %v3099 = vadd.f32 %v3039, 1.0
          %v3100 = vadd.f32 %v3041, 1.0
          %v3101 = vadd.f32 %v3043, 1.0
          %v3102 = vadd.f32 %v3045, 1.0
          %v3103 = vadd.f32 %v3047, 1.0
          %v3104 = vadd.f32 %v3049, 1.0
          %v3105 = vadd.f32 %v3051, 1.0
          %v3106 = vadd.f32 %v3053, 1.0
          %v3107 = vadd.f32 %v3055, 1.0
          %v3108 = vadd.f32 %v3057, 1.0
          %v3109 = vadd.f32 %v3059, 1.0
          %v3110 = vadd.f32 %v3061, 1.0
          %v3111 = vadd.f32 %v3063, 1.0
          %v3112 = vadd.f32 %v3065, 1.0
          %v3113 = vadd.f32 %v3067, 1.0
          %v3114 = vadd.f32 %v3069, 1.0
          %v3115 = vadd.f32 %v3071, 1.0
          %v3116 = vadd.f32 %v3073, 1.0
          %v3117 = vadd.f32 %v3075, 1.0
          %v3118 = vadd.f32 %v3077, 1.0
          %v3119 = vadd.f32 %v3079, 1.0
          %v3120 = vadd.f32 %v3081, 1.0
          %v3121 = vadd.f32 %v3083, 1.0
          %v3122 = vadd.f32 %v3085, 1.0
          %v3123 = vadd.f32 %v3087, 1.0
          %v3124 = vadd.f32 %v3089, 1.0
          %v3125 = vadd.f32 %v3091, 1.0
          %v3126 = vadd.f32 %v3093, 1.0
          %v3127 = vadd.f32 %v3095, 1.0
          %v3128 = vrcp.pop %v3096
          %v3129 = vmul.f32 %v3096, %v3128
          %v3130 = vsub.f32 1.0, %v3129
          %v3131 = vmul.f32 %v3128, %v3130
          %v3132 = vadd.f32 %v3128, %v3131
          %vm3133 = vweird.f32 %v3096
          %vm3134 = vweird.f32 %v3128
          %vm3135 = vmor %vm3133, %vm3134
          %v3136 = vsel %vm3135, %v3128, %v3132
          %v3137 = vand.u32 2147483647, %v3096
          %vm3138 = vcmp.eq.f32.partialorder %v3137, 8.507059e+37
          %v3139 = vand.u32 %v3096, 2147483648
          %v3140 = vor.u32 1.1754944e-38, %v3139
          %v3141 = vsel %vm3138, %v3140, %v3136
          %v3142 = vmul.f32 1.0, %v3141
          %v3143 = vrcp.pop %v3097
          %v3144 = vmul.f32 %v3097, %v3143
          %v3145 = vsub.f32 1.0, %v3144
          %v3146 = vmul.f32 %v3143, %v3145
          %v3147 = vadd.f32 %v3143, %v3146
          %vm3148 = vweird.f32 %v3097
          %vm3149 = vweird.f32 %v3143
          %vm3150 = vmor %vm3148, %vm3149
          %v3151 = vsel %vm3150, %v3143, %v3147
          %v3152 = vand.u32 2147483647, %v3097
          %vm3153 = vcmp.eq.f32.partialorder %v3152, 8.507059e+37
          %v3154 = vand.u32 %v3097, 2147483648
          %v3155 = vor.u32 1.1754944e-38, %v3154
          %v3156 = vsel %vm3153, %v3155, %v3151
          %v3157 = vmul.f32 1.0, %v3156
          %v3158 = vrcp.pop %v3098
          %v3159 = vmul.f32 %v3098, %v3158
          %v3160 = vsub.f32 1.0, %v3159
          %v3161 = vmul.f32 %v3158, %v3160
          %v3162 = vadd.f32 %v3158, %v3161
          %vm3163 = vweird.f32 %v3098
          %vm3164 = vweird.f32 %v3158
          %vm3165 = vmor %vm3163, %vm3164
          %v3166 = vsel %vm3165, %v3158, %v3162
          %v3167 = vand.u32 2147483647, %v3098
          %vm3168 = vcmp.eq.f32.partialorder %v3167, 8.507059e+37
          %v3169 = vand.u32 %v3098, 2147483648
          %v3170 = vor.u32 1.1754944e-38, %v3169
          %v3171 = vsel %vm3168, %v3170, %v3166
          %v3172 = vmul.f32 1.0, %v3171
          %v3173 = vrcp.pop %v3099
          %v3174 = vmul.f32 %v3099, %v3173
          %v3175 = vsub.f32 1.0, %v3174
          %v3176 = vmul.f32 %v3173, %v3175
          %v3177 = vadd.f32 %v3173, %v3176
          %vm3178 = vweird.f32 %v3099
          %vm3179 = vweird.f32 %v3173
          %vm3180 = vmor %vm3178, %vm3179
          %v3181 = vsel %vm3180, %v3173, %v3177
          %v3182 = vand.u32 2147483647, %v3099
          %vm3183 = vcmp.eq.f32.partialorder %v3182, 8.507059e+37
          %v3184 = vand.u32 %v3099, 2147483648
          %v3185 = vor.u32 1.1754944e-38, %v3184
          %v3186 = vsel %vm3183, %v3185, %v3181
          %v3187 = vmul.f32 1.0, %v3186
          %v3188 = vrcp.pop %v3100
          %v3189 = vmul.f32 %v3100, %v3188
          %v3190 = vsub.f32 1.0, %v3189
          %v3191 = vmul.f32 %v3188, %v3190
          %v3192 = vadd.f32 %v3188, %v3191
          %vm3193 = vweird.f32 %v3100
          %vm3194 = vweird.f32 %v3188
          %vm3195 = vmor %vm3193, %vm3194
          %v3196 = vsel %vm3195, %v3188, %v3192
          %v3197 = vand.u32 2147483647, %v3100
          %vm3198 = vcmp.eq.f32.partialorder %v3197, 8.507059e+37
          %v3199 = vand.u32 %v3100, 2147483648
          %v3200 = vor.u32 1.1754944e-38, %v3199
          %v3201 = vsel %vm3198, %v3200, %v3196
          %v3202 = vmul.f32 1.0, %v3201
          %v3203 = vrcp.pop %v3101
          %v3204 = vmul.f32 %v3101, %v3203
          %v3205 = vsub.f32 1.0, %v3204
          %v3206 = vmul.f32 %v3203, %v3205
          %v3207 = vadd.f32 %v3203, %v3206
          %vm3208 = vweird.f32 %v3101
          %vm3209 = vweird.f32 %v3203
          %vm3210 = vmor %vm3208, %vm3209
          %v3211 = vsel %vm3210, %v3203, %v3207
          %v3212 = vand.u32 2147483647, %v3101
          %vm3213 = vcmp.eq.f32.partialorder %v3212, 8.507059e+37
          %v3214 = vand.u32 %v3101, 2147483648
          %v3215 = vor.u32 1.1754944e-38, %v3214
          %v3216 = vsel %vm3213, %v3215, %v3211
          %v3217 = vmul.f32 1.0, %v3216
          %v3218 = vrcp.pop %v3102
          %v3219 = vmul.f32 %v3102, %v3218
          %v3220 = vsub.f32 1.0, %v3219
          %v3221 = vmul.f32 %v3218, %v3220
          %v3222 = vadd.f32 %v3218, %v3221
          %vm3223 = vweird.f32 %v3102
          %vm3224 = vweird.f32 %v3218
          %vm3225 = vmor %vm3223, %vm3224
          %v3226 = vsel %vm3225, %v3218, %v3222
          %v3227 = vand.u32 2147483647, %v3102
          %vm3228 = vcmp.eq.f32.partialorder %v3227, 8.507059e+37
          %v3229 = vand.u32 %v3102, 2147483648
          %v3230 = vor.u32 1.1754944e-38, %v3229
          %v3231 = vsel %vm3228, %v3230, %v3226
          %v3232 = vmul.f32 1.0, %v3231
          %v3233 = vrcp.pop %v3103
          %v3234 = vmul.f32 %v3103, %v3233
          %v3235 = vsub.f32 1.0, %v3234
          %v3236 = vmul.f32 %v3233, %v3235
          %v3237 = vadd.f32 %v3233, %v3236
          %vm3238 = vweird.f32 %v3103
          %vm3239 = vweird.f32 %v3233
          %vm3240 = vmor %vm3238, %vm3239
          %v3241 = vsel %vm3240, %v3233, %v3237
          %v3242 = vand.u32 2147483647, %v3103
          %vm3243 = vcmp.eq.f32.partialorder %v3242, 8.507059e+37
          %v3244 = vand.u32 %v3103, 2147483648
          %v3245 = vor.u32 1.1754944e-38, %v3244
          %v3246 = vsel %vm3243, %v3245, %v3241
          %v3247 = vmul.f32 1.0, %v3246
          %v3248 = vrcp.pop %v3104
          %v3249 = vmul.f32 %v3104, %v3248
          %v3250 = vsub.f32 1.0, %v3249
          %v3251 = vmul.f32 %v3248, %v3250
          %v3252 = vadd.f32 %v3248, %v3251
          %vm3253 = vweird.f32 %v3104
          %vm3254 = vweird.f32 %v3248
          %vm3255 = vmor %vm3253, %vm3254
          %v3256 = vsel %vm3255, %v3248, %v3252
          %v3257 = vand.u32 2147483647, %v3104
          %vm3258 = vcmp.eq.f32.partialorder %v3257, 8.507059e+37
          %v3259 = vand.u32 %v3104, 2147483648
          %v3260 = vor.u32 1.1754944e-38, %v3259
          %v3261 = vsel %vm3258, %v3260, %v3256
          %v3262 = vmul.f32 1.0, %v3261
          %v3263 = vrcp.pop %v3105
          %v3264 = vmul.f32 %v3105, %v3263
          %v3265 = vsub.f32 1.0, %v3264
          %v3266 = vmul.f32 %v3263, %v3265
          %v3267 = vadd.f32 %v3263, %v3266
          %vm3268 = vweird.f32 %v3105
          %vm3269 = vweird.f32 %v3263
          %vm3270 = vmor %vm3268, %vm3269
          %v3271 = vsel %vm3270, %v3263, %v3267
          %v3272 = vand.u32 2147483647, %v3105
          %vm3273 = vcmp.eq.f32.partialorder %v3272, 8.507059e+37
          %v3274 = vand.u32 %v3105, 2147483648
          %v3275 = vor.u32 1.1754944e-38, %v3274
          %v3276 = vsel %vm3273, %v3275, %v3271
          %v3277 = vmul.f32 1.0, %v3276
          %v3278 = vrcp.pop %v3106
          %v3279 = vmul.f32 %v3106, %v3278
          %v3280 = vsub.f32 1.0, %v3279
          %v3281 = vmul.f32 %v3278, %v3280
          %v3282 = vadd.f32 %v3278, %v3281
          %vm3283 = vweird.f32 %v3106
          %vm3284 = vweird.f32 %v3278
          %vm3285 = vmor %vm3283, %vm3284
          %v3286 = vsel %vm3285, %v3278, %v3282
          %v3287 = vand.u32 2147483647, %v3106
          %vm3288 = vcmp.eq.f32.partialorder %v3287, 8.507059e+37
          %v3289 = vand.u32 %v3106, 2147483648
          %v3290 = vor.u32 1.1754944e-38, %v3289
          %v3291 = vsel %vm3288, %v3290, %v3286
          %v3292 = vmul.f32 1.0, %v3291
          %v3293 = vrcp.pop %v3107
          %v3294 = vmul.f32 %v3107, %v3293
          %v3295 = vsub.f32 1.0, %v3294
          %v3296 = vmul.f32 %v3293, %v3295
          %v3297 = vadd.f32 %v3293, %v3296
          %vm3298 = vweird.f32 %v3107
          %vm3299 = vweird.f32 %v3293
          %vm3300 = vmor %vm3298, %vm3299
          %v3301 = vsel %vm3300, %v3293, %v3297
          %v3302 = vand.u32 2147483647, %v3107
          %vm3303 = vcmp.eq.f32.partialorder %v3302, 8.507059e+37
          %v3304 = vand.u32 %v3107, 2147483648
          %v3305 = vor.u32 1.1754944e-38, %v3304
          %v3306 = vsel %vm3303, %v3305, %v3301
          %v3307 = vmul.f32 1.0, %v3306
          %v3308 = vrcp.pop %v3108
          %v3309 = vmul.f32 %v3108, %v3308
          %v3310 = vsub.f32 1.0, %v3309
          %v3311 = vmul.f32 %v3308, %v3310
          %v3312 = vadd.f32 %v3308, %v3311
          %vm3313 = vweird.f32 %v3108
          %vm3314 = vweird.f32 %v3308
          %vm3315 = vmor %vm3313, %vm3314
          %v3316 = vsel %vm3315, %v3308, %v3312
          %v3317 = vand.u32 2147483647, %v3108
          %vm3318 = vcmp.eq.f32.partialorder %v3317, 8.507059e+37
          %v3319 = vand.u32 %v3108, 2147483648
          %v3320 = vor.u32 1.1754944e-38, %v3319
          %v3321 = vsel %vm3318, %v3320, %v3316
          %v3322 = vmul.f32 1.0, %v3321
          %v3323 = vrcp.pop %v3109
          %v3324 = vmul.f32 %v3109, %v3323
          %v3325 = vsub.f32 1.0, %v3324
          %v3326 = vmul.f32 %v3323, %v3325
          %v3327 = vadd.f32 %v3323, %v3326
          %vm3328 = vweird.f32 %v3109
          %vm3329 = vweird.f32 %v3323
          %vm3330 = vmor %vm3328, %vm3329
          %v3331 = vsel %vm3330, %v3323, %v3327
          %v3332 = vand.u32 2147483647, %v3109
          %vm3333 = vcmp.eq.f32.partialorder %v3332, 8.507059e+37
          %v3334 = vand.u32 %v3109, 2147483648
          %v3335 = vor.u32 1.1754944e-38, %v3334
          %v3336 = vsel %vm3333, %v3335, %v3331
          %v3337 = vmul.f32 1.0, %v3336
          %v3338 = vrcp.pop %v3110
          %v3339 = vmul.f32 %v3110, %v3338
          %v3340 = vsub.f32 1.0, %v3339
          %v3341 = vmul.f32 %v3338, %v3340
          %v3342 = vadd.f32 %v3338, %v3341
          %vm3343 = vweird.f32 %v3110
          %vm3344 = vweird.f32 %v3338
          %vm3345 = vmor %vm3343, %vm3344
          %v3346 = vsel %vm3345, %v3338, %v3342
          %v3347 = vand.u32 2147483647, %v3110
          %vm3348 = vcmp.eq.f32.partialorder %v3347, 8.507059e+37
          %v3349 = vand.u32 %v3110, 2147483648
          %v3350 = vor.u32 1.1754944e-38, %v3349
          %v3351 = vsel %vm3348, %v3350, %v3346
          %v3352 = vmul.f32 1.0, %v3351
          %v3353 = vrcp.pop %v3111
          %v3354 = vmul.f32 %v3111, %v3353
          %v3355 = vsub.f32 1.0, %v3354
          %v3356 = vmul.f32 %v3353, %v3355
          %v3357 = vadd.f32 %v3353, %v3356
          %vm3358 = vweird.f32 %v3111
          %vm3359 = vweird.f32 %v3353
          %vm3360 = vmor %vm3358, %vm3359
          %v3361 = vsel %vm3360, %v3353, %v3357
          %v3362 = vand.u32 2147483647, %v3111
          %vm3363 = vcmp.eq.f32.partialorder %v3362, 8.507059e+37
          %v3364 = vand.u32 %v3111, 2147483648
          %v3365 = vor.u32 1.1754944e-38, %v3364
          %v3366 = vsel %vm3363, %v3365, %v3361
          %v3367 = vmul.f32 1.0, %v3366
          %v3368 = vrcp.pop %v3112
          %v3369 = vmul.f32 %v3112, %v3368
          %v3370 = vsub.f32 1.0, %v3369
          %v3371 = vmul.f32 %v3368, %v3370
          %v3372 = vadd.f32 %v3368, %v3371
          %vm3373 = vweird.f32 %v3112
          %vm3374 = vweird.f32 %v3368
          %vm3375 = vmor %vm3373, %vm3374
          %v3376 = vsel %vm3375, %v3368, %v3372
          %v3377 = vand.u32 2147483647, %v3112
          %vm3378 = vcmp.eq.f32.partialorder %v3377, 8.507059e+37
          %v3379 = vand.u32 %v3112, 2147483648
          %v3380 = vor.u32 1.1754944e-38, %v3379
          %v3381 = vsel %vm3378, %v3380, %v3376
          %v3382 = vmul.f32 1.0, %v3381
          %v3383 = vrcp.pop %v3113
          %v3384 = vmul.f32 %v3113, %v3383
          %v3385 = vsub.f32 1.0, %v3384
          %v3386 = vmul.f32 %v3383, %v3385
          %v3387 = vadd.f32 %v3383, %v3386
          %vm3388 = vweird.f32 %v3113
          %vm3389 = vweird.f32 %v3383
          %vm3390 = vmor %vm3388, %vm3389
          %v3391 = vsel %vm3390, %v3383, %v3387
          %v3392 = vand.u32 2147483647, %v3113
          %vm3393 = vcmp.eq.f32.partialorder %v3392, 8.507059e+37
          %v3394 = vand.u32 %v3113, 2147483648
          %v3395 = vor.u32 1.1754944e-38, %v3394
          %v3396 = vsel %vm3393, %v3395, %v3391
          %v3397 = vmul.f32 1.0, %v3396
          %v3398 = vrcp.pop %v3114
          %v3399 = vmul.f32 %v3114, %v3398
          %v3400 = vsub.f32 1.0, %v3399
          %v3401 = vmul.f32 %v3398, %v3400
          %v3402 = vadd.f32 %v3398, %v3401
          %vm3403 = vweird.f32 %v3114
          %vm3404 = vweird.f32 %v3398
          %vm3405 = vmor %vm3403, %vm3404
          %v3406 = vsel %vm3405, %v3398, %v3402
          %v3407 = vand.u32 2147483647, %v3114
          %vm3408 = vcmp.eq.f32.partialorder %v3407, 8.507059e+37
          %v3409 = vand.u32 %v3114, 2147483648
          %v3410 = vor.u32 1.1754944e-38, %v3409
          %v3411 = vsel %vm3408, %v3410, %v3406
          %v3412 = vmul.f32 1.0, %v3411
          %v3413 = vrcp.pop %v3115
          %v3414 = vmul.f32 %v3115, %v3413
          %v3415 = vsub.f32 1.0, %v3414
          %v3416 = vmul.f32 %v3413, %v3415
          %v3417 = vadd.f32 %v3413, %v3416
          %vm3418 = vweird.f32 %v3115
          %vm3419 = vweird.f32 %v3413
          %vm3420 = vmor %vm3418, %vm3419
          %v3421 = vsel %vm3420, %v3413, %v3417
          %v3422 = vand.u32 2147483647, %v3115
          %vm3423 = vcmp.eq.f32.partialorder %v3422, 8.507059e+37
          %v3424 = vand.u32 %v3115, 2147483648
          %v3425 = vor.u32 1.1754944e-38, %v3424
          %v3426 = vsel %vm3423, %v3425, %v3421
          %v3427 = vmul.f32 1.0, %v3426
          %v3428 = vrcp.pop %v3116
          %v3429 = vmul.f32 %v3116, %v3428
          %v3430 = vsub.f32 1.0, %v3429
          %v3431 = vmul.f32 %v3428, %v3430
          %v3432 = vadd.f32 %v3428, %v3431
          %vm3433 = vweird.f32 %v3116
          %vm3434 = vweird.f32 %v3428
          %vm3435 = vmor %vm3433, %vm3434
          %v3436 = vsel %vm3435, %v3428, %v3432
          %v3437 = vand.u32 2147483647, %v3116
          %vm3438 = vcmp.eq.f32.partialorder %v3437, 8.507059e+37
          %v3439 = vand.u32 %v3116, 2147483648
          %v3440 = vor.u32 1.1754944e-38, %v3439
          %v3441 = vsel %vm3438, %v3440, %v3436
          %v3442 = vmul.f32 1.0, %v3441
          %v3443 = vrcp.pop %v3117
          %v3444 = vmul.f32 %v3117, %v3443
          %v3445 = vsub.f32 1.0, %v3444
          %v3446 = vmul.f32 %v3443, %v3445
          %v3447 = vadd.f32 %v3443, %v3446
          %vm3448 = vweird.f32 %v3117
          %vm3449 = vweird.f32 %v3443
          %vm3450 = vmor %vm3448, %vm3449
          %v3451 = vsel %vm3450, %v3443, %v3447
          %v3452 = vand.u32 2147483647, %v3117
          %vm3453 = vcmp.eq.f32.partialorder %v3452, 8.507059e+37
          %v3454 = vand.u32 %v3117, 2147483648
          %v3455 = vor.u32 1.1754944e-38, %v3454
          %v3456 = vsel %vm3453, %v3455, %v3451
          %v3457 = vmul.f32 1.0, %v3456
          %v3458 = vrcp.pop %v3118
          %v3459 = vmul.f32 %v3118, %v3458
          %v3460 = vsub.f32 1.0, %v3459
          %v3461 = vmul.f32 %v3458, %v3460
          %v3462 = vadd.f32 %v3458, %v3461
          %vm3463 = vweird.f32 %v3118
          %vm3464 = vweird.f32 %v3458
          %vm3465 = vmor %vm3463, %vm3464
          %v3466 = vsel %vm3465, %v3458, %v3462
          %v3467 = vand.u32 2147483647, %v3118
          %vm3468 = vcmp.eq.f32.partialorder %v3467, 8.507059e+37
          %v3469 = vand.u32 %v3118, 2147483648
          %v3470 = vor.u32 1.1754944e-38, %v3469
          %v3471 = vsel %vm3468, %v3470, %v3466
          %v3472 = vmul.f32 1.0, %v3471
          %v3473 = vrcp.pop %v3119
          %v3474 = vmul.f32 %v3119, %v3473
          %v3475 = vsub.f32 1.0, %v3474
          %v3476 = vmul.f32 %v3473, %v3475
          %v3477 = vadd.f32 %v3473, %v3476
          %vm3478 = vweird.f32 %v3119
          %vm3479 = vweird.f32 %v3473
          %vm3480 = vmor %vm3478, %vm3479
          %v3481 = vsel %vm3480, %v3473, %v3477
          %v3482 = vand.u32 2147483647, %v3119
          %vm3483 = vcmp.eq.f32.partialorder %v3482, 8.507059e+37
          %v3484 = vand.u32 %v3119, 2147483648
          %v3485 = vor.u32 1.1754944e-38, %v3484
          %v3486 = vsel %vm3483, %v3485, %v3481
          %v3487 = vmul.f32 1.0, %v3486
          %v3488 = vrcp.pop %v3120
          %v3489 = vmul.f32 %v3120, %v3488
          %v3490 = vsub.f32 1.0, %v3489
          %v3491 = vmul.f32 %v3488, %v3490
          %v3492 = vadd.f32 %v3488, %v3491
          %vm3493 = vweird.f32 %v3120
          %vm3494 = vweird.f32 %v3488
          %vm3495 = vmor %vm3493, %vm3494
          %v3496 = vsel %vm3495, %v3488, %v3492
          %v3497 = vand.u32 2147483647, %v3120
          %vm3498 = vcmp.eq.f32.partialorder %v3497, 8.507059e+37
          %v3499 = vand.u32 %v3120, 2147483648
          %v3500 = vor.u32 1.1754944e-38, %v3499
          %v3501 = vsel %vm3498, %v3500, %v3496
          %v3502 = vmul.f32 1.0, %v3501
          %v3503 = vrcp.pop %v3121
          %v3504 = vmul.f32 %v3121, %v3503
          %v3505 = vsub.f32 1.0, %v3504
          %v3506 = vmul.f32 %v3503, %v3505
          %v3507 = vadd.f32 %v3503, %v3506
          %vm3508 = vweird.f32 %v3121
          %vm3509 = vweird.f32 %v3503
          %vm3510 = vmor %vm3508, %vm3509
          %v3511 = vsel %vm3510, %v3503, %v3507
          %v3512 = vand.u32 2147483647, %v3121
          %vm3513 = vcmp.eq.f32.partialorder %v3512, 8.507059e+37
          %v3514 = vand.u32 %v3121, 2147483648
          %v3515 = vor.u32 1.1754944e-38, %v3514
          %v3516 = vsel %vm3513, %v3515, %v3511
          %v3517 = vmul.f32 1.0, %v3516
          %v3518 = vrcp.pop %v3122
          %v3519 = vmul.f32 %v3122, %v3518
          %v3520 = vsub.f32 1.0, %v3519
          %v3521 = vmul.f32 %v3518, %v3520
          %v3522 = vadd.f32 %v3518, %v3521
          %vm3523 = vweird.f32 %v3122
          %vm3524 = vweird.f32 %v3518
          %vm3525 = vmor %vm3523, %vm3524
          %v3526 = vsel %vm3525, %v3518, %v3522
          %v3527 = vand.u32 2147483647, %v3122
          %vm3528 = vcmp.eq.f32.partialorder %v3527, 8.507059e+37
          %v3529 = vand.u32 %v3122, 2147483648
          %v3530 = vor.u32 1.1754944e-38, %v3529
          %v3531 = vsel %vm3528, %v3530, %v3526
          %v3532 = vmul.f32 1.0, %v3531
          %v3533 = vrcp.pop %v3123
          %v3534 = vmul.f32 %v3123, %v3533
          %v3535 = vsub.f32 1.0, %v3534
          %v3536 = vmul.f32 %v3533, %v3535
          %v3537 = vadd.f32 %v3533, %v3536
          %vm3538 = vweird.f32 %v3123
          %vm3539 = vweird.f32 %v3533
          %vm3540 = vmor %vm3538, %vm3539
          %v3541 = vsel %vm3540, %v3533, %v3537
          %v3542 = vand.u32 2147483647, %v3123
          %vm3543 = vcmp.eq.f32.partialorder %v3542, 8.507059e+37
          %v3544 = vand.u32 %v3123, 2147483648
          %v3545 = vor.u32 1.1754944e-38, %v3544
          %v3546 = vsel %vm3543, %v3545, %v3541
          %v3547 = vmul.f32 1.0, %v3546
          %v3548 = vrcp.pop %v3124
          %v3549 = vmul.f32 %v3124, %v3548
          %v3550 = vsub.f32 1.0, %v3549
          %v3551 = vmul.f32 %v3548, %v3550
          %v3552 = vadd.f32 %v3548, %v3551
          %vm3553 = vweird.f32 %v3124
          %vm3554 = vweird.f32 %v3548
          %vm3555 = vmor %vm3553, %vm3554
          %v3556 = vsel %vm3555, %v3548, %v3552
          %v3557 = vand.u32 2147483647, %v3124
          %vm3558 = vcmp.eq.f32.partialorder %v3557, 8.507059e+37
          %v3559 = vand.u32 %v3124, 2147483648
          %v3560 = vor.u32 1.1754944e-38, %v3559
          %v3561 = vsel %vm3558, %v3560, %v3556
          %v3562 = vmul.f32 1.0, %v3561
          %v3563 = vrcp.pop %v3125
          %v3564 = vmul.f32 %v3125, %v3563
          %v3565 = vsub.f32 1.0, %v3564
          %v3566 = vmul.f32 %v3563, %v3565
          %v3567 = vadd.f32 %v3563, %v3566
          %vm3568 = vweird.f32 %v3125
          %vm3569 = vweird.f32 %v3563
          %vm3570 = vmor %vm3568, %vm3569
          %v3571 = vsel %vm3570, %v3563, %v3567
          %v3572 = vand.u32 2147483647, %v3125
          %vm3573 = vcmp.eq.f32.partialorder %v3572, 8.507059e+37
          %v3574 = vand.u32 %v3125, 2147483648
          %v3575 = vor.u32 1.1754944e-38, %v3574
          %v3576 = vsel %vm3573, %v3575, %v3571
          %v3577 = vmul.f32 1.0, %v3576
          %v3578 = vrcp.pop %v3126
          %v3579 = vmul.f32 %v3126, %v3578
          %v3580 = vsub.f32 1.0, %v3579
          %v3581 = vmul.f32 %v3578, %v3580
          %v3582 = vadd.f32 %v3578, %v3581
          %vm3583 = vweird.f32 %v3126
          %vm3584 = vweird.f32 %v3578
          %vm3585 = vmor %vm3583, %vm3584
          %v3586 = vsel %vm3585, %v3578, %v3582
          %v3587 = vand.u32 2147483647, %v3126
          %vm3588 = vcmp.eq.f32.partialorder %v3587, 8.507059e+37
          %v3589 = vand.u32 %v3126, 2147483648
          %v3590 = vor.u32 1.1754944e-38, %v3589
          %v3591 = vsel %vm3588, %v3590, %v3586
          %v3592 = vmul.f32 1.0, %v3591
          %v3593 = vrcp.pop %v3127
          %v3594 = vmul.f32 %v3127, %v3593
          %v3595 = vsub.f32 1.0, %v3594
          %v3596 = vmul.f32 %v3593, %v3595
          %v3597 = vadd.f32 %v3593, %v3596
          %vm3598 = vweird.f32 %v3127
          %vm3599 = vweird.f32 %v3593
          %vm3600 = vmor %vm3598, %vm3599
          %v3601 = vsel %vm3600, %v3593, %v3597
          %v3602 = vand.u32 2147483647, %v3127
          %vm3603 = vcmp.eq.f32.partialorder %v3602, 8.507059e+37
          %v3604 = vand.u32 %v3127, 2147483648
          %v3605 = vor.u32 1.1754944e-38, %v3604
          %v3606 = vsel %vm3603, %v3605, %v3601
          %v3607 = vmul.f32 1.0, %v3606
          %v3608 = vtanh.pop %v2345
          %v3609 = vtanh.pop %v2347
          %v3610 = vtanh.pop %v2349
          %v3611 = vtanh.pop %v2351
          %v3612 = vtanh.pop %v2353
          %v3613 = vtanh.pop %v2355
          %v3614 = vtanh.pop %v2357
          %v3615 = vtanh.pop %v2359
          %v3616 = vtanh.pop %v2361
          %v3617 = vtanh.pop %v2363
          %v3618 = vtanh.pop %v2365
          %v3619 = vtanh.pop %v2367
          %v3620 = vtanh.pop %v2369
          %v3621 = vtanh.pop %v2371
          %v3622 = vtanh.pop %v2373
          %v3623 = vtanh.pop %v2375
          %3640 = vrot.lane.b32.xlu0 %v1805, 64
          %v3641 = vpop.permute.xlu0 %3640
          %3642 = vrot.lane.b32.xlu0 %v1806, 64
          %v3643 = vpop.permute.xlu0 %3642
          %3644 = vrot.lane.b32.xlu0 %v1807, 64
          %v3645 = vpop.permute.xlu0 %3644
          %3646 = vrot.lane.b32.xlu0 %v1808, 64
          %v3647 = vpop.permute.xlu0 %3646
          %3648 = vrot.lane.b32.xlu0 %v1809, 64
          %v3649 = vpop.permute.xlu0 %3648
          %3650 = vrot.lane.b32.xlu0 %v1810, 64
          %v3651 = vpop.permute.xlu0 %3650
          %3652 = vrot.lane.b32.xlu0 %v1811, 64
          %v3653 = vpop.permute.xlu0 %3652
          %3654 = vrot.lane.b32.xlu0 %v1812, 64
          %v3655 = vpop.permute.xlu0 %3654
          %3656 = vrot.lane.b32.xlu0 %v1813, 64
          %v3657 = vpop.permute.xlu0 %3656
          %3658 = vrot.lane.b32.xlu0 %v1814, 64
          %v3659 = vpop.permute.xlu0 %3658
          %3660 = vrot.lane.b32.xlu0 %v1815, 64
          %v3661 = vpop.permute.xlu0 %3660
          %3662 = vrot.lane.b32.xlu0 %v1816, 64
          %v3663 = vpop.permute.xlu0 %3662
          %3664 = vrot.lane.b32.xlu0 %v1817, 64
          %v3665 = vpop.permute.xlu0 %3664
          %3666 = vrot.lane.b32.xlu0 %v1818, 64
          %v3667 = vpop.permute.xlu0 %3666
          %3668 = vrot.lane.b32.xlu0 %v1819, 64
          %v3669 = vpop.permute.xlu0 %3668
          %3670 = vrot.lane.b32.xlu0 %v1820, 64
          %v3671 = vpop.permute.xlu0 %3670
          %v3688 = vmul.f32 %v2518, %v3641
          %v3689 = vmul.f32 %v2548, %v3643
          %v3690 = vmul.f32 %v2578, %v3645
          %v3691 = vmul.f32 %v2608, %v3647
          %v3692 = vmul.f32 %v2638, %v3649
          %v3693 = vmul.f32 %v2668, %v3651
          %v3694 = vmul.f32 %v2698, %v3653
          %v3695 = vmul.f32 %v2728, %v3655
          %v3696 = vmul.f32 %v2758, %v3657
          %v3697 = vmul.f32 %v2788, %v3659
          %v3698 = vmul.f32 %v2818, %v3661
          %v3699 = vmul.f32 %v2848, %v3663
          %v3700 = vmul.f32 %v2878, %v3665
          %v3701 = vmul.f32 %v2908, %v3667
          %v3702 = vmul.f32 %v2938, %v3669
          %v3703 = vmul.f32 %v2968, %v3671
          %3720 = vrot.lane.b32.xlu0 %v2984, 64
          %v3721 = vpop.permute.xlu0 %3720
          %3722 = vrot.lane.b32.xlu0 %v2985, 64
          %v3723 = vpop.permute.xlu0 %3722
          %3724 = vrot.lane.b32.xlu0 %v2986, 64
          %v3725 = vpop.permute.xlu0 %3724
          %3726 = vrot.lane.b32.xlu0 %v2987, 64
          %v3727 = vpop.permute.xlu0 %3726
          %3728 = vrot.lane.b32.xlu0 %v2988, 64
          %v3729 = vpop.permute.xlu0 %3728
          %3730 = vrot.lane.b32.xlu0 %v2989, 64
          %v3731 = vpop.permute.xlu0 %3730
          %3732 = vrot.lane.b32.xlu0 %v2990, 64
          %v3733 = vpop.permute.xlu0 %3732
          %3734 = vrot.lane.b32.xlu0 %v2991, 64
          %v3735 = vpop.permute.xlu0 %3734
          %3736 = vrot.lane.b32.xlu0 %v2992, 64
          %v3737 = vpop.permute.xlu0 %3736
          %3738 = vrot.lane.b32.xlu0 %v2993, 64
          %v3739 = vpop.permute.xlu0 %3738
          %3740 = vrot.lane.b32.xlu0 %v2994, 64
          %v3741 = vpop.permute.xlu0 %3740
          %3742 = vrot.lane.b32.xlu0 %v2995, 64
          %v3743 = vpop.permute.xlu0 %3742
          %3744 = vrot.lane.b32.xlu0 %v2996, 64
          %v3745 = vpop.permute.xlu0 %3744
          %3746 = vrot.lane.b32.xlu0 %v2997, 64
          %v3747 = vpop.permute.xlu0 %3746
          %3748 = vrot.lane.b32.xlu0 %v2998, 64
          %v3749 = vpop.permute.xlu0 %3748
          %3750 = vrot.lane.b32.xlu0 %v2999, 64
          %v3751 = vpop.permute.xlu0 %3750
          %v3768 = vmul.f32 %v2518, %v3721
          %v3769 = vmul.f32 %v2548, %v3723
          %v3770 = vmul.f32 %v2578, %v3725
          %v3771 = vmul.f32 %v2608, %v3727
          %v3772 = vmul.f32 %v2638, %v3729
          %v3773 = vmul.f32 %v2668, %v3731
          %v3774 = vmul.f32 %v2698, %v3733
          %v3775 = vmul.f32 %v2728, %v3735
          %v3776 = vmul.f32 %v2758, %v3737
          %v3777 = vmul.f32 %v2788, %v3739
          %v3778 = vmul.f32 %v2818, %v3741
          %v3779 = vmul.f32 %v2848, %v3743
          %v3780 = vmul.f32 %v2878, %v3745
          %v3781 = vmul.f32 %v2908, %v3747
          %v3782 = vmul.f32 %v2938, %v3749
          %v3783 = vmul.f32 %v2968, %v3751
          %3800 = vrot.lane.b32.xlu0 %v3768, 64
          %v3801 = vpop.permute.xlu0 %3800
          %3802 = vrot.lane.b32.xlu0 %v3769, 64
          %v3803 = vpop.permute.xlu0 %3802
          %3804 = vrot.lane.b32.xlu0 %v3770, 64
          %v3805 = vpop.permute.xlu0 %3804
          %3806 = vrot.lane.b32.xlu0 %v3771, 64
          %v3807 = vpop.permute.xlu0 %3806
          %3808 = vrot.lane.b32.xlu0 %v3772, 64
          %v3809 = vpop.permute.xlu0 %3808
          %3810 = vrot.lane.b32.xlu0 %v3773, 64
          %v3811 = vpop.permute.xlu0 %3810
          %3812 = vrot.lane.b32.xlu0 %v3774, 64
          %v3813 = vpop.permute.xlu0 %3812
          %3814 = vrot.lane.b32.xlu0 %v3775, 64
          %v3815 = vpop.permute.xlu0 %3814
          %3816 = vrot.lane.b32.xlu0 %v3776, 64
          %v3817 = vpop.permute.xlu0 %3816
          %3818 = vrot.lane.b32.xlu0 %v3777, 64
          %v3819 = vpop.permute.xlu0 %3818
          %3820 = vrot.lane.b32.xlu0 %v3778, 64
          %v3821 = vpop.permute.xlu0 %3820
          %3822 = vrot.lane.b32.xlu0 %v3779, 64
          %v3823 = vpop.permute.xlu0 %3822
          %3824 = vrot.lane.b32.xlu0 %v3780, 64
          %v3825 = vpop.permute.xlu0 %3824
          %3826 = vrot.lane.b32.xlu0 %v3781, 64
          %v3827 = vpop.permute.xlu0 %3826
          %3828 = vrot.lane.b32.xlu0 %v3782, 64
          %v3829 = vpop.permute.xlu0 %3828
          %3830 = vrot.lane.b32.xlu0 %v3783, 64
          %v3831 = vpop.permute.xlu0 %3830
          %v3848 = vadd.f32 %v3688, %v3801
          %v3849 = vadd.f32 %v3689, %v3803
          %v3850 = vadd.f32 %v3690, %v3805
          %v3851 = vadd.f32 %v3691, %v3807
          %v3852 = vadd.f32 %v3692, %v3809
          %v3853 = vadd.f32 %v3693, %v3811
          %v3854 = vadd.f32 %v3694, %v3813
          %v3855 = vadd.f32 %v3695, %v3815
          %v3856 = vadd.f32 %v3696, %v3817
          %v3857 = vadd.f32 %v3697, %v3819
          %v3858 = vadd.f32 %v3698, %v3821
          %v3859 = vadd.f32 %v3699, %v3823
          %v3860 = vadd.f32 %v3700, %v3825
          %v3861 = vadd.f32 %v3701, %v3827
          %v3862 = vadd.f32 %v3702, %v3829
          %v3863 = vadd.f32 %v3703, %v3831
          %v3864 = vtanh.pop %v3848
          %v3865 = vtanh.pop %v3849
          %v3866 = vtanh.pop %v3850
          %v3867 = vtanh.pop %v3851
          %v3868 = vtanh.pop %v3852
          %v3869 = vtanh.pop %v3853
          %v3870 = vtanh.pop %v3854
          %v3871 = vtanh.pop %v3855
          %v3872 = vtanh.pop %v3856
          %v3873 = vtanh.pop %v3857
          %v3874 = vtanh.pop %v3858
          %v3875 = vtanh.pop %v3859
          %v3876 = vtanh.pop %v3860
          %v3877 = vtanh.pop %v3861
          %v3878 = vtanh.pop %v3862
          %v3879 = vtanh.pop %v3863
          %3896 = vrot.lane.b32.xlu0 %v3864, 64
          %v3897 = vpop.permute.xlu0 %3896
          %3898 = vrot.lane.b32.xlu0 %v3865, 64
          %v3899 = vpop.permute.xlu0 %3898
          %3900 = vrot.lane.b32.xlu0 %v3866, 64
          %v3901 = vpop.permute.xlu0 %3900
          %3902 = vrot.lane.b32.xlu0 %v3867, 64
          %v3903 = vpop.permute.xlu0 %3902
          %3904 = vrot.lane.b32.xlu0 %v3868, 64
          %v3905 = vpop.permute.xlu0 %3904
          %3906 = vrot.lane.b32.xlu0 %v3869, 64
          %v3907 = vpop.permute.xlu0 %3906
          %3908 = vrot.lane.b32.xlu0 %v3870, 64
          %v3909 = vpop.permute.xlu0 %3908
          %3910 = vrot.lane.b32.xlu0 %v3871, 64
          %v3911 = vpop.permute.xlu0 %3910
          %3912 = vrot.lane.b32.xlu0 %v3872, 64
          %v3913 = vpop.permute.xlu0 %3912
          %3914 = vrot.lane.b32.xlu0 %v3873, 64
          %v3915 = vpop.permute.xlu0 %3914
          %3916 = vrot.lane.b32.xlu0 %v3874, 64
          %v3917 = vpop.permute.xlu0 %3916
          %3918 = vrot.lane.b32.xlu0 %v3875, 64
          %v3919 = vpop.permute.xlu0 %3918
          %3920 = vrot.lane.b32.xlu0 %v3876, 64
          %v3921 = vpop.permute.xlu0 %3920
          %3922 = vrot.lane.b32.xlu0 %v3877, 64
          %v3923 = vpop.permute.xlu0 %3922
          %3924 = vrot.lane.b32.xlu0 %v3878, 64
          %v3925 = vpop.permute.xlu0 %3924
          %3926 = vrot.lane.b32.xlu0 %v3879, 64
          %v3927 = vpop.permute.xlu0 %3926
          %v3944 = vmul.f32 %v2533, %v3897
          %v3945 = vmul.f32 %v2563, %v3899
          %v3946 = vmul.f32 %v2593, %v3901
          %v3947 = vmul.f32 %v2623, %v3903
          %v3948 = vmul.f32 %v2653, %v3905
          %v3949 = vmul.f32 %v2683, %v3907
          %v3950 = vmul.f32 %v2713, %v3909
          %v3951 = vmul.f32 %v2743, %v3911
          %v3952 = vmul.f32 %v2773, %v3913
          %v3953 = vmul.f32 %v2803, %v3915
          %v3954 = vmul.f32 %v2833, %v3917
          %v3955 = vmul.f32 %v2863, %v3919
          %v3956 = vmul.f32 %v2893, %v3921
          %v3957 = vmul.f32 %v2923, %v3923
          %v3958 = vmul.f32 %v2953, %v3925
          %v3959 = vmul.f32 %v2983, %v3927
          %3976 = vrot.lane.b32.xlu0 %v1837, 64
          %v3977 = vpop.permute.xlu0 %3976
          %3978 = vrot.lane.b32.xlu0 %v1838, 64
          %v3979 = vpop.permute.xlu0 %3978
          %3980 = vrot.lane.b32.xlu0 %v1839, 64
          %v3981 = vpop.permute.xlu0 %3980
          %3982 = vrot.lane.b32.xlu0 %v1840, 64
          %v3983 = vpop.permute.xlu0 %3982
          %3984 = vrot.lane.b32.xlu0 %v1841, 64
          %v3985 = vpop.permute.xlu0 %3984
          %3986 = vrot.lane.b32.xlu0 %v1842, 64
          %v3987 = vpop.permute.xlu0 %3986
          %3988 = vrot.lane.b32.xlu0 %v1843, 64
          %v3989 = vpop.permute.xlu0 %3988
          %3990 = vrot.lane.b32.xlu0 %v1844, 64
          %v3991 = vpop.permute.xlu0 %3990
          %3992 = vrot.lane.b32.xlu0 %v1845, 64
          %v3993 = vpop.permute.xlu0 %3992
          %3994 = vrot.lane.b32.xlu0 %v1846, 64
          %v3995 = vpop.permute.xlu0 %3994
          %3996 = vrot.lane.b32.xlu0 %v1847, 64
          %v3997 = vpop.permute.xlu0 %3996
          %3998 = vrot.lane.b32.xlu0 %v1848, 64
          %v3999 = vpop.permute.xlu0 %3998
          %4000 = vrot.lane.b32.xlu0 %v1849, 64
          %v4001 = vpop.permute.xlu0 %4000
          %4002 = vrot.lane.b32.xlu0 %v1850, 64
          %v4003 = vpop.permute.xlu0 %4002
          %4004 = vrot.lane.b32.xlu0 %v1851, 64
          %v4005 = vpop.permute.xlu0 %4004
          %4006 = vrot.lane.b32.xlu0 %v1852, 64
          %v4007 = vpop.permute.xlu0 %4006
          %v4024 = vmul.f32 %v3142, %v3977
          %v4025 = vmul.f32 %v3172, %v3979
          %v4026 = vmul.f32 %v3202, %v3981
          %v4027 = vmul.f32 %v3232, %v3983
          %v4028 = vmul.f32 %v3262, %v3985
          %v4029 = vmul.f32 %v3292, %v3987
          %v4030 = vmul.f32 %v3322, %v3989
          %v4031 = vmul.f32 %v3352, %v3991
          %v4032 = vmul.f32 %v3382, %v3993
          %v4033 = vmul.f32 %v3412, %v3995
          %v4034 = vmul.f32 %v3442, %v3997
          %v4035 = vmul.f32 %v3472, %v3999
          %v4036 = vmul.f32 %v3502, %v4001
          %v4037 = vmul.f32 %v3532, %v4003
          %v4038 = vmul.f32 %v3562, %v4005
          %v4039 = vmul.f32 %v3592, %v4007
          %4056 = vrot.lane.b32.xlu0 %v3608, 64
          %v4057 = vpop.permute.xlu0 %4056
          %4058 = vrot.lane.b32.xlu0 %v3609, 64
          %v4059 = vpop.permute.xlu0 %4058
          %4060 = vrot.lane.b32.xlu0 %v3610, 64
          %v4061 = vpop.permute.xlu0 %4060
          %4062 = vrot.lane.b32.xlu0 %v3611, 64
          %v4063 = vpop.permute.xlu0 %4062
          %4064 = vrot.lane.b32.xlu0 %v3612, 64
          %v4065 = vpop.permute.xlu0 %4064
          %4066 = vrot.lane.b32.xlu0 %v3613, 64
          %v4067 = vpop.permute.xlu0 %4066
          %4068 = vrot.lane.b32.xlu0 %v3614, 64
          %v4069 = vpop.permute.xlu0 %4068
          %4070 = vrot.lane.b32.xlu0 %v3615, 64
          %v4071 = vpop.permute.xlu0 %4070
          %4072 = vrot.lane.b32.xlu0 %v3616, 64
          %v4073 = vpop.permute.xlu0 %4072
          %4074 = vrot.lane.b32.xlu0 %v3617, 64
          %v4075 = vpop.permute.xlu0 %4074
          %4076 = vrot.lane.b32.xlu0 %v3618, 64
          %v4077 = vpop.permute.xlu0 %4076
          %4078 = vrot.lane.b32.xlu0 %v3619, 64
          %v4079 = vpop.permute.xlu0 %4078
          %4080 = vrot.lane.b32.xlu0 %v3620, 64
          %v4081 = vpop.permute.xlu0 %4080
          %4082 = vrot.lane.b32.xlu0 %v3621, 64
          %v4083 = vpop.permute.xlu0 %4082
          %4084 = vrot.lane.b32.xlu0 %v3622, 64
          %v4085 = vpop.permute.xlu0 %4084
          %4086 = vrot.lane.b32.xlu0 %v3623, 64
          %v4087 = vpop.permute.xlu0 %4086
          %v4104 = vmul.f32 %v3142, %v4057
          %v4105 = vmul.f32 %v3172, %v4059
          %v4106 = vmul.f32 %v3202, %v4061
          %v4107 = vmul.f32 %v3232, %v4063
          %v4108 = vmul.f32 %v3262, %v4065
          %v4109 = vmul.f32 %v3292, %v4067
          %v4110 = vmul.f32 %v3322, %v4069
          %v4111 = vmul.f32 %v3352, %v4071
          %v4112 = vmul.f32 %v3382, %v4073
          %v4113 = vmul.f32 %v3412, %v4075
          %v4114 = vmul.f32 %v3442, %v4077
          %v4115 = vmul.f32 %v3472, %v4079
          %v4116 = vmul.f32 %v3502, %v4081
          %v4117 = vmul.f32 %v3532, %v4083
          %v4118 = vmul.f32 %v3562, %v4085
          %v4119 = vmul.f32 %v3592, %v4087
          %4136 = vrot.lane.b32.xlu0 %v4104, 64
          %v4137 = vpop.permute.xlu0 %4136
          %4138 = vrot.lane.b32.xlu0 %v4105, 64
          %v4139 = vpop.permute.xlu0 %4138
          %4140 = vrot.lane.b32.xlu0 %v4106, 64
          %v4141 = vpop.permute.xlu0 %4140
          %4142 = vrot.lane.b32.xlu0 %v4107, 64
          %v4143 = vpop.permute.xlu0 %4142
          %4144 = vrot.lane.b32.xlu0 %v4108, 64
          %v4145 = vpop.permute.xlu0 %4144
          %4146 = vrot.lane.b32.xlu0 %v4109, 64
          %v4147 = vpop.permute.xlu0 %4146
          %4148 = vrot.lane.b32.xlu0 %v4110, 64
          %v4149 = vpop.permute.xlu0 %4148
          %4150 = vrot.lane.b32.xlu0 %v4111, 64
          %v4151 = vpop.permute.xlu0 %4150
          %4152 = vrot.lane.b32.xlu0 %v4112, 64
          %v4153 = vpop.permute.xlu0 %4152
          %4154 = vrot.lane.b32.xlu0 %v4113, 64
          %v4155 = vpop.permute.xlu0 %4154
          %4156 = vrot.lane.b32.xlu0 %v4114, 64
          %v4157 = vpop.permute.xlu0 %4156
          %4158 = vrot.lane.b32.xlu0 %v4115, 64
          %v4159 = vpop.permute.xlu0 %4158
          %4160 = vrot.lane.b32.xlu0 %v4116, 64
          %v4161 = vpop.permute.xlu0 %4160
          %4162 = vrot.lane.b32.xlu0 %v4117, 64
          %v4163 = vpop.permute.xlu0 %4162
          %4164 = vrot.lane.b32.xlu0 %v4118, 64
          %v4165 = vpop.permute.xlu0 %4164
          %4166 = vrot.lane.b32.xlu0 %v4119, 64
          %v4167 = vpop.permute.xlu0 %4166
          %v4184 = vadd.f32 %v4024, %v4137
          %v4185 = vadd.f32 %v4025, %v4139
          %v4186 = vadd.f32 %v4026, %v4141
          %v4187 = vadd.f32 %v4027, %v4143
          %v4188 = vadd.f32 %v4028, %v4145
          %v4189 = vadd.f32 %v4029, %v4147
          %v4190 = vadd.f32 %v4030, %v4149
          %v4191 = vadd.f32 %v4031, %v4151
          %v4192 = vadd.f32 %v4032, %v4153
          %v4193 = vadd.f32 %v4033, %v4155
          %v4194 = vadd.f32 %v4034, %v4157
          %v4195 = vadd.f32 %v4035, %v4159
          %v4196 = vadd.f32 %v4036, %v4161
          %v4197 = vadd.f32 %v4037, %v4163
          %v4198 = vadd.f32 %v4038, %v4165
          %v4199 = vadd.f32 %v4039, %v4167
          %v4200 = vtanh.pop %v4184
          %v4201 = vtanh.pop %v4185
          %v4202 = vtanh.pop %v4186
          %v4203 = vtanh.pop %v4187
          %v4204 = vtanh.pop %v4188
          %v4205 = vtanh.pop %v4189
          %v4206 = vtanh.pop %v4190
          %v4207 = vtanh.pop %v4191
          %v4208 = vtanh.pop %v4192
          %v4209 = vtanh.pop %v4193
          %v4210 = vtanh.pop %v4194
          %v4211 = vtanh.pop %v4195
          %v4212 = vtanh.pop %v4196
          %v4213 = vtanh.pop %v4197
          %v4214 = vtanh.pop %v4198
          %v4215 = vtanh.pop %v4199
          %4232 = vrot.lane.b32.xlu0 %v4200, 64
          %v4233 = vpop.permute.xlu0 %4232
          %4234 = vrot.lane.b32.xlu0 %v4201, 64
          %v4235 = vpop.permute.xlu0 %4234
          %4236 = vrot.lane.b32.xlu0 %v4202, 64
          %v4237 = vpop.permute.xlu0 %4236
          %4238 = vrot.lane.b32.xlu0 %v4203, 64
          %v4239 = vpop.permute.xlu0 %4238
          %4240 = vrot.lane.b32.xlu0 %v4204, 64
          %v4241 = vpop.permute.xlu0 %4240
          %4242 = vrot.lane.b32.xlu0 %v4205, 64
          %v4243 = vpop.permute.xlu0 %4242
          %4244 = vrot.lane.b32.xlu0 %v4206, 64
          %v4245 = vpop.permute.xlu0 %4244
          %4246 = vrot.lane.b32.xlu0 %v4207, 64
          %v4247 = vpop.permute.xlu0 %4246
          %4248 = vrot.lane.b32.xlu0 %v4208, 64
          %v4249 = vpop.permute.xlu0 %4248
          %4250 = vrot.lane.b32.xlu0 %v4209, 64
          %v4251 = vpop.permute.xlu0 %4250
          %4252 = vrot.lane.b32.xlu0 %v4210, 64
          %v4253 = vpop.permute.xlu0 %4252
          %4254 = vrot.lane.b32.xlu0 %v4211, 64
          %v4255 = vpop.permute.xlu0 %4254
          %4256 = vrot.lane.b32.xlu0 %v4212, 64
          %v4257 = vpop.permute.xlu0 %4256
          %4258 = vrot.lane.b32.xlu0 %v4213, 64
          %v4259 = vpop.permute.xlu0 %4258
          %4260 = vrot.lane.b32.xlu0 %v4214, 64
          %v4261 = vpop.permute.xlu0 %4260
          %4262 = vrot.lane.b32.xlu0 %v4215, 64
          %v4263 = vpop.permute.xlu0 %4262
          %v4280 = vmul.f32 %v3157, %v4233
          %v4281 = vmul.f32 %v3187, %v4235
          %v4282 = vmul.f32 %v3217, %v4237
          %v4283 = vmul.f32 %v3247, %v4239
          %v4284 = vmul.f32 %v3277, %v4241
          %v4285 = vmul.f32 %v3307, %v4243
          %v4286 = vmul.f32 %v3337, %v4245
          %v4287 = vmul.f32 %v3367, %v4247
          %v4288 = vmul.f32 %v3397, %v4249
          %v4289 = vmul.f32 %v3427, %v4251
          %v4290 = vmul.f32 %v3457, %v4253
          %v4291 = vmul.f32 %v3487, %v4255
          %v4292 = vmul.f32 %v3517, %v4257
          %v4293 = vmul.f32 %v3547, %v4259
          %v4294 = vmul.f32 %v3577, %v4261
          %v4295 = vmul.f32 %v3607, %v4263
          %v4296 = vstv %s1767
          %vm4297 = vcmp.lt.s32.totalorder %v4296, %v1773
          %vm4298 = vcmp.lt.s32.totalorder %v4296, %v1774
          %vm4299 = vcmp.lt.s32.totalorder %v4296, %v1775
          %vm4300 = vcmp.lt.s32.totalorder %v4296, %v1776
          %vm4301 = vcmp.lt.s32.totalorder %v4296, %v1777
          %vm4302 = vcmp.lt.s32.totalorder %v4296, %v1778
          %vm4303 = vcmp.lt.s32.totalorder %v4296, %v1779
          %vm4304 = vcmp.lt.s32.totalorder %v4296, %v1780
          %vm4305 = vcmp.lt.s32.totalorder %v4296, %v1781
          %vm4306 = vcmp.lt.s32.totalorder %v4296, %v1782
          %vm4307 = vcmp.lt.s32.totalorder %v4296, %v1783
          %vm4308 = vcmp.lt.s32.totalorder %v4296, %v1784
          %vm4309 = vcmp.lt.s32.totalorder %v4296, %v1785
          %vm4310 = vcmp.lt.s32.totalorder %v4296, %v1786
          %vm4311 = vcmp.lt.s32.totalorder %v4296, %v1787
          %vm4312 = vcmp.lt.s32.totalorder %v4296, %v1788
          %v4313 = vstv %s1772
          %vm4314 = vcmp.lt.s32.totalorder %v4313, %v1773
          %vm4315 = vcmp.lt.s32.totalorder %v4313, %v1774
          %vm4316 = vcmp.lt.s32.totalorder %v4313, %v1775
          %vm4317 = vcmp.lt.s32.totalorder %v4313, %v1776
          %vm4318 = vcmp.lt.s32.totalorder %v4313, %v1777
          %vm4319 = vcmp.lt.s32.totalorder %v4313, %v1778
          %vm4320 = vcmp.lt.s32.totalorder %v4313, %v1779
          %vm4321 = vcmp.lt.s32.totalorder %v4313, %v1780
          %vm4322 = vcmp.lt.s32.totalorder %v4313, %v1781
          %vm4323 = vcmp.lt.s32.totalorder %v4313, %v1782
          %vm4324 = vcmp.lt.s32.totalorder %v4313, %v1783
          %vm4325 = vcmp.lt.s32.totalorder %v4313, %v1784
          %vm4326 = vcmp.lt.s32.totalorder %v4313, %v1785
          %vm4327 = vcmp.lt.s32.totalorder %v4313, %v1786
          %vm4328 = vcmp.lt.s32.totalorder %v4313, %v1787
          %vm4329 = vcmp.lt.s32.totalorder %v4313, %v1788
          %v4330 = vsel %vm4297, 1, 0
          %v4331 = vsel %vm4298, 1, 0
          %v4332 = vsel %vm4299, 1, 0
          %v4333 = vsel %vm4300, 1, 0
          %v4334 = vsel %vm4301, 1, 0
          %v4335 = vsel %vm4302, 1, 0
          %v4336 = vsel %vm4303, 1, 0
          %v4337 = vsel %vm4304, 1, 0
          %v4338 = vsel %vm4305, 1, 0
          %v4339 = vsel %vm4306, 1, 0
          %v4340 = vsel %vm4307, 1, 0
          %v4341 = vsel %vm4308, 1, 0
          %v4342 = vsel %vm4309, 1, 0
          %v4343 = vsel %vm4310, 1, 0
          %v4344 = vsel %vm4311, 1, 0
          %v4345 = vsel %vm4312, 1, 0
          %4346 = vset.pattern.permute.xlu0 0
          %4347 = vperm.xlu0 %4346, %v4330
          %v4348 = vpop.permute.xlu0 %4347
          %4349 = vset.pattern.permute.xlu0 0
          %4350 = vperm.xlu0 %4349, %v4331
          %v4351 = vpop.permute.xlu0 %4350
          %4352 = vset.pattern.permute.xlu0 0
          %4353 = vperm.xlu0 %4352, %v4332
          %v4354 = vpop.permute.xlu0 %4353
          %4355 = vset.pattern.permute.xlu0 0
          %4356 = vperm.xlu0 %4355, %v4333
          %v4357 = vpop.permute.xlu0 %4356
          %4358 = vset.pattern.permute.xlu0 0
          %4359 = vperm.xlu0 %4358, %v4334
          %v4360 = vpop.permute.xlu0 %4359
          %4361 = vset.pattern.permute.xlu0 0
          %4362 = vperm.xlu0 %4361, %v4335
          %v4363 = vpop.permute.xlu0 %4362
          %4364 = vset.pattern.permute.xlu0 0
          %4365 = vperm.xlu0 %4364, %v4336
          %v4366 = vpop.permute.xlu0 %4365
          %4367 = vset.pattern.permute.xlu0 0
          %4368 = vperm.xlu0 %4367, %v4337
          %v4369 = vpop.permute.xlu0 %4368
          %4370 = vset.pattern.permute.xlu0 0
          %4371 = vperm.xlu0 %4370, %v4338
          %v4372 = vpop.permute.xlu0 %4371
          %4373 = vset.pattern.permute.xlu0 0
          %4374 = vperm.xlu0 %4373, %v4339
          %v4375 = vpop.permute.xlu0 %4374
          %4376 = vset.pattern.permute.xlu0 0
          %4377 = vperm.xlu0 %4376, %v4340
          %v4378 = vpop.permute.xlu0 %4377
          %4379 = vset.pattern.permute.xlu0 0
          %4380 = vperm.xlu0 %4379, %v4341
          %v4381 = vpop.permute.xlu0 %4380
          %4382 = vset.pattern.permute.xlu0 0
          %4383 = vperm.xlu0 %4382, %v4342
          %v4384 = vpop.permute.xlu0 %4383
          %4385 = vset.pattern.permute.xlu0 0
          %4386 = vperm.xlu0 %4385, %v4343
          %v4387 = vpop.permute.xlu0 %4386
          %4388 = vset.pattern.permute.xlu0 0
          %4389 = vperm.xlu0 %4388, %v4344
          %v4390 = vpop.permute.xlu0 %4389
          %4391 = vset.pattern.permute.xlu0 0
          %4392 = vperm.xlu0 %4391, %v4345
          %v4393 = vpop.permute.xlu0 %4392
          %vm4394 = vcmp.eq.s32.totalorder %v4348, 1
          %vm4395 = vcmp.eq.s32.totalorder %v4351, 1
          %vm4396 = vcmp.eq.s32.totalorder %v4354, 1
          %vm4397 = vcmp.eq.s32.totalorder %v4357, 1
          %vm4398 = vcmp.eq.s32.totalorder %v4360, 1
          %vm4399 = vcmp.eq.s32.totalorder %v4363, 1
          %vm4400 = vcmp.eq.s32.totalorder %v4366, 1
          %vm4401 = vcmp.eq.s32.totalorder %v4369, 1
          %vm4402 = vcmp.eq.s32.totalorder %v4372, 1
          %vm4403 = vcmp.eq.s32.totalorder %v4375, 1
          %vm4404 = vcmp.eq.s32.totalorder %v4378, 1
          %vm4405 = vcmp.eq.s32.totalorder %v4381, 1
          %vm4406 = vcmp.eq.s32.totalorder %v4384, 1
          %vm4407 = vcmp.eq.s32.totalorder %v4387, 1
          %vm4408 = vcmp.eq.s32.totalorder %v4390, 1
          %vm4409 = vcmp.eq.s32.totalorder %v4393, 1
          %v4410 = vsel %vm4394, %v3944, %v1789
          %v4411 = vsel %vm4395, %v3945, %v1790
          %v4412 = vsel %vm4396, %v3946, %v1791
          %v4413 = vsel %vm4397, %v3947, %v1792
          %v4414 = vsel %vm4398, %v3948, %v1793
          %v4415 = vsel %vm4399, %v3949, %v1794
          %v4416 = vsel %vm4400, %v3950, %v1795
          %v4417 = vsel %vm4401, %v3951, %v1796
          %v4418 = vsel %vm4402, %v3952, %v1797
          %v4419 = vsel %vm4403, %v3953, %v1798
          %v4420 = vsel %vm4404, %v3954, %v1799
          %v4421 = vsel %vm4405, %v3955, %v1800
          %v4422 = vsel %vm4406, %v3956, %v1801
          %v4423 = vsel %vm4407, %v3957, %v1802
          %v4424 = vsel %vm4408, %v3958, %v1803
          %v4425 = vsel %vm4409, %v3959, %v1804
          %4426 = vst.msk [vmem:[#allocation4] sm:$0xff] %vm1701, %v4410
          %4427 = vst.msk [vmem:[#allocation4 + $0x8] sm:$0xff] %vm1701, %v4411
          %4428 = vst.msk [vmem:[#allocation4 + $0x10] sm:$0xff] %vm1701, %v4412
          %4429 = vst.msk [vmem:[#allocation4 + $0x18] sm:$0xff] %vm1701, %v4413
          %4430 = vst.msk [vmem:[#allocation4 + $0x20] sm:$0xff] %vm1701, %v4414
          %4431 = vst.msk [vmem:[#allocation4 + $0x28] sm:$0xff] %vm1701, %v4415
          %4432 = vst.msk [vmem:[#allocation4 + $0x30] sm:$0xff] %vm1701, %v4416
          %4433 = vst.msk [vmem:[#allocation4 + $0x38] sm:$0xff] %vm1701, %v4417
          %4434 = vst.msk [vmem:[#allocation4 + $0x40] sm:$0xff] %vm1701, %v4418
          %4435 = vst.msk [vmem:[#allocation4 + $0x48] sm:$0xff] %vm1701, %v4419
          %4436 = vst.msk [vmem:[#allocation4 + $0x50] sm:$0xff] %vm1701, %v4420
          %4437 = vst.msk [vmem:[#allocation4 + $0x58] sm:$0xff] %vm1701, %v4421
          %4438 = vst.msk [vmem:[#allocation4 + $0x60] sm:$0xff] %vm1701, %v4422
          %4439 = vst.msk [vmem:[#allocation4 + $0x68] sm:$0xff] %vm1701, %v4423
          %4440 = vst.msk [vmem:[#allocation4 + $0x70] sm:$0xff] %vm1701, %v4424
          %4441 = vst.msk [vmem:[#allocation4 + $0x78] sm:$0xff] %vm1701, %v4425
          %v4442 = vsel %vm4394, %v3848, %v3641
          %v4443 = vsel %vm4395, %v3849, %v3643
          %v4444 = vsel %vm4396, %v3850, %v3645
          %v4445 = vsel %vm4397, %v3851, %v3647
          %v4446 = vsel %vm4398, %v3852, %v3649
          %v4447 = vsel %vm4399, %v3853, %v3651
          %v4448 = vsel %vm4400, %v3854, %v3653
          %v4449 = vsel %vm4401, %v3855, %v3655
          %v4450 = vsel %vm4402, %v3856, %v3657
          %v4451 = vsel %vm4403, %v3857, %v3659
          %v4452 = vsel %vm4404, %v3858, %v3661
          %v4453 = vsel %vm4405, %v3859, %v3663
          %v4454 = vsel %vm4406, %v3860, %v3665
          %v4455 = vsel %vm4407, %v3861, %v3667
          %v4456 = vsel %vm4408, %v3862, %v3669
          %v4457 = vsel %vm4409, %v3863, %v3671
          %4474 = vrot.lane.b32.xlu0 %v4442, 64
          %v4475 = vpop.permute.xlu0 %4474
          %4476 = vrot.lane.b32.xlu0 %v4443, 64
          %v4477 = vpop.permute.xlu0 %4476
          %4478 = vrot.lane.b32.xlu0 %v4444, 64
          %v4479 = vpop.permute.xlu0 %4478
          %4480 = vrot.lane.b32.xlu0 %v4445, 64
          %v4481 = vpop.permute.xlu0 %4480
          %4482 = vrot.lane.b32.xlu0 %v4446, 64
          %v4483 = vpop.permute.xlu0 %4482
          %4484 = vrot.lane.b32.xlu0 %v4447, 64
          %v4485 = vpop.permute.xlu0 %4484
          %4486 = vrot.lane.b32.xlu0 %v4448, 64
          %v4487 = vpop.permute.xlu0 %4486
          %4488 = vrot.lane.b32.xlu0 %v4449, 64
          %v4489 = vpop.permute.xlu0 %4488
          %4490 = vrot.lane.b32.xlu0 %v4450, 64
          %v4491 = vpop.permute.xlu0 %4490
          %4492 = vrot.lane.b32.xlu0 %v4451, 64
          %v4493 = vpop.permute.xlu0 %4492
          %4494 = vrot.lane.b32.xlu0 %v4452, 64
          %v4495 = vpop.permute.xlu0 %4494
          %4496 = vrot.lane.b32.xlu0 %v4453, 64
          %v4497 = vpop.permute.xlu0 %4496
          %4498 = vrot.lane.b32.xlu0 %v4454, 64
          %v4499 = vpop.permute.xlu0 %4498
          %4500 = vrot.lane.b32.xlu0 %v4455, 64
          %v4501 = vpop.permute.xlu0 %4500
          %4502 = vrot.lane.b32.xlu0 %v4456, 64
          %v4503 = vpop.permute.xlu0 %4502
          %4504 = vrot.lane.b32.xlu0 %v4457, 64
          %v4505 = vpop.permute.xlu0 %4504
          %4522 = vst.msk [vmem:[#allocation5] sm:$0xff] %vm1701, %v4475
          %4523 = vst.msk [vmem:[#allocation5 + $0x8] sm:$0xff] %vm1701, %v4477
          %4524 = vst.msk [vmem:[#allocation5 + $0x10] sm:$0xff] %vm1701, %v4479
          %4525 = vst.msk [vmem:[#allocation5 + $0x18] sm:$0xff] %vm1701, %v4481
          %4526 = vst.msk [vmem:[#allocation5 + $0x20] sm:$0xff] %vm1701, %v4483
          %4527 = vst.msk [vmem:[#allocation5 + $0x28] sm:$0xff] %vm1701, %v4485
          %4528 = vst.msk [vmem:[#allocation5 + $0x30] sm:$0xff] %vm1701, %v4487
          %4529 = vst.msk [vmem:[#allocation5 + $0x38] sm:$0xff] %vm1701, %v4489
          %4530 = vst.msk [vmem:[#allocation5 + $0x40] sm:$0xff] %vm1701, %v4491
          %4531 = vst.msk [vmem:[#allocation5 + $0x48] sm:$0xff] %vm1701, %v4493
          %4532 = vst.msk [vmem:[#allocation5 + $0x50] sm:$0xff] %vm1701, %v4495
          %4533 = vst.msk [vmem:[#allocation5 + $0x58] sm:$0xff] %vm1701, %v4497
          %4534 = vst.msk [vmem:[#allocation5 + $0x60] sm:$0xff] %vm1701, %v4499
          %4535 = vst.msk [vmem:[#allocation5 + $0x68] sm:$0xff] %vm1701, %v4501
          %4536 = vst.msk [vmem:[#allocation5 + $0x70] sm:$0xff] %vm1701, %v4503
          %4537 = vst.msk [vmem:[#allocation5 + $0x78] sm:$0xff] %vm1701, %v4505
          %v4538 = vsel %vm4314, 1, 0
          %v4539 = vsel %vm4315, 1, 0
          %v4540 = vsel %vm4316, 1, 0
          %v4541 = vsel %vm4317, 1, 0
          %v4542 = vsel %vm4318, 1, 0
          %v4543 = vsel %vm4319, 1, 0
          %v4544 = vsel %vm4320, 1, 0
          %v4545 = vsel %vm4321, 1, 0
          %v4546 = vsel %vm4322, 1, 0
          %v4547 = vsel %vm4323, 1, 0
          %v4548 = vsel %vm4324, 1, 0
          %v4549 = vsel %vm4325, 1, 0
          %v4550 = vsel %vm4326, 1, 0
          %v4551 = vsel %vm4327, 1, 0
          %v4552 = vsel %vm4328, 1, 0
          %v4553 = vsel %vm4329, 1, 0
          %4554 = vset.pattern.permute.xlu0 0
          %4555 = vperm.xlu0 %4554, %v4538
          %v4556 = vpop.permute.xlu0 %4555
          %4557 = vset.pattern.permute.xlu0 0
          %4558 = vperm.xlu0 %4557, %v4539
          %v4559 = vpop.permute.xlu0 %4558
          %4560 = vset.pattern.permute.xlu0 0
          %4561 = vperm.xlu0 %4560, %v4540
          %v4562 = vpop.permute.xlu0 %4561
          %4563 = vset.pattern.permute.xlu0 0
          %4564 = vperm.xlu0 %4563, %v4541
          %v4565 = vpop.permute.xlu0 %4564
          %4566 = vset.pattern.permute.xlu0 0
          %4567 = vperm.xlu0 %4566, %v4542
          %v4568 = vpop.permute.xlu0 %4567
          %4569 = vset.pattern.permute.xlu0 0
          %4570 = vperm.xlu0 %4569, %v4543
          %v4571 = vpop.permute.xlu0 %4570
          %4572 = vset.pattern.permute.xlu0 0
          %4573 = vperm.xlu0 %4572, %v4544
          %v4574 = vpop.permute.xlu0 %4573
          %4575 = vset.pattern.permute.xlu0 0
          %4576 = vperm.xlu0 %4575, %v4545
          %v4577 = vpop.permute.xlu0 %4576
          %4578 = vset.pattern.permute.xlu0 0
          %4579 = vperm.xlu0 %4578, %v4546
          %v4580 = vpop.permute.xlu0 %4579
          %4581 = vset.pattern.permute.xlu0 0
          %4582 = vperm.xlu0 %4581, %v4547
          %v4583 = vpop.permute.xlu0 %4582
          %4584 = vset.pattern.permute.xlu0 0
          %4585 = vperm.xlu0 %4584, %v4548
          %v4586 = vpop.permute.xlu0 %4585
          %4587 = vset.pattern.permute.xlu0 0
          %4588 = vperm.xlu0 %4587, %v4549
          %v4589 = vpop.permute.xlu0 %4588
          %4590 = vset.pattern.permute.xlu0 0
          %4591 = vperm.xlu0 %4590, %v4550
          %v4592 = vpop.permute.xlu0 %4591
          %4593 = vset.pattern.permute.xlu0 0
          %4594 = vperm.xlu0 %4593, %v4551
          %v4595 = vpop.permute.xlu0 %4594
          %4596 = vset.pattern.permute.xlu0 0
          %4597 = vperm.xlu0 %4596, %v4552
          %v4598 = vpop.permute.xlu0 %4597
          %4599 = vset.pattern.permute.xlu0 0
          %4600 = vperm.xlu0 %4599, %v4553
          %v4601 = vpop.permute.xlu0 %4600
          %vm4602 = vcmp.eq.s32.totalorder %v4556, 1
          %vm4603 = vcmp.eq.s32.totalorder %v4559, 1
          %vm4604 = vcmp.eq.s32.totalorder %v4562, 1
          %vm4605 = vcmp.eq.s32.totalorder %v4565, 1
          %vm4606 = vcmp.eq.s32.totalorder %v4568, 1
          %vm4607 = vcmp.eq.s32.totalorder %v4571, 1
          %vm4608 = vcmp.eq.s32.totalorder %v4574, 1
          %vm4609 = vcmp.eq.s32.totalorder %v4577, 1
          %vm4610 = vcmp.eq.s32.totalorder %v4580, 1
          %vm4611 = vcmp.eq.s32.totalorder %v4583, 1
          %vm4612 = vcmp.eq.s32.totalorder %v4586, 1
          %vm4613 = vcmp.eq.s32.totalorder %v4589, 1
          %vm4614 = vcmp.eq.s32.totalorder %v4592, 1
          %vm4615 = vcmp.eq.s32.totalorder %v4595, 1
          %vm4616 = vcmp.eq.s32.totalorder %v4598, 1
          %vm4617 = vcmp.eq.s32.totalorder %v4601, 1
          %v4618 = vsel %vm4602, %v4280, %v1821
          %v4619 = vsel %vm4603, %v4281, %v1822
          %v4620 = vsel %vm4604, %v4282, %v1823
          %v4621 = vsel %vm4605, %v4283, %v1824
          %v4622 = vsel %vm4606, %v4284, %v1825
          %v4623 = vsel %vm4607, %v4285, %v1826
          %v4624 = vsel %vm4608, %v4286, %v1827
          %v4625 = vsel %vm4609, %v4287, %v1828
          %v4626 = vsel %vm4610, %v4288, %v1829
          %v4627 = vsel %vm4611, %v4289, %v1830
          %v4628 = vsel %vm4612, %v4290, %v1831
          %v4629 = vsel %vm4613, %v4291, %v1832
          %v4630 = vsel %vm4614, %v4292, %v1833
          %v4631 = vsel %vm4615, %v4293, %v1834
          %v4632 = vsel %vm4616, %v4294, %v1835
          %v4633 = vsel %vm4617, %v4295, %v1836
          %4634 = vst.msk [vmem:[#allocation6] sm:$0xff] %vm1701, %v4618
          %4635 = vst.msk [vmem:[#allocation6 + $0x8] sm:$0xff] %vm1701, %v4619
          %4636 = vst.msk [vmem:[#allocation6 + $0x10] sm:$0xff] %vm1701, %v4620
          %4637 = vst.msk [vmem:[#allocation6 + $0x18] sm:$0xff] %vm1701, %v4621
          %4638 = vst.msk [vmem:[#allocation6 + $0x20] sm:$0xff] %vm1701, %v4622
          %4639 = vst.msk [vmem:[#allocation6 + $0x28] sm:$0xff] %vm1701, %v4623
          %4640 = vst.msk [vmem:[#allocation6 + $0x30] sm:$0xff] %vm1701, %v4624
          %4641 = vst.msk [vmem:[#allocation6 + $0x38] sm:$0xff] %vm1701, %v4625
          %4642 = vst.msk [vmem:[#allocation6 + $0x40] sm:$0xff] %vm1701, %v4626
          %4643 = vst.msk [vmem:[#allocation6 + $0x48] sm:$0xff] %vm1701, %v4627
          %4644 = vst.msk [vmem:[#allocation6 + $0x50] sm:$0xff] %vm1701, %v4628
          %4645 = vst.msk [vmem:[#allocation6 + $0x58] sm:$0xff] %vm1701, %v4629
          %4646 = vst.msk [vmem:[#allocation6 + $0x60] sm:$0xff] %vm1701, %v4630
          %4647 = vst.msk [vmem:[#allocation6 + $0x68] sm:$0xff] %vm1701, %v4631
          %4648 = vst.msk [vmem:[#allocation6 + $0x70] sm:$0xff] %vm1701, %v4632
          %4649 = vst.msk [vmem:[#allocation6 + $0x78] sm:$0xff] %vm1701, %v4633
          %v4650 = vsel %vm4602, %v4184, %v3977
          %v4651 = vsel %vm4603, %v4185, %v3979
          %v4652 = vsel %vm4604, %v4186, %v3981
          %v4653 = vsel %vm4605, %v4187, %v3983
          %v4654 = vsel %vm4606, %v4188, %v3985
          %v4655 = vsel %vm4607, %v4189, %v3987
          %v4656 = vsel %vm4608, %v4190, %v3989
          %v4657 = vsel %vm4609, %v4191, %v3991
          %v4658 = vsel %vm4610, %v4192, %v3993
          %v4659 = vsel %vm4611, %v4193, %v3995
          %v4660 = vsel %vm4612, %v4194, %v3997
          %v4661 = vsel %vm4613, %v4195, %v3999
          %v4662 = vsel %vm4614, %v4196, %v4001
          %v4663 = vsel %vm4615, %v4197, %v4003
          %v4664 = vsel %vm4616, %v4198, %v4005
          %v4665 = vsel %vm4617, %v4199, %v4007
          %4682 = vrot.lane.b32.xlu0 %v4650, 64
          %v4683 = vpop.permute.xlu0 %4682
          %4684 = vrot.lane.b32.xlu0 %v4651, 64
          %v4685 = vpop.permute.xlu0 %4684
          %4686 = vrot.lane.b32.xlu0 %v4652, 64
          %v4687 = vpop.permute.xlu0 %4686
          %4688 = vrot.lane.b32.xlu0 %v4653, 64
          %v4689 = vpop.permute.xlu0 %4688
          %4690 = vrot.lane.b32.xlu0 %v4654, 64
          %v4691 = vpop.permute.xlu0 %4690
          %4692 = vrot.lane.b32.xlu0 %v4655, 64
          %v4693 = vpop.permute.xlu0 %4692
          %4694 = vrot.lane.b32.xlu0 %v4656, 64
          %v4695 = vpop.permute.xlu0 %4694
          %4696 = vrot.lane.b32.xlu0 %v4657, 64
          %v4697 = vpop.permute.xlu0 %4696
          %4698 = vrot.lane.b32.xlu0 %v4658, 64
          %v4699 = vpop.permute.xlu0 %4698
          %4700 = vrot.lane.b32.xlu0 %v4659, 64
          %v4701 = vpop.permute.xlu0 %4700
          %4702 = vrot.lane.b32.xlu0 %v4660, 64
          %v4703 = vpop.permute.xlu0 %4702
          %4704 = vrot.lane.b32.xlu0 %v4661, 64
          %v4705 = vpop.permute.xlu0 %4704
          %4706 = vrot.lane.b32.xlu0 %v4662, 64
          %v4707 = vpop.permute.xlu0 %4706
          %4708 = vrot.lane.b32.xlu0 %v4663, 64
          %v4709 = vpop.permute.xlu0 %4708
          %4710 = vrot.lane.b32.xlu0 %v4664, 64
          %v4711 = vpop.permute.xlu0 %4710
          %4712 = vrot.lane.b32.xlu0 %v4665, 64
          %v4713 = vpop.permute.xlu0 %4712
          %4730 = vst.msk [vmem:[#allocation7] sm:$0xff] %vm1701, %v4683
          %4731 = vst.msk [vmem:[#allocation7 + $0x8] sm:$0xff] %vm1701, %v4685
          %4732 = vst.msk [vmem:[#allocation7 + $0x10] sm:$0xff] %vm1701, %v4687
          %4733 = vst.msk [vmem:[#allocation7 + $0x18] sm:$0xff] %vm1701, %v4689
          %4734 = vst.msk [vmem:[#allocation7 + $0x20] sm:$0xff] %vm1701, %v4691
          %4735 = vst.msk [vmem:[#allocation7 + $0x28] sm:$0xff] %vm1701, %v4693
          %4736 = vst.msk [vmem:[#allocation7 + $0x30] sm:$0xff] %vm1701, %v4695
          %4737 = vst.msk [vmem:[#allocation7 + $0x38] sm:$0xff] %vm1701, %v4697
          %4738 = vst.msk [vmem:[#allocation7 + $0x40] sm:$0xff] %vm1701, %v4699
          %4739 = vst.msk [vmem:[#allocation7 + $0x48] sm:$0xff] %vm1701, %v4701
          %4740 = vst.msk [vmem:[#allocation7 + $0x50] sm:$0xff] %vm1701, %v4703
          %4741 = vst.msk [vmem:[#allocation7 + $0x58] sm:$0xff] %vm1701, %v4705
          %4742 = vst.msk [vmem:[#allocation7 + $0x60] sm:$0xff] %vm1701, %v4707
          %4743 = vst.msk [vmem:[#allocation7 + $0x68] sm:$0xff] %vm1701, %v4709
          %4744 = vst.msk [vmem:[#allocation7 + $0x70] sm:$0xff] %vm1701, %v4711
          %4745 = vst.msk [vmem:[#allocation7 + $0x78] sm:$0xff] %vm1701, %v4713
          %v4746 = vsel %vm4394, %v3944, 0.0
          %v4747 = vsel %vm4395, %v3945, 0.0
          %v4748 = vsel %vm4396, %v3946, 0.0
          %v4749 = vsel %vm4397, %v3947, 0.0
          %v4750 = vsel %vm4398, %v3948, 0.0
          %v4751 = vsel %vm4399, %v3949, 0.0
          %v4752 = vsel %vm4400, %v3950, 0.0
          %v4753 = vsel %vm4401, %v3951, 0.0
          %v4754 = vsel %vm4402, %v3952, 0.0
          %v4755 = vsel %vm4403, %v3953, 0.0
          %v4756 = vsel %vm4404, %v3954, 0.0
          %v4757 = vsel %vm4405, %v3955, 0.0
          %v4758 = vsel %vm4406, %v3956, 0.0
          %v4759 = vsel %vm4407, %v3957, 0.0
          %v4760 = vsel %vm4408, %v3958, 0.0
          %v4761 = vsel %vm4409, %v3959, 0.0
          %s4762 = smul.u32 %s1767, 128
          %s4763 = scalar_lea.vmem [#allocation8], %s4762
          %4764 = vst.msk [vmem:[%s4763] sm:$0xff] %vm1701, %v4746
          %4765 = vst.msk [vmem:[%s4763 + $0x8] sm:$0xff] %vm1701, %v4747
          %4766 = vst.msk [vmem:[%s4763 + $0x10] sm:$0xff] %vm1701, %v4748
          %4767 = vst.msk [vmem:[%s4763 + $0x18] sm:$0xff] %vm1701, %v4749
          %4768 = vst.msk [vmem:[%s4763 + $0x20] sm:$0xff] %vm1701, %v4750
          %4769 = vst.msk [vmem:[%s4763 + $0x28] sm:$0xff] %vm1701, %v4751
          %4770 = vst.msk [vmem:[%s4763 + $0x30] sm:$0xff] %vm1701, %v4752
          %4771 = vst.msk [vmem:[%s4763 + $0x38] sm:$0xff] %vm1701, %v4753
          %4772 = vst.msk [vmem:[%s4763 + $0x40] sm:$0xff] %vm1701, %v4754
          %4773 = vst.msk [vmem:[%s4763 + $0x48] sm:$0xff] %vm1701, %v4755
          %4774 = vst.msk [vmem:[%s4763 + $0x50] sm:$0xff] %vm1701, %v4756
          %4775 = vst.msk [vmem:[%s4763 + $0x58] sm:$0xff] %vm1701, %v4757
          %4776 = vst.msk [vmem:[%s4763 + $0x60] sm:$0xff] %vm1701, %v4758
          %4777 = vst.msk [vmem:[%s4763 + $0x68] sm:$0xff] %vm1701, %v4759
          %4778 = vst.msk [vmem:[%s4763 + $0x70] sm:$0xff] %vm1701, %v4760
          %4779 = vst.msk [vmem:[%s4763 + $0x78] sm:$0xff] %vm1701, %v4761
          %v4780 = vsel %vm4602, %v4280, 0.0
          %v4781 = vsel %vm4603, %v4281, 0.0
          %v4782 = vsel %vm4604, %v4282, 0.0
          %v4783 = vsel %vm4605, %v4283, 0.0
          %v4784 = vsel %vm4606, %v4284, 0.0
          %v4785 = vsel %vm4607, %v4285, 0.0
          %v4786 = vsel %vm4608, %v4286, 0.0
          %v4787 = vsel %vm4609, %v4287, 0.0
          %v4788 = vsel %vm4610, %v4288, 0.0
          %v4789 = vsel %vm4611, %v4289, 0.0
          %v4790 = vsel %vm4612, %v4290, 0.0
          %v4791 = vsel %vm4613, %v4291, 0.0
          %v4792 = vsel %vm4614, %v4292, 0.0
          %v4793 = vsel %vm4615, %v4293, 0.0
          %v4794 = vsel %vm4616, %v4294, 0.0
          %v4795 = vsel %vm4617, %v4295, 0.0
          %4812 = vrot.lane.b32.xlu0 %v4780, 64
          %v4813 = vpop.permute.xlu0 %4812
          %4814 = vrot.lane.b32.xlu0 %v4781, 64
          %v4815 = vpop.permute.xlu0 %4814
          %4816 = vrot.lane.b32.xlu0 %v4782, 64
          %v4817 = vpop.permute.xlu0 %4816
          %4818 = vrot.lane.b32.xlu0 %v4783, 64
          %v4819 = vpop.permute.xlu0 %4818
          %4820 = vrot.lane.b32.xlu0 %v4784, 64
          %v4821 = vpop.permute.xlu0 %4820
          %4822 = vrot.lane.b32.xlu0 %v4785, 64
          %v4823 = vpop.permute.xlu0 %4822
          %4824 = vrot.lane.b32.xlu0 %v4786, 64
          %v4825 = vpop.permute.xlu0 %4824
          %4826 = vrot.lane.b32.xlu0 %v4787, 64
          %v4827 = vpop.permute.xlu0 %4826
          %4828 = vrot.lane.b32.xlu0 %v4788, 64
          %v4829 = vpop.permute.xlu0 %4828
          %4830 = vrot.lane.b32.xlu0 %v4789, 64
          %v4831 = vpop.permute.xlu0 %4830
          %4832 = vrot.lane.b32.xlu0 %v4790, 64
          %v4833 = vpop.permute.xlu0 %4832
          %4834 = vrot.lane.b32.xlu0 %v4791, 64
          %v4835 = vpop.permute.xlu0 %4834
          %4836 = vrot.lane.b32.xlu0 %v4792, 64
          %v4837 = vpop.permute.xlu0 %4836
          %4838 = vrot.lane.b32.xlu0 %v4793, 64
          %v4839 = vpop.permute.xlu0 %4838
          %4840 = vrot.lane.b32.xlu0 %v4794, 64
          %v4841 = vpop.permute.xlu0 %4840
          %4842 = vrot.lane.b32.xlu0 %v4795, 64
          %v4843 = vpop.permute.xlu0 %4842
          %s4860 = smul.u32 %s1772, 128
          %s4861 = scalar_lea.vmem [#allocation8], %s4860
          %vm4862 = vcmask 1048064
          %4863 = vst.msk [vmem:[%s4861] sm:$0xff] %vm4862, %v4813
          %4864 = vst.msk [vmem:[%s4861 + $0x8] sm:$0xff] %vm4862, %v4815
          %4865 = vst.msk [vmem:[%s4861 + $0x10] sm:$0xff] %vm4862, %v4817
          %4866 = vst.msk [vmem:[%s4861 + $0x18] sm:$0xff] %vm4862, %v4819
          %4867 = vst.msk [vmem:[%s4861 + $0x20] sm:$0xff] %vm4862, %v4821
          %4868 = vst.msk [vmem:[%s4861 + $0x28] sm:$0xff] %vm4862, %v4823
          %4869 = vst.msk [vmem:[%s4861 + $0x30] sm:$0xff] %vm4862, %v4825
          %4870 = vst.msk [vmem:[%s4861 + $0x38] sm:$0xff] %vm4862, %v4827
          %4871 = vst.msk [vmem:[%s4861 + $0x40] sm:$0xff] %vm4862, %v4829
          %4872 = vst.msk [vmem:[%s4861 + $0x48] sm:$0xff] %vm4862, %v4831
          %4873 = vst.msk [vmem:[%s4861 + $0x50] sm:$0xff] %vm4862, %v4833
          %4874 = vst.msk [vmem:[%s4861 + $0x58] sm:$0xff] %vm4862, %v4835
          %4875 = vst.msk [vmem:[%s4861 + $0x60] sm:$0xff] %vm4862, %v4837
          %4876 = vst.msk [vmem:[%s4861 + $0x68] sm:$0xff] %vm4862, %v4839
          %4877 = vst.msk [vmem:[%s4861 + $0x70] sm:$0xff] %vm4862, %v4841
          %4878 = vst.msk [vmem:[%s4861 + $0x78] sm:$0xff] %vm4862, %v4843
        $region102: #{tpu_custom_call.1} parent=85 // loop_footer
          %s1771 = sadd.s32 1, %s1767
        $region103: #{tpu_custom_call.1} parent=85 // loop_footer_branch
          %1766 = sbr.rel target = $region99
        $region104: #{tpu_custom_call.1} parent=85 // loop_exit
          _
        loop: start=0, step=1, limit=14
        $region105: #{tpu_custom_call.1} parent=85 // loop_pre_header
          _
        $region106: #{tpu_custom_call.1} parent=85 // loop_header
          %s4880 = sphi 0, %s4884
          %p4881 = scmp.ge.s32.totalorder %s4880, 14
        $region107: #{tpu_custom_call.1} parent=85 // loop_header_branch
          %4883 = sbr.rel (%p4881) target = $region111
        $region108: #{tpu_custom_call.1} parent=85 // loop_body
          %s4885 = smul.u32 %s4880, 128
          %s4886 = scalar_lea.vmem [#allocation8], %s4885
          %v4887 = vld [vmem:[%s4886] sm:$0xff]
          %v4888 = vld [vmem:[%s4886 + $0x8] sm:$0xff]
          %v4889 = vld [vmem:[%s4886 + $0x10] sm:$0xff]
          %v4890 = vld [vmem:[%s4886 + $0x18] sm:$0xff]
          %v4891 = vld [vmem:[%s4886 + $0x20] sm:$0xff]
          %v4892 = vld [vmem:[%s4886 + $0x28] sm:$0xff]
          %v4893 = vld [vmem:[%s4886 + $0x30] sm:$0xff]
          %v4894 = vld [vmem:[%s4886 + $0x38] sm:$0xff]
          %v4895 = vld [vmem:[%s4886 + $0x40] sm:$0xff]
          %v4896 = vld [vmem:[%s4886 + $0x48] sm:$0xff]
          %v4897 = vld [vmem:[%s4886 + $0x50] sm:$0xff]
          %v4898 = vld [vmem:[%s4886 + $0x58] sm:$0xff]
          %v4899 = vld [vmem:[%s4886 + $0x60] sm:$0xff]
          %v4900 = vld [vmem:[%s4886 + $0x68] sm:$0xff]
          %v4901 = vld [vmem:[%s4886 + $0x70] sm:$0xff]
          %v4902 = vld [vmem:[%s4886 + $0x78] sm:$0xff]
          %v4903 = vld [vmem:[%s5] sm:$0xff]
          %v4904 = vld [vmem:[%s5 + $0x8] sm:$0xff]
          %v4905 = vld [vmem:[%s5 + $0x10] sm:$0xff]
          %v4906 = vld [vmem:[%s5 + $0x18] sm:$0xff]
          %v4907 = vld [vmem:[%s5 + $0x20] sm:$0xff]
          %v4908 = vld [vmem:[%s5 + $0x28] sm:$0xff]
          %v4909 = vld [vmem:[%s5 + $0x30] sm:$0xff]
          %v4910 = vld [vmem:[%s5 + $0x38] sm:$0xff]
          %v4911 = vld [vmem:[%s5 + $0x40] sm:$0xff]
          %v4912 = vld [vmem:[%s5 + $0x48] sm:$0xff]
          %v4913 = vld [vmem:[%s5 + $0x50] sm:$0xff]
          %v4914 = vld [vmem:[%s5 + $0x58] sm:$0xff]
          %v4915 = vld [vmem:[%s5 + $0x60] sm:$0xff]
          %v4916 = vld [vmem:[%s5 + $0x68] sm:$0xff]
          %v4917 = vld [vmem:[%s5 + $0x70] sm:$0xff]
          %v4918 = vld [vmem:[%s5 + $0x78] sm:$0xff]
          %v4919 = vld [vmem:[%s5 + $0x80] sm:$0xff]
          %v4920 = vld [vmem:[%s5 + $0x88] sm:$0xff]
          %v4921 = vld [vmem:[%s5 + $0x90] sm:$0xff]
          %v4922 = vld [vmem:[%s5 + $0x98] sm:$0xff]
          %v4923 = vld [vmem:[%s5 + $0xa0] sm:$0xff]
          %v4924 = vld [vmem:[%s5 + $0xa8] sm:$0xff]
          %v4925 = vld [vmem:[%s5 + $0xb0] sm:$0xff]
          %v4926 = vld [vmem:[%s5 + $0xb8] sm:$0xff]
          %v4927 = vld [vmem:[%s5 + $0xc0] sm:$0xff]
          %v4928 = vld [vmem:[%s5 + $0xc8] sm:$0xff]
          %v4929 = vld [vmem:[%s5 + $0xd0] sm:$0xff]
          %v4930 = vld [vmem:[%s5 + $0xd8] sm:$0xff]
          %v4931 = vld [vmem:[%s5 + $0xe0] sm:$0xff]
          %v4932 = vld [vmem:[%s5 + $0xe8] sm:$0xff]
          %v4933 = vld [vmem:[%s5 + $0xf0] sm:$0xff]
          %v4934 = vld [vmem:[%s5 + $0xf8] sm:$0xff]
          %v4935 = vld [vmem:[%s5 + $0x100] sm:$0xff]
          %v4936 = vld [vmem:[%s5 + $0x108] sm:$0xff]
          %v4937 = vld [vmem:[%s5 + $0x110] sm:$0xff]
          %v4938 = vld [vmem:[%s5 + $0x118] sm:$0xff]
          %v4939 = vld [vmem:[%s5 + $0x120] sm:$0xff]
          %v4940 = vld [vmem:[%s5 + $0x128] sm:$0xff]
          %v4941 = vld [vmem:[%s5 + $0x130] sm:$0xff]
          %v4942 = vld [vmem:[%s5 + $0x138] sm:$0xff]
          %v4943 = vld [vmem:[%s5 + $0x140] sm:$0xff]
          %v4944 = vld [vmem:[%s5 + $0x148] sm:$0xff]
          %v4945 = vld [vmem:[%s5 + $0x150] sm:$0xff]
          %v4946 = vld [vmem:[%s5 + $0x158] sm:$0xff]
          %v4947 = vld [vmem:[%s5 + $0x160] sm:$0xff]
          %v4948 = vld [vmem:[%s5 + $0x168] sm:$0xff]
          %v4949 = vld [vmem:[%s5 + $0x170] sm:$0xff]
          %v4950 = vld [vmem:[%s5 + $0x178] sm:$0xff]
          %v4951 = vld [vmem:[%s5 + $0x180] sm:$0xff]
          %v4952 = vld [vmem:[%s5 + $0x188] sm:$0xff]
          %v4953 = vld [vmem:[%s5 + $0x190] sm:$0xff]
          %v4954 = vld [vmem:[%s5 + $0x198] sm:$0xff]
          %v4955 = vld [vmem:[%s5 + $0x1a0] sm:$0xff]
          %v4956 = vld [vmem:[%s5 + $0x1a8] sm:$0xff]
          %v4957 = vld [vmem:[%s5 + $0x1b0] sm:$0xff]
          %v4958 = vld [vmem:[%s5 + $0x1b8] sm:$0xff]
          %v4959 = vld [vmem:[%s5 + $0x1c0] sm:$0xff]
          %v4960 = vld [vmem:[%s5 + $0x1c8] sm:$0xff]
          %v4961 = vld [vmem:[%s5 + $0x1d0] sm:$0xff]
          %v4962 = vld [vmem:[%s5 + $0x1d8] sm:$0xff]
          %v4963 = vld [vmem:[%s5 + $0x1e0] sm:$0xff]
          %v4964 = vld [vmem:[%s5 + $0x1e8] sm:$0xff]
          %v4965 = vld [vmem:[%s5 + $0x1f0] sm:$0xff]
          %v4966 = vld [vmem:[%s5 + $0x1f8] sm:$0xff]
          %v4967 = vld [vmem:[%s7] sm:$0xf]
          %v4969 = vperm.slane %v4967, 0
          %v4970 = vperm.slane %v4967, 1
          %v4971 = vperm.slane %v4967, 2
          %v4972 = vperm.slane %v4967, 3
          %4977 = vmatpush.msra.mxu0 %v4963
          %4978 = vmatpush.msra.mxu0 %v4959
          %4979 = vmatpush.msra.mxu0 %v4955
          %4980 = vmatpush.msra.mxu0 %v4951
          %4981 = vmatpush.msra.mxu0 %v4947
          %4982 = vmatpush.msra.mxu0 %v4943
          %4983 = vmatpush.msra.mxu0 %v4939
          %4984 = vmatpush.msra.mxu0 %v4935
          %4985 = vmatpush.msra.mxu0 %v4931
          %4986 = vmatpush.msra.mxu0 %v4927
          %4987 = vmatpush.msra.mxu0 %v4923
          %4988 = vmatpush.msra.mxu0 %v4919
          %4989 = vmatpush.msra.mxu0 %v4915
          %4990 = vmatpush.msra.mxu0 %v4911
          %4991 = vmatpush.msra.mxu0 %v4907
          %4992 = vmatpush.msra.mxu0 %v4903
          %4993 = vmatmul.f32.gmra.mxu0 %v4887
          %v4994 = vpop.f32.mrf.mxu0
          %v4995 = vadd.f32 %v4969, %v4994
          %4996 = vmatmul.f32.gmra.mxu0 %v4888
          %v4997 = vpop.f32.mrf.mxu0
          %v4998 = vadd.f32 %v4969, %v4997
          %4999 = vmatmul.f32.gmra.mxu0 %v4889
          %v5000 = vpop.f32.mrf.mxu0
          %v5001 = vadd.f32 %v4969, %v5000
          %5002 = vmatmul.f32.gmra.mxu0 %v4890
          %v5003 = vpop.f32.mrf.mxu0
          %v5004 = vadd.f32 %v4969, %v5003
          %5005 = vmatmul.f32.gmra.mxu0 %v4891
          %v5006 = vpop.f32.mrf.mxu0
          %v5007 = vadd.f32 %v4969, %v5006
          %5008 = vmatmul.f32.gmra.mxu0 %v4892
          %v5009 = vpop.f32.mrf.mxu0
          %v5010 = vadd.f32 %v4969, %v5009
          %5011 = vmatmul.f32.gmra.mxu0 %v4893
          %v5012 = vpop.f32.mrf.mxu0
          %v5013 = vadd.f32 %v4969, %v5012
          %5014 = vmatmul.f32.gmra.mxu0 %v4894
          %v5015 = vpop.f32.mrf.mxu0
          %v5016 = vadd.f32 %v4969, %v5015
          %5017 = vmatmul.f32.gmra.mxu0 %v4895
          %v5018 = vpop.f32.mrf.mxu0
          %v5019 = vadd.f32 %v4969, %v5018
          %5020 = vmatmul.f32.gmra.mxu0 %v4896
          %v5021 = vpop.f32.mrf.mxu0
          %v5022 = vadd.f32 %v4969, %v5021
          %5023 = vmatmul.f32.gmra.mxu0 %v4897
          %v5024 = vpop.f32.mrf.mxu0
          %v5025 = vadd.f32 %v4969, %v5024
          %5026 = vmatmul.f32.gmra.mxu0 %v4898
          %v5027 = vpop.f32.mrf.mxu0
          %v5028 = vadd.f32 %v4969, %v5027
          %5029 = vmatmul.f32.gmra.mxu0 %v4899
          %v5030 = vpop.f32.mrf.mxu0
          %v5031 = vadd.f32 %v4969, %v5030
          %5032 = vmatmul.f32.gmra.mxu0 %v4900
          %v5033 = vpop.f32.mrf.mxu0
          %v5034 = vadd.f32 %v4969, %v5033
          %5035 = vmatmul.f32.gmra.mxu0 %v4901
          %v5036 = vpop.f32.mrf.mxu0
          %v5037 = vadd.f32 %v4969, %v5036
          %5038 = vmatmul.f32.gmra.mxu0 %v4902
          %v5039 = vpop.f32.mrf.mxu0
          %v5040 = vadd.f32 %v4969, %v5039
          %5041 = vdwg.mxu0
          %5042 = vmatpush.msra.mxu0 %v4964
          %5043 = vmatpush.msra.mxu0 %v4960
          %5044 = vmatpush.msra.mxu0 %v4956
          %5045 = vmatpush.msra.mxu0 %v4952
          %5046 = vmatpush.msra.mxu0 %v4948
          %5047 = vmatpush.msra.mxu0 %v4944
          %5048 = vmatpush.msra.mxu0 %v4940
          %5049 = vmatpush.msra.mxu0 %v4936
          %5050 = vmatpush.msra.mxu0 %v4932
          %5051 = vmatpush.msra.mxu0 %v4928
          %5052 = vmatpush.msra.mxu0 %v4924
          %5053 = vmatpush.msra.mxu0 %v4920
          %5054 = vmatpush.msra.mxu0 %v4916
          %5055 = vmatpush.msra.mxu0 %v4912
          %5056 = vmatpush.msra.mxu0 %v4908
          %5057 = vmatpush.msra.mxu0 %v4904
          %5058 = vmatmul.f32.gmra.mxu0 %v4887
          %v5059 = vpop.f32.mrf.mxu0
          %v5060 = vadd.f32 %v4970, %v5059
          %5061 = vmatmul.f32.gmra.mxu0 %v4888
          %v5062 = vpop.f32.mrf.mxu0
          %v5063 = vadd.f32 %v4970, %v5062
          %5064 = vmatmul.f32.gmra.mxu0 %v4889
          %v5065 = vpop.f32.mrf.mxu0
          %v5066 = vadd.f32 %v4970, %v5065
          %5067 = vmatmul.f32.gmra.mxu0 %v4890
          %v5068 = vpop.f32.mrf.mxu0
          %v5069 = vadd.f32 %v4970, %v5068
          %5070 = vmatmul.f32.gmra.mxu0 %v4891
          %v5071 = vpop.f32.mrf.mxu0
          %v5072 = vadd.f32 %v4970, %v5071
          %5073 = vmatmul.f32.gmra.mxu0 %v4892
          %v5074 = vpop.f32.mrf.mxu0
          %v5075 = vadd.f32 %v4970, %v5074
          %5076 = vmatmul.f32.gmra.mxu0 %v4893
          %v5077 = vpop.f32.mrf.mxu0
          %v5078 = vadd.f32 %v4970, %v5077
          %5079 = vmatmul.f32.gmra.mxu0 %v4894
          %v5080 = vpop.f32.mrf.mxu0
          %v5081 = vadd.f32 %v4970, %v5080
          %5082 = vmatmul.f32.gmra.mxu0 %v4895
          %v5083 = vpop.f32.mrf.mxu0
          %v5084 = vadd.f32 %v4970, %v5083
          %5085 = vmatmul.f32.gmra.mxu0 %v4896
          %v5086 = vpop.f32.mrf.mxu0
          %v5087 = vadd.f32 %v4970, %v5086
          %5088 = vmatmul.f32.gmra.mxu0 %v4897
          %v5089 = vpop.f32.mrf.mxu0
          %v5090 = vadd.f32 %v4970, %v5089
          %5091 = vmatmul.f32.gmra.mxu0 %v4898
          %v5092 = vpop.f32.mrf.mxu0
          %v5093 = vadd.f32 %v4970, %v5092
          %5094 = vmatmul.f32.gmra.mxu0 %v4899
          %v5095 = vpop.f32.mrf.mxu0
          %v5096 = vadd.f32 %v4970, %v5095
          %5097 = vmatmul.f32.gmra.mxu0 %v4900
          %v5098 = vpop.f32.mrf.mxu0
          %v5099 = vadd.f32 %v4970, %v5098
          %5100 = vmatmul.f32.gmra.mxu0 %v4901
          %v5101 = vpop.f32.mrf.mxu0
          %v5102 = vadd.f32 %v4970, %v5101
          %5103 = vmatmul.f32.gmra.mxu0 %v4902
          %v5104 = vpop.f32.mrf.mxu0
          %v5105 = vadd.f32 %v4970, %v5104
          %5106 = vdwg.mxu0
          %5107 = vmatpush.msra.mxu0 %v4965
          %5108 = vmatpush.msra.mxu0 %v4961
          %5109 = vmatpush.msra.mxu0 %v4957
          %5110 = vmatpush.msra.mxu0 %v4953
          %5111 = vmatpush.msra.mxu0 %v4949
          %5112 = vmatpush.msra.mxu0 %v4945
          %5113 = vmatpush.msra.mxu0 %v4941
          %5114 = vmatpush.msra.mxu0 %v4937
          %5115 = vmatpush.msra.mxu0 %v4933
          %5116 = vmatpush.msra.mxu0 %v4929
          %5117 = vmatpush.msra.mxu0 %v4925
          %5118 = vmatpush.msra.mxu0 %v4921
          %5119 = vmatpush.msra.mxu0 %v4917
          %5120 = vmatpush.msra.mxu0 %v4913
          %5121 = vmatpush.msra.mxu0 %v4909
          %5122 = vmatpush.msra.mxu0 %v4905
          %5123 = vmatmul.f32.gmra.mxu0 %v4887
          %v5124 = vpop.f32.mrf.mxu0
          %v5125 = vadd.f32 %v4971, %v5124
          %5126 = vmatmul.f32.gmra.mxu0 %v4888
          %v5127 = vpop.f32.mrf.mxu0
          %v5128 = vadd.f32 %v4971, %v5127
          %5129 = vmatmul.f32.gmra.mxu0 %v4889
          %v5130 = vpop.f32.mrf.mxu0
          %v5131 = vadd.f32 %v4971, %v5130
          %5132 = vmatmul.f32.gmra.mxu0 %v4890
          %v5133 = vpop.f32.mrf.mxu0
          %v5134 = vadd.f32 %v4971, %v5133
          %5135 = vmatmul.f32.gmra.mxu0 %v4891
          %v5136 = vpop.f32.mrf.mxu0
          %v5137 = vadd.f32 %v4971, %v5136
          %5138 = vmatmul.f32.gmra.mxu0 %v4892
          %v5139 = vpop.f32.mrf.mxu0
          %v5140 = vadd.f32 %v4971, %v5139
          %5141 = vmatmul.f32.gmra.mxu0 %v4893
          %v5142 = vpop.f32.mrf.mxu0
          %v5143 = vadd.f32 %v4971, %v5142
          %5144 = vmatmul.f32.gmra.mxu0 %v4894
          %v5145 = vpop.f32.mrf.mxu0
          %v5146 = vadd.f32 %v4971, %v5145
          %5147 = vmatmul.f32.gmra.mxu0 %v4895
          %v5148 = vpop.f32.mrf.mxu0
          %v5149 = vadd.f32 %v4971, %v5148
          %5150 = vmatmul.f32.gmra.mxu0 %v4896
          %v5151 = vpop.f32.mrf.mxu0
          %v5152 = vadd.f32 %v4971, %v5151
          %5153 = vmatmul.f32.gmra.mxu0 %v4897
          %v5154 = vpop.f32.mrf.mxu0
          %v5155 = vadd.f32 %v4971, %v5154
          %5156 = vmatmul.f32.gmra.mxu0 %v4898
          %v5157 = vpop.f32.mrf.mxu0
          %v5158 = vadd.f32 %v4971, %v5157
          %5159 = vmatmul.f32.gmra.mxu0 %v4899
          %v5160 = vpop.f32.mrf.mxu0
          %v5161 = vadd.f32 %v4971, %v5160
          %5162 = vmatmul.f32.gmra.mxu0 %v4900
          %v5163 = vpop.f32.mrf.mxu0
          %v5164 = vadd.f32 %v4971, %v5163
          %5165 = vmatmul.f32.gmra.mxu0 %v4901
          %v5166 = vpop.f32.mrf.mxu0
          %v5167 = vadd.f32 %v4971, %v5166
          %5168 = vmatmul.f32.gmra.mxu0 %v4902
          %v5169 = vpop.f32.mrf.mxu0
          %v5170 = vadd.f32 %v4971, %v5169
          %5171 = vdwg.mxu0
          %5172 = vmatpush.msra.mxu0 %v4966
          %5173 = vmatpush.msra.mxu0 %v4962
          %5174 = vmatpush.msra.mxu0 %v4958
          %5175 = vmatpush.msra.mxu0 %v4954
          %5176 = vmatpush.msra.mxu0 %v4950
          %5177 = vmatpush.msra.mxu0 %v4946
          %5178 = vmatpush.msra.mxu0 %v4942
          %5179 = vmatpush.msra.mxu0 %v4938
          %5180 = vmatpush.msra.mxu0 %v4934
          %5181 = vmatpush.msra.mxu0 %v4930
          %5182 = vmatpush.msra.mxu0 %v4926
          %5183 = vmatpush.msra.mxu0 %v4922
          %5184 = vmatpush.msra.mxu0 %v4918
          %5185 = vmatpush.msra.mxu0 %v4914
          %5186 = vmatpush.msra.mxu0 %v4910
          %5187 = vmatpush.msra.mxu0 %v4906
          %5188 = vmatmul.f32.gmra.mxu0 %v4887
          %v5189 = vpop.f32.mrf.mxu0
          %v5190 = vadd.f32 %v4972, %v5189
          %5191 = vmatmul.f32.gmra.mxu0 %v4888
          %v5192 = vpop.f32.mrf.mxu0
          %v5193 = vadd.f32 %v4972, %v5192
          %5194 = vmatmul.f32.gmra.mxu0 %v4889
          %v5195 = vpop.f32.mrf.mxu0
          %v5196 = vadd.f32 %v4972, %v5195
          %5197 = vmatmul.f32.gmra.mxu0 %v4890
          %v5198 = vpop.f32.mrf.mxu0
          %v5199 = vadd.f32 %v4972, %v5198
          %5200 = vmatmul.f32.gmra.mxu0 %v4891
          %v5201 = vpop.f32.mrf.mxu0
          %v5202 = vadd.f32 %v4972, %v5201
          %5203 = vmatmul.f32.gmra.mxu0 %v4892
          %v5204 = vpop.f32.mrf.mxu0
          %v5205 = vadd.f32 %v4972, %v5204
          %5206 = vmatmul.f32.gmra.mxu0 %v4893
          %v5207 = vpop.f32.mrf.mxu0
          %v5208 = vadd.f32 %v4972, %v5207
          %5209 = vmatmul.f32.gmra.mxu0 %v4894
          %v5210 = vpop.f32.mrf.mxu0
          %v5211 = vadd.f32 %v4972, %v5210
          %5212 = vmatmul.f32.gmra.mxu0 %v4895
          %v5213 = vpop.f32.mrf.mxu0
          %v5214 = vadd.f32 %v4972, %v5213
          %5215 = vmatmul.f32.gmra.mxu0 %v4896
          %v5216 = vpop.f32.mrf.mxu0
          %v5217 = vadd.f32 %v4972, %v5216
          %5218 = vmatmul.f32.gmra.mxu0 %v4897
          %v5219 = vpop.f32.mrf.mxu0
          %v5220 = vadd.f32 %v4972, %v5219
          %5221 = vmatmul.f32.gmra.mxu0 %v4898
          %v5222 = vpop.f32.mrf.mxu0
          %v5223 = vadd.f32 %v4972, %v5222
          %5224 = vmatmul.f32.gmra.mxu0 %v4899
          %v5225 = vpop.f32.mrf.mxu0
          %v5226 = vadd.f32 %v4972, %v5225
          %5227 = vmatmul.f32.gmra.mxu0 %v4900
          %v5228 = vpop.f32.mrf.mxu0
          %v5229 = vadd.f32 %v4972, %v5228
          %5230 = vmatmul.f32.gmra.mxu0 %v4901
          %v5231 = vpop.f32.mrf.mxu0
          %v5232 = vadd.f32 %v4972, %v5231
          %5233 = vmatmul.f32.gmra.mxu0 %v4902
          %v5234 = vpop.f32.mrf.mxu0
          %v5235 = vadd.f32 %v4972, %v5234
          %5236 = vdwg.mxu0
          %s5237 = smul.u32 %s4880, 32
          %s5238 = smul.addr %s5237, 8
          %s5239 = scalar_lea.vmem [#allocation2], %s5238
          %5240 = vst [vmem:[%s5239] sm:$0xff] %v4995
          %5241 = vst [vmem:[%s5239 + $0x8] sm:$0xff] %v5060
          %5242 = vst [vmem:[%s5239 + $0x10] sm:$0xff] %v4998
          %5243 = vst [vmem:[%s5239 + $0x18] sm:$0xff] %v5063
          %5244 = vst [vmem:[%s5239 + $0x20] sm:$0xff] %v5001
          %5245 = vst [vmem:[%s5239 + $0x28] sm:$0xff] %v5066
          %5246 = vst [vmem:[%s5239 + $0x30] sm:$0xff] %v5004
          %5247 = vst [vmem:[%s5239 + $0x38] sm:$0xff] %v5069
          %5248 = vst [vmem:[%s5239 + $0x40] sm:$0xff] %v5007
          %5249 = vst [vmem:[%s5239 + $0x48] sm:$0xff] %v5072
          %5250 = vst [vmem:[%s5239 + $0x50] sm:$0xff] %v5010
          %5251 = vst [vmem:[%s5239 + $0x58] sm:$0xff] %v5075
          %5252 = vst [vmem:[%s5239 + $0x60] sm:$0xff] %v5013
          %5253 = vst [vmem:[%s5239 + $0x68] sm:$0xff] %v5078
          %5254 = vst [vmem:[%s5239 + $0x70] sm:$0xff] %v5016
          %5255 = vst [vmem:[%s5239 + $0x78] sm:$0xff] %v5081
          %5256 = vst [vmem:[%s5239 + $0x80] sm:$0xff] %v5019
          %5257 = vst [vmem:[%s5239 + $0x88] sm:$0xff] %v5084
          %5258 = vst [vmem:[%s5239 + $0x90] sm:$0xff] %v5022
          %5259 = vst [vmem:[%s5239 + $0x98] sm:$0xff] %v5087
          %5260 = vst [vmem:[%s5239 + $0xa0] sm:$0xff] %v5025
          %5261 = vst [vmem:[%s5239 + $0xa8] sm:$0xff] %v5090
          %5262 = vst [vmem:[%s5239 + $0xb0] sm:$0xff] %v5028
          %5263 = vst [vmem:[%s5239 + $0xb8] sm:$0xff] %v5093
          %5264 = vst [vmem:[%s5239 + $0xc0] sm:$0xff] %v5031
          %5265 = vst [vmem:[%s5239 + $0xc8] sm:$0xff] %v5096
          %5266 = vst [vmem:[%s5239 + $0xd0] sm:$0xff] %v5034
          %5267 = vst [vmem:[%s5239 + $0xd8] sm:$0xff] %v5099
          %5268 = vst [vmem:[%s5239 + $0xe0] sm:$0xff] %v5037
          %5269 = vst [vmem:[%s5239 + $0xe8] sm:$0xff] %v5102
          %5270 = vst [vmem:[%s5239 + $0xf0] sm:$0xff] %v5040
          %5271 = vst [vmem:[%s5239 + $0xf8] sm:$0xff] %v5105
          %s5272 = smul.addr %s5237, 8
          %s5273 = scalar_lea.vmem [#allocation3], %s5272
          %5274 = vst [vmem:[%s5273] sm:$0xff] %v5125
          %5275 = vst [vmem:[%s5273 + $0x8] sm:$0xff] %v5190
          %5276 = vst [vmem:[%s5273 + $0x10] sm:$0xff] %v5128
          %5277 = vst [vmem:[%s5273 + $0x18] sm:$0xff] %v5193
          %5278 = vst [vmem:[%s5273 + $0x20] sm:$0xff] %v5131
          %5279 = vst [vmem:[%s5273 + $0x28] sm:$0xff] %v5196
          %5280 = vst [vmem:[%s5273 + $0x30] sm:$0xff] %v5134
          %5281 = vst [vmem:[%s5273 + $0x38] sm:$0xff] %v5199
          %5282 = vst [vmem:[%s5273 + $0x40] sm:$0xff] %v5137
          %5283 = vst [vmem:[%s5273 + $0x48] sm:$0xff] %v5202
          %5284 = vst [vmem:[%s5273 + $0x50] sm:$0xff] %v5140
          %5285 = vst [vmem:[%s5273 + $0x58] sm:$0xff] %v5205
          %5286 = vst [vmem:[%s5273 + $0x60] sm:$0xff] %v5143
          %5287 = vst [vmem:[%s5273 + $0x68] sm:$0xff] %v5208
          %5288 = vst [vmem:[%s5273 + $0x70] sm:$0xff] %v5146
          %5289 = vst [vmem:[%s5273 + $0x78] sm:$0xff] %v5211
          %5290 = vst [vmem:[%s5273 + $0x80] sm:$0xff] %v5149
          %5291 = vst [vmem:[%s5273 + $0x88] sm:$0xff] %v5214
          %5292 = vst [vmem:[%s5273 + $0x90] sm:$0xff] %v5152
          %5293 = vst [vmem:[%s5273 + $0x98] sm:$0xff] %v5217
          %5294 = vst [vmem:[%s5273 + $0xa0] sm:$0xff] %v5155
          %5295 = vst [vmem:[%s5273 + $0xa8] sm:$0xff] %v5220
          %5296 = vst [vmem:[%s5273 + $0xb0] sm:$0xff] %v5158
          %5297 = vst [vmem:[%s5273 + $0xb8] sm:$0xff] %v5223
          %5298 = vst [vmem:[%s5273 + $0xc0] sm:$0xff] %v5161
          %5299 = vst [vmem:[%s5273 + $0xc8] sm:$0xff] %v5226
          %5300 = vst [vmem:[%s5273 + $0xd0] sm:$0xff] %v5164
          %5301 = vst [vmem:[%s5273 + $0xd8] sm:$0xff] %v5229
          %5302 = vst [vmem:[%s5273 + $0xe0] sm:$0xff] %v5167
          %5303 = vst [vmem:[%s5273 + $0xe8] sm:$0xff] %v5232
          %5304 = vst [vmem:[%s5273 + $0xf0] sm:$0xff] %v5170
          %5305 = vst [vmem:[%s5273 + $0xf8] sm:$0xff] %v5235
        $region109: #{tpu_custom_call.1} parent=85 // loop_footer
          %s4884 = sadd.s32 1, %s4880
        $region110: #{tpu_custom_call.1} parent=85 // loop_footer_branch
          %4879 = sbr.rel target = $region106
        $region111: #{tpu_custom_call.1} parent=85 // loop_exit
          _
        %5306 = vst.msk [vmem:[#allocation4] sm:$0xff] %vm1701, 0.0
        %5307 = vst.msk [vmem:[#allocation4 + $0x8] sm:$0xff] %vm1701, 0.0
        %5308 = vst.msk [vmem:[#allocation4 + $0x10] sm:$0xff] %vm1701, 0.0
        %5309 = vst.msk [vmem:[#allocation4 + $0x18] sm:$0xff] %vm1701, 0.0
        %5310 = vst.msk [vmem:[#allocation4 + $0x20] sm:$0xff] %vm1701, 0.0
        %5311 = vst.msk [vmem:[#allocation4 + $0x28] sm:$0xff] %vm1701, 0.0
        %5312 = vst.msk [vmem:[#allocation4 + $0x30] sm:$0xff] %vm1701, 0.0
        %5313 = vst.msk [vmem:[#allocation4 + $0x38] sm:$0xff] %vm1701, 0.0
        %5314 = vst.msk [vmem:[#allocation4 + $0x40] sm:$0xff] %vm1701, 0.0
        %5315 = vst.msk [vmem:[#allocation4 + $0x48] sm:$0xff] %vm1701, 0.0
        %5316 = vst.msk [vmem:[#allocation4 + $0x50] sm:$0xff] %vm1701, 0.0
        %5317 = vst.msk [vmem:[#allocation4 + $0x58] sm:$0xff] %vm1701, 0.0
        %5318 = vst.msk [vmem:[#allocation4 + $0x60] sm:$0xff] %vm1701, 0.0
        %5319 = vst.msk [vmem:[#allocation4 + $0x68] sm:$0xff] %vm1701, 0.0
        %5320 = vst.msk [vmem:[#allocation4 + $0x70] sm:$0xff] %vm1701, 0.0
        %5321 = vst.msk [vmem:[#allocation4 + $0x78] sm:$0xff] %vm1701, 0.0
        %5322 = vst.msk [vmem:[#allocation5] sm:$0xff] %vm1701, 0.0
        %5323 = vst.msk [vmem:[#allocation5 + $0x8] sm:$0xff] %vm1701, 0.0
        %5324 = vst.msk [vmem:[#allocation5 + $0x10] sm:$0xff] %vm1701, 0.0
        %5325 = vst.msk [vmem:[#allocation5 + $0x18] sm:$0xff] %vm1701, 0.0
        %5326 = vst.msk [vmem:[#allocation5 + $0x20] sm:$0xff] %vm1701, 0.0
        %5327 = vst.msk [vmem:[#allocation5 + $0x28] sm:$0xff] %vm1701, 0.0
        %5328 = vst.msk [vmem:[#allocation5 + $0x30] sm:$0xff] %vm1701, 0.0
        %5329 = vst.msk [vmem:[#allocation5 + $0x38] sm:$0xff] %vm1701, 0.0
        %5330 = vst.msk [vmem:[#allocation5 + $0x40] sm:$0xff] %vm1701, 0.0
        %5331 = vst.msk [vmem:[#allocation5 + $0x48] sm:$0xff] %vm1701, 0.0
        %5332 = vst.msk [vmem:[#allocation5 + $0x50] sm:$0xff] %vm1701, 0.0
        %5333 = vst.msk [vmem:[#allocation5 + $0x58] sm:$0xff] %vm1701, 0.0
        %5334 = vst.msk [vmem:[#allocation5 + $0x60] sm:$0xff] %vm1701, 0.0
        %5335 = vst.msk [vmem:[#allocation5 + $0x68] sm:$0xff] %vm1701, 0.0
        %5336 = vst.msk [vmem:[#allocation5 + $0x70] sm:$0xff] %vm1701, 0.0
        %5337 = vst.msk [vmem:[#allocation5 + $0x78] sm:$0xff] %vm1701, 0.0
        %5338 = vst.msk [vmem:[#allocation6] sm:$0xff] %vm1701, 0.0
        %5339 = vst.msk [vmem:[#allocation6 + $0x8] sm:$0xff] %vm1701, 0.0
        %5340 = vst.msk [vmem:[#allocation6 + $0x10] sm:$0xff] %vm1701, 0.0
        %5341 = vst.msk [vmem:[#allocation6 + $0x18] sm:$0xff] %vm1701, 0.0
        %5342 = vst.msk [vmem:[#allocation6 + $0x20] sm:$0xff] %vm1701, 0.0
        %5343 = vst.msk [vmem:[#allocation6 + $0x28] sm:$0xff] %vm1701, 0.0
        %5344 = vst.msk [vmem:[#allocation6 + $0x30] sm:$0xff] %vm1701, 0.0
        %5345 = vst.msk [vmem:[#allocation6 + $0x38] sm:$0xff] %vm1701, 0.0
        %5346 = vst.msk [vmem:[#allocation6 + $0x40] sm:$0xff] %vm1701, 0.0
        %5347 = vst.msk [vmem:[#allocation6 + $0x48] sm:$0xff] %vm1701, 0.0
        %5348 = vst.msk [vmem:[#allocation6 + $0x50] sm:$0xff] %vm1701, 0.0
        %5349 = vst.msk [vmem:[#allocation6 + $0x58] sm:$0xff] %vm1701, 0.0
        %5350 = vst.msk [vmem:[#allocation6 + $0x60] sm:$0xff] %vm1701, 0.0
        %5351 = vst.msk [vmem:[#allocation6 + $0x68] sm:$0xff] %vm1701, 0.0
        %5352 = vst.msk [vmem:[#allocation6 + $0x70] sm:$0xff] %vm1701, 0.0
        %5353 = vst.msk [vmem:[#allocation6 + $0x78] sm:$0xff] %vm1701, 0.0
        %5354 = vst.msk [vmem:[#allocation7] sm:$0xff] %vm1701, 0.0
        %5355 = vst.msk [vmem:[#allocation7 + $0x8] sm:$0xff] %vm1701, 0.0
        %5356 = vst.msk [vmem:[#allocation7 + $0x10] sm:$0xff] %vm1701, 0.0
        %5357 = vst.msk [vmem:[#allocation7 + $0x18] sm:$0xff] %vm1701, 0.0
        %5358 = vst.msk [vmem:[#allocation7 + $0x20] sm:$0xff] %vm1701, 0.0
        %5359 = vst.msk [vmem:[#allocation7 + $0x28] sm:$0xff] %vm1701, 0.0
        %5360 = vst.msk [vmem:[#allocation7 + $0x30] sm:$0xff] %vm1701, 0.0
        %5361 = vst.msk [vmem:[#allocation7 + $0x38] sm:$0xff] %vm1701, 0.0
        %5362 = vst.msk [vmem:[#allocation7 + $0x40] sm:$0xff] %vm1701, 0.0
        %5363 = vst.msk [vmem:[#allocation7 + $0x48] sm:$0xff] %vm1701, 0.0
        %5364 = vst.msk [vmem:[#allocation7 + $0x50] sm:$0xff] %vm1701, 0.0
        %5365 = vst.msk [vmem:[#allocation7 + $0x58] sm:$0xff] %vm1701, 0.0
        %5366 = vst.msk [vmem:[#allocation7 + $0x60] sm:$0xff] %vm1701, 0.0
        %5367 = vst.msk [vmem:[#allocation7 + $0x68] sm:$0xff] %vm1701, 0.0
        %5368 = vst.msk [vmem:[#allocation7 + $0x70] sm:$0xff] %vm1701, 0.0
        %5369 = vst.msk [vmem:[#allocation7 + $0x78] sm:$0xff] %vm1701, 0.0
        loop: start=0, step=1, limit=14
        $region112: #{tpu_custom_call.1} parent=85 // loop_pre_header
          _
        $region113: #{tpu_custom_call.1} parent=85 // loop_header
          %s5371 = sphi 0, %s5375
          %p5372 = scmp.ge.s32.totalorder %s5371, 14
        $region114: #{tpu_custom_call.1} parent=85 // loop_header_branch
          %5374 = sbr.rel (%p5372) target = $region118
        $region115: #{tpu_custom_call.1} parent=85 // loop_body
          %s5376 = ssub.s32 13, %s5371
          %v5377 = vld [vmem:[%s1252] sm:$0xff]
          %v5378 = vld [vmem:[%s1252 + $0x8] sm:$0xff]
          %v5379 = vld [vmem:[%s1252 + $0x10] sm:$0xff]
          %v5380 = vld [vmem:[%s1252 + $0x18] sm:$0xff]
          %v5381 = vld [vmem:[%s1252 + $0x20] sm:$0xff]
          %v5382 = vld [vmem:[%s1252 + $0x28] sm:$0xff]
          %v5383 = vld [vmem:[%s1252 + $0x30] sm:$0xff]
          %v5384 = vld [vmem:[%s1252 + $0x38] sm:$0xff]
          %v5385 = vld [vmem:[%s1252 + $0x40] sm:$0xff]
          %v5386 = vld [vmem:[%s1252 + $0x48] sm:$0xff]
          %v5387 = vld [vmem:[%s1252 + $0x50] sm:$0xff]
          %v5388 = vld [vmem:[%s1252 + $0x58] sm:$0xff]
          %v5389 = vld [vmem:[%s1252 + $0x60] sm:$0xff]
          %v5390 = vld [vmem:[%s1252 + $0x68] sm:$0xff]
          %v5391 = vld [vmem:[%s1252 + $0x70] sm:$0xff]
          %v5392 = vld [vmem:[%s1252 + $0x78] sm:$0xff]
          %v5393 = vld [vmem:[#allocation4] sm:$0xff]
          %v5394 = vld [vmem:[#allocation4 + $0x8] sm:$0xff]
          %v5395 = vld [vmem:[#allocation4 + $0x10] sm:$0xff]
          %v5396 = vld [vmem:[#allocation4 + $0x18] sm:$0xff]
          %v5397 = vld [vmem:[#allocation4 + $0x20] sm:$0xff]
          %v5398 = vld [vmem:[#allocation4 + $0x28] sm:$0xff]
          %v5399 = vld [vmem:[#allocation4 + $0x30] sm:$0xff]
          %v5400 = vld [vmem:[#allocation4 + $0x38] sm:$0xff]
          %v5401 = vld [vmem:[#allocation4 + $0x40] sm:$0xff]
          %v5402 = vld [vmem:[#allocation4 + $0x48] sm:$0xff]
          %v5403 = vld [vmem:[#allocation4 + $0x50] sm:$0xff]
          %v5404 = vld [vmem:[#allocation4 + $0x58] sm:$0xff]
          %v5405 = vld [vmem:[#allocation4 + $0x60] sm:$0xff]
          %v5406 = vld [vmem:[#allocation4 + $0x68] sm:$0xff]
          %v5407 = vld [vmem:[#allocation4 + $0x70] sm:$0xff]
          %v5408 = vld [vmem:[#allocation4 + $0x78] sm:$0xff]
          %v5409 = vld [vmem:[#allocation5] sm:$0xff]
          %v5410 = vld [vmem:[#allocation5 + $0x8] sm:$0xff]
          %v5411 = vld [vmem:[#allocation5 + $0x10] sm:$0xff]
          %v5412 = vld [vmem:[#allocation5 + $0x18] sm:$0xff]
          %v5413 = vld [vmem:[#allocation5 + $0x20] sm:$0xff]
          %v5414 = vld [vmem:[#allocation5 + $0x28] sm:$0xff]
          %v5415 = vld [vmem:[#allocation5 + $0x30] sm:$0xff]
          %v5416 = vld [vmem:[#allocation5 + $0x38] sm:$0xff]
          %v5417 = vld [vmem:[#allocation5 + $0x40] sm:$0xff]
          %v5418 = vld [vmem:[#allocation5 + $0x48] sm:$0xff]
          %v5419 = vld [vmem:[#allocation5 + $0x50] sm:$0xff]
          %v5420 = vld [vmem:[#allocation5 + $0x58] sm:$0xff]
          %v5421 = vld [vmem:[#allocation5 + $0x60] sm:$0xff]
          %v5422 = vld [vmem:[#allocation5 + $0x68] sm:$0xff]
          %v5423 = vld [vmem:[#allocation5 + $0x70] sm:$0xff]
          %v5424 = vld [vmem:[#allocation5 + $0x78] sm:$0xff]
          %v5425 = vld [vmem:[#allocation6] sm:$0xff]
          %v5426 = vld [vmem:[#allocation6 + $0x8] sm:$0xff]
          %v5427 = vld [vmem:[#allocation6 + $0x10] sm:$0xff]
          %v5428 = vld [vmem:[#allocation6 + $0x18] sm:$0xff]
          %v5429 = vld [vmem:[#allocation6 + $0x20] sm:$0xff]
          %v5430 = vld [vmem:[#allocation6 + $0x28] sm:$0xff]
          %v5431 = vld [vmem:[#allocation6 + $0x30] sm:$0xff]
          %v5432 = vld [vmem:[#allocation6 + $0x38] sm:$0xff]
          %v5433 = vld [vmem:[#allocation6 + $0x40] sm:$0xff]
          %v5434 = vld [vmem:[#allocation6 + $0x48] sm:$0xff]
          %v5435 = vld [vmem:[#allocation6 + $0x50] sm:$0xff]
          %v5436 = vld [vmem:[#allocation6 + $0x58] sm:$0xff]
          %v5437 = vld [vmem:[#allocation6 + $0x60] sm:$0xff]
          %v5438 = vld [vmem:[#allocation6 + $0x68] sm:$0xff]
          %v5439 = vld [vmem:[#allocation6 + $0x70] sm:$0xff]
          %v5440 = vld [vmem:[#allocation6 + $0x78] sm:$0xff]
          %v5441 = vld [vmem:[#allocation7] sm:$0xff]
          %v5442 = vld [vmem:[#allocation7 + $0x8] sm:$0xff]
          %v5443 = vld [vmem:[#allocation7 + $0x10] sm:$0xff]
          %v5444 = vld [vmem:[#allocation7 + $0x18] sm:$0xff]
          %v5445 = vld [vmem:[#allocation7 + $0x20] sm:$0xff]
          %v5446 = vld [vmem:[#allocation7 + $0x28] sm:$0xff]
          %v5447 = vld [vmem:[#allocation7 + $0x30] sm:$0xff]
          %v5448 = vld [vmem:[#allocation7 + $0x38] sm:$0xff]
          %v5449 = vld [vmem:[#allocation7 + $0x40] sm:$0xff]
          %v5450 = vld [vmem:[#allocation7 + $0x48] sm:$0xff]
          %v5451 = vld [vmem:[#allocation7 + $0x50] sm:$0xff]
          %v5452 = vld [vmem:[#allocation7 + $0x58] sm:$0xff]
          %v5453 = vld [vmem:[#allocation7 + $0x60] sm:$0xff]
          %v5454 = vld [vmem:[#allocation7 + $0x68] sm:$0xff]
          %v5455 = vld [vmem:[#allocation7 + $0x70] sm:$0xff]
          %v5456 = vld [vmem:[#allocation7 + $0x78] sm:$0xff]
          %s5457 = smul.u32 %s5371, 32
          %s5458 = smul.addr %s5457, 8
          %s5459 = scalar_lea.vmem [#allocation2], %s5458
          %v5460 = vld [vmem:[%s5459] sm:$0xff]
          %v5461 = vld [vmem:[%s5459 + $0x8] sm:$0xff]
          %v5462 = vld [vmem:[%s5459 + $0x10] sm:$0xff]
          %v5463 = vld [vmem:[%s5459 + $0x18] sm:$0xff]
          %v5464 = vld [vmem:[%s5459 + $0x20] sm:$0xff]
          %v5465 = vld [vmem:[%s5459 + $0x28] sm:$0xff]
          %v5466 = vld [vmem:[%s5459 + $0x30] sm:$0xff]
          %v5467 = vld [vmem:[%s5459 + $0x38] sm:$0xff]
          %v5468 = vld [vmem:[%s5459 + $0x40] sm:$0xff]
          %v5469 = vld [vmem:[%s5459 + $0x48] sm:$0xff]
          %v5470 = vld [vmem:[%s5459 + $0x50] sm:$0xff]
          %v5471 = vld [vmem:[%s5459 + $0x58] sm:$0xff]
          %v5472 = vld [vmem:[%s5459 + $0x60] sm:$0xff]
          %v5473 = vld [vmem:[%s5459 + $0x68] sm:$0xff]
          %v5474 = vld [vmem:[%s5459 + $0x70] sm:$0xff]
          %v5475 = vld [vmem:[%s5459 + $0x78] sm:$0xff]
          %v5476 = vld [vmem:[%s5459 + $0x80] sm:$0xff]
          %v5477 = vld [vmem:[%s5459 + $0x88] sm:$0xff]
          %v5478 = vld [vmem:[%s5459 + $0x90] sm:$0xff]
          %v5479 = vld [vmem:[%s5459 + $0x98] sm:$0xff]
          %v5480 = vld [vmem:[%s5459 + $0xa0] sm:$0xff]
          %v5481 = vld [vmem:[%s5459 + $0xa8] sm:$0xff]
          %v5482 = vld [vmem:[%s5459 + $0xb0] sm:$0xff]
          %v5483 = vld [vmem:[%s5459 + $0xb8] sm:$0xff]
          %v5484 = vld [vmem:[%s5459 + $0xc0] sm:$0xff]
          %v5485 = vld [vmem:[%s5459 + $0xc8] sm:$0xff]
          %v5486 = vld [vmem:[%s5459 + $0xd0] sm:$0xff]
          %v5487 = vld [vmem:[%s5459 + $0xd8] sm:$0xff]
          %v5488 = vld [vmem:[%s5459 + $0xe0] sm:$0xff]
          %v5489 = vld [vmem:[%s5459 + $0xe8] sm:$0xff]
          %v5490 = vld [vmem:[%s5459 + $0xf0] sm:$0xff]
          %v5491 = vld [vmem:[%s5459 + $0xf8] sm:$0xff]
          %v5492 = vld [vmem:[%s6] sm:$0xff]
          %v5493 = vld [vmem:[%s6 + $0x8] sm:$0xff]
          %v5494 = vld [vmem:[%s6 + $0x10] sm:$0xff]
          %v5495 = vld [vmem:[%s6 + $0x18] sm:$0xff]
          %v5496 = vld [vmem:[%s6 + $0x20] sm:$0xff]
          %v5497 = vld [vmem:[%s6 + $0x28] sm:$0xff]
          %v5498 = vld [vmem:[%s6 + $0x30] sm:$0xff]
          %v5499 = vld [vmem:[%s6 + $0x38] sm:$0xff]
          %v5500 = vld [vmem:[%s6 + $0x40] sm:$0xff]
          %v5501 = vld [vmem:[%s6 + $0x48] sm:$0xff]
          %v5502 = vld [vmem:[%s6 + $0x50] sm:$0xff]
          %v5503 = vld [vmem:[%s6 + $0x58] sm:$0xff]
          %v5504 = vld [vmem:[%s6 + $0x60] sm:$0xff]
          %v5505 = vld [vmem:[%s6 + $0x68] sm:$0xff]
          %v5506 = vld [vmem:[%s6 + $0x70] sm:$0xff]
          %v5507 = vld [vmem:[%s6 + $0x78] sm:$0xff]
          %v5509 = vsel %vm1701, %v5393, 0
          %v5512 = vsel %vm1701, %v5394, 0
          %v5515 = vsel %vm1701, %v5395, 0
          %v5518 = vsel %vm1701, %v5396, 0
          %v5521 = vsel %vm1701, %v5397, 0
          %v5524 = vsel %vm1701, %v5398, 0
          %v5527 = vsel %vm1701, %v5399, 0
          %v5530 = vsel %vm1701, %v5400, 0
          %v5533 = vsel %vm1701, %v5401, 0
          %v5536 = vsel %vm1701, %v5402, 0
          %v5539 = vsel %vm1701, %v5403, 0
          %v5542 = vsel %vm1701, %v5404, 0
          %v5545 = vsel %vm1701, %v5405, 0
          %v5548 = vsel %vm1701, %v5406, 0
          %v5551 = vsel %vm1701, %v5407, 0
          %v5554 = vsel %vm1701, %v5408, 0
          %5556 = vmatpush.msra.mxu0 0.0
          %5557 = vmatpush.msra.mxu0 0.0
          %5558 = vmatpush.msra.mxu0 0.0
          %5559 = vmatpush.msra.mxu0 0.0
          %5560 = vmatpush.msra.mxu0 0.0
          %5561 = vmatpush.msra.mxu0 0.0
          %5562 = vmatpush.msra.mxu0 0.0
          %5563 = vmatpush.msra.mxu0 0.0
          %5564 = vmatpush.msra.mxu0 %v5506
          %5565 = vmatpush.msra.mxu0 %v5504
          %5566 = vmatpush.msra.mxu0 %v5502
          %5567 = vmatpush.msra.mxu0 %v5500
          %5568 = vmatpush.msra.mxu0 %v5498
          %5569 = vmatpush.msra.mxu0 %v5496
          %5570 = vmatpush.msra.mxu0 %v5494
          %5571 = vmatpush.msra.mxu0 %v5492
          %5572 = vmatmul.f32.gmra.mxu0 %v5509
          %v5573 = vpop.f32.mrf.mxu0
          %v5574 = vadd.f32 0.0, %v5573
          %5575 = vmatmul.f32.gmra.mxu0 %v5512
          %v5576 = vpop.f32.mrf.mxu0
          %v5577 = vadd.f32 0.0, %v5576
          %5578 = vmatmul.f32.gmra.mxu0 %v5515
          %v5579 = vpop.f32.mrf.mxu0
          %v5580 = vadd.f32 0.0, %v5579
          %5581 = vmatmul.f32.gmra.mxu0 %v5518
          %v5582 = vpop.f32.mrf.mxu0
          %v5583 = vadd.f32 0.0, %v5582
          %5584 = vmatmul.f32.gmra.mxu0 %v5521
          %v5585 = vpop.f32.mrf.mxu0
          %v5586 = vadd.f32 0.0, %v5585
          %5587 = vmatmul.f32.gmra.mxu0 %v5524
          %v5588 = vpop.f32.mrf.mxu0
          %v5589 = vadd.f32 0.0, %v5588
          %5590 = vmatmul.f32.gmra.mxu0 %v5527
          %v5591 = vpop.f32.mrf.mxu0
          %v5592 = vadd.f32 0.0, %v5591
          %5593 = vmatmul.f32.gmra.mxu0 %v5530
          %v5594 = vpop.f32.mrf.mxu0
          %v5595 = vadd.f32 0.0, %v5594
          %5596 = vmatmul.f32.gmra.mxu0 %v5533
          %v5597 = vpop.f32.mrf.mxu0
          %v5598 = vadd.f32 0.0, %v5597
          %5599 = vmatmul.f32.gmra.mxu0 %v5536
          %v5600 = vpop.f32.mrf.mxu0
          %v5601 = vadd.f32 0.0, %v5600
          %5602 = vmatmul.f32.gmra.mxu0 %v5539
          %v5603 = vpop.f32.mrf.mxu0
          %v5604 = vadd.f32 0.0, %v5603
          %5605 = vmatmul.f32.gmra.mxu0 %v5542
          %v5606 = vpop.f32.mrf.mxu0
          %v5607 = vadd.f32 0.0, %v5606
          %5608 = vmatmul.f32.gmra.mxu0 %v5545
          %v5609 = vpop.f32.mrf.mxu0
          %v5610 = vadd.f32 0.0, %v5609
          %5611 = vmatmul.f32.gmra.mxu0 %v5548
          %v5612 = vpop.f32.mrf.mxu0
          %v5613 = vadd.f32 0.0, %v5612
          %5614 = vmatmul.f32.gmra.mxu0 %v5551
          %v5615 = vpop.f32.mrf.mxu0
          %v5616 = vadd.f32 0.0, %v5615
          %5617 = vmatmul.f32.gmra.mxu0 %v5554
          %v5618 = vpop.f32.mrf.mxu0
          %v5619 = vadd.f32 0.0, %v5618
          %5620 = vdwg.mxu0
          %5621 = vmatpush.msra.mxu0 0.0
          %5622 = vmatpush.msra.mxu0 0.0
          %5623 = vmatpush.msra.mxu0 0.0
          %5624 = vmatpush.msra.mxu0 0.0
          %5625 = vmatpush.msra.mxu0 0.0
          %5626 = vmatpush.msra.mxu0 0.0
          %5627 = vmatpush.msra.mxu0 0.0
          %5628 = vmatpush.msra.mxu0 0.0
          %5629 = vmatpush.msra.mxu0 %v5507
          %5630 = vmatpush.msra.mxu0 %v5505
          %5631 = vmatpush.msra.mxu0 %v5503
          %5632 = vmatpush.msra.mxu0 %v5501
          %5633 = vmatpush.msra.mxu0 %v5499
          %5634 = vmatpush.msra.mxu0 %v5497
          %5635 = vmatpush.msra.mxu0 %v5495
          %5636 = vmatpush.msra.mxu0 %v5493
          %5637 = vmatmul.f32.gmra.mxu0 %v5509
          %v5638 = vpop.f32.mrf.mxu0
          %v5639 = vadd.f32 0.0, %v5638
          %5640 = vmatmul.f32.gmra.mxu0 %v5512
          %v5641 = vpop.f32.mrf.mxu0
          %v5642 = vadd.f32 0.0, %v5641
          %5643 = vmatmul.f32.gmra.mxu0 %v5515
          %v5644 = vpop.f32.mrf.mxu0
          %v5645 = vadd.f32 0.0, %v5644
          %5646 = vmatmul.f32.gmra.mxu0 %v5518
          %v5647 = vpop.f32.mrf.mxu0
          %v5648 = vadd.f32 0.0, %v5647
          %5649 = vmatmul.f32.gmra.mxu0 %v5521
          %v5650 = vpop.f32.mrf.mxu0
          %v5651 = vadd.f32 0.0, %v5650
          %5652 = vmatmul.f32.gmra.mxu0 %v5524
          %v5653 = vpop.f32.mrf.mxu0
          %v5654 = vadd.f32 0.0, %v5653
          %5655 = vmatmul.f32.gmra.mxu0 %v5527
          %v5656 = vpop.f32.mrf.mxu0
          %v5657 = vadd.f32 0.0, %v5656
          %5658 = vmatmul.f32.gmra.mxu0 %v5530
          %v5659 = vpop.f32.mrf.mxu0
          %v5660 = vadd.f32 0.0, %v5659
          %5661 = vmatmul.f32.gmra.mxu0 %v5533
          %v5662 = vpop.f32.mrf.mxu0
          %v5663 = vadd.f32 0.0, %v5662
          %5664 = vmatmul.f32.gmra.mxu0 %v5536
          %v5665 = vpop.f32.mrf.mxu0
          %v5666 = vadd.f32 0.0, %v5665
          %5667 = vmatmul.f32.gmra.mxu0 %v5539
          %v5668 = vpop.f32.mrf.mxu0
          %v5669 = vadd.f32 0.0, %v5668
          %5670 = vmatmul.f32.gmra.mxu0 %v5542
          %v5671 = vpop.f32.mrf.mxu0
          %v5672 = vadd.f32 0.0, %v5671
          %5673 = vmatmul.f32.gmra.mxu0 %v5545
          %v5674 = vpop.f32.mrf.mxu0
          %v5675 = vadd.f32 0.0, %v5674
          %5676 = vmatmul.f32.gmra.mxu0 %v5548
          %v5677 = vpop.f32.mrf.mxu0
          %v5678 = vadd.f32 0.0, %v5677
          %5679 = vmatmul.f32.gmra.mxu0 %v5551
          %v5680 = vpop.f32.mrf.mxu0
          %v5681 = vadd.f32 0.0, %v5680
          %5682 = vmatmul.f32.gmra.mxu0 %v5554
          %v5683 = vpop.f32.mrf.mxu0
          %v5684 = vadd.f32 0.0, %v5683
          %5685 = vdwg.mxu0
          %v5686 = vadd.f32 %v5460, %v5574
          %v5687 = vadd.f32 %v5461, %v5639
          %v5688 = vadd.f32 %v5462, %v5577
          %v5689 = vadd.f32 %v5463, %v5642
          %v5690 = vadd.f32 %v5464, %v5580
          %v5691 = vadd.f32 %v5465, %v5645
          %v5692 = vadd.f32 %v5466, %v5583
          %v5693 = vadd.f32 %v5467, %v5648
          %v5694 = vadd.f32 %v5468, %v5586
          %v5695 = vadd.f32 %v5469, %v5651
          %v5696 = vadd.f32 %v5470, %v5589
          %v5697 = vadd.f32 %v5471, %v5654
          %v5698 = vadd.f32 %v5472, %v5592
          %v5699 = vadd.f32 %v5473, %v5657
          %v5700 = vadd.f32 %v5474, %v5595
          %v5701 = vadd.f32 %v5475, %v5660
          %v5702 = vadd.f32 %v5476, %v5598
          %v5703 = vadd.f32 %v5477, %v5663
          %v5704 = vadd.f32 %v5478, %v5601
          %v5705 = vadd.f32 %v5479, %v5666
          %v5706 = vadd.f32 %v5480, %v5604
          %v5707 = vadd.f32 %v5481, %v5669
          %v5708 = vadd.f32 %v5482, %v5607
          %v5709 = vadd.f32 %v5483, %v5672
          %v5710 = vadd.f32 %v5484, %v5610
          %v5711 = vadd.f32 %v5485, %v5675
          %v5712 = vadd.f32 %v5486, %v5613
          %v5713 = vadd.f32 %v5487, %v5678
          %v5714 = vadd.f32 %v5488, %v5616
          %v5715 = vadd.f32 %v5489, %v5681
          %v5716 = vadd.f32 %v5490, %v5619
          %v5717 = vadd.f32 %v5491, %v5684
          %s5718 = smul.u32 %s5376, 32
          %s5719 = smul.addr %s5718, 8
          %s5720 = scalar_lea.vmem [#allocation3], %s5719
          %v5721 = vld [vmem:[%s5720] sm:$0xff]
          %v5722 = vld [vmem:[%s5720 + $0x8] sm:$0xff]
          %v5723 = vld [vmem:[%s5720 + $0x10] sm:$0xff]
          %v5724 = vld [vmem:[%s5720 + $0x18] sm:$0xff]
          %v5725 = vld [vmem:[%s5720 + $0x20] sm:$0xff]
          %v5726 = vld [vmem:[%s5720 + $0x28] sm:$0xff]
          %v5727 = vld [vmem:[%s5720 + $0x30] sm:$0xff]
          %v5728 = vld [vmem:[%s5720 + $0x38] sm:$0xff]
          %v5729 = vld [vmem:[%s5720 + $0x40] sm:$0xff]
          %v5730 = vld [vmem:[%s5720 + $0x48] sm:$0xff]
          %v5731 = vld [vmem:[%s5720 + $0x50] sm:$0xff]
          %v5732 = vld [vmem:[%s5720 + $0x58] sm:$0xff]
          %v5733 = vld [vmem:[%s5720 + $0x60] sm:$0xff]
          %v5734 = vld [vmem:[%s5720 + $0x68] sm:$0xff]
          %v5735 = vld [vmem:[%s5720 + $0x70] sm:$0xff]
          %v5736 = vld [vmem:[%s5720 + $0x78] sm:$0xff]
          %v5737 = vld [vmem:[%s5720 + $0x80] sm:$0xff]
          %v5738 = vld [vmem:[%s5720 + $0x88] sm:$0xff]
          %v5739 = vld [vmem:[%s5720 + $0x90] sm:$0xff]
          %v5740 = vld [vmem:[%s5720 + $0x98] sm:$0xff]
          %v5741 = vld [vmem:[%s5720 + $0xa0] sm:$0xff]
          %v5742 = vld [vmem:[%s5720 + $0xa8] sm:$0xff]
          %v5743 = vld [vmem:[%s5720 + $0xb0] sm:$0xff]
          %v5744 = vld [vmem:[%s5720 + $0xb8] sm:$0xff]
          %v5745 = vld [vmem:[%s5720 + $0xc0] sm:$0xff]
          %v5746 = vld [vmem:[%s5720 + $0xc8] sm:$0xff]
          %v5747 = vld [vmem:[%s5720 + $0xd0] sm:$0xff]
          %v5748 = vld [vmem:[%s5720 + $0xd8] sm:$0xff]
          %v5749 = vld [vmem:[%s5720 + $0xe0] sm:$0xff]
          %v5750 = vld [vmem:[%s5720 + $0xe8] sm:$0xff]
          %v5751 = vld [vmem:[%s5720 + $0xf0] sm:$0xff]
          %v5752 = vld [vmem:[%s5720 + $0xf8] sm:$0xff]
          %s5753 = scalar_lea.vmem %s6, 128
          %v5754 = vld [vmem:[%s5753] sm:$0xff]
          %v5755 = vld [vmem:[%s5753 + $0x8] sm:$0xff]
          %v5756 = vld [vmem:[%s5753 + $0x10] sm:$0xff]
          %v5757 = vld [vmem:[%s5753 + $0x18] sm:$0xff]
          %v5758 = vld [vmem:[%s5753 + $0x20] sm:$0xff]
          %v5759 = vld [vmem:[%s5753 + $0x28] sm:$0xff]
          %v5760 = vld [vmem:[%s5753 + $0x30] sm:$0xff]
          %v5761 = vld [vmem:[%s5753 + $0x38] sm:$0xff]
          %v5762 = vld [vmem:[%s5753 + $0x40] sm:$0xff]
          %v5763 = vld [vmem:[%s5753 + $0x48] sm:$0xff]
          %v5764 = vld [vmem:[%s5753 + $0x50] sm:$0xff]
          %v5765 = vld [vmem:[%s5753 + $0x58] sm:$0xff]
          %v5766 = vld [vmem:[%s5753 + $0x60] sm:$0xff]
          %v5767 = vld [vmem:[%s5753 + $0x68] sm:$0xff]
          %v5768 = vld [vmem:[%s5753 + $0x70] sm:$0xff]
          %v5769 = vld [vmem:[%s5753 + $0x78] sm:$0xff]
          %v5771 = vsel %vm1701, %v5425, 0
          %v5774 = vsel %vm1701, %v5426, 0
          %v5777 = vsel %vm1701, %v5427, 0
          %v5780 = vsel %vm1701, %v5428, 0
          %v5783 = vsel %vm1701, %v5429, 0
          %v5786 = vsel %vm1701, %v5430, 0
          %v5789 = vsel %vm1701, %v5431, 0
          %v5792 = vsel %vm1701, %v5432, 0
          %v5795 = vsel %vm1701, %v5433, 0
          %v5798 = vsel %vm1701, %v5434, 0
          %v5801 = vsel %vm1701, %v5435, 0
          %v5804 = vsel %vm1701, %v5436, 0
          %v5807 = vsel %vm1701, %v5437, 0
          %v5810 = vsel %vm1701, %v5438, 0
          %v5813 = vsel %vm1701, %v5439, 0
          %v5816 = vsel %vm1701, %v5440, 0
          %5818 = vmatpush.msra.mxu0 0.0
          %5819 = vmatpush.msra.mxu0 0.0
          %5820 = vmatpush.msra.mxu0 0.0
          %5821 = vmatpush.msra.mxu0 0.0
          %5822 = vmatpush.msra.mxu0 0.0
          %5823 = vmatpush.msra.mxu0 0.0
          %5824 = vmatpush.msra.mxu0 0.0
          %5825 = vmatpush.msra.mxu0 0.0
          %5826 = vmatpush.msra.mxu0 %v5768
          %5827 = vmatpush.msra.mxu0 %v5766
          %5828 = vmatpush.msra.mxu0 %v5764
          %5829 = vmatpush.msra.mxu0 %v5762
          %5830 = vmatpush.msra.mxu0 %v5760
          %5831 = vmatpush.msra.mxu0 %v5758
          %5832 = vmatpush.msra.mxu0 %v5756
          %5833 = vmatpush.msra.mxu0 %v5754
          %5834 = vmatmul.f32.gmra.mxu0 %v5771
          %v5835 = vpop.f32.mrf.mxu0
          %v5836 = vadd.f32 0.0, %v5835
          %5837 = vmatmul.f32.gmra.mxu0 %v5774
          %v5838 = vpop.f32.mrf.mxu0
          %v5839 = vadd.f32 0.0, %v5838
          %5840 = vmatmul.f32.gmra.mxu0 %v5777
          %v5841 = vpop.f32.mrf.mxu0
          %v5842 = vadd.f32 0.0, %v5841
          %5843 = vmatmul.f32.gmra.mxu0 %v5780
          %v5844 = vpop.f32.mrf.mxu0
          %v5845 = vadd.f32 0.0, %v5844
          %5846 = vmatmul.f32.gmra.mxu0 %v5783
          %v5847 = vpop.f32.mrf.mxu0
          %v5848 = vadd.f32 0.0, %v5847
          %5849 = vmatmul.f32.gmra.mxu0 %v5786
          %v5850 = vpop.f32.mrf.mxu0
          %v5851 = vadd.f32 0.0, %v5850
          %5852 = vmatmul.f32.gmra.mxu0 %v5789
          %v5853 = vpop.f32.mrf.mxu0
          %v5854 = vadd.f32 0.0, %v5853
          %5855 = vmatmul.f32.gmra.mxu0 %v5792
          %v5856 = vpop.f32.mrf.mxu0
          %v5857 = vadd.f32 0.0, %v5856
          %5858 = vmatmul.f32.gmra.mxu0 %v5795
          %v5859 = vpop.f32.mrf.mxu0
          %v5860 = vadd.f32 0.0, %v5859
          %5861 = vmatmul.f32.gmra.mxu0 %v5798
          %v5862 = vpop.f32.mrf.mxu0
          %v5863 = vadd.f32 0.0, %v5862
          %5864 = vmatmul.f32.gmra.mxu0 %v5801
          %v5865 = vpop.f32.mrf.mxu0
          %v5866 = vadd.f32 0.0, %v5865
          %5867 = vmatmul.f32.gmra.mxu0 %v5804
          %v5868 = vpop.f32.mrf.mxu0
          %v5869 = vadd.f32 0.0, %v5868
          %5870 = vmatmul.f32.gmra.mxu0 %v5807
          %v5871 = vpop.f32.mrf.mxu0
          %v5872 = vadd.f32 0.0, %v5871
          %5873 = vmatmul.f32.gmra.mxu0 %v5810
          %v5874 = vpop.f32.mrf.mxu0
          %v5875 = vadd.f32 0.0, %v5874
          %5876 = vmatmul.f32.gmra.mxu0 %v5813
          %v5877 = vpop.f32.mrf.mxu0
          %v5878 = vadd.f32 0.0, %v5877
          %5879 = vmatmul.f32.gmra.mxu0 %v5816
          %v5880 = vpop.f32.mrf.mxu0
          %v5881 = vadd.f32 0.0, %v5880
          %5882 = vdwg.mxu0
          %5883 = vmatpush.msra.mxu0 0.0
          %5884 = vmatpush.msra.mxu0 0.0
          %5885 = vmatpush.msra.mxu0 0.0
          %5886 = vmatpush.msra.mxu0 0.0
          %5887 = vmatpush.msra.mxu0 0.0
          %5888 = vmatpush.msra.mxu0 0.0
          %5889 = vmatpush.msra.mxu0 0.0
          %5890 = vmatpush.msra.mxu0 0.0
          %5891 = vmatpush.msra.mxu0 %v5769
          %5892 = vmatpush.msra.mxu0 %v5767
          %5893 = vmatpush.msra.mxu0 %v5765
          %5894 = vmatpush.msra.mxu0 %v5763
          %5895 = vmatpush.msra.mxu0 %v5761
          %5896 = vmatpush.msra.mxu0 %v5759
          %5897 = vmatpush.msra.mxu0 %v5757
          %5898 = vmatpush.msra.mxu0 %v5755
          %5899 = vmatmul.f32.gmra.mxu0 %v5771
          %v5900 = vpop.f32.mrf.mxu0
          %v5901 = vadd.f32 0.0, %v5900
          %5902 = vmatmul.f32.gmra.mxu0 %v5774
          %v5903 = vpop.f32.mrf.mxu0
          %v5904 = vadd.f32 0.0, %v5903
          %5905 = vmatmul.f32.gmra.mxu0 %v5777
          %v5906 = vpop.f32.mrf.mxu0
          %v5907 = vadd.f32 0.0, %v5906
          %5908 = vmatmul.f32.gmra.mxu0 %v5780
          %v5909 = vpop.f32.mrf.mxu0
          %v5910 = vadd.f32 0.0, %v5909
          %5911 = vmatmul.f32.gmra.mxu0 %v5783
          %v5912 = vpop.f32.mrf.mxu0
          %v5913 = vadd.f32 0.0, %v5912
          %5914 = vmatmul.f32.gmra.mxu0 %v5786
          %v5915 = vpop.f32.mrf.mxu0
          %v5916 = vadd.f32 0.0, %v5915
          %5917 = vmatmul.f32.gmra.mxu0 %v5789
          %v5918 = vpop.f32.mrf.mxu0
          %v5919 = vadd.f32 0.0, %v5918
          %5920 = vmatmul.f32.gmra.mxu0 %v5792
          %v5921 = vpop.f32.mrf.mxu0
          %v5922 = vadd.f32 0.0, %v5921
          %5923 = vmatmul.f32.gmra.mxu0 %v5795
          %v5924 = vpop.f32.mrf.mxu0
          %v5925 = vadd.f32 0.0, %v5924
          %5926 = vmatmul.f32.gmra.mxu0 %v5798
          %v5927 = vpop.f32.mrf.mxu0
          %v5928 = vadd.f32 0.0, %v5927
          %5929 = vmatmul.f32.gmra.mxu0 %v5801
          %v5930 = vpop.f32.mrf.mxu0
          %v5931 = vadd.f32 0.0, %v5930
          %5932 = vmatmul.f32.gmra.mxu0 %v5804
          %v5933 = vpop.f32.mrf.mxu0
          %v5934 = vadd.f32 0.0, %v5933
          %5935 = vmatmul.f32.gmra.mxu0 %v5807
          %v5936 = vpop.f32.mrf.mxu0
          %v5937 = vadd.f32 0.0, %v5936
          %5938 = vmatmul.f32.gmra.mxu0 %v5810
          %v5939 = vpop.f32.mrf.mxu0
          %v5940 = vadd.f32 0.0, %v5939
          %5941 = vmatmul.f32.gmra.mxu0 %v5813
          %v5942 = vpop.f32.mrf.mxu0
          %v5943 = vadd.f32 0.0, %v5942
          %5944 = vmatmul.f32.gmra.mxu0 %v5816
          %v5945 = vpop.f32.mrf.mxu0
          %v5946 = vadd.f32 0.0, %v5945
          %5947 = vdwg.mxu0
          %v5948 = vadd.f32 %v5721, %v5836
          %v5949 = vadd.f32 %v5722, %v5901
          %v5950 = vadd.f32 %v5723, %v5839
          %v5951 = vadd.f32 %v5724, %v5904
          %v5952 = vadd.f32 %v5725, %v5842
          %v5953 = vadd.f32 %v5726, %v5907
          %v5954 = vadd.f32 %v5727, %v5845
          %v5955 = vadd.f32 %v5728, %v5910
          %v5956 = vadd.f32 %v5729, %v5848
          %v5957 = vadd.f32 %v5730, %v5913
          %v5958 = vadd.f32 %v5731, %v5851
          %v5959 = vadd.f32 %v5732, %v5916
          %v5960 = vadd.f32 %v5733, %v5854
          %v5961 = vadd.f32 %v5734, %v5919
          %v5962 = vadd.f32 %v5735, %v5857
          %v5963 = vadd.f32 %v5736, %v5922
          %v5964 = vadd.f32 %v5737, %v5860
          %v5965 = vadd.f32 %v5738, %v5925
          %v5966 = vadd.f32 %v5739, %v5863
          %v5967 = vadd.f32 %v5740, %v5928
          %v5968 = vadd.f32 %v5741, %v5866
          %v5969 = vadd.f32 %v5742, %v5931
          %v5970 = vadd.f32 %v5743, %v5869
          %v5971 = vadd.f32 %v5744, %v5934
          %v5972 = vadd.f32 %v5745, %v5872
          %v5973 = vadd.f32 %v5746, %v5937
          %v5974 = vadd.f32 %v5747, %v5875
          %v5975 = vadd.f32 %v5748, %v5940
          %v5976 = vadd.f32 %v5749, %v5878
          %v5977 = vadd.f32 %v5750, %v5943
          %v5978 = vadd.f32 %v5751, %v5881
          %v5979 = vadd.f32 %v5752, %v5946
          %v5980 = vxor.u32 %v5686, 2147483648
          %v5981 = vxor.u32 %v5687, 2147483648
          %v5982 = vxor.u32 %v5688, 2147483648
          %v5983 = vxor.u32 %v5689, 2147483648
          %v5984 = vxor.u32 %v5690, 2147483648
          %v5985 = vxor.u32 %v5691, 2147483648
          %v5986 = vxor.u32 %v5692, 2147483648
          %v5987 = vxor.u32 %v5693, 2147483648
          %v5988 = vxor.u32 %v5694, 2147483648
          %v5989 = vxor.u32 %v5695, 2147483648
          %v5990 = vxor.u32 %v5696, 2147483648
          %v5991 = vxor.u32 %v5697, 2147483648
          %v5992 = vxor.u32 %v5698, 2147483648
          %v5993 = vxor.u32 %v5699, 2147483648
          %v5994 = vxor.u32 %v5700, 2147483648
          %v5995 = vxor.u32 %v5701, 2147483648
          %v5996 = vxor.u32 %v5702, 2147483648
          %v5997 = vxor.u32 %v5703, 2147483648
          %v5998 = vxor.u32 %v5704, 2147483648
          %v5999 = vxor.u32 %v5705, 2147483648
          %v6000 = vxor.u32 %v5706, 2147483648
          %v6001 = vxor.u32 %v5707, 2147483648
          %v6002 = vxor.u32 %v5708, 2147483648
          %v6003 = vxor.u32 %v5709, 2147483648
          %v6004 = vxor.u32 %v5710, 2147483648
          %v6005 = vxor.u32 %v5711, 2147483648
          %v6006 = vxor.u32 %v5712, 2147483648
          %v6007 = vxor.u32 %v5713, 2147483648
          %v6008 = vxor.u32 %v5714, 2147483648
          %v6009 = vxor.u32 %v5715, 2147483648
          %v6010 = vxor.u32 %v5716, 2147483648
          %v6011 = vxor.u32 %v5717, 2147483648
          %v6012 = vmul.f32 %v5980, 1.442695
          %v6013 = vpow.pop %v6012
          %v6014 = vmul.f32 %v5981, 1.442695
          %v6015 = vpow.pop %v6014
          %v6016 = vmul.f32 %v5982, 1.442695
          %v6017 = vpow.pop %v6016
          %v6018 = vmul.f32 %v5983, 1.442695
          %v6019 = vpow.pop %v6018
          %v6020 = vmul.f32 %v5984, 1.442695
          %v6021 = vpow.pop %v6020
          %v6022 = vmul.f32 %v5985, 1.442695
          %v6023 = vpow.pop %v6022
          %v6024 = vmul.f32 %v5986, 1.442695
          %v6025 = vpow.pop %v6024
          %v6026 = vmul.f32 %v5987, 1.442695
          %v6027 = vpow.pop %v6026
          %v6028 = vmul.f32 %v5988, 1.442695
          %v6029 = vpow.pop %v6028
          %v6030 = vmul.f32 %v5989, 1.442695
          %v6031 = vpow.pop %v6030
          %v6032 = vmul.f32 %v5990, 1.442695
          %v6033 = vpow.pop %v6032
          %v6034 = vmul.f32 %v5991, 1.442695
          %v6035 = vpow.pop %v6034
          %v6036 = vmul.f32 %v5992, 1.442695
          %v6037 = vpow.pop %v6036
          %v6038 = vmul.f32 %v5993, 1.442695
          %v6039 = vpow.pop %v6038
          %v6040 = vmul.f32 %v5994, 1.442695
          %v6041 = vpow.pop %v6040
          %v6042 = vmul.f32 %v5995, 1.442695
          %v6043 = vpow.pop %v6042
          %v6044 = vmul.f32 %v5996, 1.442695
          %v6045 = vpow.pop %v6044
          %v6046 = vmul.f32 %v5997, 1.442695
          %v6047 = vpow.pop %v6046
          %v6048 = vmul.f32 %v5998, 1.442695
          %v6049 = vpow.pop %v6048
          %v6050 = vmul.f32 %v5999, 1.442695
          %v6051 = vpow.pop %v6050
          %v6052 = vmul.f32 %v6000, 1.442695
          %v6053 = vpow.pop %v6052
          %v6054 = vmul.f32 %v6001, 1.442695
          %v6055 = vpow.pop %v6054
          %v6056 = vmul.f32 %v6002, 1.442695
          %v6057 = vpow.pop %v6056
          %v6058 = vmul.f32 %v6003, 1.442695
          %v6059 = vpow.pop %v6058
          %v6060 = vmul.f32 %v6004, 1.442695
          %v6061 = vpow.pop %v6060
          %v6062 = vmul.f32 %v6005, 1.442695
          %v6063 = vpow.pop %v6062
          %v6064 = vmul.f32 %v6006, 1.442695
          %v6065 = vpow.pop %v6064
          %v6066 = vmul.f32 %v6007, 1.442695
          %v6067 = vpow.pop %v6066
          %v6068 = vmul.f32 %v6008, 1.442695
          %v6069 = vpow.pop %v6068
          %v6070 = vmul.f32 %v6009, 1.442695
          %v6071 = vpow.pop %v6070
          %v6072 = vmul.f32 %v6010, 1.442695
          %v6073 = vpow.pop %v6072
          %v6074 = vmul.f32 %v6011, 1.442695
          %v6075 = vpow.pop %v6074
          %v6076 = vadd.f32 %v6013, 1.0
          %v6077 = vadd.f32 %v6015, 1.0
          %v6078 = vadd.f32 %v6017, 1.0
          %v6079 = vadd.f32 %v6019, 1.0
          %v6080 = vadd.f32 %v6021, 1.0
          %v6081 = vadd.f32 %v6023, 1.0
          %v6082 = vadd.f32 %v6025, 1.0
          %v6083 = vadd.f32 %v6027, 1.0
          %v6084 = vadd.f32 %v6029, 1.0
          %v6085 = vadd.f32 %v6031, 1.0
          %v6086 = vadd.f32 %v6033, 1.0
          %v6087 = vadd.f32 %v6035, 1.0
          %v6088 = vadd.f32 %v6037, 1.0
          %v6089 = vadd.f32 %v6039, 1.0
          %v6090 = vadd.f32 %v6041, 1.0
          %v6091 = vadd.f32 %v6043, 1.0
          %v6092 = vadd.f32 %v6045, 1.0
          %v6093 = vadd.f32 %v6047, 1.0
          %v6094 = vadd.f32 %v6049, 1.0
          %v6095 = vadd.f32 %v6051, 1.0
          %v6096 = vadd.f32 %v6053, 1.0
          %v6097 = vadd.f32 %v6055, 1.0
          %v6098 = vadd.f32 %v6057, 1.0
          %v6099 = vadd.f32 %v6059, 1.0
          %v6100 = vadd.f32 %v6061, 1.0
          %v6101 = vadd.f32 %v6063, 1.0
          %v6102 = vadd.f32 %v6065, 1.0
          %v6103 = vadd.f32 %v6067, 1.0
          %v6104 = vadd.f32 %v6069, 1.0
          %v6105 = vadd.f32 %v6071, 1.0
          %v6106 = vadd.f32 %v6073, 1.0
          %v6107 = vadd.f32 %v6075, 1.0
          %v6108 = vrcp.pop %v6076
          %v6109 = vmul.f32 %v6076, %v6108
          %v6110 = vsub.f32 1.0, %v6109
          %v6111 = vmul.f32 %v6108, %v6110
          %v6112 = vadd.f32 %v6108, %v6111
          %vm6113 = vweird.f32 %v6076
          %vm6114 = vweird.f32 %v6108
          %vm6115 = vmor %vm6113, %vm6114
          %v6116 = vsel %vm6115, %v6108, %v6112
          %v6117 = vand.u32 2147483647, %v6076
          %vm6118 = vcmp.eq.f32.partialorder %v6117, 8.507059e+37
          %v6119 = vand.u32 %v6076, 2147483648
          %v6120 = vor.u32 1.1754944e-38, %v6119
          %v6121 = vsel %vm6118, %v6120, %v6116
          %v6122 = vmul.f32 1.0, %v6121
          %v6123 = vrcp.pop %v6077
          %v6124 = vmul.f32 %v6077, %v6123
          %v6125 = vsub.f32 1.0, %v6124
          %v6126 = vmul.f32 %v6123, %v6125
          %v6127 = vadd.f32 %v6123, %v6126
          %vm6128 = vweird.f32 %v6077
          %vm6129 = vweird.f32 %v6123
          %vm6130 = vmor %vm6128, %vm6129
          %v6131 = vsel %vm6130, %v6123, %v6127
          %v6132 = vand.u32 2147483647, %v6077
          %vm6133 = vcmp.eq.f32.partialorder %v6132, 8.507059e+37
          %v6134 = vand.u32 %v6077, 2147483648
          %v6135 = vor.u32 1.1754944e-38, %v6134
          %v6136 = vsel %vm6133, %v6135, %v6131
          %v6137 = vmul.f32 1.0, %v6136
          %v6138 = vrcp.pop %v6078
          %v6139 = vmul.f32 %v6078, %v6138
          %v6140 = vsub.f32 1.0, %v6139
          %v6141 = vmul.f32 %v6138, %v6140
          %v6142 = vadd.f32 %v6138, %v6141
          %vm6143 = vweird.f32 %v6078
          %vm6144 = vweird.f32 %v6138
          %vm6145 = vmor %vm6143, %vm6144
          %v6146 = vsel %vm6145, %v6138, %v6142
          %v6147 = vand.u32 2147483647, %v6078
          %vm6148 = vcmp.eq.f32.partialorder %v6147, 8.507059e+37
          %v6149 = vand.u32 %v6078, 2147483648
          %v6150 = vor.u32 1.1754944e-38, %v6149
          %v6151 = vsel %vm6148, %v6150, %v6146
          %v6152 = vmul.f32 1.0, %v6151
          %v6153 = vrcp.pop %v6079
          %v6154 = vmul.f32 %v6079, %v6153
          %v6155 = vsub.f32 1.0, %v6154
          %v6156 = vmul.f32 %v6153, %v6155
          %v6157 = vadd.f32 %v6153, %v6156
          %vm6158 = vweird.f32 %v6079
          %vm6159 = vweird.f32 %v6153
          %vm6160 = vmor %vm6158, %vm6159
          %v6161 = vsel %vm6160, %v6153, %v6157
          %v6162 = vand.u32 2147483647, %v6079
          %vm6163 = vcmp.eq.f32.partialorder %v6162, 8.507059e+37
          %v6164 = vand.u32 %v6079, 2147483648
          %v6165 = vor.u32 1.1754944e-38, %v6164
          %v6166 = vsel %vm6163, %v6165, %v6161
          %v6167 = vmul.f32 1.0, %v6166
          %v6168 = vrcp.pop %v6080
          %v6169 = vmul.f32 %v6080, %v6168
          %v6170 = vsub.f32 1.0, %v6169
          %v6171 = vmul.f32 %v6168, %v6170
          %v6172 = vadd.f32 %v6168, %v6171
          %vm6173 = vweird.f32 %v6080
          %vm6174 = vweird.f32 %v6168
          %vm6175 = vmor %vm6173, %vm6174
          %v6176 = vsel %vm6175, %v6168, %v6172
          %v6177 = vand.u32 2147483647, %v6080
          %vm6178 = vcmp.eq.f32.partialorder %v6177, 8.507059e+37
          %v6179 = vand.u32 %v6080, 2147483648
          %v6180 = vor.u32 1.1754944e-38, %v6179
          %v6181 = vsel %vm6178, %v6180, %v6176
          %v6182 = vmul.f32 1.0, %v6181
          %v6183 = vrcp.pop %v6081
          %v6184 = vmul.f32 %v6081, %v6183
          %v6185 = vsub.f32 1.0, %v6184
          %v6186 = vmul.f32 %v6183, %v6185
          %v6187 = vadd.f32 %v6183, %v6186
          %vm6188 = vweird.f32 %v6081
          %vm6189 = vweird.f32 %v6183
          %vm6190 = vmor %vm6188, %vm6189
          %v6191 = vsel %vm6190, %v6183, %v6187
          %v6192 = vand.u32 2147483647, %v6081
          %vm6193 = vcmp.eq.f32.partialorder %v6192, 8.507059e+37
          %v6194 = vand.u32 %v6081, 2147483648
          %v6195 = vor.u32 1.1754944e-38, %v6194
          %v6196 = vsel %vm6193, %v6195, %v6191
          %v6197 = vmul.f32 1.0, %v6196
          %v6198 = vrcp.pop %v6082
          %v6199 = vmul.f32 %v6082, %v6198
          %v6200 = vsub.f32 1.0, %v6199
          %v6201 = vmul.f32 %v6198, %v6200
          %v6202 = vadd.f32 %v6198, %v6201
          %vm6203 = vweird.f32 %v6082
          %vm6204 = vweird.f32 %v6198
          %vm6205 = vmor %vm6203, %vm6204
          %v6206 = vsel %vm6205, %v6198, %v6202
          %v6207 = vand.u32 2147483647, %v6082
          %vm6208 = vcmp.eq.f32.partialorder %v6207, 8.507059e+37
          %v6209 = vand.u32 %v6082, 2147483648
          %v6210 = vor.u32 1.1754944e-38, %v6209
          %v6211 = vsel %vm6208, %v6210, %v6206
          %v6212 = vmul.f32 1.0, %v6211
          %v6213 = vrcp.pop %v6083
          %v6214 = vmul.f32 %v6083, %v6213
          %v6215 = vsub.f32 1.0, %v6214
          %v6216 = vmul.f32 %v6213, %v6215
          %v6217 = vadd.f32 %v6213, %v6216
          %vm6218 = vweird.f32 %v6083
          %vm6219 = vweird.f32 %v6213
          %vm6220 = vmor %vm6218, %vm6219
          %v6221 = vsel %vm6220, %v6213, %v6217
          %v6222 = vand.u32 2147483647, %v6083
          %vm6223 = vcmp.eq.f32.partialorder %v6222, 8.507059e+37
          %v6224 = vand.u32 %v6083, 2147483648
          %v6225 = vor.u32 1.1754944e-38, %v6224
          %v6226 = vsel %vm6223, %v6225, %v6221
          %v6227 = vmul.f32 1.0, %v6226
          %v6228 = vrcp.pop %v6084
          %v6229 = vmul.f32 %v6084, %v6228
          %v6230 = vsub.f32 1.0, %v6229
          %v6231 = vmul.f32 %v6228, %v6230
          %v6232 = vadd.f32 %v6228, %v6231
          %vm6233 = vweird.f32 %v6084
          %vm6234 = vweird.f32 %v6228
          %vm6235 = vmor %vm6233, %vm6234
          %v6236 = vsel %vm6235, %v6228, %v6232
          %v6237 = vand.u32 2147483647, %v6084
          %vm6238 = vcmp.eq.f32.partialorder %v6237, 8.507059e+37
          %v6239 = vand.u32 %v6084, 2147483648
          %v6240 = vor.u32 1.1754944e-38, %v6239
          %v6241 = vsel %vm6238, %v6240, %v6236
          %v6242 = vmul.f32 1.0, %v6241
          %v6243 = vrcp.pop %v6085
          %v6244 = vmul.f32 %v6085, %v6243
          %v6245 = vsub.f32 1.0, %v6244
          %v6246 = vmul.f32 %v6243, %v6245
          %v6247 = vadd.f32 %v6243, %v6246
          %vm6248 = vweird.f32 %v6085
          %vm6249 = vweird.f32 %v6243
          %vm6250 = vmor %vm6248, %vm6249
          %v6251 = vsel %vm6250, %v6243, %v6247
          %v6252 = vand.u32 2147483647, %v6085
          %vm6253 = vcmp.eq.f32.partialorder %v6252, 8.507059e+37
          %v6254 = vand.u32 %v6085, 2147483648
          %v6255 = vor.u32 1.1754944e-38, %v6254
          %v6256 = vsel %vm6253, %v6255, %v6251
          %v6257 = vmul.f32 1.0, %v6256
          %v6258 = vrcp.pop %v6086
          %v6259 = vmul.f32 %v6086, %v6258
          %v6260 = vsub.f32 1.0, %v6259
          %v6261 = vmul.f32 %v6258, %v6260
          %v6262 = vadd.f32 %v6258, %v6261
          %vm6263 = vweird.f32 %v6086
          %vm6264 = vweird.f32 %v6258
          %vm6265 = vmor %vm6263, %vm6264
          %v6266 = vsel %vm6265, %v6258, %v6262
          %v6267 = vand.u32 2147483647, %v6086
          %vm6268 = vcmp.eq.f32.partialorder %v6267, 8.507059e+37
          %v6269 = vand.u32 %v6086, 2147483648
          %v6270 = vor.u32 1.1754944e-38, %v6269
          %v6271 = vsel %vm6268, %v6270, %v6266
          %v6272 = vmul.f32 1.0, %v6271
          %v6273 = vrcp.pop %v6087
          %v6274 = vmul.f32 %v6087, %v6273
          %v6275 = vsub.f32 1.0, %v6274
          %v6276 = vmul.f32 %v6273, %v6275
          %v6277 = vadd.f32 %v6273, %v6276
          %vm6278 = vweird.f32 %v6087
          %vm6279 = vweird.f32 %v6273
          %vm6280 = vmor %vm6278, %vm6279
          %v6281 = vsel %vm6280, %v6273, %v6277
          %v6282 = vand.u32 2147483647, %v6087
          %vm6283 = vcmp.eq.f32.partialorder %v6282, 8.507059e+37
          %v6284 = vand.u32 %v6087, 2147483648
          %v6285 = vor.u32 1.1754944e-38, %v6284
          %v6286 = vsel %vm6283, %v6285, %v6281
          %v6287 = vmul.f32 1.0, %v6286
          %v6288 = vrcp.pop %v6088
          %v6289 = vmul.f32 %v6088, %v6288
          %v6290 = vsub.f32 1.0, %v6289
          %v6291 = vmul.f32 %v6288, %v6290
          %v6292 = vadd.f32 %v6288, %v6291
          %vm6293 = vweird.f32 %v6088
          %vm6294 = vweird.f32 %v6288
          %vm6295 = vmor %vm6293, %vm6294
          %v6296 = vsel %vm6295, %v6288, %v6292
          %v6297 = vand.u32 2147483647, %v6088
          %vm6298 = vcmp.eq.f32.partialorder %v6297, 8.507059e+37
          %v6299 = vand.u32 %v6088, 2147483648
          %v6300 = vor.u32 1.1754944e-38, %v6299
          %v6301 = vsel %vm6298, %v6300, %v6296
          %v6302 = vmul.f32 1.0, %v6301
          %v6303 = vrcp.pop %v6089
          %v6304 = vmul.f32 %v6089, %v6303
          %v6305 = vsub.f32 1.0, %v6304
          %v6306 = vmul.f32 %v6303, %v6305
          %v6307 = vadd.f32 %v6303, %v6306
          %vm6308 = vweird.f32 %v6089
          %vm6309 = vweird.f32 %v6303
          %vm6310 = vmor %vm6308, %vm6309
          %v6311 = vsel %vm6310, %v6303, %v6307
          %v6312 = vand.u32 2147483647, %v6089
          %vm6313 = vcmp.eq.f32.partialorder %v6312, 8.507059e+37
          %v6314 = vand.u32 %v6089, 2147483648
          %v6315 = vor.u32 1.1754944e-38, %v6314
          %v6316 = vsel %vm6313, %v6315, %v6311
          %v6317 = vmul.f32 1.0, %v6316
          %v6318 = vrcp.pop %v6090
          %v6319 = vmul.f32 %v6090, %v6318
          %v6320 = vsub.f32 1.0, %v6319
          %v6321 = vmul.f32 %v6318, %v6320
          %v6322 = vadd.f32 %v6318, %v6321
          %vm6323 = vweird.f32 %v6090
          %vm6324 = vweird.f32 %v6318
          %vm6325 = vmor %vm6323, %vm6324
          %v6326 = vsel %vm6325, %v6318, %v6322
          %v6327 = vand.u32 2147483647, %v6090
          %vm6328 = vcmp.eq.f32.partialorder %v6327, 8.507059e+37
          %v6329 = vand.u32 %v6090, 2147483648
          %v6330 = vor.u32 1.1754944e-38, %v6329
          %v6331 = vsel %vm6328, %v6330, %v6326
          %v6332 = vmul.f32 1.0, %v6331
          %v6333 = vrcp.pop %v6091
          %v6334 = vmul.f32 %v6091, %v6333
          %v6335 = vsub.f32 1.0, %v6334
          %v6336 = vmul.f32 %v6333, %v6335
          %v6337 = vadd.f32 %v6333, %v6336
          %vm6338 = vweird.f32 %v6091
          %vm6339 = vweird.f32 %v6333
          %vm6340 = vmor %vm6338, %vm6339
          %v6341 = vsel %vm6340, %v6333, %v6337
          %v6342 = vand.u32 2147483647, %v6091
          %vm6343 = vcmp.eq.f32.partialorder %v6342, 8.507059e+37
          %v6344 = vand.u32 %v6091, 2147483648
          %v6345 = vor.u32 1.1754944e-38, %v6344
          %v6346 = vsel %vm6343, %v6345, %v6341
          %v6347 = vmul.f32 1.0, %v6346
          %v6348 = vrcp.pop %v6092
          %v6349 = vmul.f32 %v6092, %v6348
          %v6350 = vsub.f32 1.0, %v6349
          %v6351 = vmul.f32 %v6348, %v6350
          %v6352 = vadd.f32 %v6348, %v6351
          %vm6353 = vweird.f32 %v6092
          %vm6354 = vweird.f32 %v6348
          %vm6355 = vmor %vm6353, %vm6354
          %v6356 = vsel %vm6355, %v6348, %v6352
          %v6357 = vand.u32 2147483647, %v6092
          %vm6358 = vcmp.eq.f32.partialorder %v6357, 8.507059e+37
          %v6359 = vand.u32 %v6092, 2147483648
          %v6360 = vor.u32 1.1754944e-38, %v6359
          %v6361 = vsel %vm6358, %v6360, %v6356
          %v6362 = vmul.f32 1.0, %v6361
          %v6363 = vrcp.pop %v6093
          %v6364 = vmul.f32 %v6093, %v6363
          %v6365 = vsub.f32 1.0, %v6364
          %v6366 = vmul.f32 %v6363, %v6365
          %v6367 = vadd.f32 %v6363, %v6366
          %vm6368 = vweird.f32 %v6093
          %vm6369 = vweird.f32 %v6363
          %vm6370 = vmor %vm6368, %vm6369
          %v6371 = vsel %vm6370, %v6363, %v6367
          %v6372 = vand.u32 2147483647, %v6093
          %vm6373 = vcmp.eq.f32.partialorder %v6372, 8.507059e+37
          %v6374 = vand.u32 %v6093, 2147483648
          %v6375 = vor.u32 1.1754944e-38, %v6374
          %v6376 = vsel %vm6373, %v6375, %v6371
          %v6377 = vmul.f32 1.0, %v6376
          %v6378 = vrcp.pop %v6094
          %v6379 = vmul.f32 %v6094, %v6378
          %v6380 = vsub.f32 1.0, %v6379
          %v6381 = vmul.f32 %v6378, %v6380
          %v6382 = vadd.f32 %v6378, %v6381
          %vm6383 = vweird.f32 %v6094
          %vm6384 = vweird.f32 %v6378
          %vm6385 = vmor %vm6383, %vm6384
          %v6386 = vsel %vm6385, %v6378, %v6382
          %v6387 = vand.u32 2147483647, %v6094
          %vm6388 = vcmp.eq.f32.partialorder %v6387, 8.507059e+37
          %v6389 = vand.u32 %v6094, 2147483648
          %v6390 = vor.u32 1.1754944e-38, %v6389
          %v6391 = vsel %vm6388, %v6390, %v6386
          %v6392 = vmul.f32 1.0, %v6391
          %v6393 = vrcp.pop %v6095
          %v6394 = vmul.f32 %v6095, %v6393
          %v6395 = vsub.f32 1.0, %v6394
          %v6396 = vmul.f32 %v6393, %v6395
          %v6397 = vadd.f32 %v6393, %v6396
          %vm6398 = vweird.f32 %v6095
          %vm6399 = vweird.f32 %v6393
          %vm6400 = vmor %vm6398, %vm6399
          %v6401 = vsel %vm6400, %v6393, %v6397
          %v6402 = vand.u32 2147483647, %v6095
          %vm6403 = vcmp.eq.f32.partialorder %v6402, 8.507059e+37
          %v6404 = vand.u32 %v6095, 2147483648
          %v6405 = vor.u32 1.1754944e-38, %v6404
          %v6406 = vsel %vm6403, %v6405, %v6401
          %v6407 = vmul.f32 1.0, %v6406
          %v6408 = vrcp.pop %v6096
          %v6409 = vmul.f32 %v6096, %v6408
          %v6410 = vsub.f32 1.0, %v6409
          %v6411 = vmul.f32 %v6408, %v6410
          %v6412 = vadd.f32 %v6408, %v6411
          %vm6413 = vweird.f32 %v6096
          %vm6414 = vweird.f32 %v6408
          %vm6415 = vmor %vm6413, %vm6414
          %v6416 = vsel %vm6415, %v6408, %v6412
          %v6417 = vand.u32 2147483647, %v6096
          %vm6418 = vcmp.eq.f32.partialorder %v6417, 8.507059e+37
          %v6419 = vand.u32 %v6096, 2147483648
          %v6420 = vor.u32 1.1754944e-38, %v6419
          %v6421 = vsel %vm6418, %v6420, %v6416
          %v6422 = vmul.f32 1.0, %v6421
          %v6423 = vrcp.pop %v6097
          %v6424 = vmul.f32 %v6097, %v6423
          %v6425 = vsub.f32 1.0, %v6424
          %v6426 = vmul.f32 %v6423, %v6425
          %v6427 = vadd.f32 %v6423, %v6426
          %vm6428 = vweird.f32 %v6097
          %vm6429 = vweird.f32 %v6423
          %vm6430 = vmor %vm6428, %vm6429
          %v6431 = vsel %vm6430, %v6423, %v6427
          %v6432 = vand.u32 2147483647, %v6097
          %vm6433 = vcmp.eq.f32.partialorder %v6432, 8.507059e+37
          %v6434 = vand.u32 %v6097, 2147483648
          %v6435 = vor.u32 1.1754944e-38, %v6434
          %v6436 = vsel %vm6433, %v6435, %v6431
          %v6437 = vmul.f32 1.0, %v6436
          %v6438 = vrcp.pop %v6098
          %v6439 = vmul.f32 %v6098, %v6438
          %v6440 = vsub.f32 1.0, %v6439
          %v6441 = vmul.f32 %v6438, %v6440
          %v6442 = vadd.f32 %v6438, %v6441
          %vm6443 = vweird.f32 %v6098
          %vm6444 = vweird.f32 %v6438
          %vm6445 = vmor %vm6443, %vm6444
          %v6446 = vsel %vm6445, %v6438, %v6442
          %v6447 = vand.u32 2147483647, %v6098
          %vm6448 = vcmp.eq.f32.partialorder %v6447, 8.507059e+37
          %v6449 = vand.u32 %v6098, 2147483648
          %v6450 = vor.u32 1.1754944e-38, %v6449
          %v6451 = vsel %vm6448, %v6450, %v6446
          %v6452 = vmul.f32 1.0, %v6451
          %v6453 = vrcp.pop %v6099
          %v6454 = vmul.f32 %v6099, %v6453
          %v6455 = vsub.f32 1.0, %v6454
          %v6456 = vmul.f32 %v6453, %v6455
          %v6457 = vadd.f32 %v6453, %v6456
          %vm6458 = vweird.f32 %v6099
          %vm6459 = vweird.f32 %v6453
          %vm6460 = vmor %vm6458, %vm6459
          %v6461 = vsel %vm6460, %v6453, %v6457
          %v6462 = vand.u32 2147483647, %v6099
          %vm6463 = vcmp.eq.f32.partialorder %v6462, 8.507059e+37
          %v6464 = vand.u32 %v6099, 2147483648
          %v6465 = vor.u32 1.1754944e-38, %v6464
          %v6466 = vsel %vm6463, %v6465, %v6461
          %v6467 = vmul.f32 1.0, %v6466
          %v6468 = vrcp.pop %v6100
          %v6469 = vmul.f32 %v6100, %v6468
          %v6470 = vsub.f32 1.0, %v6469
          %v6471 = vmul.f32 %v6468, %v6470
          %v6472 = vadd.f32 %v6468, %v6471
          %vm6473 = vweird.f32 %v6100
          %vm6474 = vweird.f32 %v6468
          %vm6475 = vmor %vm6473, %vm6474
          %v6476 = vsel %vm6475, %v6468, %v6472
          %v6477 = vand.u32 2147483647, %v6100
          %vm6478 = vcmp.eq.f32.partialorder %v6477, 8.507059e+37
          %v6479 = vand.u32 %v6100, 2147483648
          %v6480 = vor.u32 1.1754944e-38, %v6479
          %v6481 = vsel %vm6478, %v6480, %v6476
          %v6482 = vmul.f32 1.0, %v6481
          %v6483 = vrcp.pop %v6101
          %v6484 = vmul.f32 %v6101, %v6483
          %v6485 = vsub.f32 1.0, %v6484
          %v6486 = vmul.f32 %v6483, %v6485
          %v6487 = vadd.f32 %v6483, %v6486
          %vm6488 = vweird.f32 %v6101
          %vm6489 = vweird.f32 %v6483
          %vm6490 = vmor %vm6488, %vm6489
          %v6491 = vsel %vm6490, %v6483, %v6487
          %v6492 = vand.u32 2147483647, %v6101
          %vm6493 = vcmp.eq.f32.partialorder %v6492, 8.507059e+37
          %v6494 = vand.u32 %v6101, 2147483648
          %v6495 = vor.u32 1.1754944e-38, %v6494
          %v6496 = vsel %vm6493, %v6495, %v6491
          %v6497 = vmul.f32 1.0, %v6496
          %v6498 = vrcp.pop %v6102
          %v6499 = vmul.f32 %v6102, %v6498
          %v6500 = vsub.f32 1.0, %v6499
          %v6501 = vmul.f32 %v6498, %v6500
          %v6502 = vadd.f32 %v6498, %v6501
          %vm6503 = vweird.f32 %v6102
          %vm6504 = vweird.f32 %v6498
          %vm6505 = vmor %vm6503, %vm6504
          %v6506 = vsel %vm6505, %v6498, %v6502
          %v6507 = vand.u32 2147483647, %v6102
          %vm6508 = vcmp.eq.f32.partialorder %v6507, 8.507059e+37
          %v6509 = vand.u32 %v6102, 2147483648
          %v6510 = vor.u32 1.1754944e-38, %v6509
          %v6511 = vsel %vm6508, %v6510, %v6506
          %v6512 = vmul.f32 1.0, %v6511
          %v6513 = vrcp.pop %v6103
          %v6514 = vmul.f32 %v6103, %v6513
          %v6515 = vsub.f32 1.0, %v6514
          %v6516 = vmul.f32 %v6513, %v6515
          %v6517 = vadd.f32 %v6513, %v6516
          %vm6518 = vweird.f32 %v6103
          %vm6519 = vweird.f32 %v6513
          %vm6520 = vmor %vm6518, %vm6519
          %v6521 = vsel %vm6520, %v6513, %v6517
          %v6522 = vand.u32 2147483647, %v6103
          %vm6523 = vcmp.eq.f32.partialorder %v6522, 8.507059e+37
          %v6524 = vand.u32 %v6103, 2147483648
          %v6525 = vor.u32 1.1754944e-38, %v6524
          %v6526 = vsel %vm6523, %v6525, %v6521
          %v6527 = vmul.f32 1.0, %v6526
          %v6528 = vrcp.pop %v6104
          %v6529 = vmul.f32 %v6104, %v6528
          %v6530 = vsub.f32 1.0, %v6529
          %v6531 = vmul.f32 %v6528, %v6530
          %v6532 = vadd.f32 %v6528, %v6531
          %vm6533 = vweird.f32 %v6104
          %vm6534 = vweird.f32 %v6528
          %vm6535 = vmor %vm6533, %vm6534
          %v6536 = vsel %vm6535, %v6528, %v6532
          %v6537 = vand.u32 2147483647, %v6104
          %vm6538 = vcmp.eq.f32.partialorder %v6537, 8.507059e+37
          %v6539 = vand.u32 %v6104, 2147483648
          %v6540 = vor.u32 1.1754944e-38, %v6539
          %v6541 = vsel %vm6538, %v6540, %v6536
          %v6542 = vmul.f32 1.0, %v6541
          %v6543 = vrcp.pop %v6105
          %v6544 = vmul.f32 %v6105, %v6543
          %v6545 = vsub.f32 1.0, %v6544
          %v6546 = vmul.f32 %v6543, %v6545
          %v6547 = vadd.f32 %v6543, %v6546
          %vm6548 = vweird.f32 %v6105
          %vm6549 = vweird.f32 %v6543
          %vm6550 = vmor %vm6548, %vm6549
          %v6551 = vsel %vm6550, %v6543, %v6547
          %v6552 = vand.u32 2147483647, %v6105
          %vm6553 = vcmp.eq.f32.partialorder %v6552, 8.507059e+37
          %v6554 = vand.u32 %v6105, 2147483648
          %v6555 = vor.u32 1.1754944e-38, %v6554
          %v6556 = vsel %vm6553, %v6555, %v6551
          %v6557 = vmul.f32 1.0, %v6556
          %v6558 = vrcp.pop %v6106
          %v6559 = vmul.f32 %v6106, %v6558
          %v6560 = vsub.f32 1.0, %v6559
          %v6561 = vmul.f32 %v6558, %v6560
          %v6562 = vadd.f32 %v6558, %v6561
          %vm6563 = vweird.f32 %v6106
          %vm6564 = vweird.f32 %v6558
          %vm6565 = vmor %vm6563, %vm6564
          %v6566 = vsel %vm6565, %v6558, %v6562
          %v6567 = vand.u32 2147483647, %v6106
          %vm6568 = vcmp.eq.f32.partialorder %v6567, 8.507059e+37
          %v6569 = vand.u32 %v6106, 2147483648
          %v6570 = vor.u32 1.1754944e-38, %v6569
          %v6571 = vsel %vm6568, %v6570, %v6566
          %v6572 = vmul.f32 1.0, %v6571
          %v6573 = vrcp.pop %v6107
          %v6574 = vmul.f32 %v6107, %v6573
          %v6575 = vsub.f32 1.0, %v6574
          %v6576 = vmul.f32 %v6573, %v6575
          %v6577 = vadd.f32 %v6573, %v6576
          %vm6578 = vweird.f32 %v6107
          %vm6579 = vweird.f32 %v6573
          %vm6580 = vmor %vm6578, %vm6579
          %v6581 = vsel %vm6580, %v6573, %v6577
          %v6582 = vand.u32 2147483647, %v6107
          %vm6583 = vcmp.eq.f32.partialorder %v6582, 8.507059e+37
          %v6584 = vand.u32 %v6107, 2147483648
          %v6585 = vor.u32 1.1754944e-38, %v6584
          %v6586 = vsel %vm6583, %v6585, %v6581
          %v6587 = vmul.f32 1.0, %v6586
          %v6588 = vtanh.pop %v5687
          %v6589 = vtanh.pop %v5689
          %v6590 = vtanh.pop %v5691
          %v6591 = vtanh.pop %v5693
          %v6592 = vtanh.pop %v5695
          %v6593 = vtanh.pop %v5697
          %v6594 = vtanh.pop %v5699
          %v6595 = vtanh.pop %v5701
          %v6596 = vtanh.pop %v5703
          %v6597 = vtanh.pop %v5705
          %v6598 = vtanh.pop %v5707
          %v6599 = vtanh.pop %v5709
          %v6600 = vtanh.pop %v5711
          %v6601 = vtanh.pop %v5713
          %v6602 = vtanh.pop %v5715
          %v6603 = vtanh.pop %v5717
          %v6604 = vxor.u32 %v5948, 2147483648
          %v6605 = vxor.u32 %v5949, 2147483648
          %v6606 = vxor.u32 %v5950, 2147483648
          %v6607 = vxor.u32 %v5951, 2147483648
          %v6608 = vxor.u32 %v5952, 2147483648
          %v6609 = vxor.u32 %v5953, 2147483648
          %v6610 = vxor.u32 %v5954, 2147483648
          %v6611 = vxor.u32 %v5955, 2147483648
          %v6612 = vxor.u32 %v5956, 2147483648
          %v6613 = vxor.u32 %v5957, 2147483648
          %v6614 = vxor.u32 %v5958, 2147483648
          %v6615 = vxor.u32 %v5959, 2147483648
          %v6616 = vxor.u32 %v5960, 2147483648
          %v6617 = vxor.u32 %v5961, 2147483648
          %v6618 = vxor.u32 %v5962, 2147483648
          %v6619 = vxor.u32 %v5963, 2147483648
          %v6620 = vxor.u32 %v5964, 2147483648
          %v6621 = vxor.u32 %v5965, 2147483648
          %v6622 = vxor.u32 %v5966, 2147483648
          %v6623 = vxor.u32 %v5967, 2147483648
          %v6624 = vxor.u32 %v5968, 2147483648
          %v6625 = vxor.u32 %v5969, 2147483648
          %v6626 = vxor.u32 %v5970, 2147483648
          %v6627 = vxor.u32 %v5971, 2147483648
          %v6628 = vxor.u32 %v5972, 2147483648
          %v6629 = vxor.u32 %v5973, 2147483648
          %v6630 = vxor.u32 %v5974, 2147483648
          %v6631 = vxor.u32 %v5975, 2147483648
          %v6632 = vxor.u32 %v5976, 2147483648
          %v6633 = vxor.u32 %v5977, 2147483648
          %v6634 = vxor.u32 %v5978, 2147483648
          %v6635 = vxor.u32 %v5979, 2147483648
          %v6636 = vmul.f32 %v6604, 1.442695
          %v6637 = vpow.pop %v6636
          %v6638 = vmul.f32 %v6605, 1.442695
          %v6639 = vpow.pop %v6638
          %v6640 = vmul.f32 %v6606, 1.442695
          %v6641 = vpow.pop %v6640
          %v6642 = vmul.f32 %v6607, 1.442695
          %v6643 = vpow.pop %v6642
          %v6644 = vmul.f32 %v6608, 1.442695
          %v6645 = vpow.pop %v6644
          %v6646 = vmul.f32 %v6609, 1.442695
          %v6647 = vpow.pop %v6646
          %v6648 = vmul.f32 %v6610, 1.442695
          %v6649 = vpow.pop %v6648
          %v6650 = vmul.f32 %v6611, 1.442695
          %v6651 = vpow.pop %v6650
          %v6652 = vmul.f32 %v6612, 1.442695
          %v6653 = vpow.pop %v6652
          %v6654 = vmul.f32 %v6613, 1.442695
          %v6655 = vpow.pop %v6654
          %v6656 = vmul.f32 %v6614, 1.442695
          %v6657 = vpow.pop %v6656
          %v6658 = vmul.f32 %v6615, 1.442695
          %v6659 = vpow.pop %v6658
          %v6660 = vmul.f32 %v6616, 1.442695
          %v6661 = vpow.pop %v6660
          %v6662 = vmul.f32 %v6617, 1.442695
          %v6663 = vpow.pop %v6662
          %v6664 = vmul.f32 %v6618, 1.442695
          %v6665 = vpow.pop %v6664
          %v6666 = vmul.f32 %v6619, 1.442695
          %v6667 = vpow.pop %v6666
          %v6668 = vmul.f32 %v6620, 1.442695
          %v6669 = vpow.pop %v6668
          %v6670 = vmul.f32 %v6621, 1.442695
          %v6671 = vpow.pop %v6670
          %v6672 = vmul.f32 %v6622, 1.442695
          %v6673 = vpow.pop %v6672
          %v6674 = vmul.f32 %v6623, 1.442695
          %v6675 = vpow.pop %v6674
          %v6676 = vmul.f32 %v6624, 1.442695
          %v6677 = vpow.pop %v6676
          %v6678 = vmul.f32 %v6625, 1.442695
          %v6679 = vpow.pop %v6678
          %v6680 = vmul.f32 %v6626, 1.442695
          %v6681 = vpow.pop %v6680
          %v6682 = vmul.f32 %v6627, 1.442695
          %v6683 = vpow.pop %v6682
          %v6684 = vmul.f32 %v6628, 1.442695
          %v6685 = vpow.pop %v6684
          %v6686 = vmul.f32 %v6629, 1.442695
          %v6687 = vpow.pop %v6686
          %v6688 = vmul.f32 %v6630, 1.442695
          %v6689 = vpow.pop %v6688
          %v6690 = vmul.f32 %v6631, 1.442695
          %v6691 = vpow.pop %v6690
          %v6692 = vmul.f32 %v6632, 1.442695
          %v6693 = vpow.pop %v6692
          %v6694 = vmul.f32 %v6633, 1.442695
          %v6695 = vpow.pop %v6694
          %v6696 = vmul.f32 %v6634, 1.442695
          %v6697 = vpow.pop %v6696
          %v6698 = vmul.f32 %v6635, 1.442695
          %v6699 = vpow.pop %v6698
          %v6700 = vadd.f32 %v6637, 1.0
          %v6701 = vadd.f32 %v6639, 1.0
          %v6702 = vadd.f32 %v6641, 1.0
          %v6703 = vadd.f32 %v6643, 1.0
          %v6704 = vadd.f32 %v6645, 1.0
          %v6705 = vadd.f32 %v6647, 1.0
          %v6706 = vadd.f32 %v6649, 1.0
          %v6707 = vadd.f32 %v6651, 1.0
          %v6708 = vadd.f32 %v6653, 1.0
          %v6709 = vadd.f32 %v6655, 1.0
          %v6710 = vadd.f32 %v6657, 1.0
          %v6711 = vadd.f32 %v6659, 1.0
          %v6712 = vadd.f32 %v6661, 1.0
          %v6713 = vadd.f32 %v6663, 1.0
          %v6714 = vadd.f32 %v6665, 1.0
          %v6715 = vadd.f32 %v6667, 1.0
          %v6716 = vadd.f32 %v6669, 1.0
          %v6717 = vadd.f32 %v6671, 1.0
          %v6718 = vadd.f32 %v6673, 1.0
          %v6719 = vadd.f32 %v6675, 1.0
          %v6720 = vadd.f32 %v6677, 1.0
          %v6721 = vadd.f32 %v6679, 1.0
          %v6722 = vadd.f32 %v6681, 1.0
          %v6723 = vadd.f32 %v6683, 1.0
          %v6724 = vadd.f32 %v6685, 1.0
          %v6725 = vadd.f32 %v6687, 1.0
          %v6726 = vadd.f32 %v6689, 1.0
          %v6727 = vadd.f32 %v6691, 1.0
          %v6728 = vadd.f32 %v6693, 1.0
          %v6729 = vadd.f32 %v6695, 1.0
          %v6730 = vadd.f32 %v6697, 1.0
          %v6731 = vadd.f32 %v6699, 1.0
          %v6732 = vrcp.pop %v6700
          %v6733 = vmul.f32 %v6700, %v6732
          %v6734 = vsub.f32 1.0, %v6733
          %v6735 = vmul.f32 %v6732, %v6734
          %v6736 = vadd.f32 %v6732, %v6735
          %vm6737 = vweird.f32 %v6700
          %vm6738 = vweird.f32 %v6732
          %vm6739 = vmor %vm6737, %vm6738
          %v6740 = vsel %vm6739, %v6732, %v6736
          %v6741 = vand.u32 2147483647, %v6700
          %vm6742 = vcmp.eq.f32.partialorder %v6741, 8.507059e+37
          %v6743 = vand.u32 %v6700, 2147483648
          %v6744 = vor.u32 1.1754944e-38, %v6743
          %v6745 = vsel %vm6742, %v6744, %v6740
          %v6746 = vmul.f32 1.0, %v6745
          %v6747 = vrcp.pop %v6701
          %v6748 = vmul.f32 %v6701, %v6747
          %v6749 = vsub.f32 1.0, %v6748
          %v6750 = vmul.f32 %v6747, %v6749
          %v6751 = vadd.f32 %v6747, %v6750
          %vm6752 = vweird.f32 %v6701
          %vm6753 = vweird.f32 %v6747
          %vm6754 = vmor %vm6752, %vm6753
          %v6755 = vsel %vm6754, %v6747, %v6751
          %v6756 = vand.u32 2147483647, %v6701
          %vm6757 = vcmp.eq.f32.partialorder %v6756, 8.507059e+37
          %v6758 = vand.u32 %v6701, 2147483648
          %v6759 = vor.u32 1.1754944e-38, %v6758
          %v6760 = vsel %vm6757, %v6759, %v6755
          %v6761 = vmul.f32 1.0, %v6760
          %v6762 = vrcp.pop %v6702
          %v6763 = vmul.f32 %v6702, %v6762
          %v6764 = vsub.f32 1.0, %v6763
          %v6765 = vmul.f32 %v6762, %v6764
          %v6766 = vadd.f32 %v6762, %v6765
          %vm6767 = vweird.f32 %v6702
          %vm6768 = vweird.f32 %v6762
          %vm6769 = vmor %vm6767, %vm6768
          %v6770 = vsel %vm6769, %v6762, %v6766
          %v6771 = vand.u32 2147483647, %v6702
          %vm6772 = vcmp.eq.f32.partialorder %v6771, 8.507059e+37
          %v6773 = vand.u32 %v6702, 2147483648
          %v6774 = vor.u32 1.1754944e-38, %v6773
          %v6775 = vsel %vm6772, %v6774, %v6770
          %v6776 = vmul.f32 1.0, %v6775
          %v6777 = vrcp.pop %v6703
          %v6778 = vmul.f32 %v6703, %v6777
          %v6779 = vsub.f32 1.0, %v6778
          %v6780 = vmul.f32 %v6777, %v6779
          %v6781 = vadd.f32 %v6777, %v6780
          %vm6782 = vweird.f32 %v6703
          %vm6783 = vweird.f32 %v6777
          %vm6784 = vmor %vm6782, %vm6783
          %v6785 = vsel %vm6784, %v6777, %v6781
          %v6786 = vand.u32 2147483647, %v6703
          %vm6787 = vcmp.eq.f32.partialorder %v6786, 8.507059e+37
          %v6788 = vand.u32 %v6703, 2147483648
          %v6789 = vor.u32 1.1754944e-38, %v6788
          %v6790 = vsel %vm6787, %v6789, %v6785
          %v6791 = vmul.f32 1.0, %v6790
          %v6792 = vrcp.pop %v6704
          %v6793 = vmul.f32 %v6704, %v6792
          %v6794 = vsub.f32 1.0, %v6793
          %v6795 = vmul.f32 %v6792, %v6794
          %v6796 = vadd.f32 %v6792, %v6795
          %vm6797 = vweird.f32 %v6704
          %vm6798 = vweird.f32 %v6792
          %vm6799 = vmor %vm6797, %vm6798
          %v6800 = vsel %vm6799, %v6792, %v6796
          %v6801 = vand.u32 2147483647, %v6704
          %vm6802 = vcmp.eq.f32.partialorder %v6801, 8.507059e+37
          %v6803 = vand.u32 %v6704, 2147483648
          %v6804 = vor.u32 1.1754944e-38, %v6803
          %v6805 = vsel %vm6802, %v6804, %v6800
          %v6806 = vmul.f32 1.0, %v6805
          %v6807 = vrcp.pop %v6705
          %v6808 = vmul.f32 %v6705, %v6807
          %v6809 = vsub.f32 1.0, %v6808
          %v6810 = vmul.f32 %v6807, %v6809
          %v6811 = vadd.f32 %v6807, %v6810
          %vm6812 = vweird.f32 %v6705
          %vm6813 = vweird.f32 %v6807
          %vm6814 = vmor %vm6812, %vm6813
          %v6815 = vsel %vm6814, %v6807, %v6811
          %v6816 = vand.u32 2147483647, %v6705
          %vm6817 = vcmp.eq.f32.partialorder %v6816, 8.507059e+37
          %v6818 = vand.u32 %v6705, 2147483648
          %v6819 = vor.u32 1.1754944e-38, %v6818
          %v6820 = vsel %vm6817, %v6819, %v6815
          %v6821 = vmul.f32 1.0, %v6820
          %v6822 = vrcp.pop %v6706
          %v6823 = vmul.f32 %v6706, %v6822
          %v6824 = vsub.f32 1.0, %v6823
          %v6825 = vmul.f32 %v6822, %v6824
          %v6826 = vadd.f32 %v6822, %v6825
          %vm6827 = vweird.f32 %v6706
          %vm6828 = vweird.f32 %v6822
          %vm6829 = vmor %vm6827, %vm6828
          %v6830 = vsel %vm6829, %v6822, %v6826
          %v6831 = vand.u32 2147483647, %v6706
          %vm6832 = vcmp.eq.f32.partialorder %v6831, 8.507059e+37
          %v6833 = vand.u32 %v6706, 2147483648
          %v6834 = vor.u32 1.1754944e-38, %v6833
          %v6835 = vsel %vm6832, %v6834, %v6830
          %v6836 = vmul.f32 1.0, %v6835
          %v6837 = vrcp.pop %v6707
          %v6838 = vmul.f32 %v6707, %v6837
          %v6839 = vsub.f32 1.0, %v6838
          %v6840 = vmul.f32 %v6837, %v6839
          %v6841 = vadd.f32 %v6837, %v6840
          %vm6842 = vweird.f32 %v6707
          %vm6843 = vweird.f32 %v6837
          %vm6844 = vmor %vm6842, %vm6843
          %v6845 = vsel %vm6844, %v6837, %v6841
          %v6846 = vand.u32 2147483647, %v6707
          %vm6847 = vcmp.eq.f32.partialorder %v6846, 8.507059e+37
          %v6848 = vand.u32 %v6707, 2147483648
          %v6849 = vor.u32 1.1754944e-38, %v6848
          %v6850 = vsel %vm6847, %v6849, %v6845
          %v6851 = vmul.f32 1.0, %v6850
          %v6852 = vrcp.pop %v6708
          %v6853 = vmul.f32 %v6708, %v6852
          %v6854 = vsub.f32 1.0, %v6853
          %v6855 = vmul.f32 %v6852, %v6854
          %v6856 = vadd.f32 %v6852, %v6855
          %vm6857 = vweird.f32 %v6708
          %vm6858 = vweird.f32 %v6852
          %vm6859 = vmor %vm6857, %vm6858
          %v6860 = vsel %vm6859, %v6852, %v6856
          %v6861 = vand.u32 2147483647, %v6708
          %vm6862 = vcmp.eq.f32.partialorder %v6861, 8.507059e+37
          %v6863 = vand.u32 %v6708, 2147483648
          %v6864 = vor.u32 1.1754944e-38, %v6863
          %v6865 = vsel %vm6862, %v6864, %v6860
          %v6866 = vmul.f32 1.0, %v6865
          %v6867 = vrcp.pop %v6709
          %v6868 = vmul.f32 %v6709, %v6867
          %v6869 = vsub.f32 1.0, %v6868
          %v6870 = vmul.f32 %v6867, %v6869
          %v6871 = vadd.f32 %v6867, %v6870
          %vm6872 = vweird.f32 %v6709
          %vm6873 = vweird.f32 %v6867
          %vm6874 = vmor %vm6872, %vm6873
          %v6875 = vsel %vm6874, %v6867, %v6871
          %v6876 = vand.u32 2147483647, %v6709
          %vm6877 = vcmp.eq.f32.partialorder %v6876, 8.507059e+37
          %v6878 = vand.u32 %v6709, 2147483648
          %v6879 = vor.u32 1.1754944e-38, %v6878
          %v6880 = vsel %vm6877, %v6879, %v6875
          %v6881 = vmul.f32 1.0, %v6880
          %v6882 = vrcp.pop %v6710
          %v6883 = vmul.f32 %v6710, %v6882
          %v6884 = vsub.f32 1.0, %v6883
          %v6885 = vmul.f32 %v6882, %v6884
          %v6886 = vadd.f32 %v6882, %v6885
          %vm6887 = vweird.f32 %v6710
          %vm6888 = vweird.f32 %v6882
          %vm6889 = vmor %vm6887, %vm6888
          %v6890 = vsel %vm6889, %v6882, %v6886
          %v6891 = vand.u32 2147483647, %v6710
          %vm6892 = vcmp.eq.f32.partialorder %v6891, 8.507059e+37
          %v6893 = vand.u32 %v6710, 2147483648
          %v6894 = vor.u32 1.1754944e-38, %v6893
          %v6895 = vsel %vm6892, %v6894, %v6890
          %v6896 = vmul.f32 1.0, %v6895
          %v6897 = vrcp.pop %v6711
          %v6898 = vmul.f32 %v6711, %v6897
          %v6899 = vsub.f32 1.0, %v6898
          %v6900 = vmul.f32 %v6897, %v6899
          %v6901 = vadd.f32 %v6897, %v6900
          %vm6902 = vweird.f32 %v6711
          %vm6903 = vweird.f32 %v6897
          %vm6904 = vmor %vm6902, %vm6903
          %v6905 = vsel %vm6904, %v6897, %v6901
          %v6906 = vand.u32 2147483647, %v6711
          %vm6907 = vcmp.eq.f32.partialorder %v6906, 8.507059e+37
          %v6908 = vand.u32 %v6711, 2147483648
          %v6909 = vor.u32 1.1754944e-38, %v6908
          %v6910 = vsel %vm6907, %v6909, %v6905
          %v6911 = vmul.f32 1.0, %v6910
          %v6912 = vrcp.pop %v6712
          %v6913 = vmul.f32 %v6712, %v6912
          %v6914 = vsub.f32 1.0, %v6913
          %v6915 = vmul.f32 %v6912, %v6914
          %v6916 = vadd.f32 %v6912, %v6915
          %vm6917 = vweird.f32 %v6712
          %vm6918 = vweird.f32 %v6912
          %vm6919 = vmor %vm6917, %vm6918
          %v6920 = vsel %vm6919, %v6912, %v6916
          %v6921 = vand.u32 2147483647, %v6712
          %vm6922 = vcmp.eq.f32.partialorder %v6921, 8.507059e+37
          %v6923 = vand.u32 %v6712, 2147483648
          %v6924 = vor.u32 1.1754944e-38, %v6923
          %v6925 = vsel %vm6922, %v6924, %v6920
          %v6926 = vmul.f32 1.0, %v6925
          %v6927 = vrcp.pop %v6713
          %v6928 = vmul.f32 %v6713, %v6927
          %v6929 = vsub.f32 1.0, %v6928
          %v6930 = vmul.f32 %v6927, %v6929
          %v6931 = vadd.f32 %v6927, %v6930
          %vm6932 = vweird.f32 %v6713
          %vm6933 = vweird.f32 %v6927
          %vm6934 = vmor %vm6932, %vm6933
          %v6935 = vsel %vm6934, %v6927, %v6931
          %v6936 = vand.u32 2147483647, %v6713
          %vm6937 = vcmp.eq.f32.partialorder %v6936, 8.507059e+37
          %v6938 = vand.u32 %v6713, 2147483648
          %v6939 = vor.u32 1.1754944e-38, %v6938
          %v6940 = vsel %vm6937, %v6939, %v6935
          %v6941 = vmul.f32 1.0, %v6940
          %v6942 = vrcp.pop %v6714
          %v6943 = vmul.f32 %v6714, %v6942
          %v6944 = vsub.f32 1.0, %v6943
          %v6945 = vmul.f32 %v6942, %v6944
          %v6946 = vadd.f32 %v6942, %v6945
          %vm6947 = vweird.f32 %v6714
          %vm6948 = vweird.f32 %v6942
          %vm6949 = vmor %vm6947, %vm6948
          %v6950 = vsel %vm6949, %v6942, %v6946
          %v6951 = vand.u32 2147483647, %v6714
          %vm6952 = vcmp.eq.f32.partialorder %v6951, 8.507059e+37
          %v6953 = vand.u32 %v6714, 2147483648
          %v6954 = vor.u32 1.1754944e-38, %v6953
          %v6955 = vsel %vm6952, %v6954, %v6950
          %v6956 = vmul.f32 1.0, %v6955
          %v6957 = vrcp.pop %v6715
          %v6958 = vmul.f32 %v6715, %v6957
          %v6959 = vsub.f32 1.0, %v6958
          %v6960 = vmul.f32 %v6957, %v6959
          %v6961 = vadd.f32 %v6957, %v6960
          %vm6962 = vweird.f32 %v6715
          %vm6963 = vweird.f32 %v6957
          %vm6964 = vmor %vm6962, %vm6963
          %v6965 = vsel %vm6964, %v6957, %v6961
          %v6966 = vand.u32 2147483647, %v6715
          %vm6967 = vcmp.eq.f32.partialorder %v6966, 8.507059e+37
          %v6968 = vand.u32 %v6715, 2147483648
          %v6969 = vor.u32 1.1754944e-38, %v6968
          %v6970 = vsel %vm6967, %v6969, %v6965
          %v6971 = vmul.f32 1.0, %v6970
          %v6972 = vrcp.pop %v6716
          %v6973 = vmul.f32 %v6716, %v6972
          %v6974 = vsub.f32 1.0, %v6973
          %v6975 = vmul.f32 %v6972, %v6974
          %v6976 = vadd.f32 %v6972, %v6975
          %vm6977 = vweird.f32 %v6716
          %vm6978 = vweird.f32 %v6972
          %vm6979 = vmor %vm6977, %vm6978
          %v6980 = vsel %vm6979, %v6972, %v6976
          %v6981 = vand.u32 2147483647, %v6716
          %vm6982 = vcmp.eq.f32.partialorder %v6981, 8.507059e+37
          %v6983 = vand.u32 %v6716, 2147483648
          %v6984 = vor.u32 1.1754944e-38, %v6983
          %v6985 = vsel %vm6982, %v6984, %v6980
          %v6986 = vmul.f32 1.0, %v6985
          %v6987 = vrcp.pop %v6717
          %v6988 = vmul.f32 %v6717, %v6987
          %v6989 = vsub.f32 1.0, %v6988
          %v6990 = vmul.f32 %v6987, %v6989
          %v6991 = vadd.f32 %v6987, %v6990
          %vm6992 = vweird.f32 %v6717
          %vm6993 = vweird.f32 %v6987
          %vm6994 = vmor %vm6992, %vm6993
          %v6995 = vsel %vm6994, %v6987, %v6991
          %v6996 = vand.u32 2147483647, %v6717
          %vm6997 = vcmp.eq.f32.partialorder %v6996, 8.507059e+37
          %v6998 = vand.u32 %v6717, 2147483648
          %v6999 = vor.u32 1.1754944e-38, %v6998
          %v7000 = vsel %vm6997, %v6999, %v6995
          %v7001 = vmul.f32 1.0, %v7000
          %v7002 = vrcp.pop %v6718
          %v7003 = vmul.f32 %v6718, %v7002
          %v7004 = vsub.f32 1.0, %v7003
          %v7005 = vmul.f32 %v7002, %v7004
          %v7006 = vadd.f32 %v7002, %v7005
          %vm7007 = vweird.f32 %v6718
          %vm7008 = vweird.f32 %v7002
          %vm7009 = vmor %vm7007, %vm7008
          %v7010 = vsel %vm7009, %v7002, %v7006
          %v7011 = vand.u32 2147483647, %v6718
          %vm7012 = vcmp.eq.f32.partialorder %v7011, 8.507059e+37
          %v7013 = vand.u32 %v6718, 2147483648
          %v7014 = vor.u32 1.1754944e-38, %v7013
          %v7015 = vsel %vm7012, %v7014, %v7010
          %v7016 = vmul.f32 1.0, %v7015
          %v7017 = vrcp.pop %v6719
          %v7018 = vmul.f32 %v6719, %v7017
          %v7019 = vsub.f32 1.0, %v7018
          %v7020 = vmul.f32 %v7017, %v7019
          %v7021 = vadd.f32 %v7017, %v7020
          %vm7022 = vweird.f32 %v6719
          %vm7023 = vweird.f32 %v7017
          %vm7024 = vmor %vm7022, %vm7023
          %v7025 = vsel %vm7024, %v7017, %v7021
          %v7026 = vand.u32 2147483647, %v6719
          %vm7027 = vcmp.eq.f32.partialorder %v7026, 8.507059e+37
          %v7028 = vand.u32 %v6719, 2147483648
          %v7029 = vor.u32 1.1754944e-38, %v7028
          %v7030 = vsel %vm7027, %v7029, %v7025
          %v7031 = vmul.f32 1.0, %v7030
          %v7032 = vrcp.pop %v6720
          %v7033 = vmul.f32 %v6720, %v7032
          %v7034 = vsub.f32 1.0, %v7033
          %v7035 = vmul.f32 %v7032, %v7034
          %v7036 = vadd.f32 %v7032, %v7035
          %vm7037 = vweird.f32 %v6720
          %vm7038 = vweird.f32 %v7032
          %vm7039 = vmor %vm7037, %vm7038
          %v7040 = vsel %vm7039, %v7032, %v7036
          %v7041 = vand.u32 2147483647, %v6720
          %vm7042 = vcmp.eq.f32.partialorder %v7041, 8.507059e+37
          %v7043 = vand.u32 %v6720, 2147483648
          %v7044 = vor.u32 1.1754944e-38, %v7043
          %v7045 = vsel %vm7042, %v7044, %v7040
          %v7046 = vmul.f32 1.0, %v7045
          %v7047 = vrcp.pop %v6721
          %v7048 = vmul.f32 %v6721, %v7047
          %v7049 = vsub.f32 1.0, %v7048
          %v7050 = vmul.f32 %v7047, %v7049
          %v7051 = vadd.f32 %v7047, %v7050
          %vm7052 = vweird.f32 %v6721
          %vm7053 = vweird.f32 %v7047
          %vm7054 = vmor %vm7052, %vm7053
          %v7055 = vsel %vm7054, %v7047, %v7051
          %v7056 = vand.u32 2147483647, %v6721
          %vm7057 = vcmp.eq.f32.partialorder %v7056, 8.507059e+37
          %v7058 = vand.u32 %v6721, 2147483648
          %v7059 = vor.u32 1.1754944e-38, %v7058
          %v7060 = vsel %vm7057, %v7059, %v7055
          %v7061 = vmul.f32 1.0, %v7060
          %v7062 = vrcp.pop %v6722
          %v7063 = vmul.f32 %v6722, %v7062
          %v7064 = vsub.f32 1.0, %v7063
          %v7065 = vmul.f32 %v7062, %v7064
          %v7066 = vadd.f32 %v7062, %v7065
          %vm7067 = vweird.f32 %v6722
          %vm7068 = vweird.f32 %v7062
          %vm7069 = vmor %vm7067, %vm7068
          %v7070 = vsel %vm7069, %v7062, %v7066
          %v7071 = vand.u32 2147483647, %v6722
          %vm7072 = vcmp.eq.f32.partialorder %v7071, 8.507059e+37
          %v7073 = vand.u32 %v6722, 2147483648
          %v7074 = vor.u32 1.1754944e-38, %v7073
          %v7075 = vsel %vm7072, %v7074, %v7070
          %v7076 = vmul.f32 1.0, %v7075
          %v7077 = vrcp.pop %v6723
          %v7078 = vmul.f32 %v6723, %v7077
          %v7079 = vsub.f32 1.0, %v7078
          %v7080 = vmul.f32 %v7077, %v7079
          %v7081 = vadd.f32 %v7077, %v7080
          %vm7082 = vweird.f32 %v6723
          %vm7083 = vweird.f32 %v7077
          %vm7084 = vmor %vm7082, %vm7083
          %v7085 = vsel %vm7084, %v7077, %v7081
          %v7086 = vand.u32 2147483647, %v6723
          %vm7087 = vcmp.eq.f32.partialorder %v7086, 8.507059e+37
          %v7088 = vand.u32 %v6723, 2147483648
          %v7089 = vor.u32 1.1754944e-38, %v7088
          %v7090 = vsel %vm7087, %v7089, %v7085
          %v7091 = vmul.f32 1.0, %v7090
          %v7092 = vrcp.pop %v6724
          %v7093 = vmul.f32 %v6724, %v7092
          %v7094 = vsub.f32 1.0, %v7093
          %v7095 = vmul.f32 %v7092, %v7094
          %v7096 = vadd.f32 %v7092, %v7095
          %vm7097 = vweird.f32 %v6724
          %vm7098 = vweird.f32 %v7092
          %vm7099 = vmor %vm7097, %vm7098
          %v7100 = vsel %vm7099, %v7092, %v7096
          %v7101 = vand.u32 2147483647, %v6724
          %vm7102 = vcmp.eq.f32.partialorder %v7101, 8.507059e+37
          %v7103 = vand.u32 %v6724, 2147483648
          %v7104 = vor.u32 1.1754944e-38, %v7103
          %v7105 = vsel %vm7102, %v7104, %v7100
          %v7106 = vmul.f32 1.0, %v7105
          %v7107 = vrcp.pop %v6725
          %v7108 = vmul.f32 %v6725, %v7107
          %v7109 = vsub.f32 1.0, %v7108
          %v7110 = vmul.f32 %v7107, %v7109
          %v7111 = vadd.f32 %v7107, %v7110
          %vm7112 = vweird.f32 %v6725
          %vm7113 = vweird.f32 %v7107
          %vm7114 = vmor %vm7112, %vm7113
          %v7115 = vsel %vm7114, %v7107, %v7111
          %v7116 = vand.u32 2147483647, %v6725
          %vm7117 = vcmp.eq.f32.partialorder %v7116, 8.507059e+37
          %v7118 = vand.u32 %v6725, 2147483648
          %v7119 = vor.u32 1.1754944e-38, %v7118
          %v7120 = vsel %vm7117, %v7119, %v7115
          %v7121 = vmul.f32 1.0, %v7120
          %v7122 = vrcp.pop %v6726
          %v7123 = vmul.f32 %v6726, %v7122
          %v7124 = vsub.f32 1.0, %v7123
          %v7125 = vmul.f32 %v7122, %v7124
          %v7126 = vadd.f32 %v7122, %v7125
          %vm7127 = vweird.f32 %v6726
          %vm7128 = vweird.f32 %v7122
          %vm7129 = vmor %vm7127, %vm7128
          %v7130 = vsel %vm7129, %v7122, %v7126
          %v7131 = vand.u32 2147483647, %v6726
          %vm7132 = vcmp.eq.f32.partialorder %v7131, 8.507059e+37
          %v7133 = vand.u32 %v6726, 2147483648
          %v7134 = vor.u32 1.1754944e-38, %v7133
          %v7135 = vsel %vm7132, %v7134, %v7130
          %v7136 = vmul.f32 1.0, %v7135
          %v7137 = vrcp.pop %v6727
          %v7138 = vmul.f32 %v6727, %v7137
          %v7139 = vsub.f32 1.0, %v7138
          %v7140 = vmul.f32 %v7137, %v7139
          %v7141 = vadd.f32 %v7137, %v7140
          %vm7142 = vweird.f32 %v6727
          %vm7143 = vweird.f32 %v7137
          %vm7144 = vmor %vm7142, %vm7143
          %v7145 = vsel %vm7144, %v7137, %v7141
          %v7146 = vand.u32 2147483647, %v6727
          %vm7147 = vcmp.eq.f32.partialorder %v7146, 8.507059e+37
          %v7148 = vand.u32 %v6727, 2147483648
          %v7149 = vor.u32 1.1754944e-38, %v7148
          %v7150 = vsel %vm7147, %v7149, %v7145
          %v7151 = vmul.f32 1.0, %v7150
          %v7152 = vrcp.pop %v6728
          %v7153 = vmul.f32 %v6728, %v7152
          %v7154 = vsub.f32 1.0, %v7153
          %v7155 = vmul.f32 %v7152, %v7154
          %v7156 = vadd.f32 %v7152, %v7155
          %vm7157 = vweird.f32 %v6728
          %vm7158 = vweird.f32 %v7152
          %vm7159 = vmor %vm7157, %vm7158
          %v7160 = vsel %vm7159, %v7152, %v7156
          %v7161 = vand.u32 2147483647, %v6728
          %vm7162 = vcmp.eq.f32.partialorder %v7161, 8.507059e+37
          %v7163 = vand.u32 %v6728, 2147483648
          %v7164 = vor.u32 1.1754944e-38, %v7163
          %v7165 = vsel %vm7162, %v7164, %v7160
          %v7166 = vmul.f32 1.0, %v7165
          %v7167 = vrcp.pop %v6729
          %v7168 = vmul.f32 %v6729, %v7167
          %v7169 = vsub.f32 1.0, %v7168
          %v7170 = vmul.f32 %v7167, %v7169
          %v7171 = vadd.f32 %v7167, %v7170
          %vm7172 = vweird.f32 %v6729
          %vm7173 = vweird.f32 %v7167
          %vm7174 = vmor %vm7172, %vm7173
          %v7175 = vsel %vm7174, %v7167, %v7171
          %v7176 = vand.u32 2147483647, %v6729
          %vm7177 = vcmp.eq.f32.partialorder %v7176, 8.507059e+37
          %v7178 = vand.u32 %v6729, 2147483648
          %v7179 = vor.u32 1.1754944e-38, %v7178
          %v7180 = vsel %vm7177, %v7179, %v7175
          %v7181 = vmul.f32 1.0, %v7180
          %v7182 = vrcp.pop %v6730
          %v7183 = vmul.f32 %v6730, %v7182
          %v7184 = vsub.f32 1.0, %v7183
          %v7185 = vmul.f32 %v7182, %v7184
          %v7186 = vadd.f32 %v7182, %v7185
          %vm7187 = vweird.f32 %v6730
          %vm7188 = vweird.f32 %v7182
          %vm7189 = vmor %vm7187, %vm7188
          %v7190 = vsel %vm7189, %v7182, %v7186
          %v7191 = vand.u32 2147483647, %v6730
          %vm7192 = vcmp.eq.f32.partialorder %v7191, 8.507059e+37
          %v7193 = vand.u32 %v6730, 2147483648
          %v7194 = vor.u32 1.1754944e-38, %v7193
          %v7195 = vsel %vm7192, %v7194, %v7190
          %v7196 = vmul.f32 1.0, %v7195
          %v7197 = vrcp.pop %v6731
          %v7198 = vmul.f32 %v6731, %v7197
          %v7199 = vsub.f32 1.0, %v7198
          %v7200 = vmul.f32 %v7197, %v7199
          %v7201 = vadd.f32 %v7197, %v7200
          %vm7202 = vweird.f32 %v6731
          %vm7203 = vweird.f32 %v7197
          %vm7204 = vmor %vm7202, %vm7203
          %v7205 = vsel %vm7204, %v7197, %v7201
          %v7206 = vand.u32 2147483647, %v6731
          %vm7207 = vcmp.eq.f32.partialorder %v7206, 8.507059e+37
          %v7208 = vand.u32 %v6731, 2147483648
          %v7209 = vor.u32 1.1754944e-38, %v7208
          %v7210 = vsel %vm7207, %v7209, %v7205
          %v7211 = vmul.f32 1.0, %v7210
          %v7212 = vtanh.pop %v5949
          %v7213 = vtanh.pop %v5951
          %v7214 = vtanh.pop %v5953
          %v7215 = vtanh.pop %v5955
          %v7216 = vtanh.pop %v5957
          %v7217 = vtanh.pop %v5959
          %v7218 = vtanh.pop %v5961
          %v7219 = vtanh.pop %v5963
          %v7220 = vtanh.pop %v5965
          %v7221 = vtanh.pop %v5967
          %v7222 = vtanh.pop %v5969
          %v7223 = vtanh.pop %v5971
          %v7224 = vtanh.pop %v5973
          %v7225 = vtanh.pop %v5975
          %v7226 = vtanh.pop %v5977
          %v7227 = vtanh.pop %v5979
          %7244 = vrot.lane.b32.xlu0 %v5409, 64
          %v7245 = vpop.permute.xlu0 %7244
          %7246 = vrot.lane.b32.xlu0 %v5410, 64
          %v7247 = vpop.permute.xlu0 %7246
          %7248 = vrot.lane.b32.xlu0 %v5411, 64
          %v7249 = vpop.permute.xlu0 %7248
          %7250 = vrot.lane.b32.xlu0 %v5412, 64
          %v7251 = vpop.permute.xlu0 %7250
          %7252 = vrot.lane.b32.xlu0 %v5413, 64
          %v7253 = vpop.permute.xlu0 %7252
          %7254 = vrot.lane.b32.xlu0 %v5414, 64
          %v7255 = vpop.permute.xlu0 %7254
          %7256 = vrot.lane.b32.xlu0 %v5415, 64
          %v7257 = vpop.permute.xlu0 %7256
          %7258 = vrot.lane.b32.xlu0 %v5416, 64
          %v7259 = vpop.permute.xlu0 %7258
          %7260 = vrot.lane.b32.xlu0 %v5417, 64
          %v7261 = vpop.permute.xlu0 %7260
          %7262 = vrot.lane.b32.xlu0 %v5418, 64
          %v7263 = vpop.permute.xlu0 %7262
          %7264 = vrot.lane.b32.xlu0 %v5419, 64
          %v7265 = vpop.permute.xlu0 %7264
          %7266 = vrot.lane.b32.xlu0 %v5420, 64
          %v7267 = vpop.permute.xlu0 %7266
          %7268 = vrot.lane.b32.xlu0 %v5421, 64
          %v7269 = vpop.permute.xlu0 %7268
          %7270 = vrot.lane.b32.xlu0 %v5422, 64
          %v7271 = vpop.permute.xlu0 %7270
          %7272 = vrot.lane.b32.xlu0 %v5423, 64
          %v7273 = vpop.permute.xlu0 %7272
          %7274 = vrot.lane.b32.xlu0 %v5424, 64
          %v7275 = vpop.permute.xlu0 %7274
          %v7292 = vmul.f32 %v6122, %v7245
          %v7293 = vmul.f32 %v6152, %v7247
          %v7294 = vmul.f32 %v6182, %v7249
          %v7295 = vmul.f32 %v6212, %v7251
          %v7296 = vmul.f32 %v6242, %v7253
          %v7297 = vmul.f32 %v6272, %v7255
          %v7298 = vmul.f32 %v6302, %v7257
          %v7299 = vmul.f32 %v6332, %v7259
          %v7300 = vmul.f32 %v6362, %v7261
          %v7301 = vmul.f32 %v6392, %v7263
          %v7302 = vmul.f32 %v6422, %v7265
          %v7303 = vmul.f32 %v6452, %v7267
          %v7304 = vmul.f32 %v6482, %v7269
          %v7305 = vmul.f32 %v6512, %v7271
          %v7306 = vmul.f32 %v6542, %v7273
          %v7307 = vmul.f32 %v6572, %v7275
          %7324 = vrot.lane.b32.xlu0 %v6588, 64
          %v7325 = vpop.permute.xlu0 %7324
          %7326 = vrot.lane.b32.xlu0 %v6589, 64
          %v7327 = vpop.permute.xlu0 %7326
          %7328 = vrot.lane.b32.xlu0 %v6590, 64
          %v7329 = vpop.permute.xlu0 %7328
          %7330 = vrot.lane.b32.xlu0 %v6591, 64
          %v7331 = vpop.permute.xlu0 %7330
          %7332 = vrot.lane.b32.xlu0 %v6592, 64
          %v7333 = vpop.permute.xlu0 %7332
          %7334 = vrot.lane.b32.xlu0 %v6593, 64
          %v7335 = vpop.permute.xlu0 %7334
          %7336 = vrot.lane.b32.xlu0 %v6594, 64
          %v7337 = vpop.permute.xlu0 %7336
          %7338 = vrot.lane.b32.xlu0 %v6595, 64
          %v7339 = vpop.permute.xlu0 %7338
          %7340 = vrot.lane.b32.xlu0 %v6596, 64
          %v7341 = vpop.permute.xlu0 %7340
          %7342 = vrot.lane.b32.xlu0 %v6597, 64
          %v7343 = vpop.permute.xlu0 %7342
          %7344 = vrot.lane.b32.xlu0 %v6598, 64
          %v7345 = vpop.permute.xlu0 %7344
          %7346 = vrot.lane.b32.xlu0 %v6599, 64
          %v7347 = vpop.permute.xlu0 %7346
          %7348 = vrot.lane.b32.xlu0 %v6600, 64
          %v7349 = vpop.permute.xlu0 %7348
          %7350 = vrot.lane.b32.xlu0 %v6601, 64
          %v7351 = vpop.permute.xlu0 %7350
          %7352 = vrot.lane.b32.xlu0 %v6602, 64
          %v7353 = vpop.permute.xlu0 %7352
          %7354 = vrot.lane.b32.xlu0 %v6603, 64
          %v7355 = vpop.permute.xlu0 %7354
          %v7372 = vmul.f32 %v6122, %v7325
          %v7373 = vmul.f32 %v6152, %v7327
          %v7374 = vmul.f32 %v6182, %v7329
          %v7375 = vmul.f32 %v6212, %v7331
          %v7376 = vmul.f32 %v6242, %v7333
          %v7377 = vmul.f32 %v6272, %v7335
          %v7378 = vmul.f32 %v6302, %v7337
          %v7379 = vmul.f32 %v6332, %v7339
          %v7380 = vmul.f32 %v6362, %v7341
          %v7381 = vmul.f32 %v6392, %v7343
          %v7382 = vmul.f32 %v6422, %v7345
          %v7383 = vmul.f32 %v6452, %v7347
          %v7384 = vmul.f32 %v6482, %v7349
          %v7385 = vmul.f32 %v6512, %v7351
          %v7386 = vmul.f32 %v6542, %v7353
          %v7387 = vmul.f32 %v6572, %v7355
          %7404 = vrot.lane.b32.xlu0 %v7372, 64
          %v7405 = vpop.permute.xlu0 %7404
          %7406 = vrot.lane.b32.xlu0 %v7373, 64
          %v7407 = vpop.permute.xlu0 %7406
          %7408 = vrot.lane.b32.xlu0 %v7374, 64
          %v7409 = vpop.permute.xlu0 %7408
          %7410 = vrot.lane.b32.xlu0 %v7375, 64
          %v7411 = vpop.permute.xlu0 %7410
          %7412 = vrot.lane.b32.xlu0 %v7376, 64
          %v7413 = vpop.permute.xlu0 %7412
          %7414 = vrot.lane.b32.xlu0 %v7377, 64
          %v7415 = vpop.permute.xlu0 %7414
          %7416 = vrot.lane.b32.xlu0 %v7378, 64
          %v7417 = vpop.permute.xlu0 %7416
          %7418 = vrot.lane.b32.xlu0 %v7379, 64
          %v7419 = vpop.permute.xlu0 %7418
          %7420 = vrot.lane.b32.xlu0 %v7380, 64
          %v7421 = vpop.permute.xlu0 %7420
          %7422 = vrot.lane.b32.xlu0 %v7381, 64
          %v7423 = vpop.permute.xlu0 %7422
          %7424 = vrot.lane.b32.xlu0 %v7382, 64
          %v7425 = vpop.permute.xlu0 %7424
          %7426 = vrot.lane.b32.xlu0 %v7383, 64
          %v7427 = vpop.permute.xlu0 %7426
          %7428 = vrot.lane.b32.xlu0 %v7384, 64
          %v7429 = vpop.permute.xlu0 %7428
          %7430 = vrot.lane.b32.xlu0 %v7385, 64
          %v7431 = vpop.permute.xlu0 %7430
          %7432 = vrot.lane.b32.xlu0 %v7386, 64
          %v7433 = vpop.permute.xlu0 %7432
          %7434 = vrot.lane.b32.xlu0 %v7387, 64
          %v7435 = vpop.permute.xlu0 %7434
          %v7452 = vadd.f32 %v7292, %v7405
          %v7453 = vadd.f32 %v7293, %v7407
          %v7454 = vadd.f32 %v7294, %v7409
          %v7455 = vadd.f32 %v7295, %v7411
          %v7456 = vadd.f32 %v7296, %v7413
          %v7457 = vadd.f32 %v7297, %v7415
          %v7458 = vadd.f32 %v7298, %v7417
          %v7459 = vadd.f32 %v7299, %v7419
          %v7460 = vadd.f32 %v7300, %v7421
          %v7461 = vadd.f32 %v7301, %v7423
          %v7462 = vadd.f32 %v7302, %v7425
          %v7463 = vadd.f32 %v7303, %v7427
          %v7464 = vadd.f32 %v7304, %v7429
          %v7465 = vadd.f32 %v7305, %v7431
          %v7466 = vadd.f32 %v7306, %v7433
          %v7467 = vadd.f32 %v7307, %v7435
          %v7468 = vtanh.pop %v7452
          %v7469 = vtanh.pop %v7453
          %v7470 = vtanh.pop %v7454
          %v7471 = vtanh.pop %v7455
          %v7472 = vtanh.pop %v7456
          %v7473 = vtanh.pop %v7457
          %v7474 = vtanh.pop %v7458
          %v7475 = vtanh.pop %v7459
          %v7476 = vtanh.pop %v7460
          %v7477 = vtanh.pop %v7461
          %v7478 = vtanh.pop %v7462
          %v7479 = vtanh.pop %v7463
          %v7480 = vtanh.pop %v7464
          %v7481 = vtanh.pop %v7465
          %v7482 = vtanh.pop %v7466
          %v7483 = vtanh.pop %v7467
          %7500 = vrot.lane.b32.xlu0 %v7468, 64
          %v7501 = vpop.permute.xlu0 %7500
          %7502 = vrot.lane.b32.xlu0 %v7469, 64
          %v7503 = vpop.permute.xlu0 %7502
          %7504 = vrot.lane.b32.xlu0 %v7470, 64
          %v7505 = vpop.permute.xlu0 %7504
          %7506 = vrot.lane.b32.xlu0 %v7471, 64
          %v7507 = vpop.permute.xlu0 %7506
          %7508 = vrot.lane.b32.xlu0 %v7472, 64
          %v7509 = vpop.permute.xlu0 %7508
          %7510 = vrot.lane.b32.xlu0 %v7473, 64
          %v7511 = vpop.permute.xlu0 %7510
          %7512 = vrot.lane.b32.xlu0 %v7474, 64
          %v7513 = vpop.permute.xlu0 %7512
          %7514 = vrot.lane.b32.xlu0 %v7475, 64
          %v7515 = vpop.permute.xlu0 %7514
          %7516 = vrot.lane.b32.xlu0 %v7476, 64
          %v7517 = vpop.permute.xlu0 %7516
          %7518 = vrot.lane.b32.xlu0 %v7477, 64
          %v7519 = vpop.permute.xlu0 %7518
          %7520 = vrot.lane.b32.xlu0 %v7478, 64
          %v7521 = vpop.permute.xlu0 %7520
          %7522 = vrot.lane.b32.xlu0 %v7479, 64
          %v7523 = vpop.permute.xlu0 %7522
          %7524 = vrot.lane.b32.xlu0 %v7480, 64
          %v7525 = vpop.permute.xlu0 %7524
          %7526 = vrot.lane.b32.xlu0 %v7481, 64
          %v7527 = vpop.permute.xlu0 %7526
          %7528 = vrot.lane.b32.xlu0 %v7482, 64
          %v7529 = vpop.permute.xlu0 %7528
          %7530 = vrot.lane.b32.xlu0 %v7483, 64
          %v7531 = vpop.permute.xlu0 %7530
          %v7548 = vmul.f32 %v6137, %v7501
          %v7549 = vmul.f32 %v6167, %v7503
          %v7550 = vmul.f32 %v6197, %v7505
          %v7551 = vmul.f32 %v6227, %v7507
          %v7552 = vmul.f32 %v6257, %v7509
          %v7553 = vmul.f32 %v6287, %v7511
          %v7554 = vmul.f32 %v6317, %v7513
          %v7555 = vmul.f32 %v6347, %v7515
          %v7556 = vmul.f32 %v6377, %v7517
          %v7557 = vmul.f32 %v6407, %v7519
          %v7558 = vmul.f32 %v6437, %v7521
          %v7559 = vmul.f32 %v6467, %v7523
          %v7560 = vmul.f32 %v6497, %v7525
          %v7561 = vmul.f32 %v6527, %v7527
          %v7562 = vmul.f32 %v6557, %v7529
          %v7563 = vmul.f32 %v6587, %v7531
          %7580 = vrot.lane.b32.xlu0 %v5441, 64
          %v7581 = vpop.permute.xlu0 %7580
          %7582 = vrot.lane.b32.xlu0 %v5442, 64
          %v7583 = vpop.permute.xlu0 %7582
          %7584 = vrot.lane.b32.xlu0 %v5443, 64
          %v7585 = vpop.permute.xlu0 %7584
          %7586 = vrot.lane.b32.xlu0 %v5444, 64
          %v7587 = vpop.permute.xlu0 %7586
          %7588 = vrot.lane.b32.xlu0 %v5445, 64
          %v7589 = vpop.permute.xlu0 %7588
          %7590 = vrot.lane.b32.xlu0 %v5446, 64
          %v7591 = vpop.permute.xlu0 %7590
          %7592 = vrot.lane.b32.xlu0 %v5447, 64
          %v7593 = vpop.permute.xlu0 %7592
          %7594 = vrot.lane.b32.xlu0 %v5448, 64
          %v7595 = vpop.permute.xlu0 %7594
          %7596 = vrot.lane.b32.xlu0 %v5449, 64
          %v7597 = vpop.permute.xlu0 %7596
          %7598 = vrot.lane.b32.xlu0 %v5450, 64
          %v7599 = vpop.permute.xlu0 %7598
          %7600 = vrot.lane.b32.xlu0 %v5451, 64
          %v7601 = vpop.permute.xlu0 %7600
          %7602 = vrot.lane.b32.xlu0 %v5452, 64
          %v7603 = vpop.permute.xlu0 %7602
          %7604 = vrot.lane.b32.xlu0 %v5453, 64
          %v7605 = vpop.permute.xlu0 %7604
          %7606 = vrot.lane.b32.xlu0 %v5454, 64
          %v7607 = vpop.permute.xlu0 %7606
          %7608 = vrot.lane.b32.xlu0 %v5455, 64
          %v7609 = vpop.permute.xlu0 %7608
          %7610 = vrot.lane.b32.xlu0 %v5456, 64
          %v7611 = vpop.permute.xlu0 %7610
          %v7628 = vmul.f32 %v6746, %v7581
          %v7629 = vmul.f32 %v6776, %v7583
          %v7630 = vmul.f32 %v6806, %v7585
          %v7631 = vmul.f32 %v6836, %v7587
          %v7632 = vmul.f32 %v6866, %v7589
          %v7633 = vmul.f32 %v6896, %v7591
          %v7634 = vmul.f32 %v6926, %v7593
          %v7635 = vmul.f32 %v6956, %v7595
          %v7636 = vmul.f32 %v6986, %v7597
          %v7637 = vmul.f32 %v7016, %v7599
          %v7638 = vmul.f32 %v7046, %v7601
          %v7639 = vmul.f32 %v7076, %v7603
          %v7640 = vmul.f32 %v7106, %v7605
          %v7641 = vmul.f32 %v7136, %v7607
          %v7642 = vmul.f32 %v7166, %v7609
          %v7643 = vmul.f32 %v7196, %v7611
          %7660 = vrot.lane.b32.xlu0 %v7212, 64
          %v7661 = vpop.permute.xlu0 %7660
          %7662 = vrot.lane.b32.xlu0 %v7213, 64
          %v7663 = vpop.permute.xlu0 %7662
          %7664 = vrot.lane.b32.xlu0 %v7214, 64
          %v7665 = vpop.permute.xlu0 %7664
          %7666 = vrot.lane.b32.xlu0 %v7215, 64
          %v7667 = vpop.permute.xlu0 %7666
          %7668 = vrot.lane.b32.xlu0 %v7216, 64
          %v7669 = vpop.permute.xlu0 %7668
          %7670 = vrot.lane.b32.xlu0 %v7217, 64
          %v7671 = vpop.permute.xlu0 %7670
          %7672 = vrot.lane.b32.xlu0 %v7218, 64
          %v7673 = vpop.permute.xlu0 %7672
          %7674 = vrot.lane.b32.xlu0 %v7219, 64
          %v7675 = vpop.permute.xlu0 %7674
          %7676 = vrot.lane.b32.xlu0 %v7220, 64
          %v7677 = vpop.permute.xlu0 %7676
          %7678 = vrot.lane.b32.xlu0 %v7221, 64
          %v7679 = vpop.permute.xlu0 %7678
          %7680 = vrot.lane.b32.xlu0 %v7222, 64
          %v7681 = vpop.permute.xlu0 %7680
          %7682 = vrot.lane.b32.xlu0 %v7223, 64
          %v7683 = vpop.permute.xlu0 %7682
          %7684 = vrot.lane.b32.xlu0 %v7224, 64
          %v7685 = vpop.permute.xlu0 %7684
          %7686 = vrot.lane.b32.xlu0 %v7225, 64
          %v7687 = vpop.permute.xlu0 %7686
          %7688 = vrot.lane.b32.xlu0 %v7226, 64
          %v7689 = vpop.permute.xlu0 %7688
          %7690 = vrot.lane.b32.xlu0 %v7227, 64
          %v7691 = vpop.permute.xlu0 %7690
          %v7708 = vmul.f32 %v6746, %v7661
          %v7709 = vmul.f32 %v6776, %v7663
          %v7710 = vmul.f32 %v6806, %v7665
          %v7711 = vmul.f32 %v6836, %v7667
          %v7712 = vmul.f32 %v6866, %v7669
          %v7713 = vmul.f32 %v6896, %v7671
          %v7714 = vmul.f32 %v6926, %v7673
          %v7715 = vmul.f32 %v6956, %v7675
          %v7716 = vmul.f32 %v6986, %v7677
          %v7717 = vmul.f32 %v7016, %v7679
          %v7718 = vmul.f32 %v7046, %v7681
          %v7719 = vmul.f32 %v7076, %v7683
          %v7720 = vmul.f32 %v7106, %v7685
          %v7721 = vmul.f32 %v7136, %v7687
          %v7722 = vmul.f32 %v7166, %v7689
          %v7723 = vmul.f32 %v7196, %v7691
          %7740 = vrot.lane.b32.xlu0 %v7708, 64
          %v7741 = vpop.permute.xlu0 %7740
          %7742 = vrot.lane.b32.xlu0 %v7709, 64
          %v7743 = vpop.permute.xlu0 %7742
          %7744 = vrot.lane.b32.xlu0 %v7710, 64
          %v7745 = vpop.permute.xlu0 %7744
          %7746 = vrot.lane.b32.xlu0 %v7711, 64
          %v7747 = vpop.permute.xlu0 %7746
          %7748 = vrot.lane.b32.xlu0 %v7712, 64
          %v7749 = vpop.permute.xlu0 %7748
          %7750 = vrot.lane.b32.xlu0 %v7713, 64
          %v7751 = vpop.permute.xlu0 %7750
          %7752 = vrot.lane.b32.xlu0 %v7714, 64
          %v7753 = vpop.permute.xlu0 %7752
          %7754 = vrot.lane.b32.xlu0 %v7715, 64
          %v7755 = vpop.permute.xlu0 %7754
          %7756 = vrot.lane.b32.xlu0 %v7716, 64
          %v7757 = vpop.permute.xlu0 %7756
          %7758 = vrot.lane.b32.xlu0 %v7717, 64
          %v7759 = vpop.permute.xlu0 %7758
          %7760 = vrot.lane.b32.xlu0 %v7718, 64
          %v7761 = vpop.permute.xlu0 %7760
          %7762 = vrot.lane.b32.xlu0 %v7719, 64
          %v7763 = vpop.permute.xlu0 %7762
          %7764 = vrot.lane.b32.xlu0 %v7720, 64
          %v7765 = vpop.permute.xlu0 %7764
          %7766 = vrot.lane.b32.xlu0 %v7721, 64
          %v7767 = vpop.permute.xlu0 %7766
          %7768 = vrot.lane.b32.xlu0 %v7722, 64
          %v7769 = vpop.permute.xlu0 %7768
          %7770 = vrot.lane.b32.xlu0 %v7723, 64
          %v7771 = vpop.permute.xlu0 %7770
          %v7788 = vadd.f32 %v7628, %v7741
          %v7789 = vadd.f32 %v7629, %v7743
          %v7790 = vadd.f32 %v7630, %v7745
          %v7791 = vadd.f32 %v7631, %v7747
          %v7792 = vadd.f32 %v7632, %v7749
          %v7793 = vadd.f32 %v7633, %v7751
          %v7794 = vadd.f32 %v7634, %v7753
          %v7795 = vadd.f32 %v7635, %v7755
          %v7796 = vadd.f32 %v7636, %v7757
          %v7797 = vadd.f32 %v7637, %v7759
          %v7798 = vadd.f32 %v7638, %v7761
          %v7799 = vadd.f32 %v7639, %v7763
          %v7800 = vadd.f32 %v7640, %v7765
          %v7801 = vadd.f32 %v7641, %v7767
          %v7802 = vadd.f32 %v7642, %v7769
          %v7803 = vadd.f32 %v7643, %v7771
          %v7804 = vtanh.pop %v7788
          %v7805 = vtanh.pop %v7789
          %v7806 = vtanh.pop %v7790
          %v7807 = vtanh.pop %v7791
          %v7808 = vtanh.pop %v7792
          %v7809 = vtanh.pop %v7793
          %v7810 = vtanh.pop %v7794
          %v7811 = vtanh.pop %v7795
          %v7812 = vtanh.pop %v7796
          %v7813 = vtanh.pop %v7797
          %v7814 = vtanh.pop %v7798
          %v7815 = vtanh.pop %v7799
          %v7816 = vtanh.pop %v7800
          %v7817 = vtanh.pop %v7801
          %v7818 = vtanh.pop %v7802
          %v7819 = vtanh.pop %v7803
          %7836 = vrot.lane.b32.xlu0 %v7804, 64
          %v7837 = vpop.permute.xlu0 %7836
          %7838 = vrot.lane.b32.xlu0 %v7805, 64
          %v7839 = vpop.permute.xlu0 %7838
          %7840 = vrot.lane.b32.xlu0 %v7806, 64
          %v7841 = vpop.permute.xlu0 %7840
          %7842 = vrot.lane.b32.xlu0 %v7807, 64
          %v7843 = vpop.permute.xlu0 %7842
          %7844 = vrot.lane.b32.xlu0 %v7808, 64
          %v7845 = vpop.permute.xlu0 %7844
          %7846 = vrot.lane.b32.xlu0 %v7809, 64
          %v7847 = vpop.permute.xlu0 %7846
          %7848 = vrot.lane.b32.xlu0 %v7810, 64
          %v7849 = vpop.permute.xlu0 %7848
          %7850 = vrot.lane.b32.xlu0 %v7811, 64
          %v7851 = vpop.permute.xlu0 %7850
          %7852 = vrot.lane.b32.xlu0 %v7812, 64
          %v7853 = vpop.permute.xlu0 %7852
          %7854 = vrot.lane.b32.xlu0 %v7813, 64
          %v7855 = vpop.permute.xlu0 %7854
          %7856 = vrot.lane.b32.xlu0 %v7814, 64
          %v7857 = vpop.permute.xlu0 %7856
          %7858 = vrot.lane.b32.xlu0 %v7815, 64
          %v7859 = vpop.permute.xlu0 %7858
          %7860 = vrot.lane.b32.xlu0 %v7816, 64
          %v7861 = vpop.permute.xlu0 %7860
          %7862 = vrot.lane.b32.xlu0 %v7817, 64
          %v7863 = vpop.permute.xlu0 %7862
          %7864 = vrot.lane.b32.xlu0 %v7818, 64
          %v7865 = vpop.permute.xlu0 %7864
          %7866 = vrot.lane.b32.xlu0 %v7819, 64
          %v7867 = vpop.permute.xlu0 %7866
          %v7884 = vmul.f32 %v6761, %v7837
          %v7885 = vmul.f32 %v6791, %v7839
          %v7886 = vmul.f32 %v6821, %v7841
          %v7887 = vmul.f32 %v6851, %v7843
          %v7888 = vmul.f32 %v6881, %v7845
          %v7889 = vmul.f32 %v6911, %v7847
          %v7890 = vmul.f32 %v6941, %v7849
          %v7891 = vmul.f32 %v6971, %v7851
          %v7892 = vmul.f32 %v7001, %v7853
          %v7893 = vmul.f32 %v7031, %v7855
          %v7894 = vmul.f32 %v7061, %v7857
          %v7895 = vmul.f32 %v7091, %v7859
          %v7896 = vmul.f32 %v7121, %v7861
          %v7897 = vmul.f32 %v7151, %v7863
          %v7898 = vmul.f32 %v7181, %v7865
          %v7899 = vmul.f32 %v7211, %v7867
          %v7900 = vstv %s5371
          %vm7901 = vcmp.lt.s32.totalorder %v7900, %v5377
          %vm7902 = vcmp.lt.s32.totalorder %v7900, %v5378
          %vm7903 = vcmp.lt.s32.totalorder %v7900, %v5379
          %vm7904 = vcmp.lt.s32.totalorder %v7900, %v5380
          %vm7905 = vcmp.lt.s32.totalorder %v7900, %v5381
          %vm7906 = vcmp.lt.s32.totalorder %v7900, %v5382
          %vm7907 = vcmp.lt.s32.totalorder %v7900, %v5383
          %vm7908 = vcmp.lt.s32.totalorder %v7900, %v5384
          %vm7909 = vcmp.lt.s32.totalorder %v7900, %v5385
          %vm7910 = vcmp.lt.s32.totalorder %v7900, %v5386
          %vm7911 = vcmp.lt.s32.totalorder %v7900, %v5387
          %vm7912 = vcmp.lt.s32.totalorder %v7900, %v5388
          %vm7913 = vcmp.lt.s32.totalorder %v7900, %v5389
          %vm7914 = vcmp.lt.s32.totalorder %v7900, %v5390
          %vm7915 = vcmp.lt.s32.totalorder %v7900, %v5391
          %vm7916 = vcmp.lt.s32.totalorder %v7900, %v5392
          %v7917 = vstv %s5376
          %vm7918 = vcmp.lt.s32.totalorder %v7917, %v5377
          %vm7919 = vcmp.lt.s32.totalorder %v7917, %v5378
          %vm7920 = vcmp.lt.s32.totalorder %v7917, %v5379
          %vm7921 = vcmp.lt.s32.totalorder %v7917, %v5380
          %vm7922 = vcmp.lt.s32.totalorder %v7917, %v5381
          %vm7923 = vcmp.lt.s32.totalorder %v7917, %v5382
          %vm7924 = vcmp.lt.s32.totalorder %v7917, %v5383
          %vm7925 = vcmp.lt.s32.totalorder %v7917, %v5384
          %vm7926 = vcmp.lt.s32.totalorder %v7917, %v5385
          %vm7927 = vcmp.lt.s32.totalorder %v7917, %v5386
          %vm7928 = vcmp.lt.s32.totalorder %v7917, %v5387
          %vm7929 = vcmp.lt.s32.totalorder %v7917, %v5388
          %vm7930 = vcmp.lt.s32.totalorder %v7917, %v5389
          %vm7931 = vcmp.lt.s32.totalorder %v7917, %v5390
          %vm7932 = vcmp.lt.s32.totalorder %v7917, %v5391
          %vm7933 = vcmp.lt.s32.totalorder %v7917, %v5392
          %v7934 = vsel %vm7901, 1, 0
          %v7935 = vsel %vm7902, 1, 0
          %v7936 = vsel %vm7903, 1, 0
          %v7937 = vsel %vm7904, 1, 0
          %v7938 = vsel %vm7905, 1, 0
          %v7939 = vsel %vm7906, 1, 0
          %v7940 = vsel %vm7907, 1, 0
          %v7941 = vsel %vm7908, 1, 0
          %v7942 = vsel %vm7909, 1, 0
          %v7943 = vsel %vm7910, 1, 0
          %v7944 = vsel %vm7911, 1, 0
          %v7945 = vsel %vm7912, 1, 0
          %v7946 = vsel %vm7913, 1, 0
          %v7947 = vsel %vm7914, 1, 0
          %v7948 = vsel %vm7915, 1, 0
          %v7949 = vsel %vm7916, 1, 0
          %7950 = vset.pattern.permute.xlu0 0
          %7951 = vperm.xlu0 %7950, %v7934
          %v7952 = vpop.permute.xlu0 %7951
          %7953 = vset.pattern.permute.xlu0 0
          %7954 = vperm.xlu0 %7953, %v7935
          %v7955 = vpop.permute.xlu0 %7954
          %7956 = vset.pattern.permute.xlu0 0
          %7957 = vperm.xlu0 %7956, %v7936
          %v7958 = vpop.permute.xlu0 %7957
          %7959 = vset.pattern.permute.xlu0 0
          %7960 = vperm.xlu0 %7959, %v7937
          %v7961 = vpop.permute.xlu0 %7960
          %7962 = vset.pattern.permute.xlu0 0
          %7963 = vperm.xlu0 %7962, %v7938
          %v7964 = vpop.permute.xlu0 %7963
          %7965 = vset.pattern.permute.xlu0 0
          %7966 = vperm.xlu0 %7965, %v7939
          %v7967 = vpop.permute.xlu0 %7966
          %7968 = vset.pattern.permute.xlu0 0
          %7969 = vperm.xlu0 %7968, %v7940
          %v7970 = vpop.permute.xlu0 %7969
          %7971 = vset.pattern.permute.xlu0 0
          %7972 = vperm.xlu0 %7971, %v7941
          %v7973 = vpop.permute.xlu0 %7972
          %7974 = vset.pattern.permute.xlu0 0
          %7975 = vperm.xlu0 %7974, %v7942
          %v7976 = vpop.permute.xlu0 %7975
          %7977 = vset.pattern.permute.xlu0 0
          %7978 = vperm.xlu0 %7977, %v7943
          %v7979 = vpop.permute.xlu0 %7978
          %7980 = vset.pattern.permute.xlu0 0
          %7981 = vperm.xlu0 %7980, %v7944
          %v7982 = vpop.permute.xlu0 %7981
          %7983 = vset.pattern.permute.xlu0 0
          %7984 = vperm.xlu0 %7983, %v7945
          %v7985 = vpop.permute.xlu0 %7984
          %7986 = vset.pattern.permute.xlu0 0
          %7987 = vperm.xlu0 %7986, %v7946
          %v7988 = vpop.permute.xlu0 %7987
          %7989 = vset.pattern.permute.xlu0 0
          %7990 = vperm.xlu0 %7989, %v7947
          %v7991 = vpop.permute.xlu0 %7990
          %7992 = vset.pattern.permute.xlu0 0
          %7993 = vperm.xlu0 %7992, %v7948
          %v7994 = vpop.permute.xlu0 %7993
          %7995 = vset.pattern.permute.xlu0 0
          %7996 = vperm.xlu0 %7995, %v7949
          %v7997 = vpop.permute.xlu0 %7996
          %vm7998 = vcmp.eq.s32.totalorder %v7952, 1
          %vm7999 = vcmp.eq.s32.totalorder %v7955, 1
          %vm8000 = vcmp.eq.s32.totalorder %v7958, 1
          %vm8001 = vcmp.eq.s32.totalorder %v7961, 1
          %vm8002 = vcmp.eq.s32.totalorder %v7964, 1
          %vm8003 = vcmp.eq.s32.totalorder %v7967, 1
          %vm8004 = vcmp.eq.s32.totalorder %v7970, 1
          %vm8005 = vcmp.eq.s32.totalorder %v7973, 1
          %vm8006 = vcmp.eq.s32.totalorder %v7976, 1
          %vm8007 = vcmp.eq.s32.totalorder %v7979, 1
          %vm8008 = vcmp.eq.s32.totalorder %v7982, 1
          %vm8009 = vcmp.eq.s32.totalorder %v7985, 1
          %vm8010 = vcmp.eq.s32.totalorder %v7988, 1
          %vm8011 = vcmp.eq.s32.totalorder %v7991, 1
          %vm8012 = vcmp.eq.s32.totalorder %v7994, 1
          %vm8013 = vcmp.eq.s32.totalorder %v7997, 1
          %v8014 = vsel %vm7998, %v7548, %v5393
          %v8015 = vsel %vm7999, %v7549, %v5394
          %v8016 = vsel %vm8000, %v7550, %v5395
          %v8017 = vsel %vm8001, %v7551, %v5396
          %v8018 = vsel %vm8002, %v7552, %v5397
          %v8019 = vsel %vm8003, %v7553, %v5398
          %v8020 = vsel %vm8004, %v7554, %v5399
          %v8021 = vsel %vm8005, %v7555, %v5400
          %v8022 = vsel %vm8006, %v7556, %v5401
          %v8023 = vsel %vm8007, %v7557, %v5402
          %v8024 = vsel %vm8008, %v7558, %v5403
          %v8025 = vsel %vm8009, %v7559, %v5404
          %v8026 = vsel %vm8010, %v7560, %v5405
          %v8027 = vsel %vm8011, %v7561, %v5406
          %v8028 = vsel %vm8012, %v7562, %v5407
          %v8029 = vsel %vm8013, %v7563, %v5408
          %8030 = vst.msk [vmem:[#allocation4] sm:$0xff] %vm1701, %v8014
          %8031 = vst.msk [vmem:[#allocation4 + $0x8] sm:$0xff] %vm1701, %v8015
          %8032 = vst.msk [vmem:[#allocation4 + $0x10] sm:$0xff] %vm1701, %v8016
          %8033 = vst.msk [vmem:[#allocation4 + $0x18] sm:$0xff] %vm1701, %v8017
          %8034 = vst.msk [vmem:[#allocation4 + $0x20] sm:$0xff] %vm1701, %v8018
          %8035 = vst.msk [vmem:[#allocation4 + $0x28] sm:$0xff] %vm1701, %v8019
          %8036 = vst.msk [vmem:[#allocation4 + $0x30] sm:$0xff] %vm1701, %v8020
          %8037 = vst.msk [vmem:[#allocation4 + $0x38] sm:$0xff] %vm1701, %v8021
          %8038 = vst.msk [vmem:[#allocation4 + $0x40] sm:$0xff] %vm1701, %v8022
          %8039 = vst.msk [vmem:[#allocation4 + $0x48] sm:$0xff] %vm1701, %v8023
          %8040 = vst.msk [vmem:[#allocation4 + $0x50] sm:$0xff] %vm1701, %v8024
          %8041 = vst.msk [vmem:[#allocation4 + $0x58] sm:$0xff] %vm1701, %v8025
          %8042 = vst.msk [vmem:[#allocation4 + $0x60] sm:$0xff] %vm1701, %v8026
          %8043 = vst.msk [vmem:[#allocation4 + $0x68] sm:$0xff] %vm1701, %v8027
          %8044 = vst.msk [vmem:[#allocation4 + $0x70] sm:$0xff] %vm1701, %v8028
          %8045 = vst.msk [vmem:[#allocation4 + $0x78] sm:$0xff] %vm1701, %v8029
          %v8046 = vsel %vm7998, %v7452, %v7245
          %v8047 = vsel %vm7999, %v7453, %v7247
          %v8048 = vsel %vm8000, %v7454, %v7249
          %v8049 = vsel %vm8001, %v7455, %v7251
          %v8050 = vsel %vm8002, %v7456, %v7253
          %v8051 = vsel %vm8003, %v7457, %v7255
          %v8052 = vsel %vm8004, %v7458, %v7257
          %v8053 = vsel %vm8005, %v7459, %v7259
          %v8054 = vsel %vm8006, %v7460, %v7261
          %v8055 = vsel %vm8007, %v7461, %v7263
          %v8056 = vsel %vm8008, %v7462, %v7265
          %v8057 = vsel %vm8009, %v7463, %v7267
          %v8058 = vsel %vm8010, %v7464, %v7269
          %v8059 = vsel %vm8011, %v7465, %v7271
          %v8060 = vsel %vm8012, %v7466, %v7273
          %v8061 = vsel %vm8013, %v7467, %v7275
          %8078 = vrot.lane.b32.xlu0 %v8046, 64
          %v8079 = vpop.permute.xlu0 %8078
          %8080 = vrot.lane.b32.xlu0 %v8047, 64
          %v8081 = vpop.permute.xlu0 %8080
          %8082 = vrot.lane.b32.xlu0 %v8048, 64
          %v8083 = vpop.permute.xlu0 %8082
          %8084 = vrot.lane.b32.xlu0 %v8049, 64
          %v8085 = vpop.permute.xlu0 %8084
          %8086 = vrot.lane.b32.xlu0 %v8050, 64
          %v8087 = vpop.permute.xlu0 %8086
          %8088 = vrot.lane.b32.xlu0 %v8051, 64
          %v8089 = vpop.permute.xlu0 %8088
          %8090 = vrot.lane.b32.xlu0 %v8052, 64
          %v8091 = vpop.permute.xlu0 %8090
          %8092 = vrot.lane.b32.xlu0 %v8053, 64
          %v8093 = vpop.permute.xlu0 %8092
          %8094 = vrot.lane.b32.xlu0 %v8054, 64
          %v8095 = vpop.permute.xlu0 %8094
          %8096 = vrot.lane.b32.xlu0 %v8055, 64
          %v8097 = vpop.permute.xlu0 %8096
          %8098 = vrot.lane.b32.xlu0 %v8056, 64
          %v8099 = vpop.permute.xlu0 %8098
          %8100 = vrot.lane.b32.xlu0 %v8057, 64
          %v8101 = vpop.permute.xlu0 %8100
          %8102 = vrot.lane.b32.xlu0 %v8058, 64
          %v8103 = vpop.permute.xlu0 %8102
          %8104 = vrot.lane.b32.xlu0 %v8059, 64
          %v8105 = vpop.permute.xlu0 %8104
          %8106 = vrot.lane.b32.xlu0 %v8060, 64
          %v8107 = vpop.permute.xlu0 %8106
          %8108 = vrot.lane.b32.xlu0 %v8061, 64
          %v8109 = vpop.permute.xlu0 %8108
          %8126 = vst.msk [vmem:[#allocation5] sm:$0xff] %vm1701, %v8079
          %8127 = vst.msk [vmem:[#allocation5 + $0x8] sm:$0xff] %vm1701, %v8081
          %8128 = vst.msk [vmem:[#allocation5 + $0x10] sm:$0xff] %vm1701, %v8083
          %8129 = vst.msk [vmem:[#allocation5 + $0x18] sm:$0xff] %vm1701, %v8085
          %8130 = vst.msk [vmem:[#allocation5 + $0x20] sm:$0xff] %vm1701, %v8087
          %8131 = vst.msk [vmem:[#allocation5 + $0x28] sm:$0xff] %vm1701, %v8089
          %8132 = vst.msk [vmem:[#allocation5 + $0x30] sm:$0xff] %vm1701, %v8091
          %8133 = vst.msk [vmem:[#allocation5 + $0x38] sm:$0xff] %vm1701, %v8093
          %8134 = vst.msk [vmem:[#allocation5 + $0x40] sm:$0xff] %vm1701, %v8095
          %8135 = vst.msk [vmem:[#allocation5 + $0x48] sm:$0xff] %vm1701, %v8097
          %8136 = vst.msk [vmem:[#allocation5 + $0x50] sm:$0xff] %vm1701, %v8099
          %8137 = vst.msk [vmem:[#allocation5 + $0x58] sm:$0xff] %vm1701, %v8101
          %8138 = vst.msk [vmem:[#allocation5 + $0x60] sm:$0xff] %vm1701, %v8103
          %8139 = vst.msk [vmem:[#allocation5 + $0x68] sm:$0xff] %vm1701, %v8105
          %8140 = vst.msk [vmem:[#allocation5 + $0x70] sm:$0xff] %vm1701, %v8107
          %8141 = vst.msk [vmem:[#allocation5 + $0x78] sm:$0xff] %vm1701, %v8109
          %v8142 = vsel %vm7918, 1, 0
          %v8143 = vsel %vm7919, 1, 0
          %v8144 = vsel %vm7920, 1, 0
          %v8145 = vsel %vm7921, 1, 0
          %v8146 = vsel %vm7922, 1, 0
          %v8147 = vsel %vm7923, 1, 0
          %v8148 = vsel %vm7924, 1, 0
          %v8149 = vsel %vm7925, 1, 0
          %v8150 = vsel %vm7926, 1, 0
          %v8151 = vsel %vm7927, 1, 0
          %v8152 = vsel %vm7928, 1, 0
          %v8153 = vsel %vm7929, 1, 0
          %v8154 = vsel %vm7930, 1, 0
          %v8155 = vsel %vm7931, 1, 0
          %v8156 = vsel %vm7932, 1, 0
          %v8157 = vsel %vm7933, 1, 0
          %8158 = vset.pattern.permute.xlu0 0
          %8159 = vperm.xlu0 %8158, %v8142
          %v8160 = vpop.permute.xlu0 %8159
          %8161 = vset.pattern.permute.xlu0 0
          %8162 = vperm.xlu0 %8161, %v8143
          %v8163 = vpop.permute.xlu0 %8162
          %8164 = vset.pattern.permute.xlu0 0
          %8165 = vperm.xlu0 %8164, %v8144
          %v8166 = vpop.permute.xlu0 %8165
          %8167 = vset.pattern.permute.xlu0 0
          %8168 = vperm.xlu0 %8167, %v8145
          %v8169 = vpop.permute.xlu0 %8168
          %8170 = vset.pattern.permute.xlu0 0
          %8171 = vperm.xlu0 %8170, %v8146
          %v8172 = vpop.permute.xlu0 %8171
          %8173 = vset.pattern.permute.xlu0 0
          %8174 = vperm.xlu0 %8173, %v8147
          %v8175 = vpop.permute.xlu0 %8174
          %8176 = vset.pattern.permute.xlu0 0
          %8177 = vperm.xlu0 %8176, %v8148
          %v8178 = vpop.permute.xlu0 %8177
          %8179 = vset.pattern.permute.xlu0 0
          %8180 = vperm.xlu0 %8179, %v8149
          %v8181 = vpop.permute.xlu0 %8180
          %8182 = vset.pattern.permute.xlu0 0
          %8183 = vperm.xlu0 %8182, %v8150
          %v8184 = vpop.permute.xlu0 %8183
          %8185 = vset.pattern.permute.xlu0 0
          %8186 = vperm.xlu0 %8185, %v8151
          %v8187 = vpop.permute.xlu0 %8186
          %8188 = vset.pattern.permute.xlu0 0
          %8189 = vperm.xlu0 %8188, %v8152
          %v8190 = vpop.permute.xlu0 %8189
          %8191 = vset.pattern.permute.xlu0 0
          %8192 = vperm.xlu0 %8191, %v8153
          %v8193 = vpop.permute.xlu0 %8192
          %8194 = vset.pattern.permute.xlu0 0
          %8195 = vperm.xlu0 %8194, %v8154
          %v8196 = vpop.permute.xlu0 %8195
          %8197 = vset.pattern.permute.xlu0 0
          %8198 = vperm.xlu0 %8197, %v8155
          %v8199 = vpop.permute.xlu0 %8198
          %8200 = vset.pattern.permute.xlu0 0
          %8201 = vperm.xlu0 %8200, %v8156
          %v8202 = vpop.permute.xlu0 %8201
          %8203 = vset.pattern.permute.xlu0 0
          %8204 = vperm.xlu0 %8203, %v8157
          %v8205 = vpop.permute.xlu0 %8204
          %vm8206 = vcmp.eq.s32.totalorder %v8160, 1
          %vm8207 = vcmp.eq.s32.totalorder %v8163, 1
          %vm8208 = vcmp.eq.s32.totalorder %v8166, 1
          %vm8209 = vcmp.eq.s32.totalorder %v8169, 1
          %vm8210 = vcmp.eq.s32.totalorder %v8172, 1
          %vm8211 = vcmp.eq.s32.totalorder %v8175, 1
          %vm8212 = vcmp.eq.s32.totalorder %v8178, 1
          %vm8213 = vcmp.eq.s32.totalorder %v8181, 1
          %vm8214 = vcmp.eq.s32.totalorder %v8184, 1
          %vm8215 = vcmp.eq.s32.totalorder %v8187, 1
          %vm8216 = vcmp.eq.s32.totalorder %v8190, 1
          %vm8217 = vcmp.eq.s32.totalorder %v8193, 1
          %vm8218 = vcmp.eq.s32.totalorder %v8196, 1
          %vm8219 = vcmp.eq.s32.totalorder %v8199, 1
          %vm8220 = vcmp.eq.s32.totalorder %v8202, 1
          %vm8221 = vcmp.eq.s32.totalorder %v8205, 1
          %v8222 = vsel %vm8206, %v7884, %v5425
          %v8223 = vsel %vm8207, %v7885, %v5426
          %v8224 = vsel %vm8208, %v7886, %v5427
          %v8225 = vsel %vm8209, %v7887, %v5428
          %v8226 = vsel %vm8210, %v7888, %v5429
          %v8227 = vsel %vm8211, %v7889, %v5430
          %v8228 = vsel %vm8212, %v7890, %v5431
          %v8229 = vsel %vm8213, %v7891, %v5432
          %v8230 = vsel %vm8214, %v7892, %v5433
          %v8231 = vsel %vm8215, %v7893, %v5434
          %v8232 = vsel %vm8216, %v7894, %v5435
          %v8233 = vsel %vm8217, %v7895, %v5436
          %v8234 = vsel %vm8218, %v7896, %v5437
          %v8235 = vsel %vm8219, %v7897, %v5438
          %v8236 = vsel %vm8220, %v7898, %v5439
          %v8237 = vsel %vm8221, %v7899, %v5440
          %8238 = vst.msk [vmem:[#allocation6] sm:$0xff] %vm1701, %v8222
          %8239 = vst.msk [vmem:[#allocation6 + $0x8] sm:$0xff] %vm1701, %v8223
          %8240 = vst.msk [vmem:[#allocation6 + $0x10] sm:$0xff] %vm1701, %v8224
          %8241 = vst.msk [vmem:[#allocation6 + $0x18] sm:$0xff] %vm1701, %v8225
          %8242 = vst.msk [vmem:[#allocation6 + $0x20] sm:$0xff] %vm1701, %v8226
          %8243 = vst.msk [vmem:[#allocation6 + $0x28] sm:$0xff] %vm1701, %v8227
          %8244 = vst.msk [vmem:[#allocation6 + $0x30] sm:$0xff] %vm1701, %v8228
          %8245 = vst.msk [vmem:[#allocation6 + $0x38] sm:$0xff] %vm1701, %v8229
          %8246 = vst.msk [vmem:[#allocation6 + $0x40] sm:$0xff] %vm1701, %v8230
          %8247 = vst.msk [vmem:[#allocation6 + $0x48] sm:$0xff] %vm1701, %v8231
          %8248 = vst.msk [vmem:[#allocation6 + $0x50] sm:$0xff] %vm1701, %v8232
          %8249 = vst.msk [vmem:[#allocation6 + $0x58] sm:$0xff] %vm1701, %v8233
          %8250 = vst.msk [vmem:[#allocation6 + $0x60] sm:$0xff] %vm1701, %v8234
          %8251 = vst.msk [vmem:[#allocation6 + $0x68] sm:$0xff] %vm1701, %v8235
          %8252 = vst.msk [vmem:[#allocation6 + $0x70] sm:$0xff] %vm1701, %v8236
          %8253 = vst.msk [vmem:[#allocation6 + $0x78] sm:$0xff] %vm1701, %v8237
          %v8254 = vsel %vm8206, %v7788, %v7581
          %v8255 = vsel %vm8207, %v7789, %v7583
          %v8256 = vsel %vm8208, %v7790, %v7585
          %v8257 = vsel %vm8209, %v7791, %v7587
          %v8258 = vsel %vm8210, %v7792, %v7589
          %v8259 = vsel %vm8211, %v7793, %v7591
          %v8260 = vsel %vm8212, %v7794, %v7593
          %v8261 = vsel %vm8213, %v7795, %v7595
          %v8262 = vsel %vm8214, %v7796, %v7597
          %v8263 = vsel %vm8215, %v7797, %v7599
          %v8264 = vsel %vm8216, %v7798, %v7601
          %v8265 = vsel %vm8217, %v7799, %v7603
          %v8266 = vsel %vm8218, %v7800, %v7605
          %v8267 = vsel %vm8219, %v7801, %v7607
          %v8268 = vsel %vm8220, %v7802, %v7609
          %v8269 = vsel %vm8221, %v7803, %v7611
          %8286 = vrot.lane.b32.xlu0 %v8254, 64
          %v8287 = vpop.permute.xlu0 %8286
          %8288 = vrot.lane.b32.xlu0 %v8255, 64
          %v8289 = vpop.permute.xlu0 %8288
          %8290 = vrot.lane.b32.xlu0 %v8256, 64
          %v8291 = vpop.permute.xlu0 %8290
          %8292 = vrot.lane.b32.xlu0 %v8257, 64
          %v8293 = vpop.permute.xlu0 %8292
          %8294 = vrot.lane.b32.xlu0 %v8258, 64
          %v8295 = vpop.permute.xlu0 %8294
          %8296 = vrot.lane.b32.xlu0 %v8259, 64
          %v8297 = vpop.permute.xlu0 %8296
          %8298 = vrot.lane.b32.xlu0 %v8260, 64
          %v8299 = vpop.permute.xlu0 %8298
          %8300 = vrot.lane.b32.xlu0 %v8261, 64
          %v8301 = vpop.permute.xlu0 %8300
          %8302 = vrot.lane.b32.xlu0 %v8262, 64
          %v8303 = vpop.permute.xlu0 %8302
          %8304 = vrot.lane.b32.xlu0 %v8263, 64
          %v8305 = vpop.permute.xlu0 %8304
          %8306 = vrot.lane.b32.xlu0 %v8264, 64
          %v8307 = vpop.permute.xlu0 %8306
          %8308 = vrot.lane.b32.xlu0 %v8265, 64
          %v8309 = vpop.permute.xlu0 %8308
          %8310 = vrot.lane.b32.xlu0 %v8266, 64
          %v8311 = vpop.permute.xlu0 %8310
          %8312 = vrot.lane.b32.xlu0 %v8267, 64
          %v8313 = vpop.permute.xlu0 %8312
          %8314 = vrot.lane.b32.xlu0 %v8268, 64
          %v8315 = vpop.permute.xlu0 %8314
          %8316 = vrot.lane.b32.xlu0 %v8269, 64
          %v8317 = vpop.permute.xlu0 %8316
          %8334 = vst.msk [vmem:[#allocation7] sm:$0xff] %vm1701, %v8287
          %8335 = vst.msk [vmem:[#allocation7 + $0x8] sm:$0xff] %vm1701, %v8289
          %8336 = vst.msk [vmem:[#allocation7 + $0x10] sm:$0xff] %vm1701, %v8291
          %8337 = vst.msk [vmem:[#allocation7 + $0x18] sm:$0xff] %vm1701, %v8293
          %8338 = vst.msk [vmem:[#allocation7 + $0x20] sm:$0xff] %vm1701, %v8295
          %8339 = vst.msk [vmem:[#allocation7 + $0x28] sm:$0xff] %vm1701, %v8297
          %8340 = vst.msk [vmem:[#allocation7 + $0x30] sm:$0xff] %vm1701, %v8299
          %8341 = vst.msk [vmem:[#allocation7 + $0x38] sm:$0xff] %vm1701, %v8301
          %8342 = vst.msk [vmem:[#allocation7 + $0x40] sm:$0xff] %vm1701, %v8303
          %8343 = vst.msk [vmem:[#allocation7 + $0x48] sm:$0xff] %vm1701, %v8305
          %8344 = vst.msk [vmem:[#allocation7 + $0x50] sm:$0xff] %vm1701, %v8307
          %8345 = vst.msk [vmem:[#allocation7 + $0x58] sm:$0xff] %vm1701, %v8309
          %8346 = vst.msk [vmem:[#allocation7 + $0x60] sm:$0xff] %vm1701, %v8311
          %8347 = vst.msk [vmem:[#allocation7 + $0x68] sm:$0xff] %vm1701, %v8313
          %8348 = vst.msk [vmem:[#allocation7 + $0x70] sm:$0xff] %vm1701, %v8315
          %8349 = vst.msk [vmem:[#allocation7 + $0x78] sm:$0xff] %vm1701, %v8317
          %v8350 = vsel %vm7998, %v7548, 0.0
          %v8351 = vsel %vm7999, %v7549, 0.0
          %v8352 = vsel %vm8000, %v7550, 0.0
          %v8353 = vsel %vm8001, %v7551, 0.0
          %v8354 = vsel %vm8002, %v7552, 0.0
          %v8355 = vsel %vm8003, %v7553, 0.0
          %v8356 = vsel %vm8004, %v7554, 0.0
          %v8357 = vsel %vm8005, %v7555, 0.0
          %v8358 = vsel %vm8006, %v7556, 0.0
          %v8359 = vsel %vm8007, %v7557, 0.0
          %v8360 = vsel %vm8008, %v7558, 0.0
          %v8361 = vsel %vm8009, %v7559, 0.0
          %v8362 = vsel %vm8010, %v7560, 0.0
          %v8363 = vsel %vm8011, %v7561, 0.0
          %v8364 = vsel %vm8012, %v7562, 0.0
          %v8365 = vsel %vm8013, %v7563, 0.0
          %s8366 = smul.u32 %s5371, 128
          %s8367 = scalar_lea.vmem %s1247, %s8366 [#allocation10]
          %8368 = vst.msk [vmem:[%s8367] sm:$0xff] %vm1701, %v8350
          %8369 = vst.msk [vmem:[%s8367 + $0x8] sm:$0xff] %vm1701, %v8351
          %8370 = vst.msk [vmem:[%s8367 + $0x10] sm:$0xff] %vm1701, %v8352
          %8371 = vst.msk [vmem:[%s8367 + $0x18] sm:$0xff] %vm1701, %v8353
          %8372 = vst.msk [vmem:[%s8367 + $0x20] sm:$0xff] %vm1701, %v8354
          %8373 = vst.msk [vmem:[%s8367 + $0x28] sm:$0xff] %vm1701, %v8355
          %8374 = vst.msk [vmem:[%s8367 + $0x30] sm:$0xff] %vm1701, %v8356
          %8375 = vst.msk [vmem:[%s8367 + $0x38] sm:$0xff] %vm1701, %v8357
          %8376 = vst.msk [vmem:[%s8367 + $0x40] sm:$0xff] %vm1701, %v8358
          %8377 = vst.msk [vmem:[%s8367 + $0x48] sm:$0xff] %vm1701, %v8359
          %8378 = vst.msk [vmem:[%s8367 + $0x50] sm:$0xff] %vm1701, %v8360
          %8379 = vst.msk [vmem:[%s8367 + $0x58] sm:$0xff] %vm1701, %v8361
          %8380 = vst.msk [vmem:[%s8367 + $0x60] sm:$0xff] %vm1701, %v8362
          %8381 = vst.msk [vmem:[%s8367 + $0x68] sm:$0xff] %vm1701, %v8363
          %8382 = vst.msk [vmem:[%s8367 + $0x70] sm:$0xff] %vm1701, %v8364
          %8383 = vst.msk [vmem:[%s8367 + $0x78] sm:$0xff] %vm1701, %v8365
          %v8384 = vsel %vm8206, %v7884, 0.0
          %v8385 = vsel %vm8207, %v7885, 0.0
          %v8386 = vsel %vm8208, %v7886, 0.0
          %v8387 = vsel %vm8209, %v7887, 0.0
          %v8388 = vsel %vm8210, %v7888, 0.0
          %v8389 = vsel %vm8211, %v7889, 0.0
          %v8390 = vsel %vm8212, %v7890, 0.0
          %v8391 = vsel %vm8213, %v7891, 0.0
          %v8392 = vsel %vm8214, %v7892, 0.0
          %v8393 = vsel %vm8215, %v7893, 0.0
          %v8394 = vsel %vm8216, %v7894, 0.0
          %v8395 = vsel %vm8217, %v7895, 0.0
          %v8396 = vsel %vm8218, %v7896, 0.0
          %v8397 = vsel %vm8219, %v7897, 0.0
          %v8398 = vsel %vm8220, %v7898, 0.0
          %v8399 = vsel %vm8221, %v7899, 0.0
          %8416 = vrot.lane.b32.xlu0 %v8384, 64
          %v8417 = vpop.permute.xlu0 %8416
          %8418 = vrot.lane.b32.xlu0 %v8385, 64
          %v8419 = vpop.permute.xlu0 %8418
          %8420 = vrot.lane.b32.xlu0 %v8386, 64
          %v8421 = vpop.permute.xlu0 %8420
          %8422 = vrot.lane.b32.xlu0 %v8387, 64
          %v8423 = vpop.permute.xlu0 %8422
          %8424 = vrot.lane.b32.xlu0 %v8388, 64
          %v8425 = vpop.permute.xlu0 %8424
          %8426 = vrot.lane.b32.xlu0 %v8389, 64
          %v8427 = vpop.permute.xlu0 %8426
          %8428 = vrot.lane.b32.xlu0 %v8390, 64
          %v8429 = vpop.permute.xlu0 %8428
          %8430 = vrot.lane.b32.xlu0 %v8391, 64
          %v8431 = vpop.permute.xlu0 %8430
          %8432 = vrot.lane.b32.xlu0 %v8392, 64
          %v8433 = vpop.permute.xlu0 %8432
          %8434 = vrot.lane.b32.xlu0 %v8393, 64
          %v8435 = vpop.permute.xlu0 %8434
          %8436 = vrot.lane.b32.xlu0 %v8394, 64
          %v8437 = vpop.permute.xlu0 %8436
          %8438 = vrot.lane.b32.xlu0 %v8395, 64
          %v8439 = vpop.permute.xlu0 %8438
          %8440 = vrot.lane.b32.xlu0 %v8396, 64
          %v8441 = vpop.permute.xlu0 %8440
          %8442 = vrot.lane.b32.xlu0 %v8397, 64
          %v8443 = vpop.permute.xlu0 %8442
          %8444 = vrot.lane.b32.xlu0 %v8398, 64
          %v8445 = vpop.permute.xlu0 %8444
          %8446 = vrot.lane.b32.xlu0 %v8399, 64
          %v8447 = vpop.permute.xlu0 %8446
          %s8464 = smul.u32 %s5376, 128
          %s8465 = scalar_lea.vmem %s1247, %s8464 [#allocation10]
          %vm8466 = vcmask 1048064
          %8467 = vst.msk [vmem:[%s8465] sm:$0xff] %vm8466, %v8417
          %8468 = vst.msk [vmem:[%s8465 + $0x8] sm:$0xff] %vm8466, %v8419
          %8469 = vst.msk [vmem:[%s8465 + $0x10] sm:$0xff] %vm8466, %v8421
          %8470 = vst.msk [vmem:[%s8465 + $0x18] sm:$0xff] %vm8466, %v8423
          %8471 = vst.msk [vmem:[%s8465 + $0x20] sm:$0xff] %vm8466, %v8425
          %8472 = vst.msk [vmem:[%s8465 + $0x28] sm:$0xff] %vm8466, %v8427
          %8473 = vst.msk [vmem:[%s8465 + $0x30] sm:$0xff] %vm8466, %v8429
          %8474 = vst.msk [vmem:[%s8465 + $0x38] sm:$0xff] %vm8466, %v8431
          %8475 = vst.msk [vmem:[%s8465 + $0x40] sm:$0xff] %vm8466, %v8433
          %8476 = vst.msk [vmem:[%s8465 + $0x48] sm:$0xff] %vm8466, %v8435
          %8477 = vst.msk [vmem:[%s8465 + $0x50] sm:$0xff] %vm8466, %v8437
          %8478 = vst.msk [vmem:[%s8465 + $0x58] sm:$0xff] %vm8466, %v8439
          %8479 = vst.msk [vmem:[%s8465 + $0x60] sm:$0xff] %vm8466, %v8441
          %8480 = vst.msk [vmem:[%s8465 + $0x68] sm:$0xff] %vm8466, %v8443
          %8481 = vst.msk [vmem:[%s8465 + $0x70] sm:$0xff] %vm8466, %v8445
          %8482 = vst.msk [vmem:[%s8465 + $0x78] sm:$0xff] %vm8466, %v8447
        $region116: #{tpu_custom_call.1} parent=85 // loop_footer
          %s5375 = sadd.s32 1, %s5371
        $region117: #{tpu_custom_call.1} parent=85 // loop_footer_branch
          %5370 = sbr.rel target = $region113
        $region118: #{tpu_custom_call.1} parent=85 // loop_exit
          _
        %s8483 = sand.u32 %s208, 1
        %s8484 = scalar_lea.sflag [#allocation11], %s8483
        %s8485 = sand.u32 %s208, 1
        %s8486 = smul.addr %s8485, 1792
        %s8487 = scalar_lea.vmem [#allocation10], %s8486
        // Predicated region
        $region119: #{tpu_custom_call.1} parent=85 // pred_check
          %p8488 = pneg %p218
        $region120: #{tpu_custom_call.1} parent=85 // pred_check_branch
          %8490 = sbr.rel (%p8488) target = $region122
        $region121: #{tpu_custom_call.1} parent=85 // pred_region
          #allocation13 [shape = 'u32[6]{0}', space=smem, size = 0x18, scoped, tag = 'DMA stride descriptor']
          %s8491 = smul.u32 16, %s22
          %8493 = vsyncadd %s8484, 0
          %s8494 = smul.addr %s8491, 8
          %s8495 = scalar_lea.hbm %s8, %s8494
          %s8497 = sshll.u32 1, 14
          %s8498 = sxor.u32 4294967295, %s8497
          %s8501 = sshll.u32 7, 18
          %s8502 = sxor.u32 4294967295, %s8501
          %s8503 = sand.u32 0, %s8502
          %s8505 = sor.u32 %s8503, 0
          %s8506 = sshll.u32 %s8487, 4
          %s8507 = int_to_ptr.vmem [resolvable:$true] %s8506
          %s8508 = sshll.u32 %s8495, 4
          %s8509 = int_to_ptr.hbm [resolvable:$true] %s8508
          %8515 = sst [smem:[#allocation13]] 2048
          %s8516 = scalar_lea.smem [#allocation13], 1
          %8517 = sst [smem:[%s8516]] 10240
          %s8518 = scalar_lea.smem [#allocation13], 2
          %8519 = sst [smem:[%s8518]] 16
          %s8520 = scalar_lea.smem [#allocation13], 3
          %8521 = sst [smem:[%s8520]] 128
          %s8522 = scalar_lea.smem [#allocation13], 4
          %8523 = sst [smem:[%s8522]] 128
          %s8524 = scalar_lea.smem [#allocation13], 5
          %8525 = sst [smem:[%s8524]] 8
          %8527 = dma.general %s8507, 28672, %s8509, %s8484, [#allocation12], [#allocation13], %s8505, 0
        $region122: #{tpu_custom_call.1} parent=85 // pred_fallthru
          _
      $region86: #{tpu_custom_call.1} parent=5 // pred_fallthru
        _
      %p8528 = scmp.le.s32.totalorder 2, %s17
      // Predicated region
      $region123: #{tpu_custom_call.1} parent=5 // pred_check
        %p8529 = pneg %p8528
      $region124: #{tpu_custom_call.1} parent=5 // pred_check_branch
        %8531 = sbr.rel (%p8529) target = $region126
      $region125: #{tpu_custom_call.1} parent=5 // pred_region
        %s8532 = ssub.s32 %s17, 2
        // Predicated region
        $region127: #{tpu_custom_call.1} parent=125 // pred_check
          %p8533 = pneg %p224
        $region128: #{tpu_custom_call.1} parent=125 // pred_check_branch
          %8535 = sbr.rel (%p8533) target = $region130
        $region129: #{tpu_custom_call.1} parent=125 // pred_region
          %s8536 = sand.u32 %s209, 1
          %s8537 = scalar_lea.sflag [#allocation11], %s8536
          %s8538 = sand.u32 %s209, 1
          %s8539 = smul.addr %s8538, 1792
          %s8540 = scalar_lea.vmem [#allocation10], %s8539
          %8542 = dma.done %s8537, 28672
        $region130: #{tpu_custom_call.1} parent=125 // pred_fallthru
          _
      $region126: #{tpu_custom_call.1} parent=5 // pred_fallthru
        _
    $region6: #{tpu_custom_call.1} parent=1 // loop_footer
      %s21 = sadd.s32 1, %s17
    $region7: #{tpu_custom_call.1} parent=1 // loop_footer_branch
      %16 = sbr.rel target = $region3
    $region8: #{tpu_custom_call.1} parent=1 // loop_exit
      _
    %8543 = vsyncpa [#allocation11], 1
    %s8544 = scalar_lea.sflag [#allocation11], 1
    %8545 = vsyncpa %s8544, 1

</llo_original>
